<compile_context>
chip_gen: v6e
topology: v6e:2x2x1
jax: 0.10.0
libtpu: 0.0.40
codegen_flags: <defaults>
</compile_context>

<pallas_src>
import numpy as np
import jax
import jax.numpy as jnp
from jax.experimental import pallas as pl
from jax.experimental.pallas import tpu as pltpu

LANE = 128


# ---------------------------------------------------------------------------
# Fold a 3x3 / stride-2 / pad-1 conv into a dense operator on the HWC-flattened map.
# in_flat[(hi*n + wi)*cin + ci]  @ M  ->  out_flat[(ho*m + wo)*cout + co],  m = n//2
# ---------------------------------------------------------------------------
def _conv_to_dense(w_hwio, n):
    kh_, kw_, cin, cout = w_hwio.shape
    assert (kh_, kw_) == (3, 3)
    m = n // 2
    M = np.zeros((n * n * cin, m * m * cout), dtype=np.float32)
    for kh in range(3):
        for kw in range(3):
            wt = w_hwio[kh, kw]                               # (cin, cout)
            for ho in range(m):
                hi = 2 * ho + kh - 1
                if not 0 <= hi < n:
                    continue
                for wo in range(m):
                    wi = 2 * wo + kw - 1
                    if not 0 <= wi < n:
                        continue
                    r0 = (hi * n + wi) * cin
                    c0 = (ho * m + wo) * cout
                    M[r0:r0 + cin, c0:c0 + cout] = wt
    return M


def fold_params(params, spatial=16):
    """Fold conv weights into per-layer dense operators (done once, outside jit)."""
    assert spatial == 16, "demo assumes 16x16 input (4 stride-2 convs -> 1x1)"
    dense = []
    n = spatial
    for (w, b) in params:
        w_np, b_np = np.asarray(w), np.asarray(b)
        M = _conv_to_dense(w_np, n)
        m = n // 2
        bt = np.tile(b_np, m * m)[None, :]                    # bias tiled over positions
        dense.append([M, bt])
        n = m
    # Last layer: zero-pad output columns 32 -> 128 so the kernel's store is a
    # full-lane (unmasked) block; the wrapper slices back to 32 channels.
    M4, b4 = dense[-1]
    pad = LANE - M4.shape[1]
    dense[-1] = [np.pad(M4, ((0, 0), (0, pad))), np.pad(b4, ((0, 0), (0, pad)))]
    return [(jnp.asarray(M), jnp.asarray(bt)) for M, bt in dense]


# ---------------------------------------------------------------------------
# Fused kernel: all 4 conv layers for one batch block of TB samples.
# ---------------------------------------------------------------------------
def _fused_kernel(x_ref, m1_ref, b1_ref, m2_ref, b2_ref,
                  m3_ref, b3_ref, m4_ref, b4_ref, o_ref):
    a = jnp.dot(x_ref[...], m1_ref[...], preferred_element_type=jnp.float32) + b1_ref[...]
    a = jnp.dot(a, m2_ref[...], preferred_element_type=jnp.float32) + b2_ref[...]
    a = jnp.dot(a, m3_ref[...], preferred_element_type=jnp.float32) + b3_ref[...]
    o_ref[...] = jnp.dot(a, m4_ref[...], preferred_element_type=jnp.float32) + b4_ref[...]


def _pick_batch_tile(B):
    if B <= 8:
        return B                                   # one block; block dims == full dims
    TB = min(256, (B + 1) // 2)                    # >=2 grid steps -> both v7x TCs busy
    return max(8, (TB // 8) * 8)                   # sublane-aligned


# ---------------------------------------------------------------------------
# Parameter init (deterministic, PyTorch-Conv2d-style uniform bounds), HWIO.
# ---------------------------------------------------------------------------
def init_params(num_inputs, key):
    params = []
    cin = num_inputs
    for _ in range(4):
        key, kw_key, kb_key = jax.random.split(key, 3)
        fan_in = cin * 3 * 3
        bound = 1.0 / float(fan_in) ** 0.5
        w = jax.random.uniform(kw_key, (3, 3, cin, 32), jnp.float32, -bound, bound)
        b = jax.random.uniform(kb_key, (32,), jnp.float32, -bound, bound)
        params.append((w, b))
        cin = 32
    return params


# ---------------------------------------------------------------------------
# ActorCritic forward: NCHW input -> 4 convs -> flatten (NCHW order).
# ---------------------------------------------------------------------------
def actor_critic_forward(x_nchw, dense_params):
    B, Cin, H, W = x_nchw.shape
    assert H == 16 and W == 16, "demo assumes 16x16 input (4 stride-2 convs -> 1x1)"
    (m1, b1), (m2, b2), (m3, b3), (m4, b4) = dense_params
    feat_in = H * W * Cin
    assert m1.shape[0] == feat_in
    Cout = 32

    # NCHW -> NHWC -> (B, H*W*Cin): matches the dense operators' row layout.
    x = jnp.transpose(x_nchw, (0, 2, 3, 1)).reshape(B, feat_in)

    TB = _pick_batch_tile(B)
    nblk = -(-B // TB)
    B_pad = nblk * TB
    if B_pad != B:
        x = jnp.pad(x, ((0, B_pad - B), (0, 0)))

    const = lambda i: (0, 0)
    out = pl.pallas_call(
        _fused_kernel,
        out_shape=jax.ShapeDtypeStruct((B_pad, LANE), jnp.float32),
        grid_spec=pltpu.PrefetchScalarGridSpec(
            num_scalar_prefetch=0,
            grid=(nblk,),                                      # one step per batch block
            in_specs=[
                pl.BlockSpec((TB, feat_in), lambda i: (i, 0)), # batch block of inputs
                pl.BlockSpec(m1.shape, const), pl.BlockSpec(b1.shape, const),
                pl.BlockSpec(m2.shape, const), pl.BlockSpec(b2.shape, const),
                pl.BlockSpec(m3.shape, const), pl.BlockSpec(b3.shape, const),
                pl.BlockSpec(m4.shape, const), pl.BlockSpec(b4.shape, const),
            ],
            out_specs=pl.BlockSpec((TB, LANE), lambda i: (i, 0)),  # lane-dense store
        ),
        compiler_params=pltpu.CompilerParams(
            dimension_semantics=("parallel",),                 # shard blocks over v7x TCs
            vmem_limit_bytes=40 * 1024 * 1024),
    )(x, m1, b1, m2, b2, m3, b3, m4, b4)

    # TODO(synk): reference forward is just `torch.flatten()` (placeholder; no
    # activations or actor/critic heads defined) - we return the 4-conv output
    # flattened in NCHW order.
    return out[:B, :Cout]                                      # (B, 32*1*1)


# ---------------------------------------------------------------------------
# Pure-XLA reference (lax.conv) for correctness validation.
# ---------------------------------------------------------------------------
def reference_forward(x_nchw, params):
    y = x_nchw
    for w_hwio, b in params:
        w_oihw = jnp.transpose(w_hwio, (3, 2, 0, 1))
        y = jax.lax.conv_general_dilated(
            y, w_oihw, window_strides=(2, 2), padding=((1, 1), (1, 1)),
            dimension_numbers=("NCHW", "OIHW", "NCHW"),
            precision=jax.lax.Precision.HIGHEST) + b.reshape(1, -1, 1, 1)
    return y.reshape(y.shape[0], -1)


if __name__ == "__main__":
    key = jax.random.PRNGKey(0)
    key, pkey, xkey = jax.random.split(key, 3)

    num_inputs = 4
    params = init_params(num_inputs, pkey)
    dense_params = fold_params(params)            # folded once, outside jit

    # small shapes consistent with the module: batch=2, channels=4, spatial=16
    x = jax.random.normal(xkey, (2, num_inputs, 16, 16), dtype=jnp.float32)

    fwd = jax.jit(actor_critic_forward)
    out = jax.block_until_ready(fwd(x, dense_params))
    assert out.shape == (2, 32), out.shape        # 16 -> 8 -> 4 -> 2 -> 1, 32 channels

    ref = jax.block_until_ready(reference_forward(x, params))
    assert jnp.allclose(out, ref, atol=1e-3, rtol=1e-3), float(jnp.max(jnp.abs(out - ref)))

    print("KERNEL_OK")
</pallas_src>

<mosaic_0001>
module attributes {stable_mosaic.version = 11 : i64} {
  func.func @_fused_kernel(%arg0: i32, %arg1: memref<2x1024xf32, #tpu.memory_space<vmem>>, %arg2: memref<1024x2048xf32, #tpu.memory_space<vmem>>, %arg3: memref<1x2048xf32, #tpu.memory_space<vmem>>, %arg4: memref<2048x512xf32, #tpu.memory_space<vmem>>, %arg5: memref<1x512xf32, #tpu.memory_space<vmem>>, %arg6: memref<512x128xf32, #tpu.memory_space<vmem>>, %arg7: memref<1x128xf32, #tpu.memory_space<vmem>>, %arg8: memref<128x128xf32, #tpu.memory_space<vmem>>, %arg9: memref<1x128xf32, #tpu.memory_space<vmem>>, %arg10: memref<2x128xf32, #tpu.memory_space<vmem>>) attributes {dimension_semantics = [#tpu.dimension_semantics<parallel>], iteration_bounds = array<i64: 1>, scalar_prefetch = 0 : i64, scratch_operands = 0 : i64, tpu.core_type = #tpu.core_type<tc>, window_params = [{transform_indices = @transform_0, window_bounds = array<i64: 2, 1024>}, {pipeline_mode = #tpu.pipeline_mode<synchronous>, transform_indices = @transform_1, window_bounds = array<i64: 1024, 2048>}, {pipeline_mode = #tpu.pipeline_mode<synchronous>, transform_indices = @transform_2, window_bounds = array<i64: 1, 2048>}, {pipeline_mode = #tpu.pipeline_mode<synchronous>, transform_indices = @transform_3, window_bounds = array<i64: 2048, 512>}, {pipeline_mode = #tpu.pipeline_mode<synchronous>, transform_indices = @transform_4, window_bounds = array<i64: 1, 512>}, {pipeline_mode = #tpu.pipeline_mode<synchronous>, transform_indices = @transform_5, window_bounds = array<i64: 512, 128>}, {pipeline_mode = #tpu.pipeline_mode<synchronous>, transform_indices = @transform_6, window_bounds = array<i64: 1, 128>}, {pipeline_mode = #tpu.pipeline_mode<synchronous>, transform_indices = @transform_7, window_bounds = array<i64: 128, 128>}, {pipeline_mode = #tpu.pipeline_mode<synchronous>, transform_indices = @transform_8, window_bounds = array<i64: 1, 128>}, {transform_indices = @transform_9, window_bounds = array<i64: 2, 128>}]} {
    %c0 = arith.constant 0 : index
    %c0_0 = arith.constant 0 : index
    %0 = vector.load %arg1[%c0, %c0_0] : memref<2x1024xf32, #tpu.memory_space<vmem>>, vector<2x1024xf32>
    %c0_1 = arith.constant 0 : index
    %c0_2 = arith.constant 0 : index
    %1 = vector.load %arg2[%c0_1, %c0_2] : memref<1024x2048xf32, #tpu.memory_space<vmem>>, vector<1024x2048xf32>
    %cst = arith.constant dense<0.000000e+00> : vector<2x2048xf32>
    %2 = tpu.matmul %0, %1, %cst {dimension_numbers = #tpu.dot_dimension_numbers<[1], [0], [0], [1], [0, 0, 1, 1], [], []>} : vector<2x1024xf32>, vector<1024x2048xf32>, vector<2x2048xf32> -> vector<2x2048xf32>
    %c0_3 = arith.constant 0 : index
    %c0_4 = arith.constant 0 : index
    %3 = vector.load %arg3[%c0_3, %c0_4] : memref<1x2048xf32, #tpu.memory_space<vmem>>, vector<1x2048xf32>
    %4 = vector.broadcast %3 : vector<1x2048xf32> to vector<2x2048xf32>
    %5 = arith.addf %2, %4 : vector<2x2048xf32>
    %c0_5 = arith.constant 0 : index
    %c0_6 = arith.constant 0 : index
    %6 = vector.load %arg4[%c0_5, %c0_6] : memref<2048x512xf32, #tpu.memory_space<vmem>>, vector<2048x512xf32>
    %cst_7 = arith.constant dense<0.000000e+00> : vector<2x512xf32>
    %7 = tpu.matmul %5, %6, %cst_7 {dimension_numbers = #tpu.dot_dimension_numbers<[1], [0], [0], [1], [0, 0, 1, 1], [], []>} : vector<2x2048xf32>, vector<2048x512xf32>, vector<2x512xf32> -> vector<2x512xf32>
    %c0_8 = arith.constant 0 : index
    %c0_9 = arith.constant 0 : index
    %8 = vector.load %arg5[%c0_8, %c0_9] : memref<1x512xf32, #tpu.memory_space<vmem>>, vector<1x512xf32>
    %9 = vector.broadcast %8 : vector<1x512xf32> to vector<2x512xf32>
    %10 = arith.addf %7, %9 : vector<2x512xf32>
    %c0_10 = arith.constant 0 : index
    %c0_11 = arith.constant 0 : index
    %11 = vector.load %arg6[%c0_10, %c0_11] : memref<512x128xf32, #tpu.memory_space<vmem>>, vector<512x128xf32>
    %cst_12 = arith.constant dense<0.000000e+00> : vector<2x128xf32>
    %12 = tpu.matmul %10, %11, %cst_12 {dimension_numbers = #tpu.dot_dimension_numbers<[1], [0], [0], [1], [0, 0, 1, 1], [], []>} : vector<2x512xf32>, vector<512x128xf32>, vector<2x128xf32> -> vector<2x128xf32>
    %c0_13 = arith.constant 0 : index
    %c0_14 = arith.constant 0 : index
    %13 = vector.load %arg7[%c0_13, %c0_14] : memref<1x128xf32, #tpu.memory_space<vmem>>, vector<1x128xf32>
    %14 = vector.broadcast %13 : vector<1x128xf32> to vector<2x128xf32>
    %15 = arith.addf %12, %14 : vector<2x128xf32>
    %c0_15 = arith.constant 0 : index
    %c0_16 = arith.constant 0 : index
    %16 = vector.load %arg8[%c0_15, %c0_16] : memref<128x128xf32, #tpu.memory_space<vmem>>, vector<128x128xf32>
    %cst_17 = arith.constant dense<0.000000e+00> : vector<2x128xf32>
    %17 = tpu.matmul %15, %16, %cst_17 {dimension_numbers = #tpu.dot_dimension_numbers<[1], [0], [0], [1], [0, 0, 1, 1], [], []>} : vector<2x128xf32>, vector<128x128xf32>, vector<2x128xf32> -> vector<2x128xf32>
    %c0_18 = arith.constant 0 : index
    %c0_19 = arith.constant 0 : index
    %18 = vector.load %arg9[%c0_18, %c0_19] : memref<1x128xf32, #tpu.memory_space<vmem>>, vector<1x128xf32>
    %19 = vector.broadcast %18 : vector<1x128xf32> to vector<2x128xf32>
    %20 = arith.addf %17, %19 : vector<2x128xf32>
    %c0_20 = arith.constant 0 : index
    %c0_21 = arith.constant 0 : index
    %21 = vector.load %arg10[%c0_20, %c0_21] : memref<2x128xf32, #tpu.memory_space<vmem>>, vector<2x128xf32>
    tpu.vector_store %arg10[%c0_20, %c0_21], %20 {strides = array<i32>} : memref<2x128xf32, #tpu.memory_space<vmem>>, vector<2x128xf32>,
    return
  }
  func.func @transform_0(%arg0: i32) -> (i32, i32) {
    %c0_i32 = arith.constant 0 : i32
    %c0_i32_0 = arith.constant 0 : i32
    return %arg0, %c0_i32 : i32, i32
  }
  func.func @transform_1(%arg0: i32) -> (i32, i32) {
    %c0_i32 = arith.constant 0 : i32
    %c0_i32_0 = arith.constant 0 : i32
    %c0_i32_1 = arith.constant 0 : i32
    return %c0_i32, %c0_i32_0 : i32, i32
  }
  func.func @transform_2(%arg0: i32) -> (i32, i32) {
    %c0_i32 = arith.constant 0 : i32
    %c0_i32_0 = arith.constant 0 : i32
    %c0_i32_1 = arith.constant 0 : i32
    return %c0_i32, %c0_i32_0 : i32, i32
  }
  func.func @transform_3(%arg0: i32) -> (i32, i32) {
    %c0_i32 = arith.constant 0 : i32
    %c0_i32_0 = arith.constant 0 : i32
    %c0_i32_1 = arith.constant 0 : i32
    return %c0_i32, %c0_i32_0 : i32, i32
  }
  func.func @transform_4(%arg0: i32) -> (i32, i32) {
    %c0_i32 = arith.constant 0 : i32
    %c0_i32_0 = arith.constant 0 : i32
    %c0_i32_1 = arith.constant 0 : i32
    return %c0_i32, %c0_i32_0 : i32, i32
  }
  func.func @transform_5(%arg0: i32) -> (i32, i32) {
    %c0_i32 = arith.constant 0 : i32
    %c0_i32_0 = arith.constant 0 : i32
    %c0_i32_1 = arith.constant 0 : i32
    return %c0_i32, %c0_i32_0 : i32, i32
  }
  func.func @transform_6(%arg0: i32) -> (i32, i32) {
    %c0_i32 = arith.constant 0 : i32
    %c0_i32_0 = arith.constant 0 : i32
    %c0_i32_1 = arith.constant 0 : i32
    return %c0_i32, %c0_i32_0 : i32, i32
  }
  func.func @transform_7(%arg0: i32) -> (i32, i32) {
    %c0_i32 = arith.constant 0 : i32
    %c0_i32_0 = arith.constant 0 : i32
    %c0_i32_1 = arith.constant 0 : i32
    return %c0_i32, %c0_i32_0 : i32, i32
  }
  func.func @transform_8(%arg0: i32) -> (i32, i32) {
    %c0_i32 = arith.constant 0 : i32
    %c0_i32_0 = arith.constant 0 : i32
    %c0_i32_1 = arith.constant 0 : i32
    return %c0_i32, %c0_i32_0 : i32, i32
  }
  func.func @transform_9(%arg0: i32) -> (i32, i32) {
    %c0_i32 = arith.constant 0 : i32
    %c0_i32_0 = arith.constant 0 : i32
    return %arg0, %c0_i32 : i32, i32
  }
}

</mosaic_0001>

<llo_original>
// kernel: actor_critic_forward.1
$region0: #{actor_critic_forward.1}
  #allocation0 [shape = 'u32[]', space=smem, size = 0x4, offset = 0x4, fixed_abs, tag = 'smem constant byte address 0x4 - core index']
  #allocation1 [shape = 'u32[144,128]{1,0:T(1,128)}', space=vmem, size = 0x12000, scoped, tag = 'internal scratch']
  %s0 = inlined_call_operand.vmem [shape: f32[2,1024], index: 0, kind: input, shape index: {}]
  %s1 = inlined_call_operand.hbm [shape: f32[1024,2048], index: 1, kind: input, shape index: {}]
  %s2 = inlined_call_operand.hbm [shape: f32[1,2048], index: 2, kind: input, shape index: {}]
  %s3 = inlined_call_operand.hbm [shape: f32[2048,512], index: 3, kind: input, shape index: {}]
  %s4 = inlined_call_operand.hbm [shape: f32[1,512], index: 4, kind: input, shape index: {}]
  %s5 = inlined_call_operand.hbm [shape: f32[512,128], index: 5, kind: input, shape index: {}]
  %s6 = inlined_call_operand.hbm [shape: f32[1,128], index: 6, kind: input, shape index: {}]
  %s7 = inlined_call_operand.hbm [shape: f32[128,128], index: 7, kind: input, shape index: {}]
  %s8 = inlined_call_operand.hbm [shape: f32[1,128], index: 8, kind: input, shape index: {}]
  %s9 = inlined_call_operand.hbm [shape: f32[2,128], index: 9, kind: output, shape index: {}]
  %s10 = sld [smem:[#allocation0]]
  $region78: #{actor_critic_forward.1} parent=0
    _
  %s12 = ssub.s32 1, %s10
  %s13 = scalar_select 0, %s12, %s10
  $region1: #{actor_critic_forward.1} parent=0
    #allocation2 [shape = 'u8[8388608]{0}', space=vmem, size = 0x800000, scoped, tag = 'input window, operand 1, single buffered']
    #allocation3 [shape = 's32[1]{0}', space=sflag, size = 0x4, scoped, tag = 'scoped memory for actor_critic_forward.1']
    #allocation4 [shape = 's32[1]{0}', space=sflag, size = 0x4, scoped, tag = 'scoped memory for actor_critic_forward.1']
    #allocation5 [shape = 'u8[8192]{0}', space=vmem, size = 0x2000, scoped, tag = 'input window, operand 2, single buffered']
    #allocation6 [shape = 's32[1]{0}', space=sflag, size = 0x4, scoped, tag = 'scoped memory for actor_critic_forward.1']
    #allocation7 [shape = 'u8[4194304]{0}', space=vmem, size = 0x400000, scoped, tag = 'input window, operand 3, single buffered']
    #allocation8 [shape = 'u8[2048]{0}', space=vmem, size = 0x800, scoped, tag = 'input window, operand 4, single buffered']
    #allocation9 [shape = 's32[1]{0}', space=sflag, size = 0x4, scoped, tag = 'scoped memory for actor_critic_forward.1']
    #allocation10 [shape = 'u8[262144]{0}', space=vmem, size = 0x40000, scoped, tag = 'input window, operand 5, single buffered']
    #allocation11 [shape = 'u8[512]{0}', space=vmem, size = 0x400, scoped, tag = 'input window, operand 6, single buffered']
    #allocation12 [shape = 's32[1]{0}', space=sflag, size = 0x4, scoped, tag = 'scoped memory for actor_critic_forward.1']
    #allocation13 [shape = 'u8[65536]{0}', space=vmem, size = 0x10000, scoped, tag = 'input window, operand 7, single buffered']
    #allocation14 [shape = 'u8[512]{0}', space=vmem, size = 0x400, scoped, tag = 'input window, operand 8, single buffered']
    #allocation15 [shape = 's32[1]{0}', space=sflag, size = 0x4, scoped, tag = 'scoped memory for actor_critic_forward.1']
    #allocation16 [shape = 'u8[1024]{0}', space=vmem, size = 0x400, scoped, tag = 'output window, operand 0, single buffered']
    %14 = vsyncpa [#allocation3], 0
    %15 = vsyncpa [#allocation6], 0
    %16 = vsyncpa [#allocation9], 0
    %17 = vsyncpa [#allocation12], 0
    %18 = vsyncpa [#allocation15], 0
    %19 = vsyncpa [#allocation4], 0
    // Predicated region
    $region2: #{actor_critic_forward.1} parent=1 // pred_check
      _
    $region3: #{actor_critic_forward.1} parent=1 // pred_check_branch
      %21 = sbr.rel (0) target = $region5
    $region4: #{actor_critic_forward.1} parent=1 // pred_region
      _
    $region5: #{actor_critic_forward.1} parent=1 // pred_fallthru
      _
    // Predicated region
    $region6: #{actor_critic_forward.1} parent=1 // pred_check
      _
    $region7: #{actor_critic_forward.1} parent=1 // pred_check_branch
      %23 = sbr.rel (0) target = $region9
    $region8: #{actor_critic_forward.1} parent=1 // pred_region
      %s25 = ssub.s32 262144, 262144
      %26 = vsyncadd [#allocation3], %s25
      %s27 = sshll.u32 [#allocation2], 4
      %s28 = int_to_ptr.vmem [resolvable:$true] %s27
      %33 = dma.hbm_to_vmem [thread:$0]  %s1, 262144, %s28, [#allocation3], 2048, 2048, 128
    $region9: #{actor_critic_forward.1} parent=1 // pred_fallthru
      _
    // Predicated region
    $region10: #{actor_critic_forward.1} parent=1 // pred_check
      _
    $region11: #{actor_critic_forward.1} parent=1 // pred_check_branch
      %35 = sbr.rel (0) target = $region13
    $region12: #{actor_critic_forward.1} parent=1 // pred_region
      %s37 = ssub.s32 256, 256
      %38 = vsyncadd [#allocation6], %s37
      %s40 = sshll.u32 [#allocation5], 4
      %s41 = int_to_ptr.vmem [resolvable:$true] %s40
      %43 = dma.hbm_to_vmem [thread:$0]  %s2, 256, %s41, [#allocation6]
    $region13: #{actor_critic_forward.1} parent=1 // pred_fallthru
      _
    // Predicated region
    $region14: #{actor_critic_forward.1} parent=1 // pred_check
      _
    $region15: #{actor_critic_forward.1} parent=1 // pred_check_branch
      %45 = sbr.rel (0) target = $region17
    $region16: #{actor_critic_forward.1} parent=1 // pred_region
      %s47 = ssub.s32 131072, 131072
      %48 = vsyncadd [#allocation6], %s47
      %s49 = sshll.u32 [#allocation7], 4
      %s50 = int_to_ptr.vmem [resolvable:$true] %s49
      %55 = dma.hbm_to_vmem [thread:$0]  %s3, 131072, %s50, [#allocation6], 512, 512, 32
    $region17: #{actor_critic_forward.1} parent=1 // pred_fallthru
      _
    // Predicated region
    $region18: #{actor_critic_forward.1} parent=1 // pred_check
      _
    $region19: #{actor_critic_forward.1} parent=1 // pred_check_branch
      %57 = sbr.rel (0) target = $region21
    $region20: #{actor_critic_forward.1} parent=1 // pred_region
      %s59 = ssub.s32 64, 64
      %60 = vsyncadd [#allocation9], %s59
      %s62 = sshll.u32 [#allocation8], 4
      %s63 = int_to_ptr.vmem [resolvable:$true] %s62
      %65 = dma.hbm_to_vmem [thread:$0]  %s4, 64, %s63, [#allocation9]
    $region21: #{actor_critic_forward.1} parent=1 // pred_fallthru
      _
    // Predicated region
    $region22: #{actor_critic_forward.1} parent=1 // pred_check
      _
    $region23: #{actor_critic_forward.1} parent=1 // pred_check_branch
      %67 = sbr.rel (0) target = $region25
    $region24: #{actor_critic_forward.1} parent=1 // pred_region
      %s69 = ssub.s32 8192, 8192
      %70 = vsyncadd [#allocation9], %s69
      %s71 = sshll.u32 [#allocation10], 4
      %s72 = int_to_ptr.vmem [resolvable:$true] %s71
      %77 = dma.hbm_to_vmem [thread:$0]  %s5, 8192, %s72, [#allocation9], 128, 128, 8
    $region25: #{actor_critic_forward.1} parent=1 // pred_fallthru
      _
    // Predicated region
    $region26: #{actor_critic_forward.1} parent=1 // pred_check
      _
    $region27: #{actor_critic_forward.1} parent=1 // pred_check_branch
      %79 = sbr.rel (0) target = $region29
    $region28: #{actor_critic_forward.1} parent=1 // pred_region
      %s81 = ssub.s32 16, 16
      %82 = vsyncadd [#allocation12], %s81
      %s84 = sshll.u32 [#allocation11], 4
      %s85 = int_to_ptr.vmem [resolvable:$true] %s84
      %87 = dma.hbm_to_vmem [thread:$0]  %s6, 16, %s85, [#allocation12]
    $region29: #{actor_critic_forward.1} parent=1 // pred_fallthru
      _
    // Predicated region
    $region30: #{actor_critic_forward.1} parent=1 // pred_check
      _
    $region31: #{actor_critic_forward.1} parent=1 // pred_check_branch
      %89 = sbr.rel (0) target = $region33
    $region32: #{actor_critic_forward.1} parent=1 // pred_region
      %s91 = ssub.s32 2048, 2048
      %92 = vsyncadd [#allocation12], %s91
      %s93 = sshll.u32 [#allocation13], 4
      %s94 = int_to_ptr.vmem [resolvable:$true] %s93
      %99 = dma.hbm_to_vmem [thread:$0]  %s7, 2048, %s94, [#allocation12], 128, 128, 8
    $region33: #{actor_critic_forward.1} parent=1 // pred_fallthru
      _
    // Predicated region
    $region34: #{actor_critic_forward.1} parent=1 // pred_check
      _
    $region35: #{actor_critic_forward.1} parent=1 // pred_check_branch
      %101 = sbr.rel (0) target = $region37
    $region36: #{actor_critic_forward.1} parent=1 // pred_region
      %s103 = ssub.s32 16, 16
      %104 = vsyncadd [#allocation15], %s103
      %s106 = sshll.u32 [#allocation14], 4
      %s107 = int_to_ptr.vmem [resolvable:$true] %s106
      %109 = dma.hbm_to_vmem [thread:$0]  %s8, 16, %s107, [#allocation15]
    $region37: #{actor_critic_forward.1} parent=1 // pred_fallthru
      _
    // Predicated region
    $region38: #{actor_critic_forward.1} parent=1 // pred_check
      _
    $region39: #{actor_critic_forward.1} parent=1 // pred_check_branch
      %111 = sbr.rel (0) target = $region41
    $region40: #{actor_critic_forward.1} parent=1 // pred_region
      %112 = dma.done [#allocation3], 262144
    $region41: #{actor_critic_forward.1} parent=1 // pred_fallthru
      _
    // Predicated region
    $region42: #{actor_critic_forward.1} parent=1 // pred_check
      _
    $region43: #{actor_critic_forward.1} parent=1 // pred_check_branch
      %114 = sbr.rel (0) target = $region45
    $region44: #{actor_critic_forward.1} parent=1 // pred_region
      %115 = dma.done [#allocation6], 256
    $region45: #{actor_critic_forward.1} parent=1 // pred_fallthru
      _
    // Predicated region
    $region46: #{actor_critic_forward.1} parent=1 // pred_check
      _
    $region47: #{actor_critic_forward.1} parent=1 // pred_check_branch
      %117 = sbr.rel (0) target = $region49
    $region48: #{actor_critic_forward.1} parent=1 // pred_region
      %118 = dma.done [#allocation6], 131072
    $region49: #{actor_critic_forward.1} parent=1 // pred_fallthru
      _
    // Predicated region
    $region50: #{actor_critic_forward.1} parent=1 // pred_check
      _
    $region51: #{actor_critic_forward.1} parent=1 // pred_check_branch
      %120 = sbr.rel (0) target = $region53
    $region52: #{actor_critic_forward.1} parent=1 // pred_region
      %121 = dma.done [#allocation9], 64
    $region53: #{actor_critic_forward.1} parent=1 // pred_fallthru
      _
    // Predicated region
    $region54: #{actor_critic_forward.1} parent=1 // pred_check
      _
    $region55: #{actor_critic_forward.1} parent=1 // pred_check_branch
      %123 = sbr.rel (0) target = $region57
    $region56: #{actor_critic_forward.1} parent=1 // pred_region
      %124 = dma.done [#allocation9], 8192
    $region57: #{actor_critic_forward.1} parent=1 // pred_fallthru
      _
    // Predicated region
    $region58: #{actor_critic_forward.1} parent=1 // pred_check
      _
    $region59: #{actor_critic_forward.1} parent=1 // pred_check_branch
      %126 = sbr.rel (0) target = $region61
    $region60: #{actor_critic_forward.1} parent=1 // pred_region
      %127 = dma.done [#allocation12], 16
    $region61: #{actor_critic_forward.1} parent=1 // pred_fallthru
      _
    // Predicated region
    $region62: #{actor_critic_forward.1} parent=1 // pred_check
      _
    $region63: #{actor_critic_forward.1} parent=1 // pred_check_branch
      %129 = sbr.rel (0) target = $region65
    $region64: #{actor_critic_forward.1} parent=1 // pred_region
      %130 = dma.done [#allocation12], 2048
    $region65: #{actor_critic_forward.1} parent=1 // pred_fallthru
      _
    // Predicated region
    $region66: #{actor_critic_forward.1} parent=1 // pred_check
      _
    $region67: #{actor_critic_forward.1} parent=1 // pred_check_branch
      %132 = sbr.rel (0) target = $region69
    $region68: #{actor_critic_forward.1} parent=1 // pred_region
      %133 = dma.done [#allocation15], 16
    $region69: #{actor_critic_forward.1} parent=1 // pred_fallthru
      _
    %v134 = vld [vmem:[%s0] sm:$0xff]
    %v135 = vld [vmem:[%s0 + $0x8] sm:$0xff]
    %v136 = vld [vmem:[#allocation2] sm:$0xff]
    %v137 = vld [vmem:[#allocation2 + $0x8] sm:$0xff]
    %v138 = vld [vmem:[#allocation2 + $0x10] sm:$0xff]
    %v139 = vld [vmem:[#allocation2 + $0x18] sm:$0xff]
    %v140 = vld [vmem:[#allocation2 + $0x20] sm:$0xff]
    %v141 = vld [vmem:[#allocation2 + $0x28] sm:$0xff]
    %v142 = vld [vmem:[#allocation2 + $0x30] sm:$0xff]
    %v143 = vld [vmem:[#allocation2 + $0x38] sm:$0xff]
    %v144 = vld [vmem:[#allocation2 + $0x40] sm:$0xff]
    %v145 = vld [vmem:[#allocation2 + $0x48] sm:$0xff]
    %v146 = vld [vmem:[#allocation2 + $0x50] sm:$0xff]
    %v147 = vld [vmem:[#allocation2 + $0x58] sm:$0xff]
    %v148 = vld [vmem:[#allocation2 + $0x60] sm:$0xff]
    %v149 = vld [vmem:[#allocation2 + $0x68] sm:$0xff]
    %v150 = vld [vmem:[#allocation2 + $0x70] sm:$0xff]
    %v151 = vld [vmem:[#allocation2 + $0x78] sm:$0xff]
    %v152 = vld [vmem:[#allocation2 + $0x80] sm:$0xff]
    %v153 = vld [vmem:[#allocation2 + $0x88] sm:$0xff]
    %v154 = vld [vmem:[#allocation2 + $0x90] sm:$0xff]
    %v155 = vld [vmem:[#allocation2 + $0x98] sm:$0xff]
    %v156 = vld [vmem:[#allocation2 + $0xa0] sm:$0xff]
    %v157 = vld [vmem:[#allocation2 + $0xa8] sm:$0xff]
    %v158 = vld [vmem:[#allocation2 + $0xb0] sm:$0xff]
    %v159 = vld [vmem:[#allocation2 + $0xb8] sm:$0xff]
    %v160 = vld [vmem:[#allocation2 + $0xc0] sm:$0xff]
    %v161 = vld [vmem:[#allocation2 + $0xc8] sm:$0xff]
    %v162 = vld [vmem:[#allocation2 + $0xd0] sm:$0xff]
    %v163 = vld [vmem:[#allocation2 + $0xd8] sm:$0xff]
    %v164 = vld [vmem:[#allocation2 + $0xe0] sm:$0xff]
    %v165 = vld [vmem:[#allocation2 + $0xe8] sm:$0xff]
    %v166 = vld [vmem:[#allocation2 + $0xf0] sm:$0xff]
    %v167 = vld [vmem:[#allocation2 + $0xf8] sm:$0xff]
    %v168 = vld [vmem:[#allocation2 + $0x100] sm:$0xff]
    %v169 = vld [vmem:[#allocation2 + $0x108] sm:$0xff]
    %v170 = vld [vmem:[#allocation2 + $0x110] sm:$0xff]
    %v171 = vld [vmem:[#allocation2 + $0x118] sm:$0xff]
    %v172 = vld [vmem:[#allocation2 + $0x120] sm:$0xff]
    %v173 = vld [vmem:[#allocation2 + $0x128] sm:$0xff]
    %v174 = vld [vmem:[#allocation2 + $0x130] sm:$0xff]
    %v175 = vld [vmem:[#allocation2 + $0x138] sm:$0xff]
    %v176 = vld [vmem:[#allocation2 + $0x140] sm:$0xff]
    %v177 = vld [vmem:[#allocation2 + $0x148] sm:$0xff]
    %v178 = vld [vmem:[#allocation2 + $0x150] sm:$0xff]
    %v179 = vld [vmem:[#allocation2 + $0x158] sm:$0xff]
    %v180 = vld [vmem:[#allocation2 + $0x160] sm:$0xff]
    %v181 = vld [vmem:[#allocation2 + $0x168] sm:$0xff]
    %v182 = vld [vmem:[#allocation2 + $0x170] sm:$0xff]
    %v183 = vld [vmem:[#allocation2 + $0x178] sm:$0xff]
    %v184 = vld [vmem:[#allocation2 + $0x180] sm:$0xff]
    %v185 = vld [vmem:[#allocation2 + $0x188] sm:$0xff]
    %v186 = vld [vmem:[#allocation2 + $0x190] sm:$0xff]
    %v187 = vld [vmem:[#allocation2 + $0x198] sm:$0xff]
    %v188 = vld [vmem:[#allocation2 + $0x1a0] sm:$0xff]
    %v189 = vld [vmem:[#allocation2 + $0x1a8] sm:$0xff]
    %v190 = vld [vmem:[#allocation2 + $0x1b0] sm:$0xff]
    %v191 = vld [vmem:[#allocation2 + $0x1b8] sm:$0xff]
    %v192 = vld [vmem:[#allocation2 + $0x1c0] sm:$0xff]
    %v193 = vld [vmem:[#allocation2 + $0x1c8] sm:$0xff]
    %v194 = vld [vmem:[#allocation2 + $0x1d0] sm:$0xff]
    %v195 = vld [vmem:[#allocation2 + $0x1d8] sm:$0xff]
    %v196 = vld [vmem:[#allocation2 + $0x1e0] sm:$0xff]
    %v197 = vld [vmem:[#allocation2 + $0x1e8] sm:$0xff]
    %v198 = vld [vmem:[#allocation2 + $0x1f0] sm:$0xff]
    %v199 = vld [vmem:[#allocation2 + $0x1f8] sm:$0xff]
    %v200 = vld [vmem:[#allocation2 + $0x200] sm:$0xff]
    %v201 = vld [vmem:[#allocation2 + $0x208] sm:$0xff]
    %v202 = vld [vmem:[#allocation2 + $0x210] sm:$0xff]
    %v203 = vld [vmem:[#allocation2 + $0x218] sm:$0xff]
    %v204 = vld [vmem:[#allocation2 + $0x220] sm:$0xff]
    %v205 = vld [vmem:[#allocation2 + $0x228] sm:$0xff]
    %v206 = vld [vmem:[#allocation2 + $0x230] sm:$0xff]
    %v207 = vld [vmem:[#allocation2 + $0x238] sm:$0xff]
    %v208 = vld [vmem:[#allocation2 + $0x240] sm:$0xff]
    %v209 = vld [vmem:[#allocation2 + $0x248] sm:$0xff]
    %v210 = vld [vmem:[#allocation2 + $0x250] sm:$0xff]
    %v211 = vld [vmem:[#allocation2 + $0x258] sm:$0xff]
    %v212 = vld [vmem:[#allocation2 + $0x260] sm:$0xff]
    %v213 = vld [vmem:[#allocation2 + $0x268] sm:$0xff]
    %v214 = vld [vmem:[#allocation2 + $0x270] sm:$0xff]
    %v215 = vld [vmem:[#allocation2 + $0x278] sm:$0xff]
    %v216 = vld [vmem:[#allocation2 + $0x280] sm:$0xff]
    %v217 = vld [vmem:[#allocation2 + $0x288] sm:$0xff]
    %v218 = vld [vmem:[#allocation2 + $0x290] sm:$0xff]
    %v219 = vld [vmem:[#allocation2 + $0x298] sm:$0xff]
    %v220 = vld [vmem:[#allocation2 + $0x2a0] sm:$0xff]
    %v221 = vld [vmem:[#allocation2 + $0x2a8] sm:$0xff]
    %v222 = vld [vmem:[#allocation2 + $0x2b0] sm:$0xff]
    %v223 = vld [vmem:[#allocation2 + $0x2b8] sm:$0xff]
    %v224 = vld [vmem:[#allocation2 + $0x2c0] sm:$0xff]
    %v225 = vld [vmem:[#allocation2 + $0x2c8] sm:$0xff]
    %v226 = vld [vmem:[#allocation2 + $0x2d0] sm:$0xff]
    %v227 = vld [vmem:[#allocation2 + $0x2d8] sm:$0xff]
    %v228 = vld [vmem:[#allocation2 + $0x2e0] sm:$0xff]
    %v229 = vld [vmem:[#allocation2 + $0x2e8] sm:$0xff]
    %v230 = vld [vmem:[#allocation2 + $0x2f0] sm:$0xff]
    %v231 = vld [vmem:[#allocation2 + $0x2f8] sm:$0xff]
    %v232 = vld [vmem:[#allocation2 + $0x300] sm:$0xff]
    %v233 = vld [vmem:[#allocation2 + $0x308] sm:$0xff]
    %v234 = vld [vmem:[#allocation2 + $0x310] sm:$0xff]
    %v235 = vld [vmem:[#allocation2 + $0x318] sm:$0xff]
    %v236 = vld [vmem:[#allocation2 + $0x320] sm:$0xff]
    %v237 = vld [vmem:[#allocation2 + $0x328] sm:$0xff]
    %v238 = vld [vmem:[#allocation2 + $0x330] sm:$0xff]
    %v239 = vld [vmem:[#allocation2 + $0x338] sm:$0xff]
    %v240 = vld [vmem:[#allocation2 + $0x340] sm:$0xff]
    %v241 = vld [vmem:[#allocation2 + $0x348] sm:$0xff]
    %v242 = vld [vmem:[#allocation2 + $0x350] sm:$0xff]
    %v243 = vld [vmem:[#allocation2 + $0x358] sm:$0xff]
    %v244 = vld [vmem:[#allocation2 + $0x360] sm:$0xff]
    %v245 = vld [vmem:[#allocation2 + $0x368] sm:$0xff]
    %v246 = vld [vmem:[#allocation2 + $0x370] sm:$0xff]
    %v247 = vld [vmem:[#allocation2 + $0x378] sm:$0xff]
    %v248 = vld [vmem:[#allocation2 + $0x380] sm:$0xff]
    %v249 = vld [vmem:[#allocation2 + $0x388] sm:$0xff]
    %v250 = vld [vmem:[#allocation2 + $0x390] sm:$0xff]
    %v251 = vld [vmem:[#allocation2 + $0x398] sm:$0xff]
    %v252 = vld [vmem:[#allocation2 + $0x3a0] sm:$0xff]
    %v253 = vld [vmem:[#allocation2 + $0x3a8] sm:$0xff]
    %v254 = vld [vmem:[#allocation2 + $0x3b0] sm:$0xff]
    %v255 = vld [vmem:[#allocation2 + $0x3b8] sm:$0xff]
    %v256 = vld [vmem:[#allocation2 + $0x3c0] sm:$0xff]
    %v257 = vld [vmem:[#allocation2 + $0x3c8] sm:$0xff]
    %v258 = vld [vmem:[#allocation2 + $0x3d0] sm:$0xff]
    %v259 = vld [vmem:[#allocation2 + $0x3d8] sm:$0xff]
    %v260 = vld [vmem:[#allocation2 + $0x3e0] sm:$0xff]
    %v261 = vld [vmem:[#allocation2 + $0x3e8] sm:$0xff]
    %v262 = vld [vmem:[#allocation2 + $0x3f0] sm:$0xff]
    %v263 = vld [vmem:[#allocation2 + $0x3f8] sm:$0xff]
    %v264 = vld [vmem:[#allocation2 + $0x400] sm:$0xff]
    %v265 = vld [vmem:[#allocation2 + $0x408] sm:$0xff]
    %v266 = vld [vmem:[#allocation2 + $0x410] sm:$0xff]
    %v267 = vld [vmem:[#allocation2 + $0x418] sm:$0xff]
    %v268 = vld [vmem:[#allocation2 + $0x420] sm:$0xff]
    %v269 = vld [vmem:[#allocation2 + $0x428] sm:$0xff]
    %v270 = vld [vmem:[#allocation2 + $0x430] sm:$0xff]
    %v271 = vld [vmem:[#allocation2 + $0x438] sm:$0xff]
    %v272 = vld [vmem:[#allocation2 + $0x440] sm:$0xff]
    %v273 = vld [vmem:[#allocation2 + $0x448] sm:$0xff]
    %v274 = vld [vmem:[#allocation2 + $0x450] sm:$0xff]
    %v275 = vld [vmem:[#allocation2 + $0x458] sm:$0xff]
    %v276 = vld [vmem:[#allocation2 + $0x460] sm:$0xff]
    %v277 = vld [vmem:[#allocation2 + $0x468] sm:$0xff]
    %v278 = vld [vmem:[#allocation2 + $0x470] sm:$0xff]
    %v279 = vld [vmem:[#allocation2 + $0x478] sm:$0xff]
    %v280 = vld [vmem:[#allocation2 + $0x480] sm:$0xff]
    %v281 = vld [vmem:[#allocation2 + $0x488] sm:$0xff]
    %v282 = vld [vmem:[#allocation2 + $0x490] sm:$0xff]
    %v283 = vld [vmem:[#allocation2 + $0x498] sm:$0xff]
    %v284 = vld [vmem:[#allocation2 + $0x4a0] sm:$0xff]
    %v285 = vld [vmem:[#allocation2 + $0x4a8] sm:$0xff]
    %v286 = vld [vmem:[#allocation2 + $0x4b0] sm:$0xff]
    %v287 = vld [vmem:[#allocation2 + $0x4b8] sm:$0xff]
    %v288 = vld [vmem:[#allocation2 + $0x4c0] sm:$0xff]
    %v289 = vld [vmem:[#allocation2 + $0x4c8] sm:$0xff]
    %v290 = vld [vmem:[#allocation2 + $0x4d0] sm:$0xff]
    %v291 = vld [vmem:[#allocation2 + $0x4d8] sm:$0xff]
    %v292 = vld [vmem:[#allocation2 + $0x4e0] sm:$0xff]
    %v293 = vld [vmem:[#allocation2 + $0x4e8] sm:$0xff]
    %v294 = vld [vmem:[#allocation2 + $0x4f0] sm:$0xff]
    %v295 = vld [vmem:[#allocation2 + $0x4f8] sm:$0xff]
    %v296 = vld [vmem:[#allocation2 + $0x500] sm:$0xff]
    %v297 = vld [vmem:[#allocation2 + $0x508] sm:$0xff]
    %v298 = vld [vmem:[#allocation2 + $0x510] sm:$0xff]
    %v299 = vld [vmem:[#allocation2 + $0x518] sm:$0xff]
    %v300 = vld [vmem:[#allocation2 + $0x520] sm:$0xff]
    %v301 = vld [vmem:[#allocation2 + $0x528] sm:$0xff]
    %v302 = vld [vmem:[#allocation2 + $0x530] sm:$0xff]
    %v303 = vld [vmem:[#allocation2 + $0x538] sm:$0xff]
    %v304 = vld [vmem:[#allocation2 + $0x540] sm:$0xff]
    %v305 = vld [vmem:[#allocation2 + $0x548] sm:$0xff]
    %v306 = vld [vmem:[#allocation2 + $0x550] sm:$0xff]
    %v307 = vld [vmem:[#allocation2 + $0x558] sm:$0xff]
    %v308 = vld [vmem:[#allocation2 + $0x560] sm:$0xff]
    %v309 = vld [vmem:[#allocation2 + $0x568] sm:$0xff]
    %v310 = vld [vmem:[#allocation2 + $0x570] sm:$0xff]
    %v311 = vld [vmem:[#allocation2 + $0x578] sm:$0xff]
    %v312 = vld [vmem:[#allocation2 + $0x580] sm:$0xff]
    %v313 = vld [vmem:[#allocation2 + $0x588] sm:$0xff]
    %v314 = vld [vmem:[#allocation2 + $0x590] sm:$0xff]
    %v315 = vld [vmem:[#allocation2 + $0x598] sm:$0xff]
    %v316 = vld [vmem:[#allocation2 + $0x5a0] sm:$0xff]
    %v317 = vld [vmem:[#allocation2 + $0x5a8] sm:$0xff]
    %v318 = vld [vmem:[#allocation2 + $0x5b0] sm:$0xff]
    %v319 = vld [vmem:[#allocation2 + $0x5b8] sm:$0xff]
    %v320 = vld [vmem:[#allocation2 + $0x5c0] sm:$0xff]
    %v321 = vld [vmem:[#allocation2 + $0x5c8] sm:$0xff]
    %v322 = vld [vmem:[#allocation2 + $0x5d0] sm:$0xff]
    %v323 = vld [vmem:[#allocation2 + $0x5d8] sm:$0xff]
    %v324 = vld [vmem:[#allocation2 + $0x5e0] sm:$0xff]
    %v325 = vld [vmem:[#allocation2 + $0x5e8] sm:$0xff]
    %v326 = vld [vmem:[#allocation2 + $0x5f0] sm:$0xff]
    %v327 = vld [vmem:[#allocation2 + $0x5f8] sm:$0xff]
    %v328 = vld [vmem:[#allocation2 + $0x600] sm:$0xff]
    %v329 = vld [vmem:[#allocation2 + $0x608] sm:$0xff]
    %v330 = vld [vmem:[#allocation2 + $0x610] sm:$0xff]
    %v331 = vld [vmem:[#allocation2 + $0x618] sm:$0xff]
    %v332 = vld [vmem:[#allocation2 + $0x620] sm:$0xff]
    %v333 = vld [vmem:[#allocation2 + $0x628] sm:$0xff]
    %v334 = vld [vmem:[#allocation2 + $0x630] sm:$0xff]
    %v335 = vld [vmem:[#allocation2 + $0x638] sm:$0xff]
    %v336 = vld [vmem:[#allocation2 + $0x640] sm:$0xff]
    %v337 = vld [vmem:[#allocation2 + $0x648] sm:$0xff]
    %v338 = vld [vmem:[#allocation2 + $0x650] sm:$0xff]
    %v339 = vld [vmem:[#allocation2 + $0x658] sm:$0xff]
    %v340 = vld [vmem:[#allocation2 + $0x660] sm:$0xff]
    %v341 = vld [vmem:[#allocation2 + $0x668] sm:$0xff]
    %v342 = vld [vmem:[#allocation2 + $0x670] sm:$0xff]
    %v343 = vld [vmem:[#allocation2 + $0x678] sm:$0xff]
    %v344 = vld [vmem:[#allocation2 + $0x680] sm:$0xff]
    %v345 = vld [vmem:[#allocation2 + $0x688] sm:$0xff]
    %v346 = vld [vmem:[#allocation2 + $0x690] sm:$0xff]
    %v347 = vld [vmem:[#allocation2 + $0x698] sm:$0xff]
    %v348 = vld [vmem:[#allocation2 + $0x6a0] sm:$0xff]
    %v349 = vld [vmem:[#allocation2 + $0x6a8] sm:$0xff]
    %v350 = vld [vmem:[#allocation2 + $0x6b0] sm:$0xff]
    %v351 = vld [vmem:[#allocation2 + $0x6b8] sm:$0xff]
    %v352 = vld [vmem:[#allocation2 + $0x6c0] sm:$0xff]
    %v353 = vld [vmem:[#allocation2 + $0x6c8] sm:$0xff]
    %v354 = vld [vmem:[#allocation2 + $0x6d0] sm:$0xff]
    %v355 = vld [vmem:[#allocation2 + $0x6d8] sm:$0xff]
    %v356 = vld [vmem:[#allocation2 + $0x6e0] sm:$0xff]
    %v357 = vld [vmem:[#allocation2 + $0x6e8] sm:$0xff]
    %v358 = vld [vmem:[#allocation2 + $0x6f0] sm:$0xff]
    %v359 = vld [vmem:[#allocation2 + $0x6f8] sm:$0xff]
    %v360 = vld [vmem:[#allocation2 + $0x700] sm:$0xff]
    %v361 = vld [vmem:[#allocation2 + $0x708] sm:$0xff]
    %v362 = vld [vmem:[#allocation2 + $0x710] sm:$0xff]
    %v363 = vld [vmem:[#allocation2 + $0x718] sm:$0xff]
    %v364 = vld [vmem:[#allocation2 + $0x720] sm:$0xff]
    %v365 = vld [vmem:[#allocation2 + $0x728] sm:$0xff]
    %v366 = vld [vmem:[#allocation2 + $0x730] sm:$0xff]
    %v367 = vld [vmem:[#allocation2 + $0x738] sm:$0xff]
    %v368 = vld [vmem:[#allocation2 + $0x740] sm:$0xff]
    %v369 = vld [vmem:[#allocation2 + $0x748] sm:$0xff]
    %v370 = vld [vmem:[#allocation2 + $0x750] sm:$0xff]
    %v371 = vld [vmem:[#allocation2 + $0x758] sm:$0xff]
    %v372 = vld [vmem:[#allocation2 + $0x760] sm:$0xff]
    %v373 = vld [vmem:[#allocation2 + $0x768] sm:$0xff]
    %v374 = vld [vmem:[#allocation2 + $0x770] sm:$0xff]
    %v375 = vld [vmem:[#allocation2 + $0x778] sm:$0xff]
    %v376 = vld [vmem:[#allocation2 + $0x780] sm:$0xff]
    %v377 = vld [vmem:[#allocation2 + $0x788] sm:$0xff]
    %v378 = vld [vmem:[#allocation2 + $0x790] sm:$0xff]
    %v379 = vld [vmem:[#allocation2 + $0x798] sm:$0xff]
    %v380 = vld [vmem:[#allocation2 + $0x7a0] sm:$0xff]
    %v381 = vld [vmem:[#allocation2 + $0x7a8] sm:$0xff]
    %v382 = vld [vmem:[#allocation2 + $0x7b0] sm:$0xff]
    %v383 = vld [vmem:[#allocation2 + $0x7b8] sm:$0xff]
    %v384 = vld [vmem:[#allocation2 + $0x7c0] sm:$0xff]
    %v385 = vld [vmem:[#allocation2 + $0x7c8] sm:$0xff]
    %v386 = vld [vmem:[#allocation2 + $0x7d0] sm:$0xff]
    %v387 = vld [vmem:[#allocation2 + $0x7d8] sm:$0xff]
    %v388 = vld [vmem:[#allocation2 + $0x7e0] sm:$0xff]
    %v389 = vld [vmem:[#allocation2 + $0x7e8] sm:$0xff]
    %v390 = vld [vmem:[#allocation2 + $0x7f0] sm:$0xff]
    %v391 = vld [vmem:[#allocation2 + $0x7f8] sm:$0xff]
    %v392 = vld [vmem:[#allocation2 + $0x800] sm:$0xff]
    %v393 = vld [vmem:[#allocation2 + $0x808] sm:$0xff]
    %v394 = vld [vmem:[#allocation2 + $0x810] sm:$0xff]
    %v395 = vld [vmem:[#allocation2 + $0x818] sm:$0xff]
    %v396 = vld [vmem:[#allocation2 + $0x820] sm:$0xff]
    %v397 = vld [vmem:[#allocation2 + $0x828] sm:$0xff]
    %v398 = vld [vmem:[#allocation2 + $0x830] sm:$0xff]
    %v399 = vld [vmem:[#allocation2 + $0x838] sm:$0xff]
    %v400 = vld [vmem:[#allocation2 + $0x840] sm:$0xff]
    %v401 = vld [vmem:[#allocation2 + $0x848] sm:$0xff]
    %v402 = vld [vmem:[#allocation2 + $0x850] sm:$0xff]
    %v403 = vld [vmem:[#allocation2 + $0x858] sm:$0xff]
    %v404 = vld [vmem:[#allocation2 + $0x860] sm:$0xff]
    %v405 = vld [vmem:[#allocation2 + $0x868] sm:$0xff]
    %v406 = vld [vmem:[#allocation2 + $0x870] sm:$0xff]
    %v407 = vld [vmem:[#allocation2 + $0x878] sm:$0xff]
    %v408 = vld [vmem:[#allocation2 + $0x880] sm:$0xff]
    %v409 = vld [vmem:[#allocation2 + $0x888] sm:$0xff]
    %v410 = vld [vmem:[#allocation2 + $0x890] sm:$0xff]
    %v411 = vld [vmem:[#allocation2 + $0x898] sm:$0xff]
    %v412 = vld [vmem:[#allocation2 + $0x8a0] sm:$0xff]
    %v413 = vld [vmem:[#allocation2 + $0x8a8] sm:$0xff]
    %v414 = vld [vmem:[#allocation2 + $0x8b0] sm:$0xff]
    %v415 = vld [vmem:[#allocation2 + $0x8b8] sm:$0xff]
    %v416 = vld [vmem:[#allocation2 + $0x8c0] sm:$0xff]
    %v417 = vld [vmem:[#allocation2 + $0x8c8] sm:$0xff]
    %v418 = vld [vmem:[#allocation2 + $0x8d0] sm:$0xff]
    %v419 = vld [vmem:[#allocation2 + $0x8d8] sm:$0xff]
    %v420 = vld [vmem:[#allocation2 + $0x8e0] sm:$0xff]
    %v421 = vld [vmem:[#allocation2 + $0x8e8] sm:$0xff]
    %v422 = vld [vmem:[#allocation2 + $0x8f0] sm:$0xff]
    %v423 = vld [vmem:[#allocation2 + $0x8f8] sm:$0xff]
    %v424 = vld [vmem:[#allocation2 + $0x900] sm:$0xff]
    %v425 = vld [vmem:[#allocation2 + $0x908] sm:$0xff]
    %v426 = vld [vmem:[#allocation2 + $0x910] sm:$0xff]
    %v427 = vld [vmem:[#allocation2 + $0x918] sm:$0xff]
    %v428 = vld [vmem:[#allocation2 + $0x920] sm:$0xff]
    %v429 = vld [vmem:[#allocation2 + $0x928] sm:$0xff]
    %v430 = vld [vmem:[#allocation2 + $0x930] sm:$0xff]
    %v431 = vld [vmem:[#allocation2 + $0x938] sm:$0xff]
    %v432 = vld [vmem:[#allocation2 + $0x940] sm:$0xff]
    %v433 = vld [vmem:[#allocation2 + $0x948] sm:$0xff]
    %v434 = vld [vmem:[#allocation2 + $0x950] sm:$0xff]
    %v435 = vld [vmem:[#allocation2 + $0x958] sm:$0xff]
    %v436 = vld [vmem:[#allocation2 + $0x960] sm:$0xff]
    %v437 = vld [vmem:[#allocation2 + $0x968] sm:$0xff]
    %v438 = vld [vmem:[#allocation2 + $0x970] sm:$0xff]
    %v439 = vld [vmem:[#allocation2 + $0x978] sm:$0xff]
    %v440 = vld [vmem:[#allocation2 + $0x980] sm:$0xff]
    %v441 = vld [vmem:[#allocation2 + $0x988] sm:$0xff]
    %v442 = vld [vmem:[#allocation2 + $0x990] sm:$0xff]
    %v443 = vld [vmem:[#allocation2 + $0x998] sm:$0xff]
    %v444 = vld [vmem:[#allocation2 + $0x9a0] sm:$0xff]
    %v445 = vld [vmem:[#allocation2 + $0x9a8] sm:$0xff]
    %v446 = vld [vmem:[#allocation2 + $0x9b0] sm:$0xff]
    %v447 = vld [vmem:[#allocation2 + $0x9b8] sm:$0xff]
    %v448 = vld [vmem:[#allocation2 + $0x9c0] sm:$0xff]
    %v449 = vld [vmem:[#allocation2 + $0x9c8] sm:$0xff]
    %v450 = vld [vmem:[#allocation2 + $0x9d0] sm:$0xff]
    %v451 = vld [vmem:[#allocation2 + $0x9d8] sm:$0xff]
    %v452 = vld [vmem:[#allocation2 + $0x9e0] sm:$0xff]
    %v453 = vld [vmem:[#allocation2 + $0x9e8] sm:$0xff]
    %v454 = vld [vmem:[#allocation2 + $0x9f0] sm:$0xff]
    %v455 = vld [vmem:[#allocation2 + $0x9f8] sm:$0xff]
    %v456 = vld [vmem:[#allocation2 + $0xa00] sm:$0xff]
    %v457 = vld [vmem:[#allocation2 + $0xa08] sm:$0xff]
    %v458 = vld [vmem:[#allocation2 + $0xa10] sm:$0xff]
    %v459 = vld [vmem:[#allocation2 + $0xa18] sm:$0xff]
    %v460 = vld [vmem:[#allocation2 + $0xa20] sm:$0xff]
    %v461 = vld [vmem:[#allocation2 + $0xa28] sm:$0xff]
    %v462 = vld [vmem:[#allocation2 + $0xa30] sm:$0xff]
    %v463 = vld [vmem:[#allocation2 + $0xa38] sm:$0xff]
    %v464 = vld [vmem:[#allocation2 + $0xa40] sm:$0xff]
    %v465 = vld [vmem:[#allocation2 + $0xa48] sm:$0xff]
    %v466 = vld [vmem:[#allocation2 + $0xa50] sm:$0xff]
    %v467 = vld [vmem:[#allocation2 + $0xa58] sm:$0xff]
    %v468 = vld [vmem:[#allocation2 + $0xa60] sm:$0xff]
    %v469 = vld [vmem:[#allocation2 + $0xa68] sm:$0xff]
    %v470 = vld [vmem:[#allocation2 + $0xa70] sm:$0xff]
    %v471 = vld [vmem:[#allocation2 + $0xa78] sm:$0xff]
    %v472 = vld [vmem:[#allocation2 + $0xa80] sm:$0xff]
    %v473 = vld [vmem:[#allocation2 + $0xa88] sm:$0xff]
    %v474 = vld [vmem:[#allocation2 + $0xa90] sm:$0xff]
    %v475 = vld [vmem:[#allocation2 + $0xa98] sm:$0xff]
    %v476 = vld [vmem:[#allocation2 + $0xaa0] sm:$0xff]
    %v477 = vld [vmem:[#allocation2 + $0xaa8] sm:$0xff]
    %v478 = vld [vmem:[#allocation2 + $0xab0] sm:$0xff]
    %v479 = vld [vmem:[#allocation2 + $0xab8] sm:$0xff]
    %v480 = vld [vmem:[#allocation2 + $0xac0] sm:$0xff]
    %v481 = vld [vmem:[#allocation2 + $0xac8] sm:$0xff]
    %v482 = vld [vmem:[#allocation2 + $0xad0] sm:$0xff]
    %v483 = vld [vmem:[#allocation2 + $0xad8] sm:$0xff]
    %v484 = vld [vmem:[#allocation2 + $0xae0] sm:$0xff]
    %v485 = vld [vmem:[#allocation2 + $0xae8] sm:$0xff]
    %v486 = vld [vmem:[#allocation2 + $0xaf0] sm:$0xff]
    %v487 = vld [vmem:[#allocation2 + $0xaf8] sm:$0xff]
    %v488 = vld [vmem:[#allocation2 + $0xb00] sm:$0xff]
    %v489 = vld [vmem:[#allocation2 + $0xb08] sm:$0xff]
    %v490 = vld [vmem:[#allocation2 + $0xb10] sm:$0xff]
    %v491 = vld [vmem:[#allocation2 + $0xb18] sm:$0xff]
    %v492 = vld [vmem:[#allocation2 + $0xb20] sm:$0xff]
    %v493 = vld [vmem:[#allocation2 + $0xb28] sm:$0xff]
    %v494 = vld [vmem:[#allocation2 + $0xb30] sm:$0xff]
    %v495 = vld [vmem:[#allocation2 + $0xb38] sm:$0xff]
    %v496 = vld [vmem:[#allocation2 + $0xb40] sm:$0xff]
    %v497 = vld [vmem:[#allocation2 + $0xb48] sm:$0xff]
    %v498 = vld [vmem:[#allocation2 + $0xb50] sm:$0xff]
    %v499 = vld [vmem:[#allocation2 + $0xb58] sm:$0xff]
    %v500 = vld [vmem:[#allocation2 + $0xb60] sm:$0xff]
    %v501 = vld [vmem:[#allocation2 + $0xb68] sm:$0xff]
    %v502 = vld [vmem:[#allocation2 + $0xb70] sm:$0xff]
    %v503 = vld [vmem:[#allocation2 + $0xb78] sm:$0xff]
    %v504 = vld [vmem:[#allocation2 + $0xb80] sm:$0xff]
    %v505 = vld [vmem:[#allocation2 + $0xb88] sm:$0xff]
    %v506 = vld [vmem:[#allocation2 + $0xb90] sm:$0xff]
    %v507 = vld [vmem:[#allocation2 + $0xb98] sm:$0xff]
    %v508 = vld [vmem:[#allocation2 + $0xba0] sm:$0xff]
    %v509 = vld [vmem:[#allocation2 + $0xba8] sm:$0xff]
    %v510 = vld [vmem:[#allocation2 + $0xbb0] sm:$0xff]
    %v511 = vld [vmem:[#allocation2 + $0xbb8] sm:$0xff]
    %v512 = vld [vmem:[#allocation2 + $0xbc0] sm:$0xff]
    %v513 = vld [vmem:[#allocation2 + $0xbc8] sm:$0xff]
    %v514 = vld [vmem:[#allocation2 + $0xbd0] sm:$0xff]
    %v515 = vld [vmem:[#allocation2 + $0xbd8] sm:$0xff]
    %v516 = vld [vmem:[#allocation2 + $0xbe0] sm:$0xff]
    %v517 = vld [vmem:[#allocation2 + $0xbe8] sm:$0xff]
    %v518 = vld [vmem:[#allocation2 + $0xbf0] sm:$0xff]
    %v519 = vld [vmem:[#allocation2 + $0xbf8] sm:$0xff]
    %v520 = vld [vmem:[#allocation2 + $0xc00] sm:$0xff]
    %v521 = vld [vmem:[#allocation2 + $0xc08] sm:$0xff]
    %v522 = vld [vmem:[#allocation2 + $0xc10] sm:$0xff]
    %v523 = vld [vmem:[#allocation2 + $0xc18] sm:$0xff]
    %v524 = vld [vmem:[#allocation2 + $0xc20] sm:$0xff]
    %v525 = vld [vmem:[#allocation2 + $0xc28] sm:$0xff]
    %v526 = vld [vmem:[#allocation2 + $0xc30] sm:$0xff]
    %v527 = vld [vmem:[#allocation2 + $0xc38] sm:$0xff]
    %v528 = vld [vmem:[#allocation2 + $0xc40] sm:$0xff]
    %v529 = vld [vmem:[#allocation2 + $0xc48] sm:$0xff]
    %v530 = vld [vmem:[#allocation2 + $0xc50] sm:$0xff]
    %v531 = vld [vmem:[#allocation2 + $0xc58] sm:$0xff]
    %v532 = vld [vmem:[#allocation2 + $0xc60] sm:$0xff]
    %v533 = vld [vmem:[#allocation2 + $0xc68] sm:$0xff]
    %v534 = vld [vmem:[#allocation2 + $0xc70] sm:$0xff]
    %v535 = vld [vmem:[#allocation2 + $0xc78] sm:$0xff]
    %v536 = vld [vmem:[#allocation2 + $0xc80] sm:$0xff]
    %v537 = vld [vmem:[#allocation2 + $0xc88] sm:$0xff]
    %v538 = vld [vmem:[#allocation2 + $0xc90] sm:$0xff]
    %v539 = vld [vmem:[#allocation2 + $0xc98] sm:$0xff]
    %v540 = vld [vmem:[#allocation2 + $0xca0] sm:$0xff]
    %v541 = vld [vmem:[#allocation2 + $0xca8] sm:$0xff]
    %v542 = vld [vmem:[#allocation2 + $0xcb0] sm:$0xff]
    %v543 = vld [vmem:[#allocation2 + $0xcb8] sm:$0xff]
    %v544 = vld [vmem:[#allocation2 + $0xcc0] sm:$0xff]
    %v545 = vld [vmem:[#allocation2 + $0xcc8] sm:$0xff]
    %v546 = vld [vmem:[#allocation2 + $0xcd0] sm:$0xff]
    %v547 = vld [vmem:[#allocation2 + $0xcd8] sm:$0xff]
    %v548 = vld [vmem:[#allocation2 + $0xce0] sm:$0xff]
    %v549 = vld [vmem:[#allocation2 + $0xce8] sm:$0xff]
    %v550 = vld [vmem:[#allocation2 + $0xcf0] sm:$0xff]
    %v551 = vld [vmem:[#allocation2 + $0xcf8] sm:$0xff]
    %v552 = vld [vmem:[#allocation2 + $0xd00] sm:$0xff]
    %v553 = vld [vmem:[#allocation2 + $0xd08] sm:$0xff]
    %v554 = vld [vmem:[#allocation2 + $0xd10] sm:$0xff]
    %v555 = vld [vmem:[#allocation2 + $0xd18] sm:$0xff]
    %v556 = vld [vmem:[#allocation2 + $0xd20] sm:$0xff]
    %v557 = vld [vmem:[#allocation2 + $0xd28] sm:$0xff]
    %v558 = vld [vmem:[#allocation2 + $0xd30] sm:$0xff]
    %v559 = vld [vmem:[#allocation2 + $0xd38] sm:$0xff]
    %v560 = vld [vmem:[#allocation2 + $0xd40] sm:$0xff]
    %v561 = vld [vmem:[#allocation2 + $0xd48] sm:$0xff]
    %v562 = vld [vmem:[#allocation2 + $0xd50] sm:$0xff]
    %v563 = vld [vmem:[#allocation2 + $0xd58] sm:$0xff]
    %v564 = vld [vmem:[#allocation2 + $0xd60] sm:$0xff]
    %v565 = vld [vmem:[#allocation2 + $0xd68] sm:$0xff]
    %v566 = vld [vmem:[#allocation2 + $0xd70] sm:$0xff]
    %v567 = vld [vmem:[#allocation2 + $0xd78] sm:$0xff]
    %v568 = vld [vmem:[#allocation2 + $0xd80] sm:$0xff]
    %v569 = vld [vmem:[#allocation2 + $0xd88] sm:$0xff]
    %v570 = vld [vmem:[#allocation2 + $0xd90] sm:$0xff]
    %v571 = vld [vmem:[#allocation2 + $0xd98] sm:$0xff]
    %v572 = vld [vmem:[#allocation2 + $0xda0] sm:$0xff]
    %v573 = vld [vmem:[#allocation2 + $0xda8] sm:$0xff]
    %v574 = vld [vmem:[#allocation2 + $0xdb0] sm:$0xff]
    %v575 = vld [vmem:[#allocation2 + $0xdb8] sm:$0xff]
    %v576 = vld [vmem:[#allocation2 + $0xdc0] sm:$0xff]
    %v577 = vld [vmem:[#allocation2 + $0xdc8] sm:$0xff]
    %v578 = vld [vmem:[#allocation2 + $0xdd0] sm:$0xff]
    %v579 = vld [vmem:[#allocation2 + $0xdd8] sm:$0xff]
    %v580 = vld [vmem:[#allocation2 + $0xde0] sm:$0xff]
    %v581 = vld [vmem:[#allocation2 + $0xde8] sm:$0xff]
    %v582 = vld [vmem:[#allocation2 + $0xdf0] sm:$0xff]
    %v583 = vld [vmem:[#allocation2 + $0xdf8] sm:$0xff]
    %v584 = vld [vmem:[#allocation2 + $0xe00] sm:$0xff]
    %v585 = vld [vmem:[#allocation2 + $0xe08] sm:$0xff]
    %v586 = vld [vmem:[#allocation2 + $0xe10] sm:$0xff]
    %v587 = vld [vmem:[#allocation2 + $0xe18] sm:$0xff]
    %v588 = vld [vmem:[#allocation2 + $0xe20] sm:$0xff]
    %v589 = vld [vmem:[#allocation2 + $0xe28] sm:$0xff]
    %v590 = vld [vmem:[#allocation2 + $0xe30] sm:$0xff]
    %v591 = vld [vmem:[#allocation2 + $0xe38] sm:$0xff]
    %v592 = vld [vmem:[#allocation2 + $0xe40] sm:$0xff]
    %v593 = vld [vmem:[#allocation2 + $0xe48] sm:$0xff]
    %v594 = vld [vmem:[#allocation2 + $0xe50] sm:$0xff]
    %v595 = vld [vmem:[#allocation2 + $0xe58] sm:$0xff]
    %v596 = vld [vmem:[#allocation2 + $0xe60] sm:$0xff]
    %v597 = vld [vmem:[#allocation2 + $0xe68] sm:$0xff]
    %v598 = vld [vmem:[#allocation2 + $0xe70] sm:$0xff]
    %v599 = vld [vmem:[#allocation2 + $0xe78] sm:$0xff]
    %v600 = vld [vmem:[#allocation2 + $0xe80] sm:$0xff]
    %v601 = vld [vmem:[#allocation2 + $0xe88] sm:$0xff]
    %v602 = vld [vmem:[#allocation2 + $0xe90] sm:$0xff]
    %v603 = vld [vmem:[#allocation2 + $0xe98] sm:$0xff]
    %v604 = vld [vmem:[#allocation2 + $0xea0] sm:$0xff]
    %v605 = vld [vmem:[#allocation2 + $0xea8] sm:$0xff]
    %v606 = vld [vmem:[#allocation2 + $0xeb0] sm:$0xff]
    %v607 = vld [vmem:[#allocation2 + $0xeb8] sm:$0xff]
    %v608 = vld [vmem:[#allocation2 + $0xec0] sm:$0xff]
    %v609 = vld [vmem:[#allocation2 + $0xec8] sm:$0xff]
    %v610 = vld [vmem:[#allocation2 + $0xed0] sm:$0xff]
    %v611 = vld [vmem:[#allocation2 + $0xed8] sm:$0xff]
    %v612 = vld [vmem:[#allocation2 + $0xee0] sm:$0xff]
    %v613 = vld [vmem:[#allocation2 + $0xee8] sm:$0xff]
    %v614 = vld [vmem:[#allocation2 + $0xef0] sm:$0xff]
    %v615 = vld [vmem:[#allocation2 + $0xef8] sm:$0xff]
    %v616 = vld [vmem:[#allocation2 + $0xf00] sm:$0xff]
    %v617 = vld [vmem:[#allocation2 + $0xf08] sm:$0xff]
    %v618 = vld [vmem:[#allocation2 + $0xf10] sm:$0xff]
    %v619 = vld [vmem:[#allocation2 + $0xf18] sm:$0xff]
    %v620 = vld [vmem:[#allocation2 + $0xf20] sm:$0xff]
    %v621 = vld [vmem:[#allocation2 + $0xf28] sm:$0xff]
    %v622 = vld [vmem:[#allocation2 + $0xf30] sm:$0xff]
    %v623 = vld [vmem:[#allocation2 + $0xf38] sm:$0xff]
    %v624 = vld [vmem:[#allocation2 + $0xf40] sm:$0xff]
    %v625 = vld [vmem:[#allocation2 + $0xf48] sm:$0xff]
    %v626 = vld [vmem:[#allocation2 + $0xf50] sm:$0xff]
    %v627 = vld [vmem:[#allocation2 + $0xf58] sm:$0xff]
    %v628 = vld [vmem:[#allocation2 + $0xf60] sm:$0xff]
    %v629 = vld [vmem:[#allocation2 + $0xf68] sm:$0xff]
    %v630 = vld [vmem:[#allocation2 + $0xf70] sm:$0xff]
    %v631 = vld [vmem:[#allocation2 + $0xf78] sm:$0xff]
    %v632 = vld [vmem:[#allocation2 + $0xf80] sm:$0xff]
    %v633 = vld [vmem:[#allocation2 + $0xf88] sm:$0xff]
    %v634 = vld [vmem:[#allocation2 + $0xf90] sm:$0xff]
    %v635 = vld [vmem:[#allocation2 + $0xf98] sm:$0xff]
    %v636 = vld [vmem:[#allocation2 + $0xfa0] sm:$0xff]
    %v637 = vld [vmem:[#allocation2 + $0xfa8] sm:$0xff]
    %v638 = vld [vmem:[#allocation2 + $0xfb0] sm:$0xff]
    %v639 = vld [vmem:[#allocation2 + $0xfb8] sm:$0xff]
    %v640 = vld [vmem:[#allocation2 + $0xfc0] sm:$0xff]
    %v641 = vld [vmem:[#allocation2 + $0xfc8] sm:$0xff]
    %v642 = vld [vmem:[#allocation2 + $0xfd0] sm:$0xff]
    %v643 = vld [vmem:[#allocation2 + $0xfd8] sm:$0xff]
    %v644 = vld [vmem:[#allocation2 + $0xfe0] sm:$0xff]
    %v645 = vld [vmem:[#allocation2 + $0xfe8] sm:$0xff]
    %v646 = vld [vmem:[#allocation2 + $0xff0] sm:$0xff]
    %v647 = vld [vmem:[#allocation2 + $0xff8] sm:$0xff]
    %v648 = vld [vmem:[#allocation2 + $0x1000] sm:$0xff]
    %v649 = vld [vmem:[#allocation2 + $0x1008] sm:$0xff]
    %v650 = vld [vmem:[#allocation2 + $0x1010] sm:$0xff]
    %v651 = vld [vmem:[#allocation2 + $0x1018] sm:$0xff]
    %v652 = vld [vmem:[#allocation2 + $0x1020] sm:$0xff]
    %v653 = vld [vmem:[#allocation2 + $0x1028] sm:$0xff]
    %v654 = vld [vmem:[#allocation2 + $0x1030] sm:$0xff]
    %v655 = vld [vmem:[#allocation2 + $0x1038] sm:$0xff]
    %v656 = vld [vmem:[#allocation2 + $0x1040] sm:$0xff]
    %v657 = vld [vmem:[#allocation2 + $0x1048] sm:$0xff]
    %v658 = vld [vmem:[#allocation2 + $0x1050] sm:$0xff]
    %v659 = vld [vmem:[#allocation2 + $0x1058] sm:$0xff]
    %v660 = vld [vmem:[#allocation2 + $0x1060] sm:$0xff]
    %v661 = vld [vmem:[#allocation2 + $0x1068] sm:$0xff]
    %v662 = vld [vmem:[#allocation2 + $0x1070] sm:$0xff]
    %v663 = vld [vmem:[#allocation2 + $0x1078] sm:$0xff]
    %v664 = vld [vmem:[#allocation2 + $0x1080] sm:$0xff]
    %v665 = vld [vmem:[#allocation2 + $0x1088] sm:$0xff]
    %v666 = vld [vmem:[#allocation2 + $0x1090] sm:$0xff]
    %v667 = vld [vmem:[#allocation2 + $0x1098] sm:$0xff]
    %v668 = vld [vmem:[#allocation2 + $0x10a0] sm:$0xff]
    %v669 = vld [vmem:[#allocation2 + $0x10a8] sm:$0xff]
    %v670 = vld [vmem:[#allocation2 + $0x10b0] sm:$0xff]
    %v671 = vld [vmem:[#allocation2 + $0x10b8] sm:$0xff]
    %v672 = vld [vmem:[#allocation2 + $0x10c0] sm:$0xff]
    %v673 = vld [vmem:[#allocation2 + $0x10c8] sm:$0xff]
    %v674 = vld [vmem:[#allocation2 + $0x10d0] sm:$0xff]
    %v675 = vld [vmem:[#allocation2 + $0x10d8] sm:$0xff]
    %v676 = vld [vmem:[#allocation2 + $0x10e0] sm:$0xff]
    %v677 = vld [vmem:[#allocation2 + $0x10e8] sm:$0xff]
    %v678 = vld [vmem:[#allocation2 + $0x10f0] sm:$0xff]
    %v679 = vld [vmem:[#allocation2 + $0x10f8] sm:$0xff]
    %v680 = vld [vmem:[#allocation2 + $0x1100] sm:$0xff]
    %v681 = vld [vmem:[#allocation2 + $0x1108] sm:$0xff]
    %v682 = vld [vmem:[#allocation2 + $0x1110] sm:$0xff]
    %v683 = vld [vmem:[#allocation2 + $0x1118] sm:$0xff]
    %v684 = vld [vmem:[#allocation2 + $0x1120] sm:$0xff]
    %v685 = vld [vmem:[#allocation2 + $0x1128] sm:$0xff]
    %v686 = vld [vmem:[#allocation2 + $0x1130] sm:$0xff]
    %v687 = vld [vmem:[#allocation2 + $0x1138] sm:$0xff]
    %v688 = vld [vmem:[#allocation2 + $0x1140] sm:$0xff]
    %v689 = vld [vmem:[#allocation2 + $0x1148] sm:$0xff]
    %v690 = vld [vmem:[#allocation2 + $0x1150] sm:$0xff]
    %v691 = vld [vmem:[#allocation2 + $0x1158] sm:$0xff]
    %v692 = vld [vmem:[#allocation2 + $0x1160] sm:$0xff]
    %v693 = vld [vmem:[#allocation2 + $0x1168] sm:$0xff]
    %v694 = vld [vmem:[#allocation2 + $0x1170] sm:$0xff]
    %v695 = vld [vmem:[#allocation2 + $0x1178] sm:$0xff]
    %v696 = vld [vmem:[#allocation2 + $0x1180] sm:$0xff]
    %v697 = vld [vmem:[#allocation2 + $0x1188] sm:$0xff]
    %v698 = vld [vmem:[#allocation2 + $0x1190] sm:$0xff]
    %v699 = vld [vmem:[#allocation2 + $0x1198] sm:$0xff]
    %v700 = vld [vmem:[#allocation2 + $0x11a0] sm:$0xff]
    %v701 = vld [vmem:[#allocation2 + $0x11a8] sm:$0xff]
    %v702 = vld [vmem:[#allocation2 + $0x11b0] sm:$0xff]
    %v703 = vld [vmem:[#allocation2 + $0x11b8] sm:$0xff]
    %v704 = vld [vmem:[#allocation2 + $0x11c0] sm:$0xff]
    %v705 = vld [vmem:[#allocation2 + $0x11c8] sm:$0xff]
    %v706 = vld [vmem:[#allocation2 + $0x11d0] sm:$0xff]
    %v707 = vld [vmem:[#allocation2 + $0x11d8] sm:$0xff]
    %v708 = vld [vmem:[#allocation2 + $0x11e0] sm:$0xff]
    %v709 = vld [vmem:[#allocation2 + $0x11e8] sm:$0xff]
    %v710 = vld [vmem:[#allocation2 + $0x11f0] sm:$0xff]
    %v711 = vld [vmem:[#allocation2 + $0x11f8] sm:$0xff]
    %v712 = vld [vmem:[#allocation2 + $0x1200] sm:$0xff]
    %v713 = vld [vmem:[#allocation2 + $0x1208] sm:$0xff]
    %v714 = vld [vmem:[#allocation2 + $0x1210] sm:$0xff]
    %v715 = vld [vmem:[#allocation2 + $0x1218] sm:$0xff]
    %v716 = vld [vmem:[#allocation2 + $0x1220] sm:$0xff]
    %v717 = vld [vmem:[#allocation2 + $0x1228] sm:$0xff]
    %v718 = vld [vmem:[#allocation2 + $0x1230] sm:$0xff]
    %v719 = vld [vmem:[#allocation2 + $0x1238] sm:$0xff]
    %v720 = vld [vmem:[#allocation2 + $0x1240] sm:$0xff]
    %v721 = vld [vmem:[#allocation2 + $0x1248] sm:$0xff]
    %v722 = vld [vmem:[#allocation2 + $0x1250] sm:$0xff]
    %v723 = vld [vmem:[#allocation2 + $0x1258] sm:$0xff]
    %v724 = vld [vmem:[#allocation2 + $0x1260] sm:$0xff]
    %v725 = vld [vmem:[#allocation2 + $0x1268] sm:$0xff]
    %v726 = vld [vmem:[#allocation2 + $0x1270] sm:$0xff]
    %v727 = vld [vmem:[#allocation2 + $0x1278] sm:$0xff]
    %v728 = vld [vmem:[#allocation2 + $0x1280] sm:$0xff]
    %v729 = vld [vmem:[#allocation2 + $0x1288] sm:$0xff]
    %v730 = vld [vmem:[#allocation2 + $0x1290] sm:$0xff]
    %v731 = vld [vmem:[#allocation2 + $0x1298] sm:$0xff]
    %v732 = vld [vmem:[#allocation2 + $0x12a0] sm:$0xff]
    %v733 = vld [vmem:[#allocation2 + $0x12a8] sm:$0xff]
    %v734 = vld [vmem:[#allocation2 + $0x12b0] sm:$0xff]
    %v735 = vld [vmem:[#allocation2 + $0x12b8] sm:$0xff]
    %v736 = vld [vmem:[#allocation2 + $0x12c0] sm:$0xff]
    %v737 = vld [vmem:[#allocation2 + $0x12c8] sm:$0xff]
    %v738 = vld [vmem:[#allocation2 + $0x12d0] sm:$0xff]
    %v739 = vld [vmem:[#allocation2 + $0x12d8] sm:$0xff]
    %v740 = vld [vmem:[#allocation2 + $0x12e0] sm:$0xff]
    %v741 = vld [vmem:[#allocation2 + $0x12e8] sm:$0xff]
    %v742 = vld [vmem:[#allocation2 + $0x12f0] sm:$0xff]
    %v743 = vld [vmem:[#allocation2 + $0x12f8] sm:$0xff]
    %v744 = vld [vmem:[#allocation2 + $0x1300] sm:$0xff]
    %v745 = vld [vmem:[#allocation2 + $0x1308] sm:$0xff]
    %v746 = vld [vmem:[#allocation2 + $0x1310] sm:$0xff]
    %v747 = vld [vmem:[#allocation2 + $0x1318] sm:$0xff]
    %v748 = vld [vmem:[#allocation2 + $0x1320] sm:$0xff]
    %v749 = vld [vmem:[#allocation2 + $0x1328] sm:$0xff]
    %v750 = vld [vmem:[#allocation2 + $0x1330] sm:$0xff]
    %v751 = vld [vmem:[#allocation2 + $0x1338] sm:$0xff]
    %v752 = vld [vmem:[#allocation2 + $0x1340] sm:$0xff]
    %v753 = vld [vmem:[#allocation2 + $0x1348] sm:$0xff]
    %v754 = vld [vmem:[#allocation2 + $0x1350] sm:$0xff]
    %v755 = vld [vmem:[#allocation2 + $0x1358] sm:$0xff]
    %v756 = vld [vmem:[#allocation2 + $0x1360] sm:$0xff]
    %v757 = vld [vmem:[#allocation2 + $0x1368] sm:$0xff]
    %v758 = vld [vmem:[#allocation2 + $0x1370] sm:$0xff]
    %v759 = vld [vmem:[#allocation2 + $0x1378] sm:$0xff]
    %v760 = vld [vmem:[#allocation2 + $0x1380] sm:$0xff]
    %v761 = vld [vmem:[#allocation2 + $0x1388] sm:$0xff]
    %v762 = vld [vmem:[#allocation2 + $0x1390] sm:$0xff]
    %v763 = vld [vmem:[#allocation2 + $0x1398] sm:$0xff]
    %v764 = vld [vmem:[#allocation2 + $0x13a0] sm:$0xff]
    %v765 = vld [vmem:[#allocation2 + $0x13a8] sm:$0xff]
    %v766 = vld [vmem:[#allocation2 + $0x13b0] sm:$0xff]
    %v767 = vld [vmem:[#allocation2 + $0x13b8] sm:$0xff]
    %v768 = vld [vmem:[#allocation2 + $0x13c0] sm:$0xff]
    %v769 = vld [vmem:[#allocation2 + $0x13c8] sm:$0xff]
    %v770 = vld [vmem:[#allocation2 + $0x13d0] sm:$0xff]
    %v771 = vld [vmem:[#allocation2 + $0x13d8] sm:$0xff]
    %v772 = vld [vmem:[#allocation2 + $0x13e0] sm:$0xff]
    %v773 = vld [vmem:[#allocation2 + $0x13e8] sm:$0xff]
    %v774 = vld [vmem:[#allocation2 + $0x13f0] sm:$0xff]
    %v775 = vld [vmem:[#allocation2 + $0x13f8] sm:$0xff]
    %v776 = vld [vmem:[#allocation2 + $0x1400] sm:$0xff]
    %v777 = vld [vmem:[#allocation2 + $0x1408] sm:$0xff]
    %v778 = vld [vmem:[#allocation2 + $0x1410] sm:$0xff]
    %v779 = vld [vmem:[#allocation2 + $0x1418] sm:$0xff]
    %v780 = vld [vmem:[#allocation2 + $0x1420] sm:$0xff]
    %v781 = vld [vmem:[#allocation2 + $0x1428] sm:$0xff]
    %v782 = vld [vmem:[#allocation2 + $0x1430] sm:$0xff]
    %v783 = vld [vmem:[#allocation2 + $0x1438] sm:$0xff]
    %v784 = vld [vmem:[#allocation2 + $0x1440] sm:$0xff]
    %v785 = vld [vmem:[#allocation2 + $0x1448] sm:$0xff]
    %v786 = vld [vmem:[#allocation2 + $0x1450] sm:$0xff]
    %v787 = vld [vmem:[#allocation2 + $0x1458] sm:$0xff]
    %v788 = vld [vmem:[#allocation2 + $0x1460] sm:$0xff]
    %v789 = vld [vmem:[#allocation2 + $0x1468] sm:$0xff]
    %v790 = vld [vmem:[#allocation2 + $0x1470] sm:$0xff]
    %v791 = vld [vmem:[#allocation2 + $0x1478] sm:$0xff]
    %v792 = vld [vmem:[#allocation2 + $0x1480] sm:$0xff]
    %v793 = vld [vmem:[#allocation2 + $0x1488] sm:$0xff]
    %v794 = vld [vmem:[#allocation2 + $0x1490] sm:$0xff]
    %v795 = vld [vmem:[#allocation2 + $0x1498] sm:$0xff]
    %v796 = vld [vmem:[#allocation2 + $0x14a0] sm:$0xff]
    %v797 = vld [vmem:[#allocation2 + $0x14a8] sm:$0xff]
    %v798 = vld [vmem:[#allocation2 + $0x14b0] sm:$0xff]
    %v799 = vld [vmem:[#allocation2 + $0x14b8] sm:$0xff]
    %v800 = vld [vmem:[#allocation2 + $0x14c0] sm:$0xff]
    %v801 = vld [vmem:[#allocation2 + $0x14c8] sm:$0xff]
    %v802 = vld [vmem:[#allocation2 + $0x14d0] sm:$0xff]
    %v803 = vld [vmem:[#allocation2 + $0x14d8] sm:$0xff]
    %v804 = vld [vmem:[#allocation2 + $0x14e0] sm:$0xff]
    %v805 = vld [vmem:[#allocation2 + $0x14e8] sm:$0xff]
    %v806 = vld [vmem:[#allocation2 + $0x14f0] sm:$0xff]
    %v807 = vld [vmem:[#allocation2 + $0x14f8] sm:$0xff]
    %v808 = vld [vmem:[#allocation2 + $0x1500] sm:$0xff]
    %v809 = vld [vmem:[#allocation2 + $0x1508] sm:$0xff]
    %v810 = vld [vmem:[#allocation2 + $0x1510] sm:$0xff]
    %v811 = vld [vmem:[#allocation2 + $0x1518] sm:$0xff]
    %v812 = vld [vmem:[#allocation2 + $0x1520] sm:$0xff]
    %v813 = vld [vmem:[#allocation2 + $0x1528] sm:$0xff]
    %v814 = vld [vmem:[#allocation2 + $0x1530] sm:$0xff]
    %v815 = vld [vmem:[#allocation2 + $0x1538] sm:$0xff]
    %v816 = vld [vmem:[#allocation2 + $0x1540] sm:$0xff]
    %v817 = vld [vmem:[#allocation2 + $0x1548] sm:$0xff]
    %v818 = vld [vmem:[#allocation2 + $0x1550] sm:$0xff]
    %v819 = vld [vmem:[#allocation2 + $0x1558] sm:$0xff]
    %v820 = vld [vmem:[#allocation2 + $0x1560] sm:$0xff]
    %v821 = vld [vmem:[#allocation2 + $0x1568] sm:$0xff]
    %v822 = vld [vmem:[#allocation2 + $0x1570] sm:$0xff]
    %v823 = vld [vmem:[#allocation2 + $0x1578] sm:$0xff]
    %v824 = vld [vmem:[#allocation2 + $0x1580] sm:$0xff]
    %v825 = vld [vmem:[#allocation2 + $0x1588] sm:$0xff]
    %v826 = vld [vmem:[#allocation2 + $0x1590] sm:$0xff]
    %v827 = vld [vmem:[#allocation2 + $0x1598] sm:$0xff]
    %v828 = vld [vmem:[#allocation2 + $0x15a0] sm:$0xff]
    %v829 = vld [vmem:[#allocation2 + $0x15a8] sm:$0xff]
    %v830 = vld [vmem:[#allocation2 + $0x15b0] sm:$0xff]
    %v831 = vld [vmem:[#allocation2 + $0x15b8] sm:$0xff]
    %v832 = vld [vmem:[#allocation2 + $0x15c0] sm:$0xff]
    %v833 = vld [vmem:[#allocation2 + $0x15c8] sm:$0xff]
    %v834 = vld [vmem:[#allocation2 + $0x15d0] sm:$0xff]
    %v835 = vld [vmem:[#allocation2 + $0x15d8] sm:$0xff]
    %v836 = vld [vmem:[#allocation2 + $0x15e0] sm:$0xff]
    %v837 = vld [vmem:[#allocation2 + $0x15e8] sm:$0xff]
    %v838 = vld [vmem:[#allocation2 + $0x15f0] sm:$0xff]
    %v839 = vld [vmem:[#allocation2 + $0x15f8] sm:$0xff]
    %v840 = vld [vmem:[#allocation2 + $0x1600] sm:$0xff]
    %v841 = vld [vmem:[#allocation2 + $0x1608] sm:$0xff]
    %v842 = vld [vmem:[#allocation2 + $0x1610] sm:$0xff]
    %v843 = vld [vmem:[#allocation2 + $0x1618] sm:$0xff]
    %v844 = vld [vmem:[#allocation2 + $0x1620] sm:$0xff]
    %v845 = vld [vmem:[#allocation2 + $0x1628] sm:$0xff]
    %v846 = vld [vmem:[#allocation2 + $0x1630] sm:$0xff]
    %v847 = vld [vmem:[#allocation2 + $0x1638] sm:$0xff]
    %v848 = vld [vmem:[#allocation2 + $0x1640] sm:$0xff]
    %v849 = vld [vmem:[#allocation2 + $0x1648] sm:$0xff]
    %v850 = vld [vmem:[#allocation2 + $0x1650] sm:$0xff]
    %v851 = vld [vmem:[#allocation2 + $0x1658] sm:$0xff]
    %v852 = vld [vmem:[#allocation2 + $0x1660] sm:$0xff]
    %v853 = vld [vmem:[#allocation2 + $0x1668] sm:$0xff]
    %v854 = vld [vmem:[#allocation2 + $0x1670] sm:$0xff]
    %v855 = vld [vmem:[#allocation2 + $0x1678] sm:$0xff]
    %v856 = vld [vmem:[#allocation2 + $0x1680] sm:$0xff]
    %v857 = vld [vmem:[#allocation2 + $0x1688] sm:$0xff]
    %v858 = vld [vmem:[#allocation2 + $0x1690] sm:$0xff]
    %v859 = vld [vmem:[#allocation2 + $0x1698] sm:$0xff]
    %v860 = vld [vmem:[#allocation2 + $0x16a0] sm:$0xff]
    %v861 = vld [vmem:[#allocation2 + $0x16a8] sm:$0xff]
    %v862 = vld [vmem:[#allocation2 + $0x16b0] sm:$0xff]
    %v863 = vld [vmem:[#allocation2 + $0x16b8] sm:$0xff]
    %v864 = vld [vmem:[#allocation2 + $0x16c0] sm:$0xff]
    %v865 = vld [vmem:[#allocation2 + $0x16c8] sm:$0xff]
    %v866 = vld [vmem:[#allocation2 + $0x16d0] sm:$0xff]
    %v867 = vld [vmem:[#allocation2 + $0x16d8] sm:$0xff]
    %v868 = vld [vmem:[#allocation2 + $0x16e0] sm:$0xff]
    %v869 = vld [vmem:[#allocation2 + $0x16e8] sm:$0xff]
    %v870 = vld [vmem:[#allocation2 + $0x16f0] sm:$0xff]
    %v871 = vld [vmem:[#allocation2 + $0x16f8] sm:$0xff]
    %v872 = vld [vmem:[#allocation2 + $0x1700] sm:$0xff]
    %v873 = vld [vmem:[#allocation2 + $0x1708] sm:$0xff]
    %v874 = vld [vmem:[#allocation2 + $0x1710] sm:$0xff]
    %v875 = vld [vmem:[#allocation2 + $0x1718] sm:$0xff]
    %v876 = vld [vmem:[#allocation2 + $0x1720] sm:$0xff]
    %v877 = vld [vmem:[#allocation2 + $0x1728] sm:$0xff]
    %v878 = vld [vmem:[#allocation2 + $0x1730] sm:$0xff]
    %v879 = vld [vmem:[#allocation2 + $0x1738] sm:$0xff]
    %v880 = vld [vmem:[#allocation2 + $0x1740] sm:$0xff]
    %v881 = vld [vmem:[#allocation2 + $0x1748] sm:$0xff]
    %v882 = vld [vmem:[#allocation2 + $0x1750] sm:$0xff]
    %v883 = vld [vmem:[#allocation2 + $0x1758] sm:$0xff]
    %v884 = vld [vmem:[#allocation2 + $0x1760] sm:$0xff]
    %v885 = vld [vmem:[#allocation2 + $0x1768] sm:$0xff]
    %v886 = vld [vmem:[#allocation2 + $0x1770] sm:$0xff]
    %v887 = vld [vmem:[#allocation2 + $0x1778] sm:$0xff]
    %v888 = vld [vmem:[#allocation2 + $0x1780] sm:$0xff]
    %v889 = vld [vmem:[#allocation2 + $0x1788] sm:$0xff]
    %v890 = vld [vmem:[#allocation2 + $0x1790] sm:$0xff]
    %v891 = vld [vmem:[#allocation2 + $0x1798] sm:$0xff]
    %v892 = vld [vmem:[#allocation2 + $0x17a0] sm:$0xff]
    %v893 = vld [vmem:[#allocation2 + $0x17a8] sm:$0xff]
    %v894 = vld [vmem:[#allocation2 + $0x17b0] sm:$0xff]
    %v895 = vld [vmem:[#allocation2 + $0x17b8] sm:$0xff]
    %v896 = vld [vmem:[#allocation2 + $0x17c0] sm:$0xff]
    %v897 = vld [vmem:[#allocation2 + $0x17c8] sm:$0xff]
    %v898 = vld [vmem:[#allocation2 + $0x17d0] sm:$0xff]
    %v899 = vld [vmem:[#allocation2 + $0x17d8] sm:$0xff]
    %v900 = vld [vmem:[#allocation2 + $0x17e0] sm:$0xff]
    %v901 = vld [vmem:[#allocation2 + $0x17e8] sm:$0xff]
    %v902 = vld [vmem:[#allocation2 + $0x17f0] sm:$0xff]
    %v903 = vld [vmem:[#allocation2 + $0x17f8] sm:$0xff]
    %v904 = vld [vmem:[#allocation2 + $0x1800] sm:$0xff]
    %v905 = vld [vmem:[#allocation2 + $0x1808] sm:$0xff]
    %v906 = vld [vmem:[#allocation2 + $0x1810] sm:$0xff]
    %v907 = vld [vmem:[#allocation2 + $0x1818] sm:$0xff]
    %v908 = vld [vmem:[#allocation2 + $0x1820] sm:$0xff]
    %v909 = vld [vmem:[#allocation2 + $0x1828] sm:$0xff]
    %v910 = vld [vmem:[#allocation2 + $0x1830] sm:$0xff]
    %v911 = vld [vmem:[#allocation2 + $0x1838] sm:$0xff]
    %v912 = vld [vmem:[#allocation2 + $0x1840] sm:$0xff]
    %v913 = vld [vmem:[#allocation2 + $0x1848] sm:$0xff]
    %v914 = vld [vmem:[#allocation2 + $0x1850] sm:$0xff]
    %v915 = vld [vmem:[#allocation2 + $0x1858] sm:$0xff]
    %v916 = vld [vmem:[#allocation2 + $0x1860] sm:$0xff]
    %v917 = vld [vmem:[#allocation2 + $0x1868] sm:$0xff]
    %v918 = vld [vmem:[#allocation2 + $0x1870] sm:$0xff]
    %v919 = vld [vmem:[#allocation2 + $0x1878] sm:$0xff]
    %v920 = vld [vmem:[#allocation2 + $0x1880] sm:$0xff]
    %v921 = vld [vmem:[#allocation2 + $0x1888] sm:$0xff]
    %v922 = vld [vmem:[#allocation2 + $0x1890] sm:$0xff]
    %v923 = vld [vmem:[#allocation2 + $0x1898] sm:$0xff]
    %v924 = vld [vmem:[#allocation2 + $0x18a0] sm:$0xff]
    %v925 = vld [vmem:[#allocation2 + $0x18a8] sm:$0xff]
    %v926 = vld [vmem:[#allocation2 + $0x18b0] sm:$0xff]
    %v927 = vld [vmem:[#allocation2 + $0x18b8] sm:$0xff]
    %v928 = vld [vmem:[#allocation2 + $0x18c0] sm:$0xff]
    %v929 = vld [vmem:[#allocation2 + $0x18c8] sm:$0xff]
    %v930 = vld [vmem:[#allocation2 + $0x18d0] sm:$0xff]
    %v931 = vld [vmem:[#allocation2 + $0x18d8] sm:$0xff]
    %v932 = vld [vmem:[#allocation2 + $0x18e0] sm:$0xff]
    %v933 = vld [vmem:[#allocation2 + $0x18e8] sm:$0xff]
    %v934 = vld [vmem:[#allocation2 + $0x18f0] sm:$0xff]
    %v935 = vld [vmem:[#allocation2 + $0x18f8] sm:$0xff]
    %v936 = vld [vmem:[#allocation2 + $0x1900] sm:$0xff]
    %v937 = vld [vmem:[#allocation2 + $0x1908] sm:$0xff]
    %v938 = vld [vmem:[#allocation2 + $0x1910] sm:$0xff]
    %v939 = vld [vmem:[#allocation2 + $0x1918] sm:$0xff]
    %v940 = vld [vmem:[#allocation2 + $0x1920] sm:$0xff]
    %v941 = vld [vmem:[#allocation2 + $0x1928] sm:$0xff]
    %v942 = vld [vmem:[#allocation2 + $0x1930] sm:$0xff]
    %v943 = vld [vmem:[#allocation2 + $0x1938] sm:$0xff]
    %v944 = vld [vmem:[#allocation2 + $0x1940] sm:$0xff]
    %v945 = vld [vmem:[#allocation2 + $0x1948] sm:$0xff]
    %v946 = vld [vmem:[#allocation2 + $0x1950] sm:$0xff]
    %v947 = vld [vmem:[#allocation2 + $0x1958] sm:$0xff]
    %v948 = vld [vmem:[#allocation2 + $0x1960] sm:$0xff]
    %v949 = vld [vmem:[#allocation2 + $0x1968] sm:$0xff]
    %v950 = vld [vmem:[#allocation2 + $0x1970] sm:$0xff]
    %v951 = vld [vmem:[#allocation2 + $0x1978] sm:$0xff]
    %v952 = vld [vmem:[#allocation2 + $0x1980] sm:$0xff]
    %v953 = vld [vmem:[#allocation2 + $0x1988] sm:$0xff]
    %v954 = vld [vmem:[#allocation2 + $0x1990] sm:$0xff]
    %v955 = vld [vmem:[#allocation2 + $0x1998] sm:$0xff]
    %v956 = vld [vmem:[#allocation2 + $0x19a0] sm:$0xff]
    %v957 = vld [vmem:[#allocation2 + $0x19a8] sm:$0xff]
    %v958 = vld [vmem:[#allocation2 + $0x19b0] sm:$0xff]
    %v959 = vld [vmem:[#allocation2 + $0x19b8] sm:$0xff]
    %v960 = vld [vmem:[#allocation2 + $0x19c0] sm:$0xff]
    %v961 = vld [vmem:[#allocation2 + $0x19c8] sm:$0xff]
    %v962 = vld [vmem:[#allocation2 + $0x19d0] sm:$0xff]
    %v963 = vld [vmem:[#allocation2 + $0x19d8] sm:$0xff]
    %v964 = vld [vmem:[#allocation2 + $0x19e0] sm:$0xff]
    %v965 = vld [vmem:[#allocation2 + $0x19e8] sm:$0xff]
    %v966 = vld [vmem:[#allocation2 + $0x19f0] sm:$0xff]
    %v967 = vld [vmem:[#allocation2 + $0x19f8] sm:$0xff]
    %v968 = vld [vmem:[#allocation2 + $0x1a00] sm:$0xff]
    %v969 = vld [vmem:[#allocation2 + $0x1a08] sm:$0xff]
    %v970 = vld [vmem:[#allocation2 + $0x1a10] sm:$0xff]
    %v971 = vld [vmem:[#allocation2 + $0x1a18] sm:$0xff]
    %v972 = vld [vmem:[#allocation2 + $0x1a20] sm:$0xff]
    %v973 = vld [vmem:[#allocation2 + $0x1a28] sm:$0xff]
    %v974 = vld [vmem:[#allocation2 + $0x1a30] sm:$0xff]
    %v975 = vld [vmem:[#allocation2 + $0x1a38] sm:$0xff]
    %v976 = vld [vmem:[#allocation2 + $0x1a40] sm:$0xff]
    %v977 = vld [vmem:[#allocation2 + $0x1a48] sm:$0xff]
    %v978 = vld [vmem:[#allocation2 + $0x1a50] sm:$0xff]
    %v979 = vld [vmem:[#allocation2 + $0x1a58] sm:$0xff]
    %v980 = vld [vmem:[#allocation2 + $0x1a60] sm:$0xff]
    %v981 = vld [vmem:[#allocation2 + $0x1a68] sm:$0xff]
    %v982 = vld [vmem:[#allocation2 + $0x1a70] sm:$0xff]
    %v983 = vld [vmem:[#allocation2 + $0x1a78] sm:$0xff]
    %v984 = vld [vmem:[#allocation2 + $0x1a80] sm:$0xff]
    %v985 = vld [vmem:[#allocation2 + $0x1a88] sm:$0xff]
    %v986 = vld [vmem:[#allocation2 + $0x1a90] sm:$0xff]
    %v987 = vld [vmem:[#allocation2 + $0x1a98] sm:$0xff]
    %v988 = vld [vmem:[#allocation2 + $0x1aa0] sm:$0xff]
    %v989 = vld [vmem:[#allocation2 + $0x1aa8] sm:$0xff]
    %v990 = vld [vmem:[#allocation2 + $0x1ab0] sm:$0xff]
    %v991 = vld [vmem:[#allocation2 + $0x1ab8] sm:$0xff]
    %v992 = vld [vmem:[#allocation2 + $0x1ac0] sm:$0xff]
    %v993 = vld [vmem:[#allocation2 + $0x1ac8] sm:$0xff]
    %v994 = vld [vmem:[#allocation2 + $0x1ad0] sm:$0xff]
    %v995 = vld [vmem:[#allocation2 + $0x1ad8] sm:$0xff]
    %v996 = vld [vmem:[#allocation2 + $0x1ae0] sm:$0xff]
    %v997 = vld [vmem:[#allocation2 + $0x1ae8] sm:$0xff]
    %v998 = vld [vmem:[#allocation2 + $0x1af0] sm:$0xff]
    %v999 = vld [vmem:[#allocation2 + $0x1af8] sm:$0xff]
    %v1000 = vld [vmem:[#allocation2 + $0x1b00] sm:$0xff]
    %v1001 = vld [vmem:[#allocation2 + $0x1b08] sm:$0xff]
    %v1002 = vld [vmem:[#allocation2 + $0x1b10] sm:$0xff]
    %v1003 = vld [vmem:[#allocation2 + $0x1b18] sm:$0xff]
    %v1004 = vld [vmem:[#allocation2 + $0x1b20] sm:$0xff]
    %v1005 = vld [vmem:[#allocation2 + $0x1b28] sm:$0xff]
    %v1006 = vld [vmem:[#allocation2 + $0x1b30] sm:$0xff]
    %v1007 = vld [vmem:[#allocation2 + $0x1b38] sm:$0xff]
    %v1008 = vld [vmem:[#allocation2 + $0x1b40] sm:$0xff]
    %v1009 = vld [vmem:[#allocation2 + $0x1b48] sm:$0xff]
    %v1010 = vld [vmem:[#allocation2 + $0x1b50] sm:$0xff]
    %v1011 = vld [vmem:[#allocation2 + $0x1b58] sm:$0xff]
    %v1012 = vld [vmem:[#allocation2 + $0x1b60] sm:$0xff]
    %v1013 = vld [vmem:[#allocation2 + $0x1b68] sm:$0xff]
    %v1014 = vld [vmem:[#allocation2 + $0x1b70] sm:$0xff]
    %v1015 = vld [vmem:[#allocation2 + $0x1b78] sm:$0xff]
    %v1016 = vld [vmem:[#allocation2 + $0x1b80] sm:$0xff]
    %v1017 = vld [vmem:[#allocation2 + $0x1b88] sm:$0xff]
    %v1018 = vld [vmem:[#allocation2 + $0x1b90] sm:$0xff]
    %v1019 = vld [vmem:[#allocation2 + $0x1b98] sm:$0xff]
    %v1020 = vld [vmem:[#allocation2 + $0x1ba0] sm:$0xff]
    %v1021 = vld [vmem:[#allocation2 + $0x1ba8] sm:$0xff]
    %v1022 = vld [vmem:[#allocation2 + $0x1bb0] sm:$0xff]
    %v1023 = vld [vmem:[#allocation2 + $0x1bb8] sm:$0xff]
    %v1024 = vld [vmem:[#allocation2 + $0x1bc0] sm:$0xff]
    %v1025 = vld [vmem:[#allocation2 + $0x1bc8] sm:$0xff]
    %v1026 = vld [vmem:[#allocation2 + $0x1bd0] sm:$0xff]
    %v1027 = vld [vmem:[#allocation2 + $0x1bd8] sm:$0xff]
    %v1028 = vld [vmem:[#allocation2 + $0x1be0] sm:$0xff]
    %v1029 = vld [vmem:[#allocation2 + $0x1be8] sm:$0xff]
    %v1030 = vld [vmem:[#allocation2 + $0x1bf0] sm:$0xff]
    %v1031 = vld [vmem:[#allocation2 + $0x1bf8] sm:$0xff]
    %v1032 = vld [vmem:[#allocation2 + $0x1c00] sm:$0xff]
    %v1033 = vld [vmem:[#allocation2 + $0x1c08] sm:$0xff]
    %v1034 = vld [vmem:[#allocation2 + $0x1c10] sm:$0xff]
    %v1035 = vld [vmem:[#allocation2 + $0x1c18] sm:$0xff]
    %v1036 = vld [vmem:[#allocation2 + $0x1c20] sm:$0xff]
    %v1037 = vld [vmem:[#allocation2 + $0x1c28] sm:$0xff]
    %v1038 = vld [vmem:[#allocation2 + $0x1c30] sm:$0xff]
    %v1039 = vld [vmem:[#allocation2 + $0x1c38] sm:$0xff]
    %v1040 = vld [vmem:[#allocation2 + $0x1c40] sm:$0xff]
    %v1041 = vld [vmem:[#allocation2 + $0x1c48] sm:$0xff]
    %v1042 = vld [vmem:[#allocation2 + $0x1c50] sm:$0xff]
    %v1043 = vld [vmem:[#allocation2 + $0x1c58] sm:$0xff]
    %v1044 = vld [vmem:[#allocation2 + $0x1c60] sm:$0xff]
    %v1045 = vld [vmem:[#allocation2 + $0x1c68] sm:$0xff]
    %v1046 = vld [vmem:[#allocation2 + $0x1c70] sm:$0xff]
    %v1047 = vld [vmem:[#allocation2 + $0x1c78] sm:$0xff]
    %v1048 = vld [vmem:[#allocation2 + $0x1c80] sm:$0xff]
    %v1049 = vld [vmem:[#allocation2 + $0x1c88] sm:$0xff]
    %v1050 = vld [vmem:[#allocation2 + $0x1c90] sm:$0xff]
    %v1051 = vld [vmem:[#allocation2 + $0x1c98] sm:$0xff]
    %v1052 = vld [vmem:[#allocation2 + $0x1ca0] sm:$0xff]
    %v1053 = vld [vmem:[#allocation2 + $0x1ca8] sm:$0xff]
    %v1054 = vld [vmem:[#allocation2 + $0x1cb0] sm:$0xff]
    %v1055 = vld [vmem:[#allocation2 + $0x1cb8] sm:$0xff]
    %v1056 = vld [vmem:[#allocation2 + $0x1cc0] sm:$0xff]
    %v1057 = vld [vmem:[#allocation2 + $0x1cc8] sm:$0xff]
    %v1058 = vld [vmem:[#allocation2 + $0x1cd0] sm:$0xff]
    %v1059 = vld [vmem:[#allocation2 + $0x1cd8] sm:$0xff]
    %v1060 = vld [vmem:[#allocation2 + $0x1ce0] sm:$0xff]
    %v1061 = vld [vmem:[#allocation2 + $0x1ce8] sm:$0xff]
    %v1062 = vld [vmem:[#allocation2 + $0x1cf0] sm:$0xff]
    %v1063 = vld [vmem:[#allocation2 + $0x1cf8] sm:$0xff]
    %v1064 = vld [vmem:[#allocation2 + $0x1d00] sm:$0xff]
    %v1065 = vld [vmem:[#allocation2 + $0x1d08] sm:$0xff]
    %v1066 = vld [vmem:[#allocation2 + $0x1d10] sm:$0xff]
    %v1067 = vld [vmem:[#allocation2 + $0x1d18] sm:$0xff]
    %v1068 = vld [vmem:[#allocation2 + $0x1d20] sm:$0xff]
    %v1069 = vld [vmem:[#allocation2 + $0x1d28] sm:$0xff]
    %v1070 = vld [vmem:[#allocation2 + $0x1d30] sm:$0xff]
    %v1071 = vld [vmem:[#allocation2 + $0x1d38] sm:$0xff]
    %v1072 = vld [vmem:[#allocation2 + $0x1d40] sm:$0xff]
    %v1073 = vld [vmem:[#allocation2 + $0x1d48] sm:$0xff]
    %v1074 = vld [vmem:[#allocation2 + $0x1d50] sm:$0xff]
    %v1075 = vld [vmem:[#allocation2 + $0x1d58] sm:$0xff]
    %v1076 = vld [vmem:[#allocation2 + $0x1d60] sm:$0xff]
    %v1077 = vld [vmem:[#allocation2 + $0x1d68] sm:$0xff]
    %v1078 = vld [vmem:[#allocation2 + $0x1d70] sm:$0xff]
    %v1079 = vld [vmem:[#allocation2 + $0x1d78] sm:$0xff]
    %v1080 = vld [vmem:[#allocation2 + $0x1d80] sm:$0xff]
    %v1081 = vld [vmem:[#allocation2 + $0x1d88] sm:$0xff]
    %v1082 = vld [vmem:[#allocation2 + $0x1d90] sm:$0xff]
    %v1083 = vld [vmem:[#allocation2 + $0x1d98] sm:$0xff]
    %v1084 = vld [vmem:[#allocation2 + $0x1da0] sm:$0xff]
    %v1085 = vld [vmem:[#allocation2 + $0x1da8] sm:$0xff]
    %v1086 = vld [vmem:[#allocation2 + $0x1db0] sm:$0xff]
    %v1087 = vld [vmem:[#allocation2 + $0x1db8] sm:$0xff]
    %v1088 = vld [vmem:[#allocation2 + $0x1dc0] sm:$0xff]
    %v1089 = vld [vmem:[#allocation2 + $0x1dc8] sm:$0xff]
    %v1090 = vld [vmem:[#allocation2 + $0x1dd0] sm:$0xff]
    %v1091 = vld [vmem:[#allocation2 + $0x1dd8] sm:$0xff]
    %v1092 = vld [vmem:[#allocation2 + $0x1de0] sm:$0xff]
    %v1093 = vld [vmem:[#allocation2 + $0x1de8] sm:$0xff]
    %v1094 = vld [vmem:[#allocation2 + $0x1df0] sm:$0xff]
    %v1095 = vld [vmem:[#allocation2 + $0x1df8] sm:$0xff]
    %v1096 = vld [vmem:[#allocation2 + $0x1e00] sm:$0xff]
    %v1097 = vld [vmem:[#allocation2 + $0x1e08] sm:$0xff]
    %v1098 = vld [vmem:[#allocation2 + $0x1e10] sm:$0xff]
    %v1099 = vld [vmem:[#allocation2 + $0x1e18] sm:$0xff]
    %v1100 = vld [vmem:[#allocation2 + $0x1e20] sm:$0xff]
    %v1101 = vld [vmem:[#allocation2 + $0x1e28] sm:$0xff]
    %v1102 = vld [vmem:[#allocation2 + $0x1e30] sm:$0xff]
    %v1103 = vld [vmem:[#allocation2 + $0x1e38] sm:$0xff]
    %v1104 = vld [vmem:[#allocation2 + $0x1e40] sm:$0xff]
    %v1105 = vld [vmem:[#allocation2 + $0x1e48] sm:$0xff]
    %v1106 = vld [vmem:[#allocation2 + $0x1e50] sm:$0xff]
    %v1107 = vld [vmem:[#allocation2 + $0x1e58] sm:$0xff]
    %v1108 = vld [vmem:[#allocation2 + $0x1e60] sm:$0xff]
    %v1109 = vld [vmem:[#allocation2 + $0x1e68] sm:$0xff]
    %v1110 = vld [vmem:[#allocation2 + $0x1e70] sm:$0xff]
    %v1111 = vld [vmem:[#allocation2 + $0x1e78] sm:$0xff]
    %v1112 = vld [vmem:[#allocation2 + $0x1e80] sm:$0xff]
    %v1113 = vld [vmem:[#allocation2 + $0x1e88] sm:$0xff]
    %v1114 = vld [vmem:[#allocation2 + $0x1e90] sm:$0xff]
    %v1115 = vld [vmem:[#allocation2 + $0x1e98] sm:$0xff]
    %v1116 = vld [vmem:[#allocation2 + $0x1ea0] sm:$0xff]
    %v1117 = vld [vmem:[#allocation2 + $0x1ea8] sm:$0xff]
    %v1118 = vld [vmem:[#allocation2 + $0x1eb0] sm:$0xff]
    %v1119 = vld [vmem:[#allocation2 + $0x1eb8] sm:$0xff]
    %v1120 = vld [vmem:[#allocation2 + $0x1ec0] sm:$0xff]
    %v1121 = vld [vmem:[#allocation2 + $0x1ec8] sm:$0xff]
    %v1122 = vld [vmem:[#allocation2 + $0x1ed0] sm:$0xff]
    %v1123 = vld [vmem:[#allocation2 + $0x1ed8] sm:$0xff]
    %v1124 = vld [vmem:[#allocation2 + $0x1ee0] sm:$0xff]
    %v1125 = vld [vmem:[#allocation2 + $0x1ee8] sm:$0xff]
    %v1126 = vld [vmem:[#allocation2 + $0x1ef0] sm:$0xff]
    %v1127 = vld [vmem:[#allocation2 + $0x1ef8] sm:$0xff]
    %v1128 = vld [vmem:[#allocation2 + $0x1f00] sm:$0xff]
    %v1129 = vld [vmem:[#allocation2 + $0x1f08] sm:$0xff]
    %v1130 = vld [vmem:[#allocation2 + $0x1f10] sm:$0xff]
    %v1131 = vld [vmem:[#allocation2 + $0x1f18] sm:$0xff]
    %v1132 = vld [vmem:[#allocation2 + $0x1f20] sm:$0xff]
    %v1133 = vld [vmem:[#allocation2 + $0x1f28] sm:$0xff]
    %v1134 = vld [vmem:[#allocation2 + $0x1f30] sm:$0xff]
    %v1135 = vld [vmem:[#allocation2 + $0x1f38] sm:$0xff]
    %v1136 = vld [vmem:[#allocation2 + $0x1f40] sm:$0xff]
    %v1137 = vld [vmem:[#allocation2 + $0x1f48] sm:$0xff]
    %v1138 = vld [vmem:[#allocation2 + $0x1f50] sm:$0xff]
    %v1139 = vld [vmem:[#allocation2 + $0x1f58] sm:$0xff]
    %v1140 = vld [vmem:[#allocation2 + $0x1f60] sm:$0xff]
    %v1141 = vld [vmem:[#allocation2 + $0x1f68] sm:$0xff]
    %v1142 = vld [vmem:[#allocation2 + $0x1f70] sm:$0xff]
    %v1143 = vld [vmem:[#allocation2 + $0x1f78] sm:$0xff]
    %v1144 = vld [vmem:[#allocation2 + $0x1f80] sm:$0xff]
    %v1145 = vld [vmem:[#allocation2 + $0x1f88] sm:$0xff]
    %v1146 = vld [vmem:[#allocation2 + $0x1f90] sm:$0xff]
    %v1147 = vld [vmem:[#allocation2 + $0x1f98] sm:$0xff]
    %v1148 = vld [vmem:[#allocation2 + $0x1fa0] sm:$0xff]
    %v1149 = vld [vmem:[#allocation2 + $0x1fa8] sm:$0xff]
    %v1150 = vld [vmem:[#allocation2 + $0x1fb0] sm:$0xff]
    %v1151 = vld [vmem:[#allocation2 + $0x1fb8] sm:$0xff]
    %v1152 = vld [vmem:[#allocation2 + $0x1fc0] sm:$0xff]
    %v1153 = vld [vmem:[#allocation2 + $0x1fc8] sm:$0xff]
    %v1154 = vld [vmem:[#allocation2 + $0x1fd0] sm:$0xff]
    %v1155 = vld [vmem:[#allocation2 + $0x1fd8] sm:$0xff]
    %v1156 = vld [vmem:[#allocation2 + $0x1fe0] sm:$0xff]
    %v1157 = vld [vmem:[#allocation2 + $0x1fe8] sm:$0xff]
    %v1158 = vld [vmem:[#allocation2 + $0x1ff0] sm:$0xff]
    %v1159 = vld [vmem:[#allocation2 + $0x1ff8] sm:$0xff]
    %v1160 = vld [vmem:[#allocation2 + $0x2000] sm:$0xff]
    %v1161 = vld [vmem:[#allocation2 + $0x2008] sm:$0xff]
    %v1162 = vld [vmem:[#allocation2 + $0x2010] sm:$0xff]
    %v1163 = vld [vmem:[#allocation2 + $0x2018] sm:$0xff]
    %v1164 = vld [vmem:[#allocation2 + $0x2020] sm:$0xff]
    %v1165 = vld [vmem:[#allocation2 + $0x2028] sm:$0xff]
    %v1166 = vld [vmem:[#allocation2 + $0x2030] sm:$0xff]
    %v1167 = vld [vmem:[#allocation2 + $0x2038] sm:$0xff]
    %v1168 = vld [vmem:[#allocation2 + $0x2040] sm:$0xff]
    %v1169 = vld [vmem:[#allocation2 + $0x2048] sm:$0xff]
    %v1170 = vld [vmem:[#allocation2 + $0x2050] sm:$0xff]
    %v1171 = vld [vmem:[#allocation2 + $0x2058] sm:$0xff]
    %v1172 = vld [vmem:[#allocation2 + $0x2060] sm:$0xff]
    %v1173 = vld [vmem:[#allocation2 + $0x2068] sm:$0xff]
    %v1174 = vld [vmem:[#allocation2 + $0x2070] sm:$0xff]
    %v1175 = vld [vmem:[#allocation2 + $0x2078] sm:$0xff]
    %v1176 = vld [vmem:[#allocation2 + $0x2080] sm:$0xff]
    %v1177 = vld [vmem:[#allocation2 + $0x2088] sm:$0xff]
    %v1178 = vld [vmem:[#allocation2 + $0x2090] sm:$0xff]
    %v1179 = vld [vmem:[#allocation2 + $0x2098] sm:$0xff]
    %v1180 = vld [vmem:[#allocation2 + $0x20a0] sm:$0xff]
    %v1181 = vld [vmem:[#allocation2 + $0x20a8] sm:$0xff]
    %v1182 = vld [vmem:[#allocation2 + $0x20b0] sm:$0xff]
    %v1183 = vld [vmem:[#allocation2 + $0x20b8] sm:$0xff]
    %v1184 = vld [vmem:[#allocation2 + $0x20c0] sm:$0xff]
    %v1185 = vld [vmem:[#allocation2 + $0x20c8] sm:$0xff]
    %v1186 = vld [vmem:[#allocation2 + $0x20d0] sm:$0xff]
    %v1187 = vld [vmem:[#allocation2 + $0x20d8] sm:$0xff]
    %v1188 = vld [vmem:[#allocation2 + $0x20e0] sm:$0xff]
    %v1189 = vld [vmem:[#allocation2 + $0x20e8] sm:$0xff]
    %v1190 = vld [vmem:[#allocation2 + $0x20f0] sm:$0xff]
    %v1191 = vld [vmem:[#allocation2 + $0x20f8] sm:$0xff]
    %v1192 = vld [vmem:[#allocation2 + $0x2100] sm:$0xff]
    %v1193 = vld [vmem:[#allocation2 + $0x2108] sm:$0xff]
    %v1194 = vld [vmem:[#allocation2 + $0x2110] sm:$0xff]
    %v1195 = vld [vmem:[#allocation2 + $0x2118] sm:$0xff]
    %v1196 = vld [vmem:[#allocation2 + $0x2120] sm:$0xff]
    %v1197 = vld [vmem:[#allocation2 + $0x2128] sm:$0xff]
    %v1198 = vld [vmem:[#allocation2 + $0x2130] sm:$0xff]
    %v1199 = vld [vmem:[#allocation2 + $0x2138] sm:$0xff]
    %v1200 = vld [vmem:[#allocation2 + $0x2140] sm:$0xff]
    %v1201 = vld [vmem:[#allocation2 + $0x2148] sm:$0xff]
    %v1202 = vld [vmem:[#allocation2 + $0x2150] sm:$0xff]
    %v1203 = vld [vmem:[#allocation2 + $0x2158] sm:$0xff]
    %v1204 = vld [vmem:[#allocation2 + $0x2160] sm:$0xff]
    %v1205 = vld [vmem:[#allocation2 + $0x2168] sm:$0xff]
    %v1206 = vld [vmem:[#allocation2 + $0x2170] sm:$0xff]
    %v1207 = vld [vmem:[#allocation2 + $0x2178] sm:$0xff]
    %v1208 = vld [vmem:[#allocation2 + $0x2180] sm:$0xff]
    %v1209 = vld [vmem:[#allocation2 + $0x2188] sm:$0xff]
    %v1210 = vld [vmem:[#allocation2 + $0x2190] sm:$0xff]
    %v1211 = vld [vmem:[#allocation2 + $0x2198] sm:$0xff]
    %v1212 = vld [vmem:[#allocation2 + $0x21a0] sm:$0xff]
    %v1213 = vld [vmem:[#allocation2 + $0x21a8] sm:$0xff]
    %v1214 = vld [vmem:[#allocation2 + $0x21b0] sm:$0xff]
    %v1215 = vld [vmem:[#allocation2 + $0x21b8] sm:$0xff]
    %v1216 = vld [vmem:[#allocation2 + $0x21c0] sm:$0xff]
    %v1217 = vld [vmem:[#allocation2 + $0x21c8] sm:$0xff]
    %v1218 = vld [vmem:[#allocation2 + $0x21d0] sm:$0xff]
    %v1219 = vld [vmem:[#allocation2 + $0x21d8] sm:$0xff]
    %v1220 = vld [vmem:[#allocation2 + $0x21e0] sm:$0xff]
    %v1221 = vld [vmem:[#allocation2 + $0x21e8] sm:$0xff]
    %v1222 = vld [vmem:[#allocation2 + $0x21f0] sm:$0xff]
    %v1223 = vld [vmem:[#allocation2 + $0x21f8] sm:$0xff]
    %v1224 = vld [vmem:[#allocation2 + $0x2200] sm:$0xff]
    %v1225 = vld [vmem:[#allocation2 + $0x2208] sm:$0xff]
    %v1226 = vld [vmem:[#allocation2 + $0x2210] sm:$0xff]
    %v1227 = vld [vmem:[#allocation2 + $0x2218] sm:$0xff]
    %v1228 = vld [vmem:[#allocation2 + $0x2220] sm:$0xff]
    %v1229 = vld [vmem:[#allocation2 + $0x2228] sm:$0xff]
    %v1230 = vld [vmem:[#allocation2 + $0x2230] sm:$0xff]
    %v1231 = vld [vmem:[#allocation2 + $0x2238] sm:$0xff]
    %v1232 = vld [vmem:[#allocation2 + $0x2240] sm:$0xff]
    %v1233 = vld [vmem:[#allocation2 + $0x2248] sm:$0xff]
    %v1234 = vld [vmem:[#allocation2 + $0x2250] sm:$0xff]
    %v1235 = vld [vmem:[#allocation2 + $0x2258] sm:$0xff]
    %v1236 = vld [vmem:[#allocation2 + $0x2260] sm:$0xff]
    %v1237 = vld [vmem:[#allocation2 + $0x2268] sm:$0xff]
    %v1238 = vld [vmem:[#allocation2 + $0x2270] sm:$0xff]
    %v1239 = vld [vmem:[#allocation2 + $0x2278] sm:$0xff]
    %v1240 = vld [vmem:[#allocation2 + $0x2280] sm:$0xff]
    %v1241 = vld [vmem:[#allocation2 + $0x2288] sm:$0xff]
    %v1242 = vld [vmem:[#allocation2 + $0x2290] sm:$0xff]
    %v1243 = vld [vmem:[#allocation2 + $0x2298] sm:$0xff]
    %v1244 = vld [vmem:[#allocation2 + $0x22a0] sm:$0xff]
    %v1245 = vld [vmem:[#allocation2 + $0x22a8] sm:$0xff]
    %v1246 = vld [vmem:[#allocation2 + $0x22b0] sm:$0xff]
    %v1247 = vld [vmem:[#allocation2 + $0x22b8] sm:$0xff]
    %v1248 = vld [vmem:[#allocation2 + $0x22c0] sm:$0xff]
    %v1249 = vld [vmem:[#allocation2 + $0x22c8] sm:$0xff]
    %v1250 = vld [vmem:[#allocation2 + $0x22d0] sm:$0xff]
    %v1251 = vld [vmem:[#allocation2 + $0x22d8] sm:$0xff]
    %v1252 = vld [vmem:[#allocation2 + $0x22e0] sm:$0xff]
    %v1253 = vld [vmem:[#allocation2 + $0x22e8] sm:$0xff]
    %v1254 = vld [vmem:[#allocation2 + $0x22f0] sm:$0xff]
    %v1255 = vld [vmem:[#allocation2 + $0x22f8] sm:$0xff]
    %v1256 = vld [vmem:[#allocation2 + $0x2300] sm:$0xff]
    %v1257 = vld [vmem:[#allocation2 + $0x2308] sm:$0xff]
    %v1258 = vld [vmem:[#allocation2 + $0x2310] sm:$0xff]
    %v1259 = vld [vmem:[#allocation2 + $0x2318] sm:$0xff]
    %v1260 = vld [vmem:[#allocation2 + $0x2320] sm:$0xff]
    %v1261 = vld [vmem:[#allocation2 + $0x2328] sm:$0xff]
    %v1262 = vld [vmem:[#allocation2 + $0x2330] sm:$0xff]
    %v1263 = vld [vmem:[#allocation2 + $0x2338] sm:$0xff]
    %v1264 = vld [vmem:[#allocation2 + $0x2340] sm:$0xff]
    %v1265 = vld [vmem:[#allocation2 + $0x2348] sm:$0xff]
    %v1266 = vld [vmem:[#allocation2 + $0x2350] sm:$0xff]
    %v1267 = vld [vmem:[#allocation2 + $0x2358] sm:$0xff]
    %v1268 = vld [vmem:[#allocation2 + $0x2360] sm:$0xff]
    %v1269 = vld [vmem:[#allocation2 + $0x2368] sm:$0xff]
    %v1270 = vld [vmem:[#allocation2 + $0x2370] sm:$0xff]
    %v1271 = vld [vmem:[#allocation2 + $0x2378] sm:$0xff]
    %v1272 = vld [vmem:[#allocation2 + $0x2380] sm:$0xff]
    %v1273 = vld [vmem:[#allocation2 + $0x2388] sm:$0xff]
    %v1274 = vld [vmem:[#allocation2 + $0x2390] sm:$0xff]
    %v1275 = vld [vmem:[#allocation2 + $0x2398] sm:$0xff]
    %v1276 = vld [vmem:[#allocation2 + $0x23a0] sm:$0xff]
    %v1277 = vld [vmem:[#allocation2 + $0x23a8] sm:$0xff]
    %v1278 = vld [vmem:[#allocation2 + $0x23b0] sm:$0xff]
    %v1279 = vld [vmem:[#allocation2 + $0x23b8] sm:$0xff]
    %v1280 = vld [vmem:[#allocation2 + $0x23c0] sm:$0xff]
    %v1281 = vld [vmem:[#allocation2 + $0x23c8] sm:$0xff]
    %v1282 = vld [vmem:[#allocation2 + $0x23d0] sm:$0xff]
    %v1283 = vld [vmem:[#allocation2 + $0x23d8] sm:$0xff]
    %v1284 = vld [vmem:[#allocation2 + $0x23e0] sm:$0xff]
    %v1285 = vld [vmem:[#allocation2 + $0x23e8] sm:$0xff]
    %v1286 = vld [vmem:[#allocation2 + $0x23f0] sm:$0xff]
    %v1287 = vld [vmem:[#allocation2 + $0x23f8] sm:$0xff]
    %v1288 = vld [vmem:[#allocation2 + $0x2400] sm:$0xff]
    %v1289 = vld [vmem:[#allocation2 + $0x2408] sm:$0xff]
    %v1290 = vld [vmem:[#allocation2 + $0x2410] sm:$0xff]
    %v1291 = vld [vmem:[#allocation2 + $0x2418] sm:$0xff]
    %v1292 = vld [vmem:[#allocation2 + $0x2420] sm:$0xff]
    %v1293 = vld [vmem:[#allocation2 + $0x2428] sm:$0xff]
    %v1294 = vld [vmem:[#allocation2 + $0x2430] sm:$0xff]
    %v1295 = vld [vmem:[#allocation2 + $0x2438] sm:$0xff]
    %v1296 = vld [vmem:[#allocation2 + $0x2440] sm:$0xff]
    %v1297 = vld [vmem:[#allocation2 + $0x2448] sm:$0xff]
    %v1298 = vld [vmem:[#allocation2 + $0x2450] sm:$0xff]
    %v1299 = vld [vmem:[#allocation2 + $0x2458] sm:$0xff]
    %v1300 = vld [vmem:[#allocation2 + $0x2460] sm:$0xff]
    %v1301 = vld [vmem:[#allocation2 + $0x2468] sm:$0xff]
    %v1302 = vld [vmem:[#allocation2 + $0x2470] sm:$0xff]
    %v1303 = vld [vmem:[#allocation2 + $0x2478] sm:$0xff]
    %v1304 = vld [vmem:[#allocation2 + $0x2480] sm:$0xff]
    %v1305 = vld [vmem:[#allocation2 + $0x2488] sm:$0xff]
    %v1306 = vld [vmem:[#allocation2 + $0x2490] sm:$0xff]
    %v1307 = vld [vmem:[#allocation2 + $0x2498] sm:$0xff]
    %v1308 = vld [vmem:[#allocation2 + $0x24a0] sm:$0xff]
    %v1309 = vld [vmem:[#allocation2 + $0x24a8] sm:$0xff]
    %v1310 = vld [vmem:[#allocation2 + $0x24b0] sm:$0xff]
    %v1311 = vld [vmem:[#allocation2 + $0x24b8] sm:$0xff]
    %v1312 = vld [vmem:[#allocation2 + $0x24c0] sm:$0xff]
    %v1313 = vld [vmem:[#allocation2 + $0x24c8] sm:$0xff]
    %v1314 = vld [vmem:[#allocation2 + $0x24d0] sm:$0xff]
    %v1315 = vld [vmem:[#allocation2 + $0x24d8] sm:$0xff]
    %v1316 = vld [vmem:[#allocation2 + $0x24e0] sm:$0xff]
    %v1317 = vld [vmem:[#allocation2 + $0x24e8] sm:$0xff]
    %v1318 = vld [vmem:[#allocation2 + $0x24f0] sm:$0xff]
    %v1319 = vld [vmem:[#allocation2 + $0x24f8] sm:$0xff]
    %v1320 = vld [vmem:[#allocation2 + $0x2500] sm:$0xff]
    %v1321 = vld [vmem:[#allocation2 + $0x2508] sm:$0xff]
    %v1322 = vld [vmem:[#allocation2 + $0x2510] sm:$0xff]
    %v1323 = vld [vmem:[#allocation2 + $0x2518] sm:$0xff]
    %v1324 = vld [vmem:[#allocation2 + $0x2520] sm:$0xff]
    %v1325 = vld [vmem:[#allocation2 + $0x2528] sm:$0xff]
    %v1326 = vld [vmem:[#allocation2 + $0x2530] sm:$0xff]
    %v1327 = vld [vmem:[#allocation2 + $0x2538] sm:$0xff]
    %v1328 = vld [vmem:[#allocation2 + $0x2540] sm:$0xff]
    %v1329 = vld [vmem:[#allocation2 + $0x2548] sm:$0xff]
    %v1330 = vld [vmem:[#allocation2 + $0x2550] sm:$0xff]
    %v1331 = vld [vmem:[#allocation2 + $0x2558] sm:$0xff]
    %v1332 = vld [vmem:[#allocation2 + $0x2560] sm:$0xff]
    %v1333 = vld [vmem:[#allocation2 + $0x2568] sm:$0xff]
    %v1334 = vld [vmem:[#allocation2 + $0x2570] sm:$0xff]
    %v1335 = vld [vmem:[#allocation2 + $0x2578] sm:$0xff]
    %v1336 = vld [vmem:[#allocation2 + $0x2580] sm:$0xff]
    %v1337 = vld [vmem:[#allocation2 + $0x2588] sm:$0xff]
    %v1338 = vld [vmem:[#allocation2 + $0x2590] sm:$0xff]
    %v1339 = vld [vmem:[#allocation2 + $0x2598] sm:$0xff]
    %v1340 = vld [vmem:[#allocation2 + $0x25a0] sm:$0xff]
    %v1341 = vld [vmem:[#allocation2 + $0x25a8] sm:$0xff]
    %v1342 = vld [vmem:[#allocation2 + $0x25b0] sm:$0xff]
    %v1343 = vld [vmem:[#allocation2 + $0x25b8] sm:$0xff]
    %v1344 = vld [vmem:[#allocation2 + $0x25c0] sm:$0xff]
    %v1345 = vld [vmem:[#allocation2 + $0x25c8] sm:$0xff]
    %v1346 = vld [vmem:[#allocation2 + $0x25d0] sm:$0xff]
    %v1347 = vld [vmem:[#allocation2 + $0x25d8] sm:$0xff]
    %v1348 = vld [vmem:[#allocation2 + $0x25e0] sm:$0xff]
    %v1349 = vld [vmem:[#allocation2 + $0x25e8] sm:$0xff]
    %v1350 = vld [vmem:[#allocation2 + $0x25f0] sm:$0xff]
    %v1351 = vld [vmem:[#allocation2 + $0x25f8] sm:$0xff]
    %v1352 = vld [vmem:[#allocation2 + $0x2600] sm:$0xff]
    %v1353 = vld [vmem:[#allocation2 + $0x2608] sm:$0xff]
    %v1354 = vld [vmem:[#allocation2 + $0x2610] sm:$0xff]
    %v1355 = vld [vmem:[#allocation2 + $0x2618] sm:$0xff]
    %v1356 = vld [vmem:[#allocation2 + $0x2620] sm:$0xff]
    %v1357 = vld [vmem:[#allocation2 + $0x2628] sm:$0xff]
    %v1358 = vld [vmem:[#allocation2 + $0x2630] sm:$0xff]
    %v1359 = vld [vmem:[#allocation2 + $0x2638] sm:$0xff]
    %v1360 = vld [vmem:[#allocation2 + $0x2640] sm:$0xff]
    %v1361 = vld [vmem:[#allocation2 + $0x2648] sm:$0xff]
    %v1362 = vld [vmem:[#allocation2 + $0x2650] sm:$0xff]
    %v1363 = vld [vmem:[#allocation2 + $0x2658] sm:$0xff]
    %v1364 = vld [vmem:[#allocation2 + $0x2660] sm:$0xff]
    %v1365 = vld [vmem:[#allocation2 + $0x2668] sm:$0xff]
    %v1366 = vld [vmem:[#allocation2 + $0x2670] sm:$0xff]
    %v1367 = vld [vmem:[#allocation2 + $0x2678] sm:$0xff]
    %v1368 = vld [vmem:[#allocation2 + $0x2680] sm:$0xff]
    %v1369 = vld [vmem:[#allocation2 + $0x2688] sm:$0xff]
    %v1370 = vld [vmem:[#allocation2 + $0x2690] sm:$0xff]
    %v1371 = vld [vmem:[#allocation2 + $0x2698] sm:$0xff]
    %v1372 = vld [vmem:[#allocation2 + $0x26a0] sm:$0xff]
    %v1373 = vld [vmem:[#allocation2 + $0x26a8] sm:$0xff]
    %v1374 = vld [vmem:[#allocation2 + $0x26b0] sm:$0xff]
    %v1375 = vld [vmem:[#allocation2 + $0x26b8] sm:$0xff]
    %v1376 = vld [vmem:[#allocation2 + $0x26c0] sm:$0xff]
    %v1377 = vld [vmem:[#allocation2 + $0x26c8] sm:$0xff]
    %v1378 = vld [vmem:[#allocation2 + $0x26d0] sm:$0xff]
    %v1379 = vld [vmem:[#allocation2 + $0x26d8] sm:$0xff]
    %v1380 = vld [vmem:[#allocation2 + $0x26e0] sm:$0xff]
    %v1381 = vld [vmem:[#allocation2 + $0x26e8] sm:$0xff]
    %v1382 = vld [vmem:[#allocation2 + $0x26f0] sm:$0xff]
    %v1383 = vld [vmem:[#allocation2 + $0x26f8] sm:$0xff]
    %v1384 = vld [vmem:[#allocation2 + $0x2700] sm:$0xff]
    %v1385 = vld [vmem:[#allocation2 + $0x2708] sm:$0xff]
    %v1386 = vld [vmem:[#allocation2 + $0x2710] sm:$0xff]
    %v1387 = vld [vmem:[#allocation2 + $0x2718] sm:$0xff]
    %v1388 = vld [vmem:[#allocation2 + $0x2720] sm:$0xff]
    %v1389 = vld [vmem:[#allocation2 + $0x2728] sm:$0xff]
    %v1390 = vld [vmem:[#allocation2 + $0x2730] sm:$0xff]
    %v1391 = vld [vmem:[#allocation2 + $0x2738] sm:$0xff]
    %v1392 = vld [vmem:[#allocation2 + $0x2740] sm:$0xff]
    %v1393 = vld [vmem:[#allocation2 + $0x2748] sm:$0xff]
    %v1394 = vld [vmem:[#allocation2 + $0x2750] sm:$0xff]
    %v1395 = vld [vmem:[#allocation2 + $0x2758] sm:$0xff]
    %v1396 = vld [vmem:[#allocation2 + $0x2760] sm:$0xff]
    %v1397 = vld [vmem:[#allocation2 + $0x2768] sm:$0xff]
    %v1398 = vld [vmem:[#allocation2 + $0x2770] sm:$0xff]
    %v1399 = vld [vmem:[#allocation2 + $0x2778] sm:$0xff]
    %v1400 = vld [vmem:[#allocation2 + $0x2780] sm:$0xff]
    %v1401 = vld [vmem:[#allocation2 + $0x2788] sm:$0xff]
    %v1402 = vld [vmem:[#allocation2 + $0x2790] sm:$0xff]
    %v1403 = vld [vmem:[#allocation2 + $0x2798] sm:$0xff]
    %v1404 = vld [vmem:[#allocation2 + $0x27a0] sm:$0xff]
    %v1405 = vld [vmem:[#allocation2 + $0x27a8] sm:$0xff]
    %v1406 = vld [vmem:[#allocation2 + $0x27b0] sm:$0xff]
    %v1407 = vld [vmem:[#allocation2 + $0x27b8] sm:$0xff]
    %v1408 = vld [vmem:[#allocation2 + $0x27c0] sm:$0xff]
    %v1409 = vld [vmem:[#allocation2 + $0x27c8] sm:$0xff]
    %v1410 = vld [vmem:[#allocation2 + $0x27d0] sm:$0xff]
    %v1411 = vld [vmem:[#allocation2 + $0x27d8] sm:$0xff]
    %v1412 = vld [vmem:[#allocation2 + $0x27e0] sm:$0xff]
    %v1413 = vld [vmem:[#allocation2 + $0x27e8] sm:$0xff]
    %v1414 = vld [vmem:[#allocation2 + $0x27f0] sm:$0xff]
    %v1415 = vld [vmem:[#allocation2 + $0x27f8] sm:$0xff]
    %v1416 = vld [vmem:[#allocation2 + $0x2800] sm:$0xff]
    %v1417 = vld [vmem:[#allocation2 + $0x2808] sm:$0xff]
    %v1418 = vld [vmem:[#allocation2 + $0x2810] sm:$0xff]
    %v1419 = vld [vmem:[#allocation2 + $0x2818] sm:$0xff]
    %v1420 = vld [vmem:[#allocation2 + $0x2820] sm:$0xff]
    %v1421 = vld [vmem:[#allocation2 + $0x2828] sm:$0xff]
    %v1422 = vld [vmem:[#allocation2 + $0x2830] sm:$0xff]
    %v1423 = vld [vmem:[#allocation2 + $0x2838] sm:$0xff]
    %v1424 = vld [vmem:[#allocation2 + $0x2840] sm:$0xff]
    %v1425 = vld [vmem:[#allocation2 + $0x2848] sm:$0xff]
    %v1426 = vld [vmem:[#allocation2 + $0x2850] sm:$0xff]
    %v1427 = vld [vmem:[#allocation2 + $0x2858] sm:$0xff]
    %v1428 = vld [vmem:[#allocation2 + $0x2860] sm:$0xff]
    %v1429 = vld [vmem:[#allocation2 + $0x2868] sm:$0xff]
    %v1430 = vld [vmem:[#allocation2 + $0x2870] sm:$0xff]
    %v1431 = vld [vmem:[#allocation2 + $0x2878] sm:$0xff]
    %v1432 = vld [vmem:[#allocation2 + $0x2880] sm:$0xff]
    %v1433 = vld [vmem:[#allocation2 + $0x2888] sm:$0xff]
    %v1434 = vld [vmem:[#allocation2 + $0x2890] sm:$0xff]
    %v1435 = vld [vmem:[#allocation2 + $0x2898] sm:$0xff]
    %v1436 = vld [vmem:[#allocation2 + $0x28a0] sm:$0xff]
    %v1437 = vld [vmem:[#allocation2 + $0x28a8] sm:$0xff]
    %v1438 = vld [vmem:[#allocation2 + $0x28b0] sm:$0xff]
    %v1439 = vld [vmem:[#allocation2 + $0x28b8] sm:$0xff]
    %v1440 = vld [vmem:[#allocation2 + $0x28c0] sm:$0xff]
    %v1441 = vld [vmem:[#allocation2 + $0x28c8] sm:$0xff]
    %v1442 = vld [vmem:[#allocation2 + $0x28d0] sm:$0xff]
    %v1443 = vld [vmem:[#allocation2 + $0x28d8] sm:$0xff]
    %v1444 = vld [vmem:[#allocation2 + $0x28e0] sm:$0xff]
    %v1445 = vld [vmem:[#allocation2 + $0x28e8] sm:$0xff]
    %v1446 = vld [vmem:[#allocation2 + $0x28f0] sm:$0xff]
    %v1447 = vld [vmem:[#allocation2 + $0x28f8] sm:$0xff]
    %v1448 = vld [vmem:[#allocation2 + $0x2900] sm:$0xff]
    %v1449 = vld [vmem:[#allocation2 + $0x2908] sm:$0xff]
    %v1450 = vld [vmem:[#allocation2 + $0x2910] sm:$0xff]
    %v1451 = vld [vmem:[#allocation2 + $0x2918] sm:$0xff]
    %v1452 = vld [vmem:[#allocation2 + $0x2920] sm:$0xff]
    %v1453 = vld [vmem:[#allocation2 + $0x2928] sm:$0xff]
    %v1454 = vld [vmem:[#allocation2 + $0x2930] sm:$0xff]
    %v1455 = vld [vmem:[#allocation2 + $0x2938] sm:$0xff]
    %v1456 = vld [vmem:[#allocation2 + $0x2940] sm:$0xff]
    %v1457 = vld [vmem:[#allocation2 + $0x2948] sm:$0xff]
    %v1458 = vld [vmem:[#allocation2 + $0x2950] sm:$0xff]
    %v1459 = vld [vmem:[#allocation2 + $0x2958] sm:$0xff]
    %v1460 = vld [vmem:[#allocation2 + $0x2960] sm:$0xff]
    %v1461 = vld [vmem:[#allocation2 + $0x2968] sm:$0xff]
    %v1462 = vld [vmem:[#allocation2 + $0x2970] sm:$0xff]
    %v1463 = vld [vmem:[#allocation2 + $0x2978] sm:$0xff]
    %v1464 = vld [vmem:[#allocation2 + $0x2980] sm:$0xff]
    %v1465 = vld [vmem:[#allocation2 + $0x2988] sm:$0xff]
    %v1466 = vld [vmem:[#allocation2 + $0x2990] sm:$0xff]
    %v1467 = vld [vmem:[#allocation2 + $0x2998] sm:$0xff]
    %v1468 = vld [vmem:[#allocation2 + $0x29a0] sm:$0xff]
    %v1469 = vld [vmem:[#allocation2 + $0x29a8] sm:$0xff]
    %v1470 = vld [vmem:[#allocation2 + $0x29b0] sm:$0xff]
    %v1471 = vld [vmem:[#allocation2 + $0x29b8] sm:$0xff]
    %v1472 = vld [vmem:[#allocation2 + $0x29c0] sm:$0xff]
    %v1473 = vld [vmem:[#allocation2 + $0x29c8] sm:$0xff]
    %v1474 = vld [vmem:[#allocation2 + $0x29d0] sm:$0xff]
    %v1475 = vld [vmem:[#allocation2 + $0x29d8] sm:$0xff]
    %v1476 = vld [vmem:[#allocation2 + $0x29e0] sm:$0xff]
    %v1477 = vld [vmem:[#allocation2 + $0x29e8] sm:$0xff]
    %v1478 = vld [vmem:[#allocation2 + $0x29f0] sm:$0xff]
    %v1479 = vld [vmem:[#allocation2 + $0x29f8] sm:$0xff]
    %v1480 = vld [vmem:[#allocation2 + $0x2a00] sm:$0xff]
    %v1481 = vld [vmem:[#allocation2 + $0x2a08] sm:$0xff]
    %v1482 = vld [vmem:[#allocation2 + $0x2a10] sm:$0xff]
    %v1483 = vld [vmem:[#allocation2 + $0x2a18] sm:$0xff]
    %v1484 = vld [vmem:[#allocation2 + $0x2a20] sm:$0xff]
    %v1485 = vld [vmem:[#allocation2 + $0x2a28] sm:$0xff]
    %v1486 = vld [vmem:[#allocation2 + $0x2a30] sm:$0xff]
    %v1487 = vld [vmem:[#allocation2 + $0x2a38] sm:$0xff]
    %v1488 = vld [vmem:[#allocation2 + $0x2a40] sm:$0xff]
    %v1489 = vld [vmem:[#allocation2 + $0x2a48] sm:$0xff]
    %v1490 = vld [vmem:[#allocation2 + $0x2a50] sm:$0xff]
    %v1491 = vld [vmem:[#allocation2 + $0x2a58] sm:$0xff]
    %v1492 = vld [vmem:[#allocation2 + $0x2a60] sm:$0xff]
    %v1493 = vld [vmem:[#allocation2 + $0x2a68] sm:$0xff]
    %v1494 = vld [vmem:[#allocation2 + $0x2a70] sm:$0xff]
    %v1495 = vld [vmem:[#allocation2 + $0x2a78] sm:$0xff]
    %v1496 = vld [vmem:[#allocation2 + $0x2a80] sm:$0xff]
    %v1497 = vld [vmem:[#allocation2 + $0x2a88] sm:$0xff]
    %v1498 = vld [vmem:[#allocation2 + $0x2a90] sm:$0xff]
    %v1499 = vld [vmem:[#allocation2 + $0x2a98] sm:$0xff]
    %v1500 = vld [vmem:[#allocation2 + $0x2aa0] sm:$0xff]
    %v1501 = vld [vmem:[#allocation2 + $0x2aa8] sm:$0xff]
    %v1502 = vld [vmem:[#allocation2 + $0x2ab0] sm:$0xff]
    %v1503 = vld [vmem:[#allocation2 + $0x2ab8] sm:$0xff]
    %v1504 = vld [vmem:[#allocation2 + $0x2ac0] sm:$0xff]
    %v1505 = vld [vmem:[#allocation2 + $0x2ac8] sm:$0xff]
    %v1506 = vld [vmem:[#allocation2 + $0x2ad0] sm:$0xff]
    %v1507 = vld [vmem:[#allocation2 + $0x2ad8] sm:$0xff]
    %v1508 = vld [vmem:[#allocation2 + $0x2ae0] sm:$0xff]
    %v1509 = vld [vmem:[#allocation2 + $0x2ae8] sm:$0xff]
    %v1510 = vld [vmem:[#allocation2 + $0x2af0] sm:$0xff]
    %v1511 = vld [vmem:[#allocation2 + $0x2af8] sm:$0xff]
    %v1512 = vld [vmem:[#allocation2 + $0x2b00] sm:$0xff]
    %v1513 = vld [vmem:[#allocation2 + $0x2b08] sm:$0xff]
    %v1514 = vld [vmem:[#allocation2 + $0x2b10] sm:$0xff]
    %v1515 = vld [vmem:[#allocation2 + $0x2b18] sm:$0xff]
    %v1516 = vld [vmem:[#allocation2 + $0x2b20] sm:$0xff]
    %v1517 = vld [vmem:[#allocation2 + $0x2b28] sm:$0xff]
    %v1518 = vld [vmem:[#allocation2 + $0x2b30] sm:$0xff]
    %v1519 = vld [vmem:[#allocation2 + $0x2b38] sm:$0xff]
    %v1520 = vld [vmem:[#allocation2 + $0x2b40] sm:$0xff]
    %v1521 = vld [vmem:[#allocation2 + $0x2b48] sm:$0xff]
    %v1522 = vld [vmem:[#allocation2 + $0x2b50] sm:$0xff]
    %v1523 = vld [vmem:[#allocation2 + $0x2b58] sm:$0xff]
    %v1524 = vld [vmem:[#allocation2 + $0x2b60] sm:$0xff]
    %v1525 = vld [vmem:[#allocation2 + $0x2b68] sm:$0xff]
    %v1526 = vld [vmem:[#allocation2 + $0x2b70] sm:$0xff]
    %v1527 = vld [vmem:[#allocation2 + $0x2b78] sm:$0xff]
    %v1528 = vld [vmem:[#allocation2 + $0x2b80] sm:$0xff]
    %v1529 = vld [vmem:[#allocation2 + $0x2b88] sm:$0xff]
    %v1530 = vld [vmem:[#allocation2 + $0x2b90] sm:$0xff]
    %v1531 = vld [vmem:[#allocation2 + $0x2b98] sm:$0xff]
    %v1532 = vld [vmem:[#allocation2 + $0x2ba0] sm:$0xff]
    %v1533 = vld [vmem:[#allocation2 + $0x2ba8] sm:$0xff]
    %v1534 = vld [vmem:[#allocation2 + $0x2bb0] sm:$0xff]
    %v1535 = vld [vmem:[#allocation2 + $0x2bb8] sm:$0xff]
    %v1536 = vld [vmem:[#allocation2 + $0x2bc0] sm:$0xff]
    %v1537 = vld [vmem:[#allocation2 + $0x2bc8] sm:$0xff]
    %v1538 = vld [vmem:[#allocation2 + $0x2bd0] sm:$0xff]
    %v1539 = vld [vmem:[#allocation2 + $0x2bd8] sm:$0xff]
    %v1540 = vld [vmem:[#allocation2 + $0x2be0] sm:$0xff]
    %v1541 = vld [vmem:[#allocation2 + $0x2be8] sm:$0xff]
    %v1542 = vld [vmem:[#allocation2 + $0x2bf0] sm:$0xff]
    %v1543 = vld [vmem:[#allocation2 + $0x2bf8] sm:$0xff]
    %v1544 = vld [vmem:[#allocation2 + $0x2c00] sm:$0xff]
    %v1545 = vld [vmem:[#allocation2 + $0x2c08] sm:$0xff]
    %v1546 = vld [vmem:[#allocation2 + $0x2c10] sm:$0xff]
    %v1547 = vld [vmem:[#allocation2 + $0x2c18] sm:$0xff]
    %v1548 = vld [vmem:[#allocation2 + $0x2c20] sm:$0xff]
    %v1549 = vld [vmem:[#allocation2 + $0x2c28] sm:$0xff]
    %v1550 = vld [vmem:[#allocation2 + $0x2c30] sm:$0xff]
    %v1551 = vld [vmem:[#allocation2 + $0x2c38] sm:$0xff]
    %v1552 = vld [vmem:[#allocation2 + $0x2c40] sm:$0xff]
    %v1553 = vld [vmem:[#allocation2 + $0x2c48] sm:$0xff]
    %v1554 = vld [vmem:[#allocation2 + $0x2c50] sm:$0xff]
    %v1555 = vld [vmem:[#allocation2 + $0x2c58] sm:$0xff]
    %v1556 = vld [vmem:[#allocation2 + $0x2c60] sm:$0xff]
    %v1557 = vld [vmem:[#allocation2 + $0x2c68] sm:$0xff]
    %v1558 = vld [vmem:[#allocation2 + $0x2c70] sm:$0xff]
    %v1559 = vld [vmem:[#allocation2 + $0x2c78] sm:$0xff]
    %v1560 = vld [vmem:[#allocation2 + $0x2c80] sm:$0xff]
    %v1561 = vld [vmem:[#allocation2 + $0x2c88] sm:$0xff]
    %v1562 = vld [vmem:[#allocation2 + $0x2c90] sm:$0xff]
    %v1563 = vld [vmem:[#allocation2 + $0x2c98] sm:$0xff]
    %v1564 = vld [vmem:[#allocation2 + $0x2ca0] sm:$0xff]
    %v1565 = vld [vmem:[#allocation2 + $0x2ca8] sm:$0xff]
    %v1566 = vld [vmem:[#allocation2 + $0x2cb0] sm:$0xff]
    %v1567 = vld [vmem:[#allocation2 + $0x2cb8] sm:$0xff]
    %v1568 = vld [vmem:[#allocation2 + $0x2cc0] sm:$0xff]
    %v1569 = vld [vmem:[#allocation2 + $0x2cc8] sm:$0xff]
    %v1570 = vld [vmem:[#allocation2 + $0x2cd0] sm:$0xff]
    %v1571 = vld [vmem:[#allocation2 + $0x2cd8] sm:$0xff]
    %v1572 = vld [vmem:[#allocation2 + $0x2ce0] sm:$0xff]
    %v1573 = vld [vmem:[#allocation2 + $0x2ce8] sm:$0xff]
    %v1574 = vld [vmem:[#allocation2 + $0x2cf0] sm:$0xff]
    %v1575 = vld [vmem:[#allocation2 + $0x2cf8] sm:$0xff]
    %v1576 = vld [vmem:[#allocation2 + $0x2d00] sm:$0xff]
    %v1577 = vld [vmem:[#allocation2 + $0x2d08] sm:$0xff]
    %v1578 = vld [vmem:[#allocation2 + $0x2d10] sm:$0xff]
    %v1579 = vld [vmem:[#allocation2 + $0x2d18] sm:$0xff]
    %v1580 = vld [vmem:[#allocation2 + $0x2d20] sm:$0xff]
    %v1581 = vld [vmem:[#allocation2 + $0x2d28] sm:$0xff]
    %v1582 = vld [vmem:[#allocation2 + $0x2d30] sm:$0xff]
    %v1583 = vld [vmem:[#allocation2 + $0x2d38] sm:$0xff]
    %v1584 = vld [vmem:[#allocation2 + $0x2d40] sm:$0xff]
    %v1585 = vld [vmem:[#allocation2 + $0x2d48] sm:$0xff]
    %v1586 = vld [vmem:[#allocation2 + $0x2d50] sm:$0xff]
    %v1587 = vld [vmem:[#allocation2 + $0x2d58] sm:$0xff]
    %v1588 = vld [vmem:[#allocation2 + $0x2d60] sm:$0xff]
    %v1589 = vld [vmem:[#allocation2 + $0x2d68] sm:$0xff]
    %v1590 = vld [vmem:[#allocation2 + $0x2d70] sm:$0xff]
    %v1591 = vld [vmem:[#allocation2 + $0x2d78] sm:$0xff]
    %v1592 = vld [vmem:[#allocation2 + $0x2d80] sm:$0xff]
    %v1593 = vld [vmem:[#allocation2 + $0x2d88] sm:$0xff]
    %v1594 = vld [vmem:[#allocation2 + $0x2d90] sm:$0xff]
    %v1595 = vld [vmem:[#allocation2 + $0x2d98] sm:$0xff]
    %v1596 = vld [vmem:[#allocation2 + $0x2da0] sm:$0xff]
    %v1597 = vld [vmem:[#allocation2 + $0x2da8] sm:$0xff]
    %v1598 = vld [vmem:[#allocation2 + $0x2db0] sm:$0xff]
    %v1599 = vld [vmem:[#allocation2 + $0x2db8] sm:$0xff]
    %v1600 = vld [vmem:[#allocation2 + $0x2dc0] sm:$0xff]
    %v1601 = vld [vmem:[#allocation2 + $0x2dc8] sm:$0xff]
    %v1602 = vld [vmem:[#allocation2 + $0x2dd0] sm:$0xff]
    %v1603 = vld [vmem:[#allocation2 + $0x2dd8] sm:$0xff]
    %v1604 = vld [vmem:[#allocation2 + $0x2de0] sm:$0xff]
    %v1605 = vld [vmem:[#allocation2 + $0x2de8] sm:$0xff]
    %v1606 = vld [vmem:[#allocation2 + $0x2df0] sm:$0xff]
    %v1607 = vld [vmem:[#allocation2 + $0x2df8] sm:$0xff]
    %v1608 = vld [vmem:[#allocation2 + $0x2e00] sm:$0xff]
    %v1609 = vld [vmem:[#allocation2 + $0x2e08] sm:$0xff]
    %v1610 = vld [vmem:[#allocation2 + $0x2e10] sm:$0xff]
    %v1611 = vld [vmem:[#allocation2 + $0x2e18] sm:$0xff]
    %v1612 = vld [vmem:[#allocation2 + $0x2e20] sm:$0xff]
    %v1613 = vld [vmem:[#allocation2 + $0x2e28] sm:$0xff]
    %v1614 = vld [vmem:[#allocation2 + $0x2e30] sm:$0xff]
    %v1615 = vld [vmem:[#allocation2 + $0x2e38] sm:$0xff]
    %v1616 = vld [vmem:[#allocation2 + $0x2e40] sm:$0xff]
    %v1617 = vld [vmem:[#allocation2 + $0x2e48] sm:$0xff]
    %v1618 = vld [vmem:[#allocation2 + $0x2e50] sm:$0xff]
    %v1619 = vld [vmem:[#allocation2 + $0x2e58] sm:$0xff]
    %v1620 = vld [vmem:[#allocation2 + $0x2e60] sm:$0xff]
    %v1621 = vld [vmem:[#allocation2 + $0x2e68] sm:$0xff]
    %v1622 = vld [vmem:[#allocation2 + $0x2e70] sm:$0xff]
    %v1623 = vld [vmem:[#allocation2 + $0x2e78] sm:$0xff]
    %v1624 = vld [vmem:[#allocation2 + $0x2e80] sm:$0xff]
    %v1625 = vld [vmem:[#allocation2 + $0x2e88] sm:$0xff]
    %v1626 = vld [vmem:[#allocation2 + $0x2e90] sm:$0xff]
    %v1627 = vld [vmem:[#allocation2 + $0x2e98] sm:$0xff]
    %v1628 = vld [vmem:[#allocation2 + $0x2ea0] sm:$0xff]
    %v1629 = vld [vmem:[#allocation2 + $0x2ea8] sm:$0xff]
    %v1630 = vld [vmem:[#allocation2 + $0x2eb0] sm:$0xff]
    %v1631 = vld [vmem:[#allocation2 + $0x2eb8] sm:$0xff]
    %v1632 = vld [vmem:[#allocation2 + $0x2ec0] sm:$0xff]
    %v1633 = vld [vmem:[#allocation2 + $0x2ec8] sm:$0xff]
    %v1634 = vld [vmem:[#allocation2 + $0x2ed0] sm:$0xff]
    %v1635 = vld [vmem:[#allocation2 + $0x2ed8] sm:$0xff]
    %v1636 = vld [vmem:[#allocation2 + $0x2ee0] sm:$0xff]
    %v1637 = vld [vmem:[#allocation2 + $0x2ee8] sm:$0xff]
    %v1638 = vld [vmem:[#allocation2 + $0x2ef0] sm:$0xff]
    %v1639 = vld [vmem:[#allocation2 + $0x2ef8] sm:$0xff]
    %v1640 = vld [vmem:[#allocation2 + $0x2f00] sm:$0xff]
    %v1641 = vld [vmem:[#allocation2 + $0x2f08] sm:$0xff]
    %v1642 = vld [vmem:[#allocation2 + $0x2f10] sm:$0xff]
    %v1643 = vld [vmem:[#allocation2 + $0x2f18] sm:$0xff]
    %v1644 = vld [vmem:[#allocation2 + $0x2f20] sm:$0xff]
    %v1645 = vld [vmem:[#allocation2 + $0x2f28] sm:$0xff]
    %v1646 = vld [vmem:[#allocation2 + $0x2f30] sm:$0xff]
    %v1647 = vld [vmem:[#allocation2 + $0x2f38] sm:$0xff]
    %v1648 = vld [vmem:[#allocation2 + $0x2f40] sm:$0xff]
    %v1649 = vld [vmem:[#allocation2 + $0x2f48] sm:$0xff]
    %v1650 = vld [vmem:[#allocation2 + $0x2f50] sm:$0xff]
    %v1651 = vld [vmem:[#allocation2 + $0x2f58] sm:$0xff]
    %v1652 = vld [vmem:[#allocation2 + $0x2f60] sm:$0xff]
    %v1653 = vld [vmem:[#allocation2 + $0x2f68] sm:$0xff]
    %v1654 = vld [vmem:[#allocation2 + $0x2f70] sm:$0xff]
    %v1655 = vld [vmem:[#allocation2 + $0x2f78] sm:$0xff]
    %v1656 = vld [vmem:[#allocation2 + $0x2f80] sm:$0xff]
    %v1657 = vld [vmem:[#allocation2 + $0x2f88] sm:$0xff]
    %v1658 = vld [vmem:[#allocation2 + $0x2f90] sm:$0xff]
    %v1659 = vld [vmem:[#allocation2 + $0x2f98] sm:$0xff]
    %v1660 = vld [vmem:[#allocation2 + $0x2fa0] sm:$0xff]
    %v1661 = vld [vmem:[#allocation2 + $0x2fa8] sm:$0xff]
    %v1662 = vld [vmem:[#allocation2 + $0x2fb0] sm:$0xff]
    %v1663 = vld [vmem:[#allocation2 + $0x2fb8] sm:$0xff]
    %v1664 = vld [vmem:[#allocation2 + $0x2fc0] sm:$0xff]
    %v1665 = vld [vmem:[#allocation2 + $0x2fc8] sm:$0xff]
    %v1666 = vld [vmem:[#allocation2 + $0x2fd0] sm:$0xff]
    %v1667 = vld [vmem:[#allocation2 + $0x2fd8] sm:$0xff]
    %v1668 = vld [vmem:[#allocation2 + $0x2fe0] sm:$0xff]
    %v1669 = vld [vmem:[#allocation2 + $0x2fe8] sm:$0xff]
    %v1670 = vld [vmem:[#allocation2 + $0x2ff0] sm:$0xff]
    %v1671 = vld [vmem:[#allocation2 + $0x2ff8] sm:$0xff]
    %v1672 = vld [vmem:[#allocation2 + $0x3000] sm:$0xff]
    %v1673 = vld [vmem:[#allocation2 + $0x3008] sm:$0xff]
    %v1674 = vld [vmem:[#allocation2 + $0x3010] sm:$0xff]
    %v1675 = vld [vmem:[#allocation2 + $0x3018] sm:$0xff]
    %v1676 = vld [vmem:[#allocation2 + $0x3020] sm:$0xff]
    %v1677 = vld [vmem:[#allocation2 + $0x3028] sm:$0xff]
    %v1678 = vld [vmem:[#allocation2 + $0x3030] sm:$0xff]
    %v1679 = vld [vmem:[#allocation2 + $0x3038] sm:$0xff]
    %v1680 = vld [vmem:[#allocation2 + $0x3040] sm:$0xff]
    %v1681 = vld [vmem:[#allocation2 + $0x3048] sm:$0xff]
    %v1682 = vld [vmem:[#allocation2 + $0x3050] sm:$0xff]
    %v1683 = vld [vmem:[#allocation2 + $0x3058] sm:$0xff]
    %v1684 = vld [vmem:[#allocation2 + $0x3060] sm:$0xff]
    %v1685 = vld [vmem:[#allocation2 + $0x3068] sm:$0xff]
    %v1686 = vld [vmem:[#allocation2 + $0x3070] sm:$0xff]
    %v1687 = vld [vmem:[#allocation2 + $0x3078] sm:$0xff]
    %v1688 = vld [vmem:[#allocation2 + $0x3080] sm:$0xff]
    %v1689 = vld [vmem:[#allocation2 + $0x3088] sm:$0xff]
    %v1690 = vld [vmem:[#allocation2 + $0x3090] sm:$0xff]
    %v1691 = vld [vmem:[#allocation2 + $0x3098] sm:$0xff]
    %v1692 = vld [vmem:[#allocation2 + $0x30a0] sm:$0xff]
    %v1693 = vld [vmem:[#allocation2 + $0x30a8] sm:$0xff]
    %v1694 = vld [vmem:[#allocation2 + $0x30b0] sm:$0xff]
    %v1695 = vld [vmem:[#allocation2 + $0x30b8] sm:$0xff]
    %v1696 = vld [vmem:[#allocation2 + $0x30c0] sm:$0xff]
    %v1697 = vld [vmem:[#allocation2 + $0x30c8] sm:$0xff]
    %v1698 = vld [vmem:[#allocation2 + $0x30d0] sm:$0xff]
    %v1699 = vld [vmem:[#allocation2 + $0x30d8] sm:$0xff]
    %v1700 = vld [vmem:[#allocation2 + $0x30e0] sm:$0xff]
    %v1701 = vld [vmem:[#allocation2 + $0x30e8] sm:$0xff]
    %v1702 = vld [vmem:[#allocation2 + $0x30f0] sm:$0xff]
    %v1703 = vld [vmem:[#allocation2 + $0x30f8] sm:$0xff]
    %v1704 = vld [vmem:[#allocation2 + $0x3100] sm:$0xff]
    %v1705 = vld [vmem:[#allocation2 + $0x3108] sm:$0xff]
    %v1706 = vld [vmem:[#allocation2 + $0x3110] sm:$0xff]
    %v1707 = vld [vmem:[#allocation2 + $0x3118] sm:$0xff]
    %v1708 = vld [vmem:[#allocation2 + $0x3120] sm:$0xff]
    %v1709 = vld [vmem:[#allocation2 + $0x3128] sm:$0xff]
    %v1710 = vld [vmem:[#allocation2 + $0x3130] sm:$0xff]
    %v1711 = vld [vmem:[#allocation2 + $0x3138] sm:$0xff]
    %v1712 = vld [vmem:[#allocation2 + $0x3140] sm:$0xff]
    %v1713 = vld [vmem:[#allocation2 + $0x3148] sm:$0xff]
    %v1714 = vld [vmem:[#allocation2 + $0x3150] sm:$0xff]
    %v1715 = vld [vmem:[#allocation2 + $0x3158] sm:$0xff]
    %v1716 = vld [vmem:[#allocation2 + $0x3160] sm:$0xff]
    %v1717 = vld [vmem:[#allocation2 + $0x3168] sm:$0xff]
    %v1718 = vld [vmem:[#allocation2 + $0x3170] sm:$0xff]
    %v1719 = vld [vmem:[#allocation2 + $0x3178] sm:$0xff]
    %v1720 = vld [vmem:[#allocation2 + $0x3180] sm:$0xff]
    %v1721 = vld [vmem:[#allocation2 + $0x3188] sm:$0xff]
    %v1722 = vld [vmem:[#allocation2 + $0x3190] sm:$0xff]
    %v1723 = vld [vmem:[#allocation2 + $0x3198] sm:$0xff]
    %v1724 = vld [vmem:[#allocation2 + $0x31a0] sm:$0xff]
    %v1725 = vld [vmem:[#allocation2 + $0x31a8] sm:$0xff]
    %v1726 = vld [vmem:[#allocation2 + $0x31b0] sm:$0xff]
    %v1727 = vld [vmem:[#allocation2 + $0x31b8] sm:$0xff]
    %v1728 = vld [vmem:[#allocation2 + $0x31c0] sm:$0xff]
    %v1729 = vld [vmem:[#allocation2 + $0x31c8] sm:$0xff]
    %v1730 = vld [vmem:[#allocation2 + $0x31d0] sm:$0xff]
    %v1731 = vld [vmem:[#allocation2 + $0x31d8] sm:$0xff]
    %v1732 = vld [vmem:[#allocation2 + $0x31e0] sm:$0xff]
    %v1733 = vld [vmem:[#allocation2 + $0x31e8] sm:$0xff]
    %v1734 = vld [vmem:[#allocation2 + $0x31f0] sm:$0xff]
    %v1735 = vld [vmem:[#allocation2 + $0x31f8] sm:$0xff]
    %v1736 = vld [vmem:[#allocation2 + $0x3200] sm:$0xff]
    %v1737 = vld [vmem:[#allocation2 + $0x3208] sm:$0xff]
    %v1738 = vld [vmem:[#allocation2 + $0x3210] sm:$0xff]
    %v1739 = vld [vmem:[#allocation2 + $0x3218] sm:$0xff]
    %v1740 = vld [vmem:[#allocation2 + $0x3220] sm:$0xff]
    %v1741 = vld [vmem:[#allocation2 + $0x3228] sm:$0xff]
    %v1742 = vld [vmem:[#allocation2 + $0x3230] sm:$0xff]
    %v1743 = vld [vmem:[#allocation2 + $0x3238] sm:$0xff]
    %v1744 = vld [vmem:[#allocation2 + $0x3240] sm:$0xff]
    %v1745 = vld [vmem:[#allocation2 + $0x3248] sm:$0xff]
    %v1746 = vld [vmem:[#allocation2 + $0x3250] sm:$0xff]
    %v1747 = vld [vmem:[#allocation2 + $0x3258] sm:$0xff]
    %v1748 = vld [vmem:[#allocation2 + $0x3260] sm:$0xff]
    %v1749 = vld [vmem:[#allocation2 + $0x3268] sm:$0xff]
    %v1750 = vld [vmem:[#allocation2 + $0x3270] sm:$0xff]
    %v1751 = vld [vmem:[#allocation2 + $0x3278] sm:$0xff]
    %v1752 = vld [vmem:[#allocation2 + $0x3280] sm:$0xff]
    %v1753 = vld [vmem:[#allocation2 + $0x3288] sm:$0xff]
    %v1754 = vld [vmem:[#allocation2 + $0x3290] sm:$0xff]
    %v1755 = vld [vmem:[#allocation2 + $0x3298] sm:$0xff]
    %v1756 = vld [vmem:[#allocation2 + $0x32a0] sm:$0xff]
    %v1757 = vld [vmem:[#allocation2 + $0x32a8] sm:$0xff]
    %v1758 = vld [vmem:[#allocation2 + $0x32b0] sm:$0xff]
    %v1759 = vld [vmem:[#allocation2 + $0x32b8] sm:$0xff]
    %v1760 = vld [vmem:[#allocation2 + $0x32c0] sm:$0xff]
    %v1761 = vld [vmem:[#allocation2 + $0x32c8] sm:$0xff]
    %v1762 = vld [vmem:[#allocation2 + $0x32d0] sm:$0xff]
    %v1763 = vld [vmem:[#allocation2 + $0x32d8] sm:$0xff]
    %v1764 = vld [vmem:[#allocation2 + $0x32e0] sm:$0xff]
    %v1765 = vld [vmem:[#allocation2 + $0x32e8] sm:$0xff]
    %v1766 = vld [vmem:[#allocation2 + $0x32f0] sm:$0xff]
    %v1767 = vld [vmem:[#allocation2 + $0x32f8] sm:$0xff]
    %v1768 = vld [vmem:[#allocation2 + $0x3300] sm:$0xff]
    %v1769 = vld [vmem:[#allocation2 + $0x3308] sm:$0xff]
    %v1770 = vld [vmem:[#allocation2 + $0x3310] sm:$0xff]
    %v1771 = vld [vmem:[#allocation2 + $0x3318] sm:$0xff]
    %v1772 = vld [vmem:[#allocation2 + $0x3320] sm:$0xff]
    %v1773 = vld [vmem:[#allocation2 + $0x3328] sm:$0xff]
    %v1774 = vld [vmem:[#allocation2 + $0x3330] sm:$0xff]
    %v1775 = vld [vmem:[#allocation2 + $0x3338] sm:$0xff]
    %v1776 = vld [vmem:[#allocation2 + $0x3340] sm:$0xff]
    %v1777 = vld [vmem:[#allocation2 + $0x3348] sm:$0xff]
    %v1778 = vld [vmem:[#allocation2 + $0x3350] sm:$0xff]
    %v1779 = vld [vmem:[#allocation2 + $0x3358] sm:$0xff]
    %v1780 = vld [vmem:[#allocation2 + $0x3360] sm:$0xff]
    %v1781 = vld [vmem:[#allocation2 + $0x3368] sm:$0xff]
    %v1782 = vld [vmem:[#allocation2 + $0x3370] sm:$0xff]
    %v1783 = vld [vmem:[#allocation2 + $0x3378] sm:$0xff]
    %v1784 = vld [vmem:[#allocation2 + $0x3380] sm:$0xff]
    %v1785 = vld [vmem:[#allocation2 + $0x3388] sm:$0xff]
    %v1786 = vld [vmem:[#allocation2 + $0x3390] sm:$0xff]
    %v1787 = vld [vmem:[#allocation2 + $0x3398] sm:$0xff]
    %v1788 = vld [vmem:[#allocation2 + $0x33a0] sm:$0xff]
    %v1789 = vld [vmem:[#allocation2 + $0x33a8] sm:$0xff]
    %v1790 = vld [vmem:[#allocation2 + $0x33b0] sm:$0xff]
    %v1791 = vld [vmem:[#allocation2 + $0x33b8] sm:$0xff]
    %v1792 = vld [vmem:[#allocation2 + $0x33c0] sm:$0xff]
    %v1793 = vld [vmem:[#allocation2 + $0x33c8] sm:$0xff]
    %v1794 = vld [vmem:[#allocation2 + $0x33d0] sm:$0xff]
    %v1795 = vld [vmem:[#allocation2 + $0x33d8] sm:$0xff]
    %v1796 = vld [vmem:[#allocation2 + $0x33e0] sm:$0xff]
    %v1797 = vld [vmem:[#allocation2 + $0x33e8] sm:$0xff]
    %v1798 = vld [vmem:[#allocation2 + $0x33f0] sm:$0xff]
    %v1799 = vld [vmem:[#allocation2 + $0x33f8] sm:$0xff]
    %v1800 = vld [vmem:[#allocation2 + $0x3400] sm:$0xff]
    %v1801 = vld [vmem:[#allocation2 + $0x3408] sm:$0xff]
    %v1802 = vld [vmem:[#allocation2 + $0x3410] sm:$0xff]
    %v1803 = vld [vmem:[#allocation2 + $0x3418] sm:$0xff]
    %v1804 = vld [vmem:[#allocation2 + $0x3420] sm:$0xff]
    %v1805 = vld [vmem:[#allocation2 + $0x3428] sm:$0xff]
    %v1806 = vld [vmem:[#allocation2 + $0x3430] sm:$0xff]
    %v1807 = vld [vmem:[#allocation2 + $0x3438] sm:$0xff]
    %v1808 = vld [vmem:[#allocation2 + $0x3440] sm:$0xff]
    %v1809 = vld [vmem:[#allocation2 + $0x3448] sm:$0xff]
    %v1810 = vld [vmem:[#allocation2 + $0x3450] sm:$0xff]
    %v1811 = vld [vmem:[#allocation2 + $0x3458] sm:$0xff]
    %v1812 = vld [vmem:[#allocation2 + $0x3460] sm:$0xff]
    %v1813 = vld [vmem:[#allocation2 + $0x3468] sm:$0xff]
    %v1814 = vld [vmem:[#allocation2 + $0x3470] sm:$0xff]
    %v1815 = vld [vmem:[#allocation2 + $0x3478] sm:$0xff]
    %v1816 = vld [vmem:[#allocation2 + $0x3480] sm:$0xff]
    %v1817 = vld [vmem:[#allocation2 + $0x3488] sm:$0xff]
    %v1818 = vld [vmem:[#allocation2 + $0x3490] sm:$0xff]
    %v1819 = vld [vmem:[#allocation2 + $0x3498] sm:$0xff]
    %v1820 = vld [vmem:[#allocation2 + $0x34a0] sm:$0xff]
    %v1821 = vld [vmem:[#allocation2 + $0x34a8] sm:$0xff]
    %v1822 = vld [vmem:[#allocation2 + $0x34b0] sm:$0xff]
    %v1823 = vld [vmem:[#allocation2 + $0x34b8] sm:$0xff]
    %v1824 = vld [vmem:[#allocation2 + $0x34c0] sm:$0xff]
    %v1825 = vld [vmem:[#allocation2 + $0x34c8] sm:$0xff]
    %v1826 = vld [vmem:[#allocation2 + $0x34d0] sm:$0xff]
    %v1827 = vld [vmem:[#allocation2 + $0x34d8] sm:$0xff]
    %v1828 = vld [vmem:[#allocation2 + $0x34e0] sm:$0xff]
    %v1829 = vld [vmem:[#allocation2 + $0x34e8] sm:$0xff]
    %v1830 = vld [vmem:[#allocation2 + $0x34f0] sm:$0xff]
    %v1831 = vld [vmem:[#allocation2 + $0x34f8] sm:$0xff]
    %v1832 = vld [vmem:[#allocation2 + $0x3500] sm:$0xff]
    %v1833 = vld [vmem:[#allocation2 + $0x3508] sm:$0xff]
    %v1834 = vld [vmem:[#allocation2 + $0x3510] sm:$0xff]
    %v1835 = vld [vmem:[#allocation2 + $0x3518] sm:$0xff]
    %v1836 = vld [vmem:[#allocation2 + $0x3520] sm:$0xff]
    %v1837 = vld [vmem:[#allocation2 + $0x3528] sm:$0xff]
    %v1838 = vld [vmem:[#allocation2 + $0x3530] sm:$0xff]
    %v1839 = vld [vmem:[#allocation2 + $0x3538] sm:$0xff]
    %v1840 = vld [vmem:[#allocation2 + $0x3540] sm:$0xff]
    %v1841 = vld [vmem:[#allocation2 + $0x3548] sm:$0xff]
    %v1842 = vld [vmem:[#allocation2 + $0x3550] sm:$0xff]
    %v1843 = vld [vmem:[#allocation2 + $0x3558] sm:$0xff]
    %v1844 = vld [vmem:[#allocation2 + $0x3560] sm:$0xff]
    %v1845 = vld [vmem:[#allocation2 + $0x3568] sm:$0xff]
    %v1846 = vld [vmem:[#allocation2 + $0x3570] sm:$0xff]
    %v1847 = vld [vmem:[#allocation2 + $0x3578] sm:$0xff]
    %v1848 = vld [vmem:[#allocation2 + $0x3580] sm:$0xff]
    %v1849 = vld [vmem:[#allocation2 + $0x3588] sm:$0xff]
    %v1850 = vld [vmem:[#allocation2 + $0x3590] sm:$0xff]
    %v1851 = vld [vmem:[#allocation2 + $0x3598] sm:$0xff]
    %v1852 = vld [vmem:[#allocation2 + $0x35a0] sm:$0xff]
    %v1853 = vld [vmem:[#allocation2 + $0x35a8] sm:$0xff]
    %v1854 = vld [vmem:[#allocation2 + $0x35b0] sm:$0xff]
    %v1855 = vld [vmem:[#allocation2 + $0x35b8] sm:$0xff]
    %v1856 = vld [vmem:[#allocation2 + $0x35c0] sm:$0xff]
    %v1857 = vld [vmem:[#allocation2 + $0x35c8] sm:$0xff]
    %v1858 = vld [vmem:[#allocation2 + $0x35d0] sm:$0xff]
    %v1859 = vld [vmem:[#allocation2 + $0x35d8] sm:$0xff]
    %v1860 = vld [vmem:[#allocation2 + $0x35e0] sm:$0xff]
    %v1861 = vld [vmem:[#allocation2 + $0x35e8] sm:$0xff]
    %v1862 = vld [vmem:[#allocation2 + $0x35f0] sm:$0xff]
    %v1863 = vld [vmem:[#allocation2 + $0x35f8] sm:$0xff]
    %v1864 = vld [vmem:[#allocation2 + $0x3600] sm:$0xff]
    %v1865 = vld [vmem:[#allocation2 + $0x3608] sm:$0xff]
    %v1866 = vld [vmem:[#allocation2 + $0x3610] sm:$0xff]
    %v1867 = vld [vmem:[#allocation2 + $0x3618] sm:$0xff]
    %v1868 = vld [vmem:[#allocation2 + $0x3620] sm:$0xff]
    %v1869 = vld [vmem:[#allocation2 + $0x3628] sm:$0xff]
    %v1870 = vld [vmem:[#allocation2 + $0x3630] sm:$0xff]
    %v1871 = vld [vmem:[#allocation2 + $0x3638] sm:$0xff]
    %v1872 = vld [vmem:[#allocation2 + $0x3640] sm:$0xff]
    %v1873 = vld [vmem:[#allocation2 + $0x3648] sm:$0xff]
    %v1874 = vld [vmem:[#allocation2 + $0x3650] sm:$0xff]
    %v1875 = vld [vmem:[#allocation2 + $0x3658] sm:$0xff]
    %v1876 = vld [vmem:[#allocation2 + $0x3660] sm:$0xff]
    %v1877 = vld [vmem:[#allocation2 + $0x3668] sm:$0xff]
    %v1878 = vld [vmem:[#allocation2 + $0x3670] sm:$0xff]
    %v1879 = vld [vmem:[#allocation2 + $0x3678] sm:$0xff]
    %v1880 = vld [vmem:[#allocation2 + $0x3680] sm:$0xff]
    %v1881 = vld [vmem:[#allocation2 + $0x3688] sm:$0xff]
    %v1882 = vld [vmem:[#allocation2 + $0x3690] sm:$0xff]
    %v1883 = vld [vmem:[#allocation2 + $0x3698] sm:$0xff]
    %v1884 = vld [vmem:[#allocation2 + $0x36a0] sm:$0xff]
    %v1885 = vld [vmem:[#allocation2 + $0x36a8] sm:$0xff]
    %v1886 = vld [vmem:[#allocation2 + $0x36b0] sm:$0xff]
    %v1887 = vld [vmem:[#allocation2 + $0x36b8] sm:$0xff]
    %v1888 = vld [vmem:[#allocation2 + $0x36c0] sm:$0xff]
    %v1889 = vld [vmem:[#allocation2 + $0x36c8] sm:$0xff]
    %v1890 = vld [vmem:[#allocation2 + $0x36d0] sm:$0xff]
    %v1891 = vld [vmem:[#allocation2 + $0x36d8] sm:$0xff]
    %v1892 = vld [vmem:[#allocation2 + $0x36e0] sm:$0xff]
    %v1893 = vld [vmem:[#allocation2 + $0x36e8] sm:$0xff]
    %v1894 = vld [vmem:[#allocation2 + $0x36f0] sm:$0xff]
    %v1895 = vld [vmem:[#allocation2 + $0x36f8] sm:$0xff]
    %v1896 = vld [vmem:[#allocation2 + $0x3700] sm:$0xff]
    %v1897 = vld [vmem:[#allocation2 + $0x3708] sm:$0xff]
    %v1898 = vld [vmem:[#allocation2 + $0x3710] sm:$0xff]
    %v1899 = vld [vmem:[#allocation2 + $0x3718] sm:$0xff]
    %v1900 = vld [vmem:[#allocation2 + $0x3720] sm:$0xff]
    %v1901 = vld [vmem:[#allocation2 + $0x3728] sm:$0xff]
    %v1902 = vld [vmem:[#allocation2 + $0x3730] sm:$0xff]
    %v1903 = vld [vmem:[#allocation2 + $0x3738] sm:$0xff]
    %v1904 = vld [vmem:[#allocation2 + $0x3740] sm:$0xff]
    %v1905 = vld [vmem:[#allocation2 + $0x3748] sm:$0xff]
    %v1906 = vld [vmem:[#allocation2 + $0x3750] sm:$0xff]
    %v1907 = vld [vmem:[#allocation2 + $0x3758] sm:$0xff]
    %v1908 = vld [vmem:[#allocation2 + $0x3760] sm:$0xff]
    %v1909 = vld [vmem:[#allocation2 + $0x3768] sm:$0xff]
    %v1910 = vld [vmem:[#allocation2 + $0x3770] sm:$0xff]
    %v1911 = vld [vmem:[#allocation2 + $0x3778] sm:$0xff]
    %v1912 = vld [vmem:[#allocation2 + $0x3780] sm:$0xff]
    %v1913 = vld [vmem:[#allocation2 + $0x3788] sm:$0xff]
    %v1914 = vld [vmem:[#allocation2 + $0x3790] sm:$0xff]
    %v1915 = vld [vmem:[#allocation2 + $0x3798] sm:$0xff]
    %v1916 = vld [vmem:[#allocation2 + $0x37a0] sm:$0xff]
    %v1917 = vld [vmem:[#allocation2 + $0x37a8] sm:$0xff]
    %v1918 = vld [vmem:[#allocation2 + $0x37b0] sm:$0xff]
    %v1919 = vld [vmem:[#allocation2 + $0x37b8] sm:$0xff]
    %v1920 = vld [vmem:[#allocation2 + $0x37c0] sm:$0xff]
    %v1921 = vld [vmem:[#allocation2 + $0x37c8] sm:$0xff]
    %v1922 = vld [vmem:[#allocation2 + $0x37d0] sm:$0xff]
    %v1923 = vld [vmem:[#allocation2 + $0x37d8] sm:$0xff]
    %v1924 = vld [vmem:[#allocation2 + $0x37e0] sm:$0xff]
    %v1925 = vld [vmem:[#allocation2 + $0x37e8] sm:$0xff]
    %v1926 = vld [vmem:[#allocation2 + $0x37f0] sm:$0xff]
    %v1927 = vld [vmem:[#allocation2 + $0x37f8] sm:$0xff]
    %v1928 = vld [vmem:[#allocation2 + $0x3800] sm:$0xff]
    %v1929 = vld [vmem:[#allocation2 + $0x3808] sm:$0xff]
    %v1930 = vld [vmem:[#allocation2 + $0x3810] sm:$0xff]
    %v1931 = vld [vmem:[#allocation2 + $0x3818] sm:$0xff]
    %v1932 = vld [vmem:[#allocation2 + $0x3820] sm:$0xff]
    %v1933 = vld [vmem:[#allocation2 + $0x3828] sm:$0xff]
    %v1934 = vld [vmem:[#allocation2 + $0x3830] sm:$0xff]
    %v1935 = vld [vmem:[#allocation2 + $0x3838] sm:$0xff]
    %v1936 = vld [vmem:[#allocation2 + $0x3840] sm:$0xff]
    %v1937 = vld [vmem:[#allocation2 + $0x3848] sm:$0xff]
    %v1938 = vld [vmem:[#allocation2 + $0x3850] sm:$0xff]
    %v1939 = vld [vmem:[#allocation2 + $0x3858] sm:$0xff]
    %v1940 = vld [vmem:[#allocation2 + $0x3860] sm:$0xff]
    %v1941 = vld [vmem:[#allocation2 + $0x3868] sm:$0xff]
    %v1942 = vld [vmem:[#allocation2 + $0x3870] sm:$0xff]
    %v1943 = vld [vmem:[#allocation2 + $0x3878] sm:$0xff]
    %v1944 = vld [vmem:[#allocation2 + $0x3880] sm:$0xff]
    %v1945 = vld [vmem:[#allocation2 + $0x3888] sm:$0xff]
    %v1946 = vld [vmem:[#allocation2 + $0x3890] sm:$0xff]
    %v1947 = vld [vmem:[#allocation2 + $0x3898] sm:$0xff]
    %v1948 = vld [vmem:[#allocation2 + $0x38a0] sm:$0xff]
    %v1949 = vld [vmem:[#allocation2 + $0x38a8] sm:$0xff]
    %v1950 = vld [vmem:[#allocation2 + $0x38b0] sm:$0xff]
    %v1951 = vld [vmem:[#allocation2 + $0x38b8] sm:$0xff]
    %v1952 = vld [vmem:[#allocation2 + $0x38c0] sm:$0xff]
    %v1953 = vld [vmem:[#allocation2 + $0x38c8] sm:$0xff]
    %v1954 = vld [vmem:[#allocation2 + $0x38d0] sm:$0xff]
    %v1955 = vld [vmem:[#allocation2 + $0x38d8] sm:$0xff]
    %v1956 = vld [vmem:[#allocation2 + $0x38e0] sm:$0xff]
    %v1957 = vld [vmem:[#allocation2 + $0x38e8] sm:$0xff]
    %v1958 = vld [vmem:[#allocation2 + $0x38f0] sm:$0xff]
    %v1959 = vld [vmem:[#allocation2 + $0x38f8] sm:$0xff]
    %v1960 = vld [vmem:[#allocation2 + $0x3900] sm:$0xff]
    %v1961 = vld [vmem:[#allocation2 + $0x3908] sm:$0xff]
    %v1962 = vld [vmem:[#allocation2 + $0x3910] sm:$0xff]
    %v1963 = vld [vmem:[#allocation2 + $0x3918] sm:$0xff]
    %v1964 = vld [vmem:[#allocation2 + $0x3920] sm:$0xff]
    %v1965 = vld [vmem:[#allocation2 + $0x3928] sm:$0xff]
    %v1966 = vld [vmem:[#allocation2 + $0x3930] sm:$0xff]
    %v1967 = vld [vmem:[#allocation2 + $0x3938] sm:$0xff]
    %v1968 = vld [vmem:[#allocation2 + $0x3940] sm:$0xff]
    %v1969 = vld [vmem:[#allocation2 + $0x3948] sm:$0xff]
    %v1970 = vld [vmem:[#allocation2 + $0x3950] sm:$0xff]
    %v1971 = vld [vmem:[#allocation2 + $0x3958] sm:$0xff]
    %v1972 = vld [vmem:[#allocation2 + $0x3960] sm:$0xff]
    %v1973 = vld [vmem:[#allocation2 + $0x3968] sm:$0xff]
    %v1974 = vld [vmem:[#allocation2 + $0x3970] sm:$0xff]
    %v1975 = vld [vmem:[#allocation2 + $0x3978] sm:$0xff]
    %v1976 = vld [vmem:[#allocation2 + $0x3980] sm:$0xff]
    %v1977 = vld [vmem:[#allocation2 + $0x3988] sm:$0xff]
    %v1978 = vld [vmem:[#allocation2 + $0x3990] sm:$0xff]
    %v1979 = vld [vmem:[#allocation2 + $0x3998] sm:$0xff]
    %v1980 = vld [vmem:[#allocation2 + $0x39a0] sm:$0xff]
    %v1981 = vld [vmem:[#allocation2 + $0x39a8] sm:$0xff]
    %v1982 = vld [vmem:[#allocation2 + $0x39b0] sm:$0xff]
    %v1983 = vld [vmem:[#allocation2 + $0x39b8] sm:$0xff]
    %v1984 = vld [vmem:[#allocation2 + $0x39c0] sm:$0xff]
    %v1985 = vld [vmem:[#allocation2 + $0x39c8] sm:$0xff]
    %v1986 = vld [vmem:[#allocation2 + $0x39d0] sm:$0xff]
    %v1987 = vld [vmem:[#allocation2 + $0x39d8] sm:$0xff]
    %v1988 = vld [vmem:[#allocation2 + $0x39e0] sm:$0xff]
    %v1989 = vld [vmem:[#allocation2 + $0x39e8] sm:$0xff]
    %v1990 = vld [vmem:[#allocation2 + $0x39f0] sm:$0xff]
    %v1991 = vld [vmem:[#allocation2 + $0x39f8] sm:$0xff]
    %v1992 = vld [vmem:[#allocation2 + $0x3a00] sm:$0xff]
    %v1993 = vld [vmem:[#allocation2 + $0x3a08] sm:$0xff]
    %v1994 = vld [vmem:[#allocation2 + $0x3a10] sm:$0xff]
    %v1995 = vld [vmem:[#allocation2 + $0x3a18] sm:$0xff]
    %v1996 = vld [vmem:[#allocation2 + $0x3a20] sm:$0xff]
    %v1997 = vld [vmem:[#allocation2 + $0x3a28] sm:$0xff]
    %v1998 = vld [vmem:[#allocation2 + $0x3a30] sm:$0xff]
    %v1999 = vld [vmem:[#allocation2 + $0x3a38] sm:$0xff]
    %v2000 = vld [vmem:[#allocation2 + $0x3a40] sm:$0xff]
    %v2001 = vld [vmem:[#allocation2 + $0x3a48] sm:$0xff]
    %v2002 = vld [vmem:[#allocation2 + $0x3a50] sm:$0xff]
    %v2003 = vld [vmem:[#allocation2 + $0x3a58] sm:$0xff]
    %v2004 = vld [vmem:[#allocation2 + $0x3a60] sm:$0xff]
    %v2005 = vld [vmem:[#allocation2 + $0x3a68] sm:$0xff]
    %v2006 = vld [vmem:[#allocation2 + $0x3a70] sm:$0xff]
    %v2007 = vld [vmem:[#allocation2 + $0x3a78] sm:$0xff]
    %v2008 = vld [vmem:[#allocation2 + $0x3a80] sm:$0xff]
    %v2009 = vld [vmem:[#allocation2 + $0x3a88] sm:$0xff]
    %v2010 = vld [vmem:[#allocation2 + $0x3a90] sm:$0xff]
    %v2011 = vld [vmem:[#allocation2 + $0x3a98] sm:$0xff]
    %v2012 = vld [vmem:[#allocation2 + $0x3aa0] sm:$0xff]
    %v2013 = vld [vmem:[#allocation2 + $0x3aa8] sm:$0xff]
    %v2014 = vld [vmem:[#allocation2 + $0x3ab0] sm:$0xff]
    %v2015 = vld [vmem:[#allocation2 + $0x3ab8] sm:$0xff]
    %v2016 = vld [vmem:[#allocation2 + $0x3ac0] sm:$0xff]
    %v2017 = vld [vmem:[#allocation2 + $0x3ac8] sm:$0xff]
    %v2018 = vld [vmem:[#allocation2 + $0x3ad0] sm:$0xff]
    %v2019 = vld [vmem:[#allocation2 + $0x3ad8] sm:$0xff]
    %v2020 = vld [vmem:[#allocation2 + $0x3ae0] sm:$0xff]
    %v2021 = vld [vmem:[#allocation2 + $0x3ae8] sm:$0xff]
    %v2022 = vld [vmem:[#allocation2 + $0x3af0] sm:$0xff]
    %v2023 = vld [vmem:[#allocation2 + $0x3af8] sm:$0xff]
    %v2024 = vld [vmem:[#allocation2 + $0x3b00] sm:$0xff]
    %v2025 = vld [vmem:[#allocation2 + $0x3b08] sm:$0xff]
    %v2026 = vld [vmem:[#allocation2 + $0x3b10] sm:$0xff]
    %v2027 = vld [vmem:[#allocation2 + $0x3b18] sm:$0xff]
    %v2028 = vld [vmem:[#allocation2 + $0x3b20] sm:$0xff]
    %v2029 = vld [vmem:[#allocation2 + $0x3b28] sm:$0xff]
    %v2030 = vld [vmem:[#allocation2 + $0x3b30] sm:$0xff]
    %v2031 = vld [vmem:[#allocation2 + $0x3b38] sm:$0xff]
    %v2032 = vld [vmem:[#allocation2 + $0x3b40] sm:$0xff]
    %v2033 = vld [vmem:[#allocation2 + $0x3b48] sm:$0xff]
    %v2034 = vld [vmem:[#allocation2 + $0x3b50] sm:$0xff]
    %v2035 = vld [vmem:[#allocation2 + $0x3b58] sm:$0xff]
    %v2036 = vld [vmem:[#allocation2 + $0x3b60] sm:$0xff]
    %v2037 = vld [vmem:[#allocation2 + $0x3b68] sm:$0xff]
    %v2038 = vld [vmem:[#allocation2 + $0x3b70] sm:$0xff]
    %v2039 = vld [vmem:[#allocation2 + $0x3b78] sm:$0xff]
    %v2040 = vld [vmem:[#allocation2 + $0x3b80] sm:$0xff]
    %v2041 = vld [vmem:[#allocation2 + $0x3b88] sm:$0xff]
    %v2042 = vld [vmem:[#allocation2 + $0x3b90] sm:$0xff]
    %v2043 = vld [vmem:[#allocation2 + $0x3b98] sm:$0xff]
    %v2044 = vld [vmem:[#allocation2 + $0x3ba0] sm:$0xff]
    %v2045 = vld [vmem:[#allocation2 + $0x3ba8] sm:$0xff]
    %v2046 = vld [vmem:[#allocation2 + $0x3bb0] sm:$0xff]
    %v2047 = vld [vmem:[#allocation2 + $0x3bb8] sm:$0xff]
    %v2048 = vld [vmem:[#allocation2 + $0x3bc0] sm:$0xff]
    %v2049 = vld [vmem:[#allocation2 + $0x3bc8] sm:$0xff]
    %v2050 = vld [vmem:[#allocation2 + $0x3bd0] sm:$0xff]
    %v2051 = vld [vmem:[#allocation2 + $0x3bd8] sm:$0xff]
    %v2052 = vld [vmem:[#allocation2 + $0x3be0] sm:$0xff]
    %v2053 = vld [vmem:[#allocation2 + $0x3be8] sm:$0xff]
    %v2054 = vld [vmem:[#allocation2 + $0x3bf0] sm:$0xff]
    %v2055 = vld [vmem:[#allocation2 + $0x3bf8] sm:$0xff]
    %v2056 = vld [vmem:[#allocation2 + $0x3c00] sm:$0xff]
    %v2057 = vld [vmem:[#allocation2 + $0x3c08] sm:$0xff]
    %v2058 = vld [vmem:[#allocation2 + $0x3c10] sm:$0xff]
    %v2059 = vld [vmem:[#allocation2 + $0x3c18] sm:$0xff]
    %v2060 = vld [vmem:[#allocation2 + $0x3c20] sm:$0xff]
    %v2061 = vld [vmem:[#allocation2 + $0x3c28] sm:$0xff]
    %v2062 = vld [vmem:[#allocation2 + $0x3c30] sm:$0xff]
    %v2063 = vld [vmem:[#allocation2 + $0x3c38] sm:$0xff]
    %v2064 = vld [vmem:[#allocation2 + $0x3c40] sm:$0xff]
    %v2065 = vld [vmem:[#allocation2 + $0x3c48] sm:$0xff]
    %v2066 = vld [vmem:[#allocation2 + $0x3c50] sm:$0xff]
    %v2067 = vld [vmem:[#allocation2 + $0x3c58] sm:$0xff]
    %v2068 = vld [vmem:[#allocation2 + $0x3c60] sm:$0xff]
    %v2069 = vld [vmem:[#allocation2 + $0x3c68] sm:$0xff]
    %v2070 = vld [vmem:[#allocation2 + $0x3c70] sm:$0xff]
    %v2071 = vld [vmem:[#allocation2 + $0x3c78] sm:$0xff]
    %v2072 = vld [vmem:[#allocation2 + $0x3c80] sm:$0xff]
    %v2073 = vld [vmem:[#allocation2 + $0x3c88] sm:$0xff]
    %v2074 = vld [vmem:[#allocation2 + $0x3c90] sm:$0xff]
    %v2075 = vld [vmem:[#allocation2 + $0x3c98] sm:$0xff]
    %v2076 = vld [vmem:[#allocation2 + $0x3ca0] sm:$0xff]
    %v2077 = vld [vmem:[#allocation2 + $0x3ca8] sm:$0xff]
    %v2078 = vld [vmem:[#allocation2 + $0x3cb0] sm:$0xff]
    %v2079 = vld [vmem:[#allocation2 + $0x3cb8] sm:$0xff]
    %v2080 = vld [vmem:[#allocation2 + $0x3cc0] sm:$0xff]
    %v2081 = vld [vmem:[#allocation2 + $0x3cc8] sm:$0xff]
    %v2082 = vld [vmem:[#allocation2 + $0x3cd0] sm:$0xff]
    %v2083 = vld [vmem:[#allocation2 + $0x3cd8] sm:$0xff]
    %v2084 = vld [vmem:[#allocation2 + $0x3ce0] sm:$0xff]
    %v2085 = vld [vmem:[#allocation2 + $0x3ce8] sm:$0xff]
    %v2086 = vld [vmem:[#allocation2 + $0x3cf0] sm:$0xff]
    %v2087 = vld [vmem:[#allocation2 + $0x3cf8] sm:$0xff]
    %v2088 = vld [vmem:[#allocation2 + $0x3d00] sm:$0xff]
    %v2089 = vld [vmem:[#allocation2 + $0x3d08] sm:$0xff]
    %v2090 = vld [vmem:[#allocation2 + $0x3d10] sm:$0xff]
    %v2091 = vld [vmem:[#allocation2 + $0x3d18] sm:$0xff]
    %v2092 = vld [vmem:[#allocation2 + $0x3d20] sm:$0xff]
    %v2093 = vld [vmem:[#allocation2 + $0x3d28] sm:$0xff]
    %v2094 = vld [vmem:[#allocation2 + $0x3d30] sm:$0xff]
    %v2095 = vld [vmem:[#allocation2 + $0x3d38] sm:$0xff]
    %v2096 = vld [vmem:[#allocation2 + $0x3d40] sm:$0xff]
    %v2097 = vld [vmem:[#allocation2 + $0x3d48] sm:$0xff]
    %v2098 = vld [vmem:[#allocation2 + $0x3d50] sm:$0xff]
    %v2099 = vld [vmem:[#allocation2 + $0x3d58] sm:$0xff]
    %v2100 = vld [vmem:[#allocation2 + $0x3d60] sm:$0xff]
    %v2101 = vld [vmem:[#allocation2 + $0x3d68] sm:$0xff]
    %v2102 = vld [vmem:[#allocation2 + $0x3d70] sm:$0xff]
    %v2103 = vld [vmem:[#allocation2 + $0x3d78] sm:$0xff]
    %v2104 = vld [vmem:[#allocation2 + $0x3d80] sm:$0xff]
    %v2105 = vld [vmem:[#allocation2 + $0x3d88] sm:$0xff]
    %v2106 = vld [vmem:[#allocation2 + $0x3d90] sm:$0xff]
    %v2107 = vld [vmem:[#allocation2 + $0x3d98] sm:$0xff]
    %v2108 = vld [vmem:[#allocation2 + $0x3da0] sm:$0xff]
    %v2109 = vld [vmem:[#allocation2 + $0x3da8] sm:$0xff]
    %v2110 = vld [vmem:[#allocation2 + $0x3db0] sm:$0xff]
    %v2111 = vld [vmem:[#allocation2 + $0x3db8] sm:$0xff]
    %v2112 = vld [vmem:[#allocation2 + $0x3dc0] sm:$0xff]
    %v2113 = vld [vmem:[#allocation2 + $0x3dc8] sm:$0xff]
    %v2114 = vld [vmem:[#allocation2 + $0x3dd0] sm:$0xff]
    %v2115 = vld [vmem:[#allocation2 + $0x3dd8] sm:$0xff]
    %v2116 = vld [vmem:[#allocation2 + $0x3de0] sm:$0xff]
    %v2117 = vld [vmem:[#allocation2 + $0x3de8] sm:$0xff]
    %v2118 = vld [vmem:[#allocation2 + $0x3df0] sm:$0xff]
    %v2119 = vld [vmem:[#allocation2 + $0x3df8] sm:$0xff]
    %v2120 = vld [vmem:[#allocation2 + $0x3e00] sm:$0xff]
    %v2121 = vld [vmem:[#allocation2 + $0x3e08] sm:$0xff]
    %v2122 = vld [vmem:[#allocation2 + $0x3e10] sm:$0xff]
    %v2123 = vld [vmem:[#allocation2 + $0x3e18] sm:$0xff]
    %v2124 = vld [vmem:[#allocation2 + $0x3e20] sm:$0xff]
    %v2125 = vld [vmem:[#allocation2 + $0x3e28] sm:$0xff]
    %v2126 = vld [vmem:[#allocation2 + $0x3e30] sm:$0xff]
    %v2127 = vld [vmem:[#allocation2 + $0x3e38] sm:$0xff]
    %v2128 = vld [vmem:[#allocation2 + $0x3e40] sm:$0xff]
    %v2129 = vld [vmem:[#allocation2 + $0x3e48] sm:$0xff]
    %v2130 = vld [vmem:[#allocation2 + $0x3e50] sm:$0xff]
    %v2131 = vld [vmem:[#allocation2 + $0x3e58] sm:$0xff]
    %v2132 = vld [vmem:[#allocation2 + $0x3e60] sm:$0xff]
    %v2133 = vld [vmem:[#allocation2 + $0x3e68] sm:$0xff]
    %v2134 = vld [vmem:[#allocation2 + $0x3e70] sm:$0xff]
    %v2135 = vld [vmem:[#allocation2 + $0x3e78] sm:$0xff]
    %v2136 = vld [vmem:[#allocation2 + $0x3e80] sm:$0xff]
    %v2137 = vld [vmem:[#allocation2 + $0x3e88] sm:$0xff]
    %v2138 = vld [vmem:[#allocation2 + $0x3e90] sm:$0xff]
    %v2139 = vld [vmem:[#allocation2 + $0x3e98] sm:$0xff]
    %v2140 = vld [vmem:[#allocation2 + $0x3ea0] sm:$0xff]
    %v2141 = vld [vmem:[#allocation2 + $0x3ea8] sm:$0xff]
    %v2142 = vld [vmem:[#allocation2 + $0x3eb0] sm:$0xff]
    %v2143 = vld [vmem:[#allocation2 + $0x3eb8] sm:$0xff]
    %v2144 = vld [vmem:[#allocation2 + $0x3ec0] sm:$0xff]
    %v2145 = vld [vmem:[#allocation2 + $0x3ec8] sm:$0xff]
    %v2146 = vld [vmem:[#allocation2 + $0x3ed0] sm:$0xff]
    %v2147 = vld [vmem:[#allocation2 + $0x3ed8] sm:$0xff]
    %v2148 = vld [vmem:[#allocation2 + $0x3ee0] sm:$0xff]
    %v2149 = vld [vmem:[#allocation2 + $0x3ee8] sm:$0xff]
    %v2150 = vld [vmem:[#allocation2 + $0x3ef0] sm:$0xff]
    %v2151 = vld [vmem:[#allocation2 + $0x3ef8] sm:$0xff]
    %v2152 = vld [vmem:[#allocation2 + $0x3f00] sm:$0xff]
    %v2153 = vld [vmem:[#allocation2 + $0x3f08] sm:$0xff]
    %v2154 = vld [vmem:[#allocation2 + $0x3f10] sm:$0xff]
    %v2155 = vld [vmem:[#allocation2 + $0x3f18] sm:$0xff]
    %v2156 = vld [vmem:[#allocation2 + $0x3f20] sm:$0xff]
    %v2157 = vld [vmem:[#allocation2 + $0x3f28] sm:$0xff]
    %v2158 = vld [vmem:[#allocation2 + $0x3f30] sm:$0xff]
    %v2159 = vld [vmem:[#allocation2 + $0x3f38] sm:$0xff]
    %v2160 = vld [vmem:[#allocation2 + $0x3f40] sm:$0xff]
    %v2161 = vld [vmem:[#allocation2 + $0x3f48] sm:$0xff]
    %v2162 = vld [vmem:[#allocation2 + $0x3f50] sm:$0xff]
    %v2163 = vld [vmem:[#allocation2 + $0x3f58] sm:$0xff]
    %v2164 = vld [vmem:[#allocation2 + $0x3f60] sm:$0xff]
    %v2165 = vld [vmem:[#allocation2 + $0x3f68] sm:$0xff]
    %v2166 = vld [vmem:[#allocation2 + $0x3f70] sm:$0xff]
    %v2167 = vld [vmem:[#allocation2 + $0x3f78] sm:$0xff]
    %v2168 = vld [vmem:[#allocation2 + $0x3f80] sm:$0xff]
    %v2169 = vld [vmem:[#allocation2 + $0x3f88] sm:$0xff]
    %v2170 = vld [vmem:[#allocation2 + $0x3f90] sm:$0xff]
    %v2171 = vld [vmem:[#allocation2 + $0x3f98] sm:$0xff]
    %v2172 = vld [vmem:[#allocation2 + $0x3fa0] sm:$0xff]
    %v2173 = vld [vmem:[#allocation2 + $0x3fa8] sm:$0xff]
    %v2174 = vld [vmem:[#allocation2 + $0x3fb0] sm:$0xff]
    %v2175 = vld [vmem:[#allocation2 + $0x3fb8] sm:$0xff]
    %v2176 = vld [vmem:[#allocation2 + $0x3fc0] sm:$0xff]
    %v2177 = vld [vmem:[#allocation2 + $0x3fc8] sm:$0xff]
    %v2178 = vld [vmem:[#allocation2 + $0x3fd0] sm:$0xff]
    %v2179 = vld [vmem:[#allocation2 + $0x3fd8] sm:$0xff]
    %v2180 = vld [vmem:[#allocation2 + $0x3fe0] sm:$0xff]
    %v2181 = vld [vmem:[#allocation2 + $0x3fe8] sm:$0xff]
    %v2182 = vld [vmem:[#allocation2 + $0x3ff0] sm:$0xff]
    %v2183 = vld [vmem:[#allocation2 + $0x3ff8] sm:$0xff]
    %v2184 = vld [vmem:[#allocation5] sm:$0xff]
    %v2185 = vld [vmem:[#allocation5 + $0x8] sm:$0xff]
    %v2188 = vlaneseq
    %v2189 = vshrl.u32 %v2188, 7
    %v2190 = vsub.s32 0, %v2189
    %v2191 = vrot.slane %v2184, %v2190
    %v2192 = vlaneseq
    %v2193 = vshrl.u32 %v2192, 7
    %v2194 = vsub.s32 1, %v2193
    %v2195 = vrot.slane %v2184, %v2194
    %v2196 = vlaneseq
    %v2197 = vshrl.u32 %v2196, 7
    %v2198 = vsub.s32 2, %v2197
    %v2199 = vrot.slane %v2184, %v2198
    %v2200 = vlaneseq
    %v2201 = vshrl.u32 %v2200, 7
    %v2202 = vsub.s32 3, %v2201
    %v2203 = vrot.slane %v2184, %v2202
    %v2204 = vlaneseq
    %v2205 = vshrl.u32 %v2204, 7
    %v2206 = vsub.s32 4, %v2205
    %v2207 = vrot.slane %v2184, %v2206
    %v2208 = vlaneseq
    %v2209 = vshrl.u32 %v2208, 7
    %v2210 = vsub.s32 5, %v2209
    %v2211 = vrot.slane %v2184, %v2210
    %v2212 = vlaneseq
    %v2213 = vshrl.u32 %v2212, 7
    %v2214 = vsub.s32 6, %v2213
    %v2215 = vrot.slane %v2184, %v2214
    %v2216 = vlaneseq
    %v2217 = vshrl.u32 %v2216, 7
    %v2218 = vsub.s32 7, %v2217
    %v2219 = vrot.slane %v2184, %v2218
    %v2220 = vlaneseq
    %v2221 = vshrl.u32 %v2220, 7
    %v2222 = vsub.s32 0, %v2221
    %v2223 = vrot.slane %v2185, %v2222
    %v2224 = vlaneseq
    %v2225 = vshrl.u32 %v2224, 7
    %v2226 = vsub.s32 1, %v2225
    %v2227 = vrot.slane %v2185, %v2226
    %v2228 = vlaneseq
    %v2229 = vshrl.u32 %v2228, 7
    %v2230 = vsub.s32 2, %v2229
    %v2231 = vrot.slane %v2185, %v2230
    %v2232 = vlaneseq
    %v2233 = vshrl.u32 %v2232, 7
    %v2234 = vsub.s32 3, %v2233
    %v2235 = vrot.slane %v2185, %v2234
    %v2236 = vlaneseq
    %v2237 = vshrl.u32 %v2236, 7
    %v2238 = vsub.s32 4, %v2237
    %v2239 = vrot.slane %v2185, %v2238
    %v2240 = vlaneseq
    %v2241 = vshrl.u32 %v2240, 7
    %v2242 = vsub.s32 5, %v2241
    %v2243 = vrot.slane %v2185, %v2242
    %v2244 = vlaneseq
    %v2245 = vshrl.u32 %v2244, 7
    %v2246 = vsub.s32 6, %v2245
    %v2247 = vrot.slane %v2185, %v2246
    %v2248 = vlaneseq
    %v2249 = vshrl.u32 %v2248, 7
    %v2250 = vsub.s32 7, %v2249
    %v2251 = vrot.slane %v2185, %v2250
    %v2270 = vcombine.high %v134, %v134
    %v2272 = vunpack.c.l.s4 1983009808
    %v2273 = vunpack.c.0.s8 %v2272
    %v2274 = vlaneseq
    %v2275 = vshrl.u32 %v2274, 7
    %v2276 = vsub.s32 %v2273, %v2275
    %v2277 = vrot.slane %v134, %v2276
    %v2279 = vunpack.c.l.s4 1983009808
    %v2280 = vunpack.c.0.s8 %v2279
    %v2281 = vlaneseq
    %v2282 = vshrl.u32 %v2281, 7
    %v2283 = vsub.s32 %v2280, %v2282
    %v2284 = vrot.slane %v2270, %v2283
    %v2285 = vcombine.high %v2277, %v2277
    %v2286 = vcombine.high %v2284, %v2284
    %v2287 = vcombine.high %v135, %v135
    %v2289 = vunpack.c.l.s4 1983009808
    %v2290 = vunpack.c.0.s8 %v2289
    %v2291 = vlaneseq
    %v2292 = vshrl.u32 %v2291, 7
    %v2293 = vsub.s32 %v2290, %v2292
    %v2294 = vrot.slane %v135, %v2293
    %v2296 = vunpack.c.l.s4 1983009808
    %v2297 = vunpack.c.0.s8 %v2296
    %v2298 = vlaneseq
    %v2299 = vshrl.u32 %v2298, 7
    %v2300 = vsub.s32 %v2297, %v2299
    %v2301 = vrot.slane %v2287, %v2300
    %v2302 = vcombine.high %v2294, %v2294
    %v2303 = vcombine.high %v2301, %v2301
    %2312 = vmatprep.subr.mxu0 %v377
    %2313 = vmatpush1.msra.mxu0 %v376
    %2314 = vmatprep.subr.mxu0 %v361
    %2315 = vmatpush1.msra.mxu0 %v360
    %2316 = vmatprep.subr.mxu0 %v345
    %2317 = vmatpush1.msra.mxu0 %v344
    %2318 = vmatprep.subr.mxu0 %v329
    %2319 = vmatpush1.msra.mxu0 %v328
    %2320 = vmatprep.subr.mxu0 %v313
    %2321 = vmatpush1.msra.mxu0 %v312
    %2322 = vmatprep.subr.mxu0 %v297
    %2323 = vmatpush1.msra.mxu0 %v296
    %2324 = vmatprep.subr.mxu0 %v281
    %2325 = vmatpush1.msra.mxu0 %v280
    %2326 = vmatprep.subr.mxu0 %v265
    %2327 = vmatpush1.msra.mxu0 %v264
    %2328 = vmatprep.subr.mxu0 %v249
    %2329 = vmatpush1.msra.mxu0 %v248
    %2330 = vmatprep.subr.mxu0 %v233
    %2331 = vmatpush1.msra.mxu0 %v232
    %2332 = vmatprep.subr.mxu0 %v217
    %2333 = vmatpush1.msra.mxu0 %v216
    %2334 = vmatprep.subr.mxu0 %v201
    %2335 = vmatpush1.msra.mxu0 %v200
    %2336 = vmatprep.subr.mxu0 %v185
    %2337 = vmatpush1.msra.mxu0 %v184
    %2338 = vmatprep.subr.mxu0 %v169
    %2339 = vmatpush1.msra.mxu0 %v168
    %2340 = vmatprep.subr.mxu0 %v153
    %2341 = vmatpush1.msra.mxu0 %v152
    %2342 = vmatprep.subr.mxu0 %v137
    %2343 = vmatpush1.msra.mxu0 %v136
    %2344 = vmatprep.subr.mxu0 %v633
    %2345 = vmatpush2.msra.mxu0 %v632
    %2346 = vmatprep.subr.mxu0 %v617
    %2347 = vmatpush2.msra.mxu0 %v616
    %2348 = vmatprep.subr.mxu0 %v601
    %2349 = vmatpush2.msra.mxu0 %v600
    %2350 = vmatprep.subr.mxu0 %v585
    %2351 = vmatpush2.msra.mxu0 %v584
    %2352 = vmatprep.subr.mxu0 %v569
    %2353 = vmatpush2.msra.mxu0 %v568
    %2354 = vmatprep.subr.mxu0 %v553
    %2355 = vmatpush2.msra.mxu0 %v552
    %2356 = vmatprep.subr.mxu0 %v537
    %2357 = vmatpush2.msra.mxu0 %v536
    %2358 = vmatprep.subr.mxu0 %v521
    %2359 = vmatpush2.msra.mxu0 %v520
    %2360 = vmatprep.subr.mxu0 %v505
    %2361 = vmatpush2.msra.mxu0 %v504
    %2362 = vmatprep.subr.mxu0 %v489
    %2363 = vmatpush2.msra.mxu0 %v488
    %2364 = vmatprep.subr.mxu0 %v473
    %2365 = vmatpush2.msra.mxu0 %v472
    %2366 = vmatprep.subr.mxu0 %v457
    %2367 = vmatpush2.msra.mxu0 %v456
    %2368 = vmatprep.subr.mxu0 %v441
    %2369 = vmatpush2.msra.mxu0 %v440
    %2370 = vmatprep.subr.mxu0 %v425
    %2371 = vmatpush2.msra.mxu0 %v424
    %2372 = vmatprep.subr.mxu0 %v409
    %2373 = vmatpush2.msra.mxu0 %v408
    %2374 = vmatprep.subr.mxu0 %v393
    %2375 = vmatpush2.msra.mxu0 %v392
    %2376 = vmatprep.mubr.f32.mxu0 %v2285
    %2377 = vmatmul.mubr.f32.gmra.mxu0 %v2277
    %v2378 = vpop.f32.mrf.mxu0
    %v2379 = vadd.f32 %v2191, %v2378
    %v2380 = vpop.f32.mrf.mxu0
    %v2381 = vadd.f32 %v2195, %v2380
    %2382 = vdwg.mxu0
    %2383 = vmatprep.subr.mxu0 %v889
    %2384 = vmatpush1.msra.mxu0 %v888
    %2385 = vmatprep.subr.mxu0 %v873
    %2386 = vmatpush1.msra.mxu0 %v872
    %2387 = vmatprep.subr.mxu0 %v857
    %2388 = vmatpush1.msra.mxu0 %v856
    %2389 = vmatprep.subr.mxu0 %v841
    %2390 = vmatpush1.msra.mxu0 %v840
    %2391 = vmatprep.subr.mxu0 %v825
    %2392 = vmatpush1.msra.mxu0 %v824
    %2393 = vmatprep.subr.mxu0 %v809
    %2394 = vmatpush1.msra.mxu0 %v808
    %2395 = vmatprep.subr.mxu0 %v793
    %2396 = vmatpush1.msra.mxu0 %v792
    %2397 = vmatprep.subr.mxu0 %v777
    %2398 = vmatpush1.msra.mxu0 %v776
    %2399 = vmatprep.subr.mxu0 %v761
    %2400 = vmatpush1.msra.mxu0 %v760
    %2401 = vmatprep.subr.mxu0 %v745
    %2402 = vmatpush1.msra.mxu0 %v744
    %2403 = vmatprep.subr.mxu0 %v729
    %2404 = vmatpush1.msra.mxu0 %v728
    %2405 = vmatprep.subr.mxu0 %v713
    %2406 = vmatpush1.msra.mxu0 %v712
    %2407 = vmatprep.subr.mxu0 %v697
    %2408 = vmatpush1.msra.mxu0 %v696
    %2409 = vmatprep.subr.mxu0 %v681
    %2410 = vmatpush1.msra.mxu0 %v680
    %2411 = vmatprep.subr.mxu0 %v665
    %2412 = vmatpush1.msra.mxu0 %v664
    %2413 = vmatprep.subr.mxu0 %v649
    %2414 = vmatpush1.msra.mxu0 %v648
    %2415 = vmatprep.subr.mxu0 %v1145
    %2416 = vmatpush2.msra.mxu0 %v1144
    %2417 = vmatprep.subr.mxu0 %v1129
    %2418 = vmatpush2.msra.mxu0 %v1128
    %2419 = vmatprep.subr.mxu0 %v1113
    %2420 = vmatpush2.msra.mxu0 %v1112
    %2421 = vmatprep.subr.mxu0 %v1097
    %2422 = vmatpush2.msra.mxu0 %v1096
    %2423 = vmatprep.subr.mxu0 %v1081
    %2424 = vmatpush2.msra.mxu0 %v1080
    %2425 = vmatprep.subr.mxu0 %v1065
    %2426 = vmatpush2.msra.mxu0 %v1064
    %2427 = vmatprep.subr.mxu0 %v1049
    %2428 = vmatpush2.msra.mxu0 %v1048
    %2429 = vmatprep.subr.mxu0 %v1033
    %2430 = vmatpush2.msra.mxu0 %v1032
    %2431 = vmatprep.subr.mxu0 %v1017
    %2432 = vmatpush2.msra.mxu0 %v1016
    %2433 = vmatprep.subr.mxu0 %v1001
    %2434 = vmatpush2.msra.mxu0 %v1000
    %2435 = vmatprep.subr.mxu0 %v985
    %2436 = vmatpush2.msra.mxu0 %v984
    %2437 = vmatprep.subr.mxu0 %v969
    %2438 = vmatpush2.msra.mxu0 %v968
    %2439 = vmatprep.subr.mxu0 %v953
    %2440 = vmatpush2.msra.mxu0 %v952
    %2441 = vmatprep.subr.mxu0 %v937
    %2442 = vmatpush2.msra.mxu0 %v936
    %2443 = vmatprep.subr.mxu0 %v921
    %2444 = vmatpush2.msra.mxu0 %v920
    %2445 = vmatprep.subr.mxu0 %v905
    %2446 = vmatpush2.msra.mxu0 %v904
    %2447 = vmatprep.mubr.f32.mxu0 %v2286
    %2448 = vmatmul.mubr.f32.gmra.mxu0 %v2284
    %v2449 = vpop.f32.mrf.mxu0
    %v2450 = vadd.f32 %v2379, %v2449
    %v2451 = vpop.f32.mrf.mxu0
    %v2452 = vadd.f32 %v2381, %v2451
    %2453 = vdwg.mxu0
    %2454 = vmatprep.subr.mxu0 %v1401
    %2455 = vmatpush1.msra.mxu0 %v1400
    %2456 = vmatprep.subr.mxu0 %v1385
    %2457 = vmatpush1.msra.mxu0 %v1384
    %2458 = vmatprep.subr.mxu0 %v1369
    %2459 = vmatpush1.msra.mxu0 %v1368
    %2460 = vmatprep.subr.mxu0 %v1353
    %2461 = vmatpush1.msra.mxu0 %v1352
    %2462 = vmatprep.subr.mxu0 %v1337
    %2463 = vmatpush1.msra.mxu0 %v1336
    %2464 = vmatprep.subr.mxu0 %v1321
    %2465 = vmatpush1.msra.mxu0 %v1320
    %2466 = vmatprep.subr.mxu0 %v1305
    %2467 = vmatpush1.msra.mxu0 %v1304
    %2468 = vmatprep.subr.mxu0 %v1289
    %2469 = vmatpush1.msra.mxu0 %v1288
    %2470 = vmatprep.subr.mxu0 %v1273
    %2471 = vmatpush1.msra.mxu0 %v1272
    %2472 = vmatprep.subr.mxu0 %v1257
    %2473 = vmatpush1.msra.mxu0 %v1256
    %2474 = vmatprep.subr.mxu0 %v1241
    %2475 = vmatpush1.msra.mxu0 %v1240
    %2476 = vmatprep.subr.mxu0 %v1225
    %2477 = vmatpush1.msra.mxu0 %v1224
    %2478 = vmatprep.subr.mxu0 %v1209
    %2479 = vmatpush1.msra.mxu0 %v1208
    %2480 = vmatprep.subr.mxu0 %v1193
    %2481 = vmatpush1.msra.mxu0 %v1192
    %2482 = vmatprep.subr.mxu0 %v1177
    %2483 = vmatpush1.msra.mxu0 %v1176
    %2484 = vmatprep.subr.mxu0 %v1161
    %2485 = vmatpush1.msra.mxu0 %v1160
    %2486 = vmatprep.subr.mxu0 %v1657
    %2487 = vmatpush2.msra.mxu0 %v1656
    %2488 = vmatprep.subr.mxu0 %v1641
    %2489 = vmatpush2.msra.mxu0 %v1640
    %2490 = vmatprep.subr.mxu0 %v1625
    %2491 = vmatpush2.msra.mxu0 %v1624
    %2492 = vmatprep.subr.mxu0 %v1609
    %2493 = vmatpush2.msra.mxu0 %v1608
    %2494 = vmatprep.subr.mxu0 %v1593
    %2495 = vmatpush2.msra.mxu0 %v1592
    %2496 = vmatprep.subr.mxu0 %v1577
    %2497 = vmatpush2.msra.mxu0 %v1576
    %2498 = vmatprep.subr.mxu0 %v1561
    %2499 = vmatpush2.msra.mxu0 %v1560
    %2500 = vmatprep.subr.mxu0 %v1545
    %2501 = vmatpush2.msra.mxu0 %v1544
    %2502 = vmatprep.subr.mxu0 %v1529
    %2503 = vmatpush2.msra.mxu0 %v1528
    %2504 = vmatprep.subr.mxu0 %v1513
    %2505 = vmatpush2.msra.mxu0 %v1512
    %2506 = vmatprep.subr.mxu0 %v1497
    %2507 = vmatpush2.msra.mxu0 %v1496
    %2508 = vmatprep.subr.mxu0 %v1481
    %2509 = vmatpush2.msra.mxu0 %v1480
    %2510 = vmatprep.subr.mxu0 %v1465
    %2511 = vmatpush2.msra.mxu0 %v1464
    %2512 = vmatprep.subr.mxu0 %v1449
    %2513 = vmatpush2.msra.mxu0 %v1448
    %2514 = vmatprep.subr.mxu0 %v1433
    %2515 = vmatpush2.msra.mxu0 %v1432
    %2516 = vmatprep.subr.mxu0 %v1417
    %2517 = vmatpush2.msra.mxu0 %v1416
    %2518 = vmatprep.mubr.f32.mxu0 %v2302
    %2519 = vmatmul.mubr.f32.gmra.mxu0 %v2294
    %v2520 = vpop.f32.mrf.mxu0
    %v2521 = vadd.f32 %v2450, %v2520
    %v2522 = vpop.f32.mrf.mxu0
    %v2523 = vadd.f32 %v2452, %v2522
    %2524 = vdwg.mxu0
    %2525 = vmatprep.subr.mxu0 %v1913
    %2526 = vmatpush1.msra.mxu0 %v1912
    %2527 = vmatprep.subr.mxu0 %v1897
    %2528 = vmatpush1.msra.mxu0 %v1896
    %2529 = vmatprep.subr.mxu0 %v1881
    %2530 = vmatpush1.msra.mxu0 %v1880
    %2531 = vmatprep.subr.mxu0 %v1865
    %2532 = vmatpush1.msra.mxu0 %v1864
    %2533 = vmatprep.subr.mxu0 %v1849
    %2534 = vmatpush1.msra.mxu0 %v1848
    %2535 = vmatprep.subr.mxu0 %v1833
    %2536 = vmatpush1.msra.mxu0 %v1832
    %2537 = vmatprep.subr.mxu0 %v1817
    %2538 = vmatpush1.msra.mxu0 %v1816
    %2539 = vmatprep.subr.mxu0 %v1801
    %2540 = vmatpush1.msra.mxu0 %v1800
    %2541 = vmatprep.subr.mxu0 %v1785
    %2542 = vmatpush1.msra.mxu0 %v1784
    %2543 = vmatprep.subr.mxu0 %v1769
    %2544 = vmatpush1.msra.mxu0 %v1768
    %2545 = vmatprep.subr.mxu0 %v1753
    %2546 = vmatpush1.msra.mxu0 %v1752
    %2547 = vmatprep.subr.mxu0 %v1737
    %2548 = vmatpush1.msra.mxu0 %v1736
    %2549 = vmatprep.subr.mxu0 %v1721
    %2550 = vmatpush1.msra.mxu0 %v1720
    %2551 = vmatprep.subr.mxu0 %v1705
    %2552 = vmatpush1.msra.mxu0 %v1704
    %2553 = vmatprep.subr.mxu0 %v1689
    %2554 = vmatpush1.msra.mxu0 %v1688
    %2555 = vmatprep.subr.mxu0 %v1673
    %2556 = vmatpush1.msra.mxu0 %v1672
    %2557 = vmatprep.subr.mxu0 %v2169
    %2558 = vmatpush2.msra.mxu0 %v2168
    %2559 = vmatprep.subr.mxu0 %v2153
    %2560 = vmatpush2.msra.mxu0 %v2152
    %2561 = vmatprep.subr.mxu0 %v2137
    %2562 = vmatpush2.msra.mxu0 %v2136
    %2563 = vmatprep.subr.mxu0 %v2121
    %2564 = vmatpush2.msra.mxu0 %v2120
    %2565 = vmatprep.subr.mxu0 %v2105
    %2566 = vmatpush2.msra.mxu0 %v2104
    %2567 = vmatprep.subr.mxu0 %v2089
    %2568 = vmatpush2.msra.mxu0 %v2088
    %2569 = vmatprep.subr.mxu0 %v2073
    %2570 = vmatpush2.msra.mxu0 %v2072
    %2571 = vmatprep.subr.mxu0 %v2057
    %2572 = vmatpush2.msra.mxu0 %v2056
    %2573 = vmatprep.subr.mxu0 %v2041
    %2574 = vmatpush2.msra.mxu0 %v2040
    %2575 = vmatprep.subr.mxu0 %v2025
    %2576 = vmatpush2.msra.mxu0 %v2024
    %2577 = vmatprep.subr.mxu0 %v2009
    %2578 = vmatpush2.msra.mxu0 %v2008
    %2579 = vmatprep.subr.mxu0 %v1993
    %2580 = vmatpush2.msra.mxu0 %v1992
    %2581 = vmatprep.subr.mxu0 %v1977
    %2582 = vmatpush2.msra.mxu0 %v1976
    %2583 = vmatprep.subr.mxu0 %v1961
    %2584 = vmatpush2.msra.mxu0 %v1960
    %2585 = vmatprep.subr.mxu0 %v1945
    %2586 = vmatpush2.msra.mxu0 %v1944
    %2587 = vmatprep.subr.mxu0 %v1929
    %2588 = vmatpush2.msra.mxu0 %v1928
    %2589 = vmatprep.mubr.f32.mxu0 %v2303
    %2590 = vmatmul.mubr.f32.gmra.mxu0 %v2301
    %v2591 = vpop.f32.mrf.mxu0
    %v2592 = vadd.f32 %v2521, %v2591
    %v2593 = vpop.f32.mrf.mxu0
    %v2594 = vadd.f32 %v2523, %v2593
    %2595 = vdwg.mxu0
    %2596 = vmatprep.subr.mxu0 %v379
    %2597 = vmatpush1.msra.mxu0 %v378
    %2598 = vmatprep.subr.mxu0 %v363
    %2599 = vmatpush1.msra.mxu0 %v362
    %2600 = vmatprep.subr.mxu0 %v347
    %2601 = vmatpush1.msra.mxu0 %v346
    %2602 = vmatprep.subr.mxu0 %v331
    %2603 = vmatpush1.msra.mxu0 %v330
    %2604 = vmatprep.subr.mxu0 %v315
    %2605 = vmatpush1.msra.mxu0 %v314
    %2606 = vmatprep.subr.mxu0 %v299
    %2607 = vmatpush1.msra.mxu0 %v298
    %2608 = vmatprep.subr.mxu0 %v283
    %2609 = vmatpush1.msra.mxu0 %v282
    %2610 = vmatprep.subr.mxu0 %v267
    %2611 = vmatpush1.msra.mxu0 %v266
    %2612 = vmatprep.subr.mxu0 %v251
    %2613 = vmatpush1.msra.mxu0 %v250
    %2614 = vmatprep.subr.mxu0 %v235
    %2615 = vmatpush1.msra.mxu0 %v234
    %2616 = vmatprep.subr.mxu0 %v219
    %2617 = vmatpush1.msra.mxu0 %v218
    %2618 = vmatprep.subr.mxu0 %v203
    %2619 = vmatpush1.msra.mxu0 %v202
    %2620 = vmatprep.subr.mxu0 %v187
    %2621 = vmatpush1.msra.mxu0 %v186
    %2622 = vmatprep.subr.mxu0 %v171
    %2623 = vmatpush1.msra.mxu0 %v170
    %2624 = vmatprep.subr.mxu0 %v155
    %2625 = vmatpush1.msra.mxu0 %v154
    %2626 = vmatprep.subr.mxu0 %v139
    %2627 = vmatpush1.msra.mxu0 %v138
    %2628 = vmatprep.subr.mxu0 %v635
    %2629 = vmatpush2.msra.mxu0 %v634
    %2630 = vmatprep.subr.mxu0 %v619
    %2631 = vmatpush2.msra.mxu0 %v618
    %2632 = vmatprep.subr.mxu0 %v603
    %2633 = vmatpush2.msra.mxu0 %v602
    %2634 = vmatprep.subr.mxu0 %v587
    %2635 = vmatpush2.msra.mxu0 %v586
    %2636 = vmatprep.subr.mxu0 %v571
    %2637 = vmatpush2.msra.mxu0 %v570
    %2638 = vmatprep.subr.mxu0 %v555
    %2639 = vmatpush2.msra.mxu0 %v554
    %2640 = vmatprep.subr.mxu0 %v539
    %2641 = vmatpush2.msra.mxu0 %v538
    %2642 = vmatprep.subr.mxu0 %v523
    %2643 = vmatpush2.msra.mxu0 %v522
    %2644 = vmatprep.subr.mxu0 %v507
    %2645 = vmatpush2.msra.mxu0 %v506
    %2646 = vmatprep.subr.mxu0 %v491
    %2647 = vmatpush2.msra.mxu0 %v490
    %2648 = vmatprep.subr.mxu0 %v475
    %2649 = vmatpush2.msra.mxu0 %v474
    %2650 = vmatprep.subr.mxu0 %v459
    %2651 = vmatpush2.msra.mxu0 %v458
    %2652 = vmatprep.subr.mxu0 %v443
    %2653 = vmatpush2.msra.mxu0 %v442
    %2654 = vmatprep.subr.mxu0 %v427
    %2655 = vmatpush2.msra.mxu0 %v426
    %2656 = vmatprep.subr.mxu0 %v411
    %2657 = vmatpush2.msra.mxu0 %v410
    %2658 = vmatprep.subr.mxu0 %v395
    %2659 = vmatpush2.msra.mxu0 %v394
    %2660 = vmatprep.mubr.f32.mxu0 %v2285
    %2661 = vmatmul.mubr.f32.gmra.mxu0 %v2277
    %v2662 = vpop.f32.mrf.mxu0
    %v2663 = vadd.f32 %v2199, %v2662
    %v2664 = vpop.f32.mrf.mxu0
    %v2665 = vadd.f32 %v2203, %v2664
    %2666 = vdwg.mxu0
    %2667 = vmatprep.subr.mxu0 %v891
    %2668 = vmatpush1.msra.mxu0 %v890
    %2669 = vmatprep.subr.mxu0 %v875
    %2670 = vmatpush1.msra.mxu0 %v874
    %2671 = vmatprep.subr.mxu0 %v859
    %2672 = vmatpush1.msra.mxu0 %v858
    %2673 = vmatprep.subr.mxu0 %v843
    %2674 = vmatpush1.msra.mxu0 %v842
    %2675 = vmatprep.subr.mxu0 %v827
    %2676 = vmatpush1.msra.mxu0 %v826
    %2677 = vmatprep.subr.mxu0 %v811
    %2678 = vmatpush1.msra.mxu0 %v810
    %2679 = vmatprep.subr.mxu0 %v795
    %2680 = vmatpush1.msra.mxu0 %v794
    %2681 = vmatprep.subr.mxu0 %v779
    %2682 = vmatpush1.msra.mxu0 %v778
    %2683 = vmatprep.subr.mxu0 %v763
    %2684 = vmatpush1.msra.mxu0 %v762
    %2685 = vmatprep.subr.mxu0 %v747
    %2686 = vmatpush1.msra.mxu0 %v746
    %2687 = vmatprep.subr.mxu0 %v731
    %2688 = vmatpush1.msra.mxu0 %v730
    %2689 = vmatprep.subr.mxu0 %v715
    %2690 = vmatpush1.msra.mxu0 %v714
    %2691 = vmatprep.subr.mxu0 %v699
    %2692 = vmatpush1.msra.mxu0 %v698
    %2693 = vmatprep.subr.mxu0 %v683
    %2694 = vmatpush1.msra.mxu0 %v682
    %2695 = vmatprep.subr.mxu0 %v667
    %2696 = vmatpush1.msra.mxu0 %v666
    %2697 = vmatprep.subr.mxu0 %v651
    %2698 = vmatpush1.msra.mxu0 %v650
    %2699 = vmatprep.subr.mxu0 %v1147
    %2700 = vmatpush2.msra.mxu0 %v1146
    %2701 = vmatprep.subr.mxu0 %v1131
    %2702 = vmatpush2.msra.mxu0 %v1130
    %2703 = vmatprep.subr.mxu0 %v1115
    %2704 = vmatpush2.msra.mxu0 %v1114
    %2705 = vmatprep.subr.mxu0 %v1099
    %2706 = vmatpush2.msra.mxu0 %v1098
    %2707 = vmatprep.subr.mxu0 %v1083
    %2708 = vmatpush2.msra.mxu0 %v1082
    %2709 = vmatprep.subr.mxu0 %v1067
    %2710 = vmatpush2.msra.mxu0 %v1066
    %2711 = vmatprep.subr.mxu0 %v1051
    %2712 = vmatpush2.msra.mxu0 %v1050
    %2713 = vmatprep.subr.mxu0 %v1035
    %2714 = vmatpush2.msra.mxu0 %v1034
    %2715 = vmatprep.subr.mxu0 %v1019
    %2716 = vmatpush2.msra.mxu0 %v1018
    %2717 = vmatprep.subr.mxu0 %v1003
    %2718 = vmatpush2.msra.mxu0 %v1002
    %2719 = vmatprep.subr.mxu0 %v987
    %2720 = vmatpush2.msra.mxu0 %v986
    %2721 = vmatprep.subr.mxu0 %v971
    %2722 = vmatpush2.msra.mxu0 %v970
    %2723 = vmatprep.subr.mxu0 %v955
    %2724 = vmatpush2.msra.mxu0 %v954
    %2725 = vmatprep.subr.mxu0 %v939
    %2726 = vmatpush2.msra.mxu0 %v938
    %2727 = vmatprep.subr.mxu0 %v923
    %2728 = vmatpush2.msra.mxu0 %v922
    %2729 = vmatprep.subr.mxu0 %v907
    %2730 = vmatpush2.msra.mxu0 %v906
    %2731 = vmatprep.mubr.f32.mxu0 %v2286
    %2732 = vmatmul.mubr.f32.gmra.mxu0 %v2284
    %v2733 = vpop.f32.mrf.mxu0
    %v2734 = vadd.f32 %v2663, %v2733
    %v2735 = vpop.f32.mrf.mxu0
    %v2736 = vadd.f32 %v2665, %v2735
    %2737 = vdwg.mxu0
    %2738 = vmatprep.subr.mxu0 %v1403
    %2739 = vmatpush1.msra.mxu0 %v1402
    %2740 = vmatprep.subr.mxu0 %v1387
    %2741 = vmatpush1.msra.mxu0 %v1386
    %2742 = vmatprep.subr.mxu0 %v1371
    %2743 = vmatpush1.msra.mxu0 %v1370
    %2744 = vmatprep.subr.mxu0 %v1355
    %2745 = vmatpush1.msra.mxu0 %v1354
    %2746 = vmatprep.subr.mxu0 %v1339
    %2747 = vmatpush1.msra.mxu0 %v1338
    %2748 = vmatprep.subr.mxu0 %v1323
    %2749 = vmatpush1.msra.mxu0 %v1322
    %2750 = vmatprep.subr.mxu0 %v1307
    %2751 = vmatpush1.msra.mxu0 %v1306
    %2752 = vmatprep.subr.mxu0 %v1291
    %2753 = vmatpush1.msra.mxu0 %v1290
    %2754 = vmatprep.subr.mxu0 %v1275
    %2755 = vmatpush1.msra.mxu0 %v1274
    %2756 = vmatprep.subr.mxu0 %v1259
    %2757 = vmatpush1.msra.mxu0 %v1258
    %2758 = vmatprep.subr.mxu0 %v1243
    %2759 = vmatpush1.msra.mxu0 %v1242
    %2760 = vmatprep.subr.mxu0 %v1227
    %2761 = vmatpush1.msra.mxu0 %v1226
    %2762 = vmatprep.subr.mxu0 %v1211
    %2763 = vmatpush1.msra.mxu0 %v1210
    %2764 = vmatprep.subr.mxu0 %v1195
    %2765 = vmatpush1.msra.mxu0 %v1194
    %2766 = vmatprep.subr.mxu0 %v1179
    %2767 = vmatpush1.msra.mxu0 %v1178
    %2768 = vmatprep.subr.mxu0 %v1163
    %2769 = vmatpush1.msra.mxu0 %v1162
    %2770 = vmatprep.subr.mxu0 %v1659
    %2771 = vmatpush2.msra.mxu0 %v1658
    %2772 = vmatprep.subr.mxu0 %v1643
    %2773 = vmatpush2.msra.mxu0 %v1642
    %2774 = vmatprep.subr.mxu0 %v1627
    %2775 = vmatpush2.msra.mxu0 %v1626
    %2776 = vmatprep.subr.mxu0 %v1611
    %2777 = vmatpush2.msra.mxu0 %v1610
    %2778 = vmatprep.subr.mxu0 %v1595
    %2779 = vmatpush2.msra.mxu0 %v1594
    %2780 = vmatprep.subr.mxu0 %v1579
    %2781 = vmatpush2.msra.mxu0 %v1578
    %2782 = vmatprep.subr.mxu0 %v1563
    %2783 = vmatpush2.msra.mxu0 %v1562
    %2784 = vmatprep.subr.mxu0 %v1547
    %2785 = vmatpush2.msra.mxu0 %v1546
    %2786 = vmatprep.subr.mxu0 %v1531
    %2787 = vmatpush2.msra.mxu0 %v1530
    %2788 = vmatprep.subr.mxu0 %v1515
    %2789 = vmatpush2.msra.mxu0 %v1514
    %2790 = vmatprep.subr.mxu0 %v1499
    %2791 = vmatpush2.msra.mxu0 %v1498
    %2792 = vmatprep.subr.mxu0 %v1483
    %2793 = vmatpush2.msra.mxu0 %v1482
    %2794 = vmatprep.subr.mxu0 %v1467
    %2795 = vmatpush2.msra.mxu0 %v1466
    %2796 = vmatprep.subr.mxu0 %v1451
    %2797 = vmatpush2.msra.mxu0 %v1450
    %2798 = vmatprep.subr.mxu0 %v1435
    %2799 = vmatpush2.msra.mxu0 %v1434
    %2800 = vmatprep.subr.mxu0 %v1419
    %2801 = vmatpush2.msra.mxu0 %v1418
    %2802 = vmatprep.mubr.f32.mxu0 %v2302
    %2803 = vmatmul.mubr.f32.gmra.mxu0 %v2294
    %v2804 = vpop.f32.mrf.mxu0
    %v2805 = vadd.f32 %v2734, %v2804
    %v2806 = vpop.f32.mrf.mxu0
    %v2807 = vadd.f32 %v2736, %v2806
    %2808 = vdwg.mxu0
    %2809 = vmatprep.subr.mxu0 %v1915
    %2810 = vmatpush1.msra.mxu0 %v1914
    %2811 = vmatprep.subr.mxu0 %v1899
    %2812 = vmatpush1.msra.mxu0 %v1898
    %2813 = vmatprep.subr.mxu0 %v1883
    %2814 = vmatpush1.msra.mxu0 %v1882
    %2815 = vmatprep.subr.mxu0 %v1867
    %2816 = vmatpush1.msra.mxu0 %v1866
    %2817 = vmatprep.subr.mxu0 %v1851
    %2818 = vmatpush1.msra.mxu0 %v1850
    %2819 = vmatprep.subr.mxu0 %v1835
    %2820 = vmatpush1.msra.mxu0 %v1834
    %2821 = vmatprep.subr.mxu0 %v1819
    %2822 = vmatpush1.msra.mxu0 %v1818
    %2823 = vmatprep.subr.mxu0 %v1803
    %2824 = vmatpush1.msra.mxu0 %v1802
    %2825 = vmatprep.subr.mxu0 %v1787
    %2826 = vmatpush1.msra.mxu0 %v1786
    %2827 = vmatprep.subr.mxu0 %v1771
    %2828 = vmatpush1.msra.mxu0 %v1770
    %2829 = vmatprep.subr.mxu0 %v1755
    %2830 = vmatpush1.msra.mxu0 %v1754
    %2831 = vmatprep.subr.mxu0 %v1739
    %2832 = vmatpush1.msra.mxu0 %v1738
    %2833 = vmatprep.subr.mxu0 %v1723
    %2834 = vmatpush1.msra.mxu0 %v1722
    %2835 = vmatprep.subr.mxu0 %v1707
    %2836 = vmatpush1.msra.mxu0 %v1706
    %2837 = vmatprep.subr.mxu0 %v1691
    %2838 = vmatpush1.msra.mxu0 %v1690
    %2839 = vmatprep.subr.mxu0 %v1675
    %2840 = vmatpush1.msra.mxu0 %v1674
    %2841 = vmatprep.subr.mxu0 %v2171
    %2842 = vmatpush2.msra.mxu0 %v2170
    %2843 = vmatprep.subr.mxu0 %v2155
    %2844 = vmatpush2.msra.mxu0 %v2154
    %2845 = vmatprep.subr.mxu0 %v2139
    %2846 = vmatpush2.msra.mxu0 %v2138
    %2847 = vmatprep.subr.mxu0 %v2123
    %2848 = vmatpush2.msra.mxu0 %v2122
    %2849 = vmatprep.subr.mxu0 %v2107
    %2850 = vmatpush2.msra.mxu0 %v2106
    %2851 = vmatprep.subr.mxu0 %v2091
    %2852 = vmatpush2.msra.mxu0 %v2090
    %2853 = vmatprep.subr.mxu0 %v2075
    %2854 = vmatpush2.msra.mxu0 %v2074
    %2855 = vmatprep.subr.mxu0 %v2059
    %2856 = vmatpush2.msra.mxu0 %v2058
    %2857 = vmatprep.subr.mxu0 %v2043
    %2858 = vmatpush2.msra.mxu0 %v2042
    %2859 = vmatprep.subr.mxu0 %v2027
    %2860 = vmatpush2.msra.mxu0 %v2026
    %2861 = vmatprep.subr.mxu0 %v2011
    %2862 = vmatpush2.msra.mxu0 %v2010
    %2863 = vmatprep.subr.mxu0 %v1995
    %2864 = vmatpush2.msra.mxu0 %v1994
    %2865 = vmatprep.subr.mxu0 %v1979
    %2866 = vmatpush2.msra.mxu0 %v1978
    %2867 = vmatprep.subr.mxu0 %v1963
    %2868 = vmatpush2.msra.mxu0 %v1962
    %2869 = vmatprep.subr.mxu0 %v1947
    %2870 = vmatpush2.msra.mxu0 %v1946
    %2871 = vmatprep.subr.mxu0 %v1931
    %2872 = vmatpush2.msra.mxu0 %v1930
    %2873 = vmatprep.mubr.f32.mxu0 %v2303
    %2874 = vmatmul.mubr.f32.gmra.mxu0 %v2301
    %v2875 = vpop.f32.mrf.mxu0
    %v2876 = vadd.f32 %v2805, %v2875
    %v2877 = vpop.f32.mrf.mxu0
    %v2878 = vadd.f32 %v2807, %v2877
    %2879 = vdwg.mxu0
    %2880 = vmatprep.subr.mxu0 %v381
    %2881 = vmatpush1.msra.mxu0 %v380
    %2882 = vmatprep.subr.mxu0 %v365
    %2883 = vmatpush1.msra.mxu0 %v364
    %2884 = vmatprep.subr.mxu0 %v349
    %2885 = vmatpush1.msra.mxu0 %v348
    %2886 = vmatprep.subr.mxu0 %v333
    %2887 = vmatpush1.msra.mxu0 %v332
    %2888 = vmatprep.subr.mxu0 %v317
    %2889 = vmatpush1.msra.mxu0 %v316
    %2890 = vmatprep.subr.mxu0 %v301
    %2891 = vmatpush1.msra.mxu0 %v300
    %2892 = vmatprep.subr.mxu0 %v285
    %2893 = vmatpush1.msra.mxu0 %v284
    %2894 = vmatprep.subr.mxu0 %v269
    %2895 = vmatpush1.msra.mxu0 %v268
    %2896 = vmatprep.subr.mxu0 %v253
    %2897 = vmatpush1.msra.mxu0 %v252
    %2898 = vmatprep.subr.mxu0 %v237
    %2899 = vmatpush1.msra.mxu0 %v236
    %2900 = vmatprep.subr.mxu0 %v221
    %2901 = vmatpush1.msra.mxu0 %v220
    %2902 = vmatprep.subr.mxu0 %v205
    %2903 = vmatpush1.msra.mxu0 %v204
    %2904 = vmatprep.subr.mxu0 %v189
    %2905 = vmatpush1.msra.mxu0 %v188
    %2906 = vmatprep.subr.mxu0 %v173
    %2907 = vmatpush1.msra.mxu0 %v172
    %2908 = vmatprep.subr.mxu0 %v157
    %2909 = vmatpush1.msra.mxu0 %v156
    %2910 = vmatprep.subr.mxu0 %v141
    %2911 = vmatpush1.msra.mxu0 %v140
    %2912 = vmatprep.subr.mxu0 %v637
    %2913 = vmatpush2.msra.mxu0 %v636
    %2914 = vmatprep.subr.mxu0 %v621
    %2915 = vmatpush2.msra.mxu0 %v620
    %2916 = vmatprep.subr.mxu0 %v605
    %2917 = vmatpush2.msra.mxu0 %v604
    %2918 = vmatprep.subr.mxu0 %v589
    %2919 = vmatpush2.msra.mxu0 %v588
    %2920 = vmatprep.subr.mxu0 %v573
    %2921 = vmatpush2.msra.mxu0 %v572
    %2922 = vmatprep.subr.mxu0 %v557
    %2923 = vmatpush2.msra.mxu0 %v556
    %2924 = vmatprep.subr.mxu0 %v541
    %2925 = vmatpush2.msra.mxu0 %v540
    %2926 = vmatprep.subr.mxu0 %v525
    %2927 = vmatpush2.msra.mxu0 %v524
    %2928 = vmatprep.subr.mxu0 %v509
    %2929 = vmatpush2.msra.mxu0 %v508
    %2930 = vmatprep.subr.mxu0 %v493
    %2931 = vmatpush2.msra.mxu0 %v492
    %2932 = vmatprep.subr.mxu0 %v477
    %2933 = vmatpush2.msra.mxu0 %v476
    %2934 = vmatprep.subr.mxu0 %v461
    %2935 = vmatpush2.msra.mxu0 %v460
    %2936 = vmatprep.subr.mxu0 %v445
    %2937 = vmatpush2.msra.mxu0 %v444
    %2938 = vmatprep.subr.mxu0 %v429
    %2939 = vmatpush2.msra.mxu0 %v428
    %2940 = vmatprep.subr.mxu0 %v413
    %2941 = vmatpush2.msra.mxu0 %v412
    %2942 = vmatprep.subr.mxu0 %v397
    %2943 = vmatpush2.msra.mxu0 %v396
    %2944 = vmatprep.mubr.f32.mxu0 %v2285
    %2945 = vmatmul.mubr.f32.gmra.mxu0 %v2277
    %v2946 = vpop.f32.mrf.mxu0
    %v2947 = vadd.f32 %v2207, %v2946
    %v2948 = vpop.f32.mrf.mxu0
    %v2949 = vadd.f32 %v2211, %v2948
    %2950 = vdwg.mxu0
    %2951 = vmatprep.subr.mxu0 %v893
    %2952 = vmatpush1.msra.mxu0 %v892
    %2953 = vmatprep.subr.mxu0 %v877
    %2954 = vmatpush1.msra.mxu0 %v876
    %2955 = vmatprep.subr.mxu0 %v861
    %2956 = vmatpush1.msra.mxu0 %v860
    %2957 = vmatprep.subr.mxu0 %v845
    %2958 = vmatpush1.msra.mxu0 %v844
    %2959 = vmatprep.subr.mxu0 %v829
    %2960 = vmatpush1.msra.mxu0 %v828
    %2961 = vmatprep.subr.mxu0 %v813
    %2962 = vmatpush1.msra.mxu0 %v812
    %2963 = vmatprep.subr.mxu0 %v797
    %2964 = vmatpush1.msra.mxu0 %v796
    %2965 = vmatprep.subr.mxu0 %v781
    %2966 = vmatpush1.msra.mxu0 %v780
    %2967 = vmatprep.subr.mxu0 %v765
    %2968 = vmatpush1.msra.mxu0 %v764
    %2969 = vmatprep.subr.mxu0 %v749
    %2970 = vmatpush1.msra.mxu0 %v748
    %2971 = vmatprep.subr.mxu0 %v733
    %2972 = vmatpush1.msra.mxu0 %v732
    %2973 = vmatprep.subr.mxu0 %v717
    %2974 = vmatpush1.msra.mxu0 %v716
    %2975 = vmatprep.subr.mxu0 %v701
    %2976 = vmatpush1.msra.mxu0 %v700
    %2977 = vmatprep.subr.mxu0 %v685
    %2978 = vmatpush1.msra.mxu0 %v684
    %2979 = vmatprep.subr.mxu0 %v669
    %2980 = vmatpush1.msra.mxu0 %v668
    %2981 = vmatprep.subr.mxu0 %v653
    %2982 = vmatpush1.msra.mxu0 %v652
    %2983 = vmatprep.subr.mxu0 %v1149
    %2984 = vmatpush2.msra.mxu0 %v1148
    %2985 = vmatprep.subr.mxu0 %v1133
    %2986 = vmatpush2.msra.mxu0 %v1132
    %2987 = vmatprep.subr.mxu0 %v1117
    %2988 = vmatpush2.msra.mxu0 %v1116
    %2989 = vmatprep.subr.mxu0 %v1101
    %2990 = vmatpush2.msra.mxu0 %v1100
    %2991 = vmatprep.subr.mxu0 %v1085
    %2992 = vmatpush2.msra.mxu0 %v1084
    %2993 = vmatprep.subr.mxu0 %v1069
    %2994 = vmatpush2.msra.mxu0 %v1068
    %2995 = vmatprep.subr.mxu0 %v1053
    %2996 = vmatpush2.msra.mxu0 %v1052
    %2997 = vmatprep.subr.mxu0 %v1037
    %2998 = vmatpush2.msra.mxu0 %v1036
    %2999 = vmatprep.subr.mxu0 %v1021
    %3000 = vmatpush2.msra.mxu0 %v1020
    %3001 = vmatprep.subr.mxu0 %v1005
    %3002 = vmatpush2.msra.mxu0 %v1004
    %3003 = vmatprep.subr.mxu0 %v989
    %3004 = vmatpush2.msra.mxu0 %v988
    %3005 = vmatprep.subr.mxu0 %v973
    %3006 = vmatpush2.msra.mxu0 %v972
    %3007 = vmatprep.subr.mxu0 %v957
    %3008 = vmatpush2.msra.mxu0 %v956
    %3009 = vmatprep.subr.mxu0 %v941
    %3010 = vmatpush2.msra.mxu0 %v940
    %3011 = vmatprep.subr.mxu0 %v925
    %3012 = vmatpush2.msra.mxu0 %v924
    %3013 = vmatprep.subr.mxu0 %v909
    %3014 = vmatpush2.msra.mxu0 %v908
    %3015 = vmatprep.mubr.f32.mxu0 %v2286
    %3016 = vmatmul.mubr.f32.gmra.mxu0 %v2284
    %v3017 = vpop.f32.mrf.mxu0
    %v3018 = vadd.f32 %v2947, %v3017
    %v3019 = vpop.f32.mrf.mxu0
    %v3020 = vadd.f32 %v2949, %v3019
    %3021 = vdwg.mxu0
    %3022 = vmatprep.subr.mxu0 %v1405
    %3023 = vmatpush1.msra.mxu0 %v1404
    %3024 = vmatprep.subr.mxu0 %v1389
    %3025 = vmatpush1.msra.mxu0 %v1388
    %3026 = vmatprep.subr.mxu0 %v1373
    %3027 = vmatpush1.msra.mxu0 %v1372
    %3028 = vmatprep.subr.mxu0 %v1357
    %3029 = vmatpush1.msra.mxu0 %v1356
    %3030 = vmatprep.subr.mxu0 %v1341
    %3031 = vmatpush1.msra.mxu0 %v1340
    %3032 = vmatprep.subr.mxu0 %v1325
    %3033 = vmatpush1.msra.mxu0 %v1324
    %3034 = vmatprep.subr.mxu0 %v1309
    %3035 = vmatpush1.msra.mxu0 %v1308
    %3036 = vmatprep.subr.mxu0 %v1293
    %3037 = vmatpush1.msra.mxu0 %v1292
    %3038 = vmatprep.subr.mxu0 %v1277
    %3039 = vmatpush1.msra.mxu0 %v1276
    %3040 = vmatprep.subr.mxu0 %v1261
    %3041 = vmatpush1.msra.mxu0 %v1260
    %3042 = vmatprep.subr.mxu0 %v1245
    %3043 = vmatpush1.msra.mxu0 %v1244
    %3044 = vmatprep.subr.mxu0 %v1229
    %3045 = vmatpush1.msra.mxu0 %v1228
    %3046 = vmatprep.subr.mxu0 %v1213
    %3047 = vmatpush1.msra.mxu0 %v1212
    %3048 = vmatprep.subr.mxu0 %v1197
    %3049 = vmatpush1.msra.mxu0 %v1196
    %3050 = vmatprep.subr.mxu0 %v1181
    %3051 = vmatpush1.msra.mxu0 %v1180
    %3052 = vmatprep.subr.mxu0 %v1165
    %3053 = vmatpush1.msra.mxu0 %v1164
    %3054 = vmatprep.subr.mxu0 %v1661
    %3055 = vmatpush2.msra.mxu0 %v1660
    %3056 = vmatprep.subr.mxu0 %v1645
    %3057 = vmatpush2.msra.mxu0 %v1644
    %3058 = vmatprep.subr.mxu0 %v1629
    %3059 = vmatpush2.msra.mxu0 %v1628
    %3060 = vmatprep.subr.mxu0 %v1613
    %3061 = vmatpush2.msra.mxu0 %v1612
    %3062 = vmatprep.subr.mxu0 %v1597
    %3063 = vmatpush2.msra.mxu0 %v1596
    %3064 = vmatprep.subr.mxu0 %v1581
    %3065 = vmatpush2.msra.mxu0 %v1580
    %3066 = vmatprep.subr.mxu0 %v1565
    %3067 = vmatpush2.msra.mxu0 %v1564
    %3068 = vmatprep.subr.mxu0 %v1549
    %3069 = vmatpush2.msra.mxu0 %v1548
    %3070 = vmatprep.subr.mxu0 %v1533
    %3071 = vmatpush2.msra.mxu0 %v1532
    %3072 = vmatprep.subr.mxu0 %v1517
    %3073 = vmatpush2.msra.mxu0 %v1516
    %3074 = vmatprep.subr.mxu0 %v1501
    %3075 = vmatpush2.msra.mxu0 %v1500
    %3076 = vmatprep.subr.mxu0 %v1485
    %3077 = vmatpush2.msra.mxu0 %v1484
    %3078 = vmatprep.subr.mxu0 %v1469
    %3079 = vmatpush2.msra.mxu0 %v1468
    %3080 = vmatprep.subr.mxu0 %v1453
    %3081 = vmatpush2.msra.mxu0 %v1452
    %3082 = vmatprep.subr.mxu0 %v1437
    %3083 = vmatpush2.msra.mxu0 %v1436
    %3084 = vmatprep.subr.mxu0 %v1421
    %3085 = vmatpush2.msra.mxu0 %v1420
    %3086 = vmatprep.mubr.f32.mxu0 %v2302
    %3087 = vmatmul.mubr.f32.gmra.mxu0 %v2294
    %v3088 = vpop.f32.mrf.mxu0
    %v3089 = vadd.f32 %v3018, %v3088
    %v3090 = vpop.f32.mrf.mxu0
    %v3091 = vadd.f32 %v3020, %v3090
    %3092 = vdwg.mxu0
    %3093 = vmatprep.subr.mxu0 %v1917
    %3094 = vmatpush1.msra.mxu0 %v1916
    %3095 = vmatprep.subr.mxu0 %v1901
    %3096 = vmatpush1.msra.mxu0 %v1900
    %3097 = vmatprep.subr.mxu0 %v1885
    %3098 = vmatpush1.msra.mxu0 %v1884
    %3099 = vmatprep.subr.mxu0 %v1869
    %3100 = vmatpush1.msra.mxu0 %v1868
    %3101 = vmatprep.subr.mxu0 %v1853
    %3102 = vmatpush1.msra.mxu0 %v1852
    %3103 = vmatprep.subr.mxu0 %v1837
    %3104 = vmatpush1.msra.mxu0 %v1836
    %3105 = vmatprep.subr.mxu0 %v1821
    %3106 = vmatpush1.msra.mxu0 %v1820
    %3107 = vmatprep.subr.mxu0 %v1805
    %3108 = vmatpush1.msra.mxu0 %v1804
    %3109 = vmatprep.subr.mxu0 %v1789
    %3110 = vmatpush1.msra.mxu0 %v1788
    %3111 = vmatprep.subr.mxu0 %v1773
    %3112 = vmatpush1.msra.mxu0 %v1772
    %3113 = vmatprep.subr.mxu0 %v1757
    %3114 = vmatpush1.msra.mxu0 %v1756
    %3115 = vmatprep.subr.mxu0 %v1741
    %3116 = vmatpush1.msra.mxu0 %v1740
    %3117 = vmatprep.subr.mxu0 %v1725
    %3118 = vmatpush1.msra.mxu0 %v1724
    %3119 = vmatprep.subr.mxu0 %v1709
    %3120 = vmatpush1.msra.mxu0 %v1708
    %3121 = vmatprep.subr.mxu0 %v1693
    %3122 = vmatpush1.msra.mxu0 %v1692
    %3123 = vmatprep.subr.mxu0 %v1677
    %3124 = vmatpush1.msra.mxu0 %v1676
    %3125 = vmatprep.subr.mxu0 %v2173
    %3126 = vmatpush2.msra.mxu0 %v2172
    %3127 = vmatprep.subr.mxu0 %v2157
    %3128 = vmatpush2.msra.mxu0 %v2156
    %3129 = vmatprep.subr.mxu0 %v2141
    %3130 = vmatpush2.msra.mxu0 %v2140
    %3131 = vmatprep.subr.mxu0 %v2125
    %3132 = vmatpush2.msra.mxu0 %v2124
    %3133 = vmatprep.subr.mxu0 %v2109
    %3134 = vmatpush2.msra.mxu0 %v2108
    %3135 = vmatprep.subr.mxu0 %v2093
    %3136 = vmatpush2.msra.mxu0 %v2092
    %3137 = vmatprep.subr.mxu0 %v2077
    %3138 = vmatpush2.msra.mxu0 %v2076
    %3139 = vmatprep.subr.mxu0 %v2061
    %3140 = vmatpush2.msra.mxu0 %v2060
    %3141 = vmatprep.subr.mxu0 %v2045
    %3142 = vmatpush2.msra.mxu0 %v2044
    %3143 = vmatprep.subr.mxu0 %v2029
    %3144 = vmatpush2.msra.mxu0 %v2028
    %3145 = vmatprep.subr.mxu0 %v2013
    %3146 = vmatpush2.msra.mxu0 %v2012
    %3147 = vmatprep.subr.mxu0 %v1997
    %3148 = vmatpush2.msra.mxu0 %v1996
    %3149 = vmatprep.subr.mxu0 %v1981
    %3150 = vmatpush2.msra.mxu0 %v1980
    %3151 = vmatprep.subr.mxu0 %v1965
    %3152 = vmatpush2.msra.mxu0 %v1964
    %3153 = vmatprep.subr.mxu0 %v1949
    %3154 = vmatpush2.msra.mxu0 %v1948
    %3155 = vmatprep.subr.mxu0 %v1933
    %3156 = vmatpush2.msra.mxu0 %v1932
    %3157 = vmatprep.mubr.f32.mxu0 %v2303
    %3158 = vmatmul.mubr.f32.gmra.mxu0 %v2301
    %v3159 = vpop.f32.mrf.mxu0
    %v3160 = vadd.f32 %v3089, %v3159
    %v3161 = vpop.f32.mrf.mxu0
    %v3162 = vadd.f32 %v3091, %v3161
    %3163 = vdwg.mxu0
    %3164 = vmatprep.subr.mxu0 %v383
    %3165 = vmatpush1.msra.mxu0 %v382
    %3166 = vmatprep.subr.mxu0 %v367
    %3167 = vmatpush1.msra.mxu0 %v366
    %3168 = vmatprep.subr.mxu0 %v351
    %3169 = vmatpush1.msra.mxu0 %v350
    %3170 = vmatprep.subr.mxu0 %v335
    %3171 = vmatpush1.msra.mxu0 %v334
    %3172 = vmatprep.subr.mxu0 %v319
    %3173 = vmatpush1.msra.mxu0 %v318
    %3174 = vmatprep.subr.mxu0 %v303
    %3175 = vmatpush1.msra.mxu0 %v302
    %3176 = vmatprep.subr.mxu0 %v287
    %3177 = vmatpush1.msra.mxu0 %v286
    %3178 = vmatprep.subr.mxu0 %v271
    %3179 = vmatpush1.msra.mxu0 %v270
    %3180 = vmatprep.subr.mxu0 %v255
    %3181 = vmatpush1.msra.mxu0 %v254
    %3182 = vmatprep.subr.mxu0 %v239
    %3183 = vmatpush1.msra.mxu0 %v238
    %3184 = vmatprep.subr.mxu0 %v223
    %3185 = vmatpush1.msra.mxu0 %v222
    %3186 = vmatprep.subr.mxu0 %v207
    %3187 = vmatpush1.msra.mxu0 %v206
    %3188 = vmatprep.subr.mxu0 %v191
    %3189 = vmatpush1.msra.mxu0 %v190
    %3190 = vmatprep.subr.mxu0 %v175
    %3191 = vmatpush1.msra.mxu0 %v174
    %3192 = vmatprep.subr.mxu0 %v159
    %3193 = vmatpush1.msra.mxu0 %v158
    %3194 = vmatprep.subr.mxu0 %v143
    %3195 = vmatpush1.msra.mxu0 %v142
    %3196 = vmatprep.subr.mxu0 %v639
    %3197 = vmatpush2.msra.mxu0 %v638
    %3198 = vmatprep.subr.mxu0 %v623
    %3199 = vmatpush2.msra.mxu0 %v622
    %3200 = vmatprep.subr.mxu0 %v607
    %3201 = vmatpush2.msra.mxu0 %v606
    %3202 = vmatprep.subr.mxu0 %v591
    %3203 = vmatpush2.msra.mxu0 %v590
    %3204 = vmatprep.subr.mxu0 %v575
    %3205 = vmatpush2.msra.mxu0 %v574
    %3206 = vmatprep.subr.mxu0 %v559
    %3207 = vmatpush2.msra.mxu0 %v558
    %3208 = vmatprep.subr.mxu0 %v543
    %3209 = vmatpush2.msra.mxu0 %v542
    %3210 = vmatprep.subr.mxu0 %v527
    %3211 = vmatpush2.msra.mxu0 %v526
    %3212 = vmatprep.subr.mxu0 %v511
    %3213 = vmatpush2.msra.mxu0 %v510
    %3214 = vmatprep.subr.mxu0 %v495
    %3215 = vmatpush2.msra.mxu0 %v494
    %3216 = vmatprep.subr.mxu0 %v479
    %3217 = vmatpush2.msra.mxu0 %v478
    %3218 = vmatprep.subr.mxu0 %v463
    %3219 = vmatpush2.msra.mxu0 %v462
    %3220 = vmatprep.subr.mxu0 %v447
    %3221 = vmatpush2.msra.mxu0 %v446
    %3222 = vmatprep.subr.mxu0 %v431
    %3223 = vmatpush2.msra.mxu0 %v430
    %3224 = vmatprep.subr.mxu0 %v415
    %3225 = vmatpush2.msra.mxu0 %v414
    %3226 = vmatprep.subr.mxu0 %v399
    %3227 = vmatpush2.msra.mxu0 %v398
    %3228 = vmatprep.mubr.f32.mxu0 %v2285
    %3229 = vmatmul.mubr.f32.gmra.mxu0 %v2277
    %v3230 = vpop.f32.mrf.mxu0
    %v3231 = vadd.f32 %v2215, %v3230
    %v3232 = vpop.f32.mrf.mxu0
    %v3233 = vadd.f32 %v2219, %v3232
    %3234 = vdwg.mxu0
    %3235 = vmatprep.subr.mxu0 %v895
    %3236 = vmatpush1.msra.mxu0 %v894
    %3237 = vmatprep.subr.mxu0 %v879
    %3238 = vmatpush1.msra.mxu0 %v878
    %3239 = vmatprep.subr.mxu0 %v863
    %3240 = vmatpush1.msra.mxu0 %v862
    %3241 = vmatprep.subr.mxu0 %v847
    %3242 = vmatpush1.msra.mxu0 %v846
    %3243 = vmatprep.subr.mxu0 %v831
    %3244 = vmatpush1.msra.mxu0 %v830
    %3245 = vmatprep.subr.mxu0 %v815
    %3246 = vmatpush1.msra.mxu0 %v814
    %3247 = vmatprep.subr.mxu0 %v799
    %3248 = vmatpush1.msra.mxu0 %v798
    %3249 = vmatprep.subr.mxu0 %v783
    %3250 = vmatpush1.msra.mxu0 %v782
    %3251 = vmatprep.subr.mxu0 %v767
    %3252 = vmatpush1.msra.mxu0 %v766
    %3253 = vmatprep.subr.mxu0 %v751
    %3254 = vmatpush1.msra.mxu0 %v750
    %3255 = vmatprep.subr.mxu0 %v735
    %3256 = vmatpush1.msra.mxu0 %v734
    %3257 = vmatprep.subr.mxu0 %v719
    %3258 = vmatpush1.msra.mxu0 %v718
    %3259 = vmatprep.subr.mxu0 %v703
    %3260 = vmatpush1.msra.mxu0 %v702
    %3261 = vmatprep.subr.mxu0 %v687
    %3262 = vmatpush1.msra.mxu0 %v686
    %3263 = vmatprep.subr.mxu0 %v671
    %3264 = vmatpush1.msra.mxu0 %v670
    %3265 = vmatprep.subr.mxu0 %v655
    %3266 = vmatpush1.msra.mxu0 %v654
    %3267 = vmatprep.subr.mxu0 %v1151
    %3268 = vmatpush2.msra.mxu0 %v1150
    %3269 = vmatprep.subr.mxu0 %v1135
    %3270 = vmatpush2.msra.mxu0 %v1134
    %3271 = vmatprep.subr.mxu0 %v1119
    %3272 = vmatpush2.msra.mxu0 %v1118
    %3273 = vmatprep.subr.mxu0 %v1103
    %3274 = vmatpush2.msra.mxu0 %v1102
    %3275 = vmatprep.subr.mxu0 %v1087
    %3276 = vmatpush2.msra.mxu0 %v1086
    %3277 = vmatprep.subr.mxu0 %v1071
    %3278 = vmatpush2.msra.mxu0 %v1070
    %3279 = vmatprep.subr.mxu0 %v1055
    %3280 = vmatpush2.msra.mxu0 %v1054
    %3281 = vmatprep.subr.mxu0 %v1039
    %3282 = vmatpush2.msra.mxu0 %v1038
    %3283 = vmatprep.subr.mxu0 %v1023
    %3284 = vmatpush2.msra.mxu0 %v1022
    %3285 = vmatprep.subr.mxu0 %v1007
    %3286 = vmatpush2.msra.mxu0 %v1006
    %3287 = vmatprep.subr.mxu0 %v991
    %3288 = vmatpush2.msra.mxu0 %v990
    %3289 = vmatprep.subr.mxu0 %v975
    %3290 = vmatpush2.msra.mxu0 %v974
    %3291 = vmatprep.subr.mxu0 %v959
    %3292 = vmatpush2.msra.mxu0 %v958
    %3293 = vmatprep.subr.mxu0 %v943
    %3294 = vmatpush2.msra.mxu0 %v942
    %3295 = vmatprep.subr.mxu0 %v927
    %3296 = vmatpush2.msra.mxu0 %v926
    %3297 = vmatprep.subr.mxu0 %v911
    %3298 = vmatpush2.msra.mxu0 %v910
    %3299 = vmatprep.mubr.f32.mxu0 %v2286
    %3300 = vmatmul.mubr.f32.gmra.mxu0 %v2284
    %v3301 = vpop.f32.mrf.mxu0
    %v3302 = vadd.f32 %v3231, %v3301
    %v3303 = vpop.f32.mrf.mxu0
    %v3304 = vadd.f32 %v3233, %v3303
    %3305 = vdwg.mxu0
    %3306 = vmatprep.subr.mxu0 %v1407
    %3307 = vmatpush1.msra.mxu0 %v1406
    %3308 = vmatprep.subr.mxu0 %v1391
    %3309 = vmatpush1.msra.mxu0 %v1390
    %3310 = vmatprep.subr.mxu0 %v1375
    %3311 = vmatpush1.msra.mxu0 %v1374
    %3312 = vmatprep.subr.mxu0 %v1359
    %3313 = vmatpush1.msra.mxu0 %v1358
    %3314 = vmatprep.subr.mxu0 %v1343
    %3315 = vmatpush1.msra.mxu0 %v1342
    %3316 = vmatprep.subr.mxu0 %v1327
    %3317 = vmatpush1.msra.mxu0 %v1326
    %3318 = vmatprep.subr.mxu0 %v1311
    %3319 = vmatpush1.msra.mxu0 %v1310
    %3320 = vmatprep.subr.mxu0 %v1295
    %3321 = vmatpush1.msra.mxu0 %v1294
    %3322 = vmatprep.subr.mxu0 %v1279
    %3323 = vmatpush1.msra.mxu0 %v1278
    %3324 = vmatprep.subr.mxu0 %v1263
    %3325 = vmatpush1.msra.mxu0 %v1262
    %3326 = vmatprep.subr.mxu0 %v1247
    %3327 = vmatpush1.msra.mxu0 %v1246
    %3328 = vmatprep.subr.mxu0 %v1231
    %3329 = vmatpush1.msra.mxu0 %v1230
    %3330 = vmatprep.subr.mxu0 %v1215
    %3331 = vmatpush1.msra.mxu0 %v1214
    %3332 = vmatprep.subr.mxu0 %v1199
    %3333 = vmatpush1.msra.mxu0 %v1198
    %3334 = vmatprep.subr.mxu0 %v1183
    %3335 = vmatpush1.msra.mxu0 %v1182
    %3336 = vmatprep.subr.mxu0 %v1167
    %3337 = vmatpush1.msra.mxu0 %v1166
    %3338 = vmatprep.subr.mxu0 %v1663
    %3339 = vmatpush2.msra.mxu0 %v1662
    %3340 = vmatprep.subr.mxu0 %v1647
    %3341 = vmatpush2.msra.mxu0 %v1646
    %3342 = vmatprep.subr.mxu0 %v1631
    %3343 = vmatpush2.msra.mxu0 %v1630
    %3344 = vmatprep.subr.mxu0 %v1615
    %3345 = vmatpush2.msra.mxu0 %v1614
    %3346 = vmatprep.subr.mxu0 %v1599
    %3347 = vmatpush2.msra.mxu0 %v1598
    %3348 = vmatprep.subr.mxu0 %v1583
    %3349 = vmatpush2.msra.mxu0 %v1582
    %3350 = vmatprep.subr.mxu0 %v1567
    %3351 = vmatpush2.msra.mxu0 %v1566
    %3352 = vmatprep.subr.mxu0 %v1551
    %3353 = vmatpush2.msra.mxu0 %v1550
    %3354 = vmatprep.subr.mxu0 %v1535
    %3355 = vmatpush2.msra.mxu0 %v1534
    %3356 = vmatprep.subr.mxu0 %v1519
    %3357 = vmatpush2.msra.mxu0 %v1518
    %3358 = vmatprep.subr.mxu0 %v1503
    %3359 = vmatpush2.msra.mxu0 %v1502
    %3360 = vmatprep.subr.mxu0 %v1487
    %3361 = vmatpush2.msra.mxu0 %v1486
    %3362 = vmatprep.subr.mxu0 %v1471
    %3363 = vmatpush2.msra.mxu0 %v1470
    %3364 = vmatprep.subr.mxu0 %v1455
    %3365 = vmatpush2.msra.mxu0 %v1454
    %3366 = vmatprep.subr.mxu0 %v1439
    %3367 = vmatpush2.msra.mxu0 %v1438
    %3368 = vmatprep.subr.mxu0 %v1423
    %3369 = vmatpush2.msra.mxu0 %v1422
    %3370 = vmatprep.mubr.f32.mxu0 %v2302
    %3371 = vmatmul.mubr.f32.gmra.mxu0 %v2294
    %v3372 = vpop.f32.mrf.mxu0
    %v3373 = vadd.f32 %v3302, %v3372
    %v3374 = vpop.f32.mrf.mxu0
    %v3375 = vadd.f32 %v3304, %v3374
    %3376 = vdwg.mxu0
    %3377 = vmatprep.subr.mxu0 %v1919
    %3378 = vmatpush1.msra.mxu0 %v1918
    %3379 = vmatprep.subr.mxu0 %v1903
    %3380 = vmatpush1.msra.mxu0 %v1902
    %3381 = vmatprep.subr.mxu0 %v1887
    %3382 = vmatpush1.msra.mxu0 %v1886
    %3383 = vmatprep.subr.mxu0 %v1871
    %3384 = vmatpush1.msra.mxu0 %v1870
    %3385 = vmatprep.subr.mxu0 %v1855
    %3386 = vmatpush1.msra.mxu0 %v1854
    %3387 = vmatprep.subr.mxu0 %v1839
    %3388 = vmatpush1.msra.mxu0 %v1838
    %3389 = vmatprep.subr.mxu0 %v1823
    %3390 = vmatpush1.msra.mxu0 %v1822
    %3391 = vmatprep.subr.mxu0 %v1807
    %3392 = vmatpush1.msra.mxu0 %v1806
    %3393 = vmatprep.subr.mxu0 %v1791
    %3394 = vmatpush1.msra.mxu0 %v1790
    %3395 = vmatprep.subr.mxu0 %v1775
    %3396 = vmatpush1.msra.mxu0 %v1774
    %3397 = vmatprep.subr.mxu0 %v1759
    %3398 = vmatpush1.msra.mxu0 %v1758
    %3399 = vmatprep.subr.mxu0 %v1743
    %3400 = vmatpush1.msra.mxu0 %v1742
    %3401 = vmatprep.subr.mxu0 %v1727
    %3402 = vmatpush1.msra.mxu0 %v1726
    %3403 = vmatprep.subr.mxu0 %v1711
    %3404 = vmatpush1.msra.mxu0 %v1710
    %3405 = vmatprep.subr.mxu0 %v1695
    %3406 = vmatpush1.msra.mxu0 %v1694
    %3407 = vmatprep.subr.mxu0 %v1679
    %3408 = vmatpush1.msra.mxu0 %v1678
    %3409 = vmatprep.subr.mxu0 %v2175
    %3410 = vmatpush2.msra.mxu0 %v2174
    %3411 = vmatprep.subr.mxu0 %v2159
    %3412 = vmatpush2.msra.mxu0 %v2158
    %3413 = vmatprep.subr.mxu0 %v2143
    %3414 = vmatpush2.msra.mxu0 %v2142
    %3415 = vmatprep.subr.mxu0 %v2127
    %3416 = vmatpush2.msra.mxu0 %v2126
    %3417 = vmatprep.subr.mxu0 %v2111
    %3418 = vmatpush2.msra.mxu0 %v2110
    %3419 = vmatprep.subr.mxu0 %v2095
    %3420 = vmatpush2.msra.mxu0 %v2094
    %3421 = vmatprep.subr.mxu0 %v2079
    %3422 = vmatpush2.msra.mxu0 %v2078
    %3423 = vmatprep.subr.mxu0 %v2063
    %3424 = vmatpush2.msra.mxu0 %v2062
    %3425 = vmatprep.subr.mxu0 %v2047
    %3426 = vmatpush2.msra.mxu0 %v2046
    %3427 = vmatprep.subr.mxu0 %v2031
    %3428 = vmatpush2.msra.mxu0 %v2030
    %3429 = vmatprep.subr.mxu0 %v2015
    %3430 = vmatpush2.msra.mxu0 %v2014
    %3431 = vmatprep.subr.mxu0 %v1999
    %3432 = vmatpush2.msra.mxu0 %v1998
    %3433 = vmatprep.subr.mxu0 %v1983
    %3434 = vmatpush2.msra.mxu0 %v1982
    %3435 = vmatprep.subr.mxu0 %v1967
    %3436 = vmatpush2.msra.mxu0 %v1966
    %3437 = vmatprep.subr.mxu0 %v1951
    %3438 = vmatpush2.msra.mxu0 %v1950
    %3439 = vmatprep.subr.mxu0 %v1935
    %3440 = vmatpush2.msra.mxu0 %v1934
    %3441 = vmatprep.mubr.f32.mxu0 %v2303
    %3442 = vmatmul.mubr.f32.gmra.mxu0 %v2301
    %v3443 = vpop.f32.mrf.mxu0
    %v3444 = vadd.f32 %v3373, %v3443
    %v3445 = vpop.f32.mrf.mxu0
    %v3446 = vadd.f32 %v3375, %v3445
    %3447 = vdwg.mxu0
    %3448 = vmatprep.subr.mxu0 %v385
    %3449 = vmatpush1.msra.mxu0 %v384
    %3450 = vmatprep.subr.mxu0 %v369
    %3451 = vmatpush1.msra.mxu0 %v368
    %3452 = vmatprep.subr.mxu0 %v353
    %3453 = vmatpush1.msra.mxu0 %v352
    %3454 = vmatprep.subr.mxu0 %v337
    %3455 = vmatpush1.msra.mxu0 %v336
    %3456 = vmatprep.subr.mxu0 %v321
    %3457 = vmatpush1.msra.mxu0 %v320
    %3458 = vmatprep.subr.mxu0 %v305
    %3459 = vmatpush1.msra.mxu0 %v304
    %3460 = vmatprep.subr.mxu0 %v289
    %3461 = vmatpush1.msra.mxu0 %v288
    %3462 = vmatprep.subr.mxu0 %v273
    %3463 = vmatpush1.msra.mxu0 %v272
    %3464 = vmatprep.subr.mxu0 %v257
    %3465 = vmatpush1.msra.mxu0 %v256
    %3466 = vmatprep.subr.mxu0 %v241
    %3467 = vmatpush1.msra.mxu0 %v240
    %3468 = vmatprep.subr.mxu0 %v225
    %3469 = vmatpush1.msra.mxu0 %v224
    %3470 = vmatprep.subr.mxu0 %v209
    %3471 = vmatpush1.msra.mxu0 %v208
    %3472 = vmatprep.subr.mxu0 %v193
    %3473 = vmatpush1.msra.mxu0 %v192
    %3474 = vmatprep.subr.mxu0 %v177
    %3475 = vmatpush1.msra.mxu0 %v176
    %3476 = vmatprep.subr.mxu0 %v161
    %3477 = vmatpush1.msra.mxu0 %v160
    %3478 = vmatprep.subr.mxu0 %v145
    %3479 = vmatpush1.msra.mxu0 %v144
    %3480 = vmatprep.subr.mxu0 %v641
    %3481 = vmatpush2.msra.mxu0 %v640
    %3482 = vmatprep.subr.mxu0 %v625
    %3483 = vmatpush2.msra.mxu0 %v624
    %3484 = vmatprep.subr.mxu0 %v609
    %3485 = vmatpush2.msra.mxu0 %v608
    %3486 = vmatprep.subr.mxu0 %v593
    %3487 = vmatpush2.msra.mxu0 %v592
    %3488 = vmatprep.subr.mxu0 %v577
    %3489 = vmatpush2.msra.mxu0 %v576
    %3490 = vmatprep.subr.mxu0 %v561
    %3491 = vmatpush2.msra.mxu0 %v560
    %3492 = vmatprep.subr.mxu0 %v545
    %3493 = vmatpush2.msra.mxu0 %v544
    %3494 = vmatprep.subr.mxu0 %v529
    %3495 = vmatpush2.msra.mxu0 %v528
    %3496 = vmatprep.subr.mxu0 %v513
    %3497 = vmatpush2.msra.mxu0 %v512
    %3498 = vmatprep.subr.mxu0 %v497
    %3499 = vmatpush2.msra.mxu0 %v496
    %3500 = vmatprep.subr.mxu0 %v481
    %3501 = vmatpush2.msra.mxu0 %v480
    %3502 = vmatprep.subr.mxu0 %v465
    %3503 = vmatpush2.msra.mxu0 %v464
    %3504 = vmatprep.subr.mxu0 %v449
    %3505 = vmatpush2.msra.mxu0 %v448
    %3506 = vmatprep.subr.mxu0 %v433
    %3507 = vmatpush2.msra.mxu0 %v432
    %3508 = vmatprep.subr.mxu0 %v417
    %3509 = vmatpush2.msra.mxu0 %v416
    %3510 = vmatprep.subr.mxu0 %v401
    %3511 = vmatpush2.msra.mxu0 %v400
    %3512 = vmatprep.mubr.f32.mxu0 %v2285
    %3513 = vmatmul.mubr.f32.gmra.mxu0 %v2277
    %v3514 = vpop.f32.mrf.mxu0
    %v3515 = vadd.f32 %v2223, %v3514
    %v3516 = vpop.f32.mrf.mxu0
    %v3517 = vadd.f32 %v2227, %v3516
    %3518 = vdwg.mxu0
    %3519 = vmatprep.subr.mxu0 %v897
    %3520 = vmatpush1.msra.mxu0 %v896
    %3521 = vmatprep.subr.mxu0 %v881
    %3522 = vmatpush1.msra.mxu0 %v880
    %3523 = vmatprep.subr.mxu0 %v865
    %3524 = vmatpush1.msra.mxu0 %v864
    %3525 = vmatprep.subr.mxu0 %v849
    %3526 = vmatpush1.msra.mxu0 %v848
    %3527 = vmatprep.subr.mxu0 %v833
    %3528 = vmatpush1.msra.mxu0 %v832
    %3529 = vmatprep.subr.mxu0 %v817
    %3530 = vmatpush1.msra.mxu0 %v816
    %3531 = vmatprep.subr.mxu0 %v801
    %3532 = vmatpush1.msra.mxu0 %v800
    %3533 = vmatprep.subr.mxu0 %v785
    %3534 = vmatpush1.msra.mxu0 %v784
    %3535 = vmatprep.subr.mxu0 %v769
    %3536 = vmatpush1.msra.mxu0 %v768
    %3537 = vmatprep.subr.mxu0 %v753
    %3538 = vmatpush1.msra.mxu0 %v752
    %3539 = vmatprep.subr.mxu0 %v737
    %3540 = vmatpush1.msra.mxu0 %v736
    %3541 = vmatprep.subr.mxu0 %v721
    %3542 = vmatpush1.msra.mxu0 %v720
    %3543 = vmatprep.subr.mxu0 %v705
    %3544 = vmatpush1.msra.mxu0 %v704
    %3545 = vmatprep.subr.mxu0 %v689
    %3546 = vmatpush1.msra.mxu0 %v688
    %3547 = vmatprep.subr.mxu0 %v673
    %3548 = vmatpush1.msra.mxu0 %v672
    %3549 = vmatprep.subr.mxu0 %v657
    %3550 = vmatpush1.msra.mxu0 %v656
    %3551 = vmatprep.subr.mxu0 %v1153
    %3552 = vmatpush2.msra.mxu0 %v1152
    %3553 = vmatprep.subr.mxu0 %v1137
    %3554 = vmatpush2.msra.mxu0 %v1136
    %3555 = vmatprep.subr.mxu0 %v1121
    %3556 = vmatpush2.msra.mxu0 %v1120
    %3557 = vmatprep.subr.mxu0 %v1105
    %3558 = vmatpush2.msra.mxu0 %v1104
    %3559 = vmatprep.subr.mxu0 %v1089
    %3560 = vmatpush2.msra.mxu0 %v1088
    %3561 = vmatprep.subr.mxu0 %v1073
    %3562 = vmatpush2.msra.mxu0 %v1072
    %3563 = vmatprep.subr.mxu0 %v1057
    %3564 = vmatpush2.msra.mxu0 %v1056
    %3565 = vmatprep.subr.mxu0 %v1041
    %3566 = vmatpush2.msra.mxu0 %v1040
    %3567 = vmatprep.subr.mxu0 %v1025
    %3568 = vmatpush2.msra.mxu0 %v1024
    %3569 = vmatprep.subr.mxu0 %v1009
    %3570 = vmatpush2.msra.mxu0 %v1008
    %3571 = vmatprep.subr.mxu0 %v993
    %3572 = vmatpush2.msra.mxu0 %v992
    %3573 = vmatprep.subr.mxu0 %v977
    %3574 = vmatpush2.msra.mxu0 %v976
    %3575 = vmatprep.subr.mxu0 %v961
    %3576 = vmatpush2.msra.mxu0 %v960
    %3577 = vmatprep.subr.mxu0 %v945
    %3578 = vmatpush2.msra.mxu0 %v944
    %3579 = vmatprep.subr.mxu0 %v929
    %3580 = vmatpush2.msra.mxu0 %v928
    %3581 = vmatprep.subr.mxu0 %v913
    %3582 = vmatpush2.msra.mxu0 %v912
    %3583 = vmatprep.mubr.f32.mxu0 %v2286
    %3584 = vmatmul.mubr.f32.gmra.mxu0 %v2284
    %v3585 = vpop.f32.mrf.mxu0
    %v3586 = vadd.f32 %v3515, %v3585
    %v3587 = vpop.f32.mrf.mxu0
    %v3588 = vadd.f32 %v3517, %v3587
    %3589 = vdwg.mxu0
    %3590 = vmatprep.subr.mxu0 %v1409
    %3591 = vmatpush1.msra.mxu0 %v1408
    %3592 = vmatprep.subr.mxu0 %v1393
    %3593 = vmatpush1.msra.mxu0 %v1392
    %3594 = vmatprep.subr.mxu0 %v1377
    %3595 = vmatpush1.msra.mxu0 %v1376
    %3596 = vmatprep.subr.mxu0 %v1361
    %3597 = vmatpush1.msra.mxu0 %v1360
    %3598 = vmatprep.subr.mxu0 %v1345
    %3599 = vmatpush1.msra.mxu0 %v1344
    %3600 = vmatprep.subr.mxu0 %v1329
    %3601 = vmatpush1.msra.mxu0 %v1328
    %3602 = vmatprep.subr.mxu0 %v1313
    %3603 = vmatpush1.msra.mxu0 %v1312
    %3604 = vmatprep.subr.mxu0 %v1297
    %3605 = vmatpush1.msra.mxu0 %v1296
    %3606 = vmatprep.subr.mxu0 %v1281
    %3607 = vmatpush1.msra.mxu0 %v1280
    %3608 = vmatprep.subr.mxu0 %v1265
    %3609 = vmatpush1.msra.mxu0 %v1264
    %3610 = vmatprep.subr.mxu0 %v1249
    %3611 = vmatpush1.msra.mxu0 %v1248
    %3612 = vmatprep.subr.mxu0 %v1233
    %3613 = vmatpush1.msra.mxu0 %v1232
    %3614 = vmatprep.subr.mxu0 %v1217
    %3615 = vmatpush1.msra.mxu0 %v1216
    %3616 = vmatprep.subr.mxu0 %v1201
    %3617 = vmatpush1.msra.mxu0 %v1200
    %3618 = vmatprep.subr.mxu0 %v1185
    %3619 = vmatpush1.msra.mxu0 %v1184
    %3620 = vmatprep.subr.mxu0 %v1169
    %3621 = vmatpush1.msra.mxu0 %v1168
    %3622 = vmatprep.subr.mxu0 %v1665
    %3623 = vmatpush2.msra.mxu0 %v1664
    %3624 = vmatprep.subr.mxu0 %v1649
    %3625 = vmatpush2.msra.mxu0 %v1648
    %3626 = vmatprep.subr.mxu0 %v1633
    %3627 = vmatpush2.msra.mxu0 %v1632
    %3628 = vmatprep.subr.mxu0 %v1617
    %3629 = vmatpush2.msra.mxu0 %v1616
    %3630 = vmatprep.subr.mxu0 %v1601
    %3631 = vmatpush2.msra.mxu0 %v1600
    %3632 = vmatprep.subr.mxu0 %v1585
    %3633 = vmatpush2.msra.mxu0 %v1584
    %3634 = vmatprep.subr.mxu0 %v1569
    %3635 = vmatpush2.msra.mxu0 %v1568
    %3636 = vmatprep.subr.mxu0 %v1553
    %3637 = vmatpush2.msra.mxu0 %v1552
    %3638 = vmatprep.subr.mxu0 %v1537
    %3639 = vmatpush2.msra.mxu0 %v1536
    %3640 = vmatprep.subr.mxu0 %v1521
    %3641 = vmatpush2.msra.mxu0 %v1520
    %3642 = vmatprep.subr.mxu0 %v1505
    %3643 = vmatpush2.msra.mxu0 %v1504
    %3644 = vmatprep.subr.mxu0 %v1489
    %3645 = vmatpush2.msra.mxu0 %v1488
    %3646 = vmatprep.subr.mxu0 %v1473
    %3647 = vmatpush2.msra.mxu0 %v1472
    %3648 = vmatprep.subr.mxu0 %v1457
    %3649 = vmatpush2.msra.mxu0 %v1456
    %3650 = vmatprep.subr.mxu0 %v1441
    %3651 = vmatpush2.msra.mxu0 %v1440
    %3652 = vmatprep.subr.mxu0 %v1425
    %3653 = vmatpush2.msra.mxu0 %v1424
    %3654 = vmatprep.mubr.f32.mxu0 %v2302
    %3655 = vmatmul.mubr.f32.gmra.mxu0 %v2294
    %v3656 = vpop.f32.mrf.mxu0
    %v3657 = vadd.f32 %v3586, %v3656
    %v3658 = vpop.f32.mrf.mxu0
    %v3659 = vadd.f32 %v3588, %v3658
    %3660 = vdwg.mxu0
    %3661 = vmatprep.subr.mxu0 %v1921
    %3662 = vmatpush1.msra.mxu0 %v1920
    %3663 = vmatprep.subr.mxu0 %v1905
    %3664 = vmatpush1.msra.mxu0 %v1904
    %3665 = vmatprep.subr.mxu0 %v1889
    %3666 = vmatpush1.msra.mxu0 %v1888
    %3667 = vmatprep.subr.mxu0 %v1873
    %3668 = vmatpush1.msra.mxu0 %v1872
    %3669 = vmatprep.subr.mxu0 %v1857
    %3670 = vmatpush1.msra.mxu0 %v1856
    %3671 = vmatprep.subr.mxu0 %v1841
    %3672 = vmatpush1.msra.mxu0 %v1840
    %3673 = vmatprep.subr.mxu0 %v1825
    %3674 = vmatpush1.msra.mxu0 %v1824
    %3675 = vmatprep.subr.mxu0 %v1809
    %3676 = vmatpush1.msra.mxu0 %v1808
    %3677 = vmatprep.subr.mxu0 %v1793
    %3678 = vmatpush1.msra.mxu0 %v1792
    %3679 = vmatprep.subr.mxu0 %v1777
    %3680 = vmatpush1.msra.mxu0 %v1776
    %3681 = vmatprep.subr.mxu0 %v1761
    %3682 = vmatpush1.msra.mxu0 %v1760
    %3683 = vmatprep.subr.mxu0 %v1745
    %3684 = vmatpush1.msra.mxu0 %v1744
    %3685 = vmatprep.subr.mxu0 %v1729
    %3686 = vmatpush1.msra.mxu0 %v1728
    %3687 = vmatprep.subr.mxu0 %v1713
    %3688 = vmatpush1.msra.mxu0 %v1712
    %3689 = vmatprep.subr.mxu0 %v1697
    %3690 = vmatpush1.msra.mxu0 %v1696
    %3691 = vmatprep.subr.mxu0 %v1681
    %3692 = vmatpush1.msra.mxu0 %v1680
    %3693 = vmatprep.subr.mxu0 %v2177
    %3694 = vmatpush2.msra.mxu0 %v2176
    %3695 = vmatprep.subr.mxu0 %v2161
    %3696 = vmatpush2.msra.mxu0 %v2160
    %3697 = vmatprep.subr.mxu0 %v2145
    %3698 = vmatpush2.msra.mxu0 %v2144
    %3699 = vmatprep.subr.mxu0 %v2129
    %3700 = vmatpush2.msra.mxu0 %v2128
    %3701 = vmatprep.subr.mxu0 %v2113
    %3702 = vmatpush2.msra.mxu0 %v2112
    %3703 = vmatprep.subr.mxu0 %v2097
    %3704 = vmatpush2.msra.mxu0 %v2096
    %3705 = vmatprep.subr.mxu0 %v2081
    %3706 = vmatpush2.msra.mxu0 %v2080
    %3707 = vmatprep.subr.mxu0 %v2065
    %3708 = vmatpush2.msra.mxu0 %v2064
    %3709 = vmatprep.subr.mxu0 %v2049
    %3710 = vmatpush2.msra.mxu0 %v2048
    %3711 = vmatprep.subr.mxu0 %v2033
    %3712 = vmatpush2.msra.mxu0 %v2032
    %3713 = vmatprep.subr.mxu0 %v2017
    %3714 = vmatpush2.msra.mxu0 %v2016
    %3715 = vmatprep.subr.mxu0 %v2001
    %3716 = vmatpush2.msra.mxu0 %v2000
    %3717 = vmatprep.subr.mxu0 %v1985
    %3718 = vmatpush2.msra.mxu0 %v1984
    %3719 = vmatprep.subr.mxu0 %v1969
    %3720 = vmatpush2.msra.mxu0 %v1968
    %3721 = vmatprep.subr.mxu0 %v1953
    %3722 = vmatpush2.msra.mxu0 %v1952
    %3723 = vmatprep.subr.mxu0 %v1937
    %3724 = vmatpush2.msra.mxu0 %v1936
    %3725 = vmatprep.mubr.f32.mxu0 %v2303
    %3726 = vmatmul.mubr.f32.gmra.mxu0 %v2301
    %v3727 = vpop.f32.mrf.mxu0
    %v3728 = vadd.f32 %v3657, %v3727
    %v3729 = vpop.f32.mrf.mxu0
    %v3730 = vadd.f32 %v3659, %v3729
    %3731 = vdwg.mxu0
    %3732 = vmatprep.subr.mxu0 %v387
    %3733 = vmatpush1.msra.mxu0 %v386
    %3734 = vmatprep.subr.mxu0 %v371
    %3735 = vmatpush1.msra.mxu0 %v370
    %3736 = vmatprep.subr.mxu0 %v355
    %3737 = vmatpush1.msra.mxu0 %v354
    %3738 = vmatprep.subr.mxu0 %v339
    %3739 = vmatpush1.msra.mxu0 %v338
    %3740 = vmatprep.subr.mxu0 %v323
    %3741 = vmatpush1.msra.mxu0 %v322
    %3742 = vmatprep.subr.mxu0 %v307
    %3743 = vmatpush1.msra.mxu0 %v306
    %3744 = vmatprep.subr.mxu0 %v291
    %3745 = vmatpush1.msra.mxu0 %v290
    %3746 = vmatprep.subr.mxu0 %v275
    %3747 = vmatpush1.msra.mxu0 %v274
    %3748 = vmatprep.subr.mxu0 %v259
    %3749 = vmatpush1.msra.mxu0 %v258
    %3750 = vmatprep.subr.mxu0 %v243
    %3751 = vmatpush1.msra.mxu0 %v242
    %3752 = vmatprep.subr.mxu0 %v227
    %3753 = vmatpush1.msra.mxu0 %v226
    %3754 = vmatprep.subr.mxu0 %v211
    %3755 = vmatpush1.msra.mxu0 %v210
    %3756 = vmatprep.subr.mxu0 %v195
    %3757 = vmatpush1.msra.mxu0 %v194
    %3758 = vmatprep.subr.mxu0 %v179
    %3759 = vmatpush1.msra.mxu0 %v178
    %3760 = vmatprep.subr.mxu0 %v163
    %3761 = vmatpush1.msra.mxu0 %v162
    %3762 = vmatprep.subr.mxu0 %v147
    %3763 = vmatpush1.msra.mxu0 %v146
    %3764 = vmatprep.subr.mxu0 %v643
    %3765 = vmatpush2.msra.mxu0 %v642
    %3766 = vmatprep.subr.mxu0 %v627
    %3767 = vmatpush2.msra.mxu0 %v626
    %3768 = vmatprep.subr.mxu0 %v611
    %3769 = vmatpush2.msra.mxu0 %v610
    %3770 = vmatprep.subr.mxu0 %v595
    %3771 = vmatpush2.msra.mxu0 %v594
    %3772 = vmatprep.subr.mxu0 %v579
    %3773 = vmatpush2.msra.mxu0 %v578
    %3774 = vmatprep.subr.mxu0 %v563
    %3775 = vmatpush2.msra.mxu0 %v562
    %3776 = vmatprep.subr.mxu0 %v547
    %3777 = vmatpush2.msra.mxu0 %v546
    %3778 = vmatprep.subr.mxu0 %v531
    %3779 = vmatpush2.msra.mxu0 %v530
    %3780 = vmatprep.subr.mxu0 %v515
    %3781 = vmatpush2.msra.mxu0 %v514
    %3782 = vmatprep.subr.mxu0 %v499
    %3783 = vmatpush2.msra.mxu0 %v498
    %3784 = vmatprep.subr.mxu0 %v483
    %3785 = vmatpush2.msra.mxu0 %v482
    %3786 = vmatprep.subr.mxu0 %v467
    %3787 = vmatpush2.msra.mxu0 %v466
    %3788 = vmatprep.subr.mxu0 %v451
    %3789 = vmatpush2.msra.mxu0 %v450
    %3790 = vmatprep.subr.mxu0 %v435
    %3791 = vmatpush2.msra.mxu0 %v434
    %3792 = vmatprep.subr.mxu0 %v419
    %3793 = vmatpush2.msra.mxu0 %v418
    %3794 = vmatprep.subr.mxu0 %v403
    %3795 = vmatpush2.msra.mxu0 %v402
    %3796 = vmatprep.mubr.f32.mxu0 %v2285
    %3797 = vmatmul.mubr.f32.gmra.mxu0 %v2277
    %v3798 = vpop.f32.mrf.mxu0
    %v3799 = vadd.f32 %v2231, %v3798
    %v3800 = vpop.f32.mrf.mxu0
    %v3801 = vadd.f32 %v2235, %v3800
    %3802 = vdwg.mxu0
    %3803 = vmatprep.subr.mxu0 %v899
    %3804 = vmatpush1.msra.mxu0 %v898
    %3805 = vmatprep.subr.mxu0 %v883
    %3806 = vmatpush1.msra.mxu0 %v882
    %3807 = vmatprep.subr.mxu0 %v867
    %3808 = vmatpush1.msra.mxu0 %v866
    %3809 = vmatprep.subr.mxu0 %v851
    %3810 = vmatpush1.msra.mxu0 %v850
    %3811 = vmatprep.subr.mxu0 %v835
    %3812 = vmatpush1.msra.mxu0 %v834
    %3813 = vmatprep.subr.mxu0 %v819
    %3814 = vmatpush1.msra.mxu0 %v818
    %3815 = vmatprep.subr.mxu0 %v803
    %3816 = vmatpush1.msra.mxu0 %v802
    %3817 = vmatprep.subr.mxu0 %v787
    %3818 = vmatpush1.msra.mxu0 %v786
    %3819 = vmatprep.subr.mxu0 %v771
    %3820 = vmatpush1.msra.mxu0 %v770
    %3821 = vmatprep.subr.mxu0 %v755
    %3822 = vmatpush1.msra.mxu0 %v754
    %3823 = vmatprep.subr.mxu0 %v739
    %3824 = vmatpush1.msra.mxu0 %v738
    %3825 = vmatprep.subr.mxu0 %v723
    %3826 = vmatpush1.msra.mxu0 %v722
    %3827 = vmatprep.subr.mxu0 %v707
    %3828 = vmatpush1.msra.mxu0 %v706
    %3829 = vmatprep.subr.mxu0 %v691
    %3830 = vmatpush1.msra.mxu0 %v690
    %3831 = vmatprep.subr.mxu0 %v675
    %3832 = vmatpush1.msra.mxu0 %v674
    %3833 = vmatprep.subr.mxu0 %v659
    %3834 = vmatpush1.msra.mxu0 %v658
    %3835 = vmatprep.subr.mxu0 %v1155
    %3836 = vmatpush2.msra.mxu0 %v1154
    %3837 = vmatprep.subr.mxu0 %v1139
    %3838 = vmatpush2.msra.mxu0 %v1138
    %3839 = vmatprep.subr.mxu0 %v1123
    %3840 = vmatpush2.msra.mxu0 %v1122
    %3841 = vmatprep.subr.mxu0 %v1107
    %3842 = vmatpush2.msra.mxu0 %v1106
    %3843 = vmatprep.subr.mxu0 %v1091
    %3844 = vmatpush2.msra.mxu0 %v1090
    %3845 = vmatprep.subr.mxu0 %v1075
    %3846 = vmatpush2.msra.mxu0 %v1074
    %3847 = vmatprep.subr.mxu0 %v1059
    %3848 = vmatpush2.msra.mxu0 %v1058
    %3849 = vmatprep.subr.mxu0 %v1043
    %3850 = vmatpush2.msra.mxu0 %v1042
    %3851 = vmatprep.subr.mxu0 %v1027
    %3852 = vmatpush2.msra.mxu0 %v1026
    %3853 = vmatprep.subr.mxu0 %v1011
    %3854 = vmatpush2.msra.mxu0 %v1010
    %3855 = vmatprep.subr.mxu0 %v995
    %3856 = vmatpush2.msra.mxu0 %v994
    %3857 = vmatprep.subr.mxu0 %v979
    %3858 = vmatpush2.msra.mxu0 %v978
    %3859 = vmatprep.subr.mxu0 %v963
    %3860 = vmatpush2.msra.mxu0 %v962
    %3861 = vmatprep.subr.mxu0 %v947
    %3862 = vmatpush2.msra.mxu0 %v946
    %3863 = vmatprep.subr.mxu0 %v931
    %3864 = vmatpush2.msra.mxu0 %v930
    %3865 = vmatprep.subr.mxu0 %v915
    %3866 = vmatpush2.msra.mxu0 %v914
    %3867 = vmatprep.mubr.f32.mxu0 %v2286
    %3868 = vmatmul.mubr.f32.gmra.mxu0 %v2284
    %v3869 = vpop.f32.mrf.mxu0
    %v3870 = vadd.f32 %v3799, %v3869
    %v3871 = vpop.f32.mrf.mxu0
    %v3872 = vadd.f32 %v3801, %v3871
    %3873 = vdwg.mxu0
    %3874 = vmatprep.subr.mxu0 %v1411
    %3875 = vmatpush1.msra.mxu0 %v1410
    %3876 = vmatprep.subr.mxu0 %v1395
    %3877 = vmatpush1.msra.mxu0 %v1394
    %3878 = vmatprep.subr.mxu0 %v1379
    %3879 = vmatpush1.msra.mxu0 %v1378
    %3880 = vmatprep.subr.mxu0 %v1363
    %3881 = vmatpush1.msra.mxu0 %v1362
    %3882 = vmatprep.subr.mxu0 %v1347
    %3883 = vmatpush1.msra.mxu0 %v1346
    %3884 = vmatprep.subr.mxu0 %v1331
    %3885 = vmatpush1.msra.mxu0 %v1330
    %3886 = vmatprep.subr.mxu0 %v1315
    %3887 = vmatpush1.msra.mxu0 %v1314
    %3888 = vmatprep.subr.mxu0 %v1299
    %3889 = vmatpush1.msra.mxu0 %v1298
    %3890 = vmatprep.subr.mxu0 %v1283
    %3891 = vmatpush1.msra.mxu0 %v1282
    %3892 = vmatprep.subr.mxu0 %v1267
    %3893 = vmatpush1.msra.mxu0 %v1266
    %3894 = vmatprep.subr.mxu0 %v1251
    %3895 = vmatpush1.msra.mxu0 %v1250
    %3896 = vmatprep.subr.mxu0 %v1235
    %3897 = vmatpush1.msra.mxu0 %v1234
    %3898 = vmatprep.subr.mxu0 %v1219
    %3899 = vmatpush1.msra.mxu0 %v1218
    %3900 = vmatprep.subr.mxu0 %v1203
    %3901 = vmatpush1.msra.mxu0 %v1202
    %3902 = vmatprep.subr.mxu0 %v1187
    %3903 = vmatpush1.msra.mxu0 %v1186
    %3904 = vmatprep.subr.mxu0 %v1171
    %3905 = vmatpush1.msra.mxu0 %v1170
    %3906 = vmatprep.subr.mxu0 %v1667
    %3907 = vmatpush2.msra.mxu0 %v1666
    %3908 = vmatprep.subr.mxu0 %v1651
    %3909 = vmatpush2.msra.mxu0 %v1650
    %3910 = vmatprep.subr.mxu0 %v1635
    %3911 = vmatpush2.msra.mxu0 %v1634
    %3912 = vmatprep.subr.mxu0 %v1619
    %3913 = vmatpush2.msra.mxu0 %v1618
    %3914 = vmatprep.subr.mxu0 %v1603
    %3915 = vmatpush2.msra.mxu0 %v1602
    %3916 = vmatprep.subr.mxu0 %v1587
    %3917 = vmatpush2.msra.mxu0 %v1586
    %3918 = vmatprep.subr.mxu0 %v1571
    %3919 = vmatpush2.msra.mxu0 %v1570
    %3920 = vmatprep.subr.mxu0 %v1555
    %3921 = vmatpush2.msra.mxu0 %v1554
    %3922 = vmatprep.subr.mxu0 %v1539
    %3923 = vmatpush2.msra.mxu0 %v1538
    %3924 = vmatprep.subr.mxu0 %v1523
    %3925 = vmatpush2.msra.mxu0 %v1522
    %3926 = vmatprep.subr.mxu0 %v1507
    %3927 = vmatpush2.msra.mxu0 %v1506
    %3928 = vmatprep.subr.mxu0 %v1491
    %3929 = vmatpush2.msra.mxu0 %v1490
    %3930 = vmatprep.subr.mxu0 %v1475
    %3931 = vmatpush2.msra.mxu0 %v1474
    %3932 = vmatprep.subr.mxu0 %v1459
    %3933 = vmatpush2.msra.mxu0 %v1458
    %3934 = vmatprep.subr.mxu0 %v1443
    %3935 = vmatpush2.msra.mxu0 %v1442
    %3936 = vmatprep.subr.mxu0 %v1427
    %3937 = vmatpush2.msra.mxu0 %v1426
    %3938 = vmatprep.mubr.f32.mxu0 %v2302
    %3939 = vmatmul.mubr.f32.gmra.mxu0 %v2294
    %v3940 = vpop.f32.mrf.mxu0
    %v3941 = vadd.f32 %v3870, %v3940
    %v3942 = vpop.f32.mrf.mxu0
    %v3943 = vadd.f32 %v3872, %v3942
    %3944 = vdwg.mxu0
    %3945 = vmatprep.subr.mxu0 %v1923
    %3946 = vmatpush1.msra.mxu0 %v1922
    %3947 = vmatprep.subr.mxu0 %v1907
    %3948 = vmatpush1.msra.mxu0 %v1906
    %3949 = vmatprep.subr.mxu0 %v1891
    %3950 = vmatpush1.msra.mxu0 %v1890
    %3951 = vmatprep.subr.mxu0 %v1875
    %3952 = vmatpush1.msra.mxu0 %v1874
    %3953 = vmatprep.subr.mxu0 %v1859
    %3954 = vmatpush1.msra.mxu0 %v1858
    %3955 = vmatprep.subr.mxu0 %v1843
    %3956 = vmatpush1.msra.mxu0 %v1842
    %3957 = vmatprep.subr.mxu0 %v1827
    %3958 = vmatpush1.msra.mxu0 %v1826
    %3959 = vmatprep.subr.mxu0 %v1811
    %3960 = vmatpush1.msra.mxu0 %v1810
    %3961 = vmatprep.subr.mxu0 %v1795
    %3962 = vmatpush1.msra.mxu0 %v1794
    %3963 = vmatprep.subr.mxu0 %v1779
    %3964 = vmatpush1.msra.mxu0 %v1778
    %3965 = vmatprep.subr.mxu0 %v1763
    %3966 = vmatpush1.msra.mxu0 %v1762
    %3967 = vmatprep.subr.mxu0 %v1747
    %3968 = vmatpush1.msra.mxu0 %v1746
    %3969 = vmatprep.subr.mxu0 %v1731
    %3970 = vmatpush1.msra.mxu0 %v1730
    %3971 = vmatprep.subr.mxu0 %v1715
    %3972 = vmatpush1.msra.mxu0 %v1714
    %3973 = vmatprep.subr.mxu0 %v1699
    %3974 = vmatpush1.msra.mxu0 %v1698
    %3975 = vmatprep.subr.mxu0 %v1683
    %3976 = vmatpush1.msra.mxu0 %v1682
    %3977 = vmatprep.subr.mxu0 %v2179
    %3978 = vmatpush2.msra.mxu0 %v2178
    %3979 = vmatprep.subr.mxu0 %v2163
    %3980 = vmatpush2.msra.mxu0 %v2162
    %3981 = vmatprep.subr.mxu0 %v2147
    %3982 = vmatpush2.msra.mxu0 %v2146
    %3983 = vmatprep.subr.mxu0 %v2131
    %3984 = vmatpush2.msra.mxu0 %v2130
    %3985 = vmatprep.subr.mxu0 %v2115
    %3986 = vmatpush2.msra.mxu0 %v2114
    %3987 = vmatprep.subr.mxu0 %v2099
    %3988 = vmatpush2.msra.mxu0 %v2098
    %3989 = vmatprep.subr.mxu0 %v2083
    %3990 = vmatpush2.msra.mxu0 %v2082
    %3991 = vmatprep.subr.mxu0 %v2067
    %3992 = vmatpush2.msra.mxu0 %v2066
    %3993 = vmatprep.subr.mxu0 %v2051
    %3994 = vmatpush2.msra.mxu0 %v2050
    %3995 = vmatprep.subr.mxu0 %v2035
    %3996 = vmatpush2.msra.mxu0 %v2034
    %3997 = vmatprep.subr.mxu0 %v2019
    %3998 = vmatpush2.msra.mxu0 %v2018
    %3999 = vmatprep.subr.mxu0 %v2003
    %4000 = vmatpush2.msra.mxu0 %v2002
    %4001 = vmatprep.subr.mxu0 %v1987
    %4002 = vmatpush2.msra.mxu0 %v1986
    %4003 = vmatprep.subr.mxu0 %v1971
    %4004 = vmatpush2.msra.mxu0 %v1970
    %4005 = vmatprep.subr.mxu0 %v1955
    %4006 = vmatpush2.msra.mxu0 %v1954
    %4007 = vmatprep.subr.mxu0 %v1939
    %4008 = vmatpush2.msra.mxu0 %v1938
    %4009 = vmatprep.mubr.f32.mxu0 %v2303
    %4010 = vmatmul.mubr.f32.gmra.mxu0 %v2301
    %v4011 = vpop.f32.mrf.mxu0
    %v4012 = vadd.f32 %v3941, %v4011
    %v4013 = vpop.f32.mrf.mxu0
    %v4014 = vadd.f32 %v3943, %v4013
    %4015 = vdwg.mxu0
    %4016 = vmatprep.subr.mxu0 %v389
    %4017 = vmatpush1.msra.mxu0 %v388
    %4018 = vmatprep.subr.mxu0 %v373
    %4019 = vmatpush1.msra.mxu0 %v372
    %4020 = vmatprep.subr.mxu0 %v357
    %4021 = vmatpush1.msra.mxu0 %v356
    %4022 = vmatprep.subr.mxu0 %v341
    %4023 = vmatpush1.msra.mxu0 %v340
    %4024 = vmatprep.subr.mxu0 %v325
    %4025 = vmatpush1.msra.mxu0 %v324
    %4026 = vmatprep.subr.mxu0 %v309
    %4027 = vmatpush1.msra.mxu0 %v308
    %4028 = vmatprep.subr.mxu0 %v293
    %4029 = vmatpush1.msra.mxu0 %v292
    %4030 = vmatprep.subr.mxu0 %v277
    %4031 = vmatpush1.msra.mxu0 %v276
    %4032 = vmatprep.subr.mxu0 %v261
    %4033 = vmatpush1.msra.mxu0 %v260
    %4034 = vmatprep.subr.mxu0 %v245
    %4035 = vmatpush1.msra.mxu0 %v244
    %4036 = vmatprep.subr.mxu0 %v229
    %4037 = vmatpush1.msra.mxu0 %v228
    %4038 = vmatprep.subr.mxu0 %v213
    %4039 = vmatpush1.msra.mxu0 %v212
    %4040 = vmatprep.subr.mxu0 %v197
    %4041 = vmatpush1.msra.mxu0 %v196
    %4042 = vmatprep.subr.mxu0 %v181
    %4043 = vmatpush1.msra.mxu0 %v180
    %4044 = vmatprep.subr.mxu0 %v165
    %4045 = vmatpush1.msra.mxu0 %v164
    %4046 = vmatprep.subr.mxu0 %v149
    %4047 = vmatpush1.msra.mxu0 %v148
    %4048 = vmatprep.subr.mxu0 %v645
    %4049 = vmatpush2.msra.mxu0 %v644
    %4050 = vmatprep.subr.mxu0 %v629
    %4051 = vmatpush2.msra.mxu0 %v628
    %4052 = vmatprep.subr.mxu0 %v613
    %4053 = vmatpush2.msra.mxu0 %v612
    %4054 = vmatprep.subr.mxu0 %v597
    %4055 = vmatpush2.msra.mxu0 %v596
    %4056 = vmatprep.subr.mxu0 %v581
    %4057 = vmatpush2.msra.mxu0 %v580
    %4058 = vmatprep.subr.mxu0 %v565
    %4059 = vmatpush2.msra.mxu0 %v564
    %4060 = vmatprep.subr.mxu0 %v549
    %4061 = vmatpush2.msra.mxu0 %v548
    %4062 = vmatprep.subr.mxu0 %v533
    %4063 = vmatpush2.msra.mxu0 %v532
    %4064 = vmatprep.subr.mxu0 %v517
    %4065 = vmatpush2.msra.mxu0 %v516
    %4066 = vmatprep.subr.mxu0 %v501
    %4067 = vmatpush2.msra.mxu0 %v500
    %4068 = vmatprep.subr.mxu0 %v485
    %4069 = vmatpush2.msra.mxu0 %v484
    %4070 = vmatprep.subr.mxu0 %v469
    %4071 = vmatpush2.msra.mxu0 %v468
    %4072 = vmatprep.subr.mxu0 %v453
    %4073 = vmatpush2.msra.mxu0 %v452
    %4074 = vmatprep.subr.mxu0 %v437
    %4075 = vmatpush2.msra.mxu0 %v436
    %4076 = vmatprep.subr.mxu0 %v421
    %4077 = vmatpush2.msra.mxu0 %v420
    %4078 = vmatprep.subr.mxu0 %v405
    %4079 = vmatpush2.msra.mxu0 %v404
    %4080 = vmatprep.mubr.f32.mxu0 %v2285
    %4081 = vmatmul.mubr.f32.gmra.mxu0 %v2277
    %v4082 = vpop.f32.mrf.mxu0
    %v4083 = vadd.f32 %v2239, %v4082
    %v4084 = vpop.f32.mrf.mxu0
    %v4085 = vadd.f32 %v2243, %v4084
    %4086 = vdwg.mxu0
    %4087 = vmatprep.subr.mxu0 %v901
    %4088 = vmatpush1.msra.mxu0 %v900
    %4089 = vmatprep.subr.mxu0 %v885
    %4090 = vmatpush1.msra.mxu0 %v884
    %4091 = vmatprep.subr.mxu0 %v869
    %4092 = vmatpush1.msra.mxu0 %v868
    %4093 = vmatprep.subr.mxu0 %v853
    %4094 = vmatpush1.msra.mxu0 %v852
    %4095 = vmatprep.subr.mxu0 %v837
    %4096 = vmatpush1.msra.mxu0 %v836
    %4097 = vmatprep.subr.mxu0 %v821
    %4098 = vmatpush1.msra.mxu0 %v820
    %4099 = vmatprep.subr.mxu0 %v805
    %4100 = vmatpush1.msra.mxu0 %v804
    %4101 = vmatprep.subr.mxu0 %v789
    %4102 = vmatpush1.msra.mxu0 %v788
    %4103 = vmatprep.subr.mxu0 %v773
    %4104 = vmatpush1.msra.mxu0 %v772
    %4105 = vmatprep.subr.mxu0 %v757
    %4106 = vmatpush1.msra.mxu0 %v756
    %4107 = vmatprep.subr.mxu0 %v741
    %4108 = vmatpush1.msra.mxu0 %v740
    %4109 = vmatprep.subr.mxu0 %v725
    %4110 = vmatpush1.msra.mxu0 %v724
    %4111 = vmatprep.subr.mxu0 %v709
    %4112 = vmatpush1.msra.mxu0 %v708
    %4113 = vmatprep.subr.mxu0 %v693
    %4114 = vmatpush1.msra.mxu0 %v692
    %4115 = vmatprep.subr.mxu0 %v677
    %4116 = vmatpush1.msra.mxu0 %v676
    %4117 = vmatprep.subr.mxu0 %v661
    %4118 = vmatpush1.msra.mxu0 %v660
    %4119 = vmatprep.subr.mxu0 %v1157
    %4120 = vmatpush2.msra.mxu0 %v1156
    %4121 = vmatprep.subr.mxu0 %v1141
    %4122 = vmatpush2.msra.mxu0 %v1140
    %4123 = vmatprep.subr.mxu0 %v1125
    %4124 = vmatpush2.msra.mxu0 %v1124
    %4125 = vmatprep.subr.mxu0 %v1109
    %4126 = vmatpush2.msra.mxu0 %v1108
    %4127 = vmatprep.subr.mxu0 %v1093
    %4128 = vmatpush2.msra.mxu0 %v1092
    %4129 = vmatprep.subr.mxu0 %v1077
    %4130 = vmatpush2.msra.mxu0 %v1076
    %4131 = vmatprep.subr.mxu0 %v1061
    %4132 = vmatpush2.msra.mxu0 %v1060
    %4133 = vmatprep.subr.mxu0 %v1045
    %4134 = vmatpush2.msra.mxu0 %v1044
    %4135 = vmatprep.subr.mxu0 %v1029
    %4136 = vmatpush2.msra.mxu0 %v1028
    %4137 = vmatprep.subr.mxu0 %v1013
    %4138 = vmatpush2.msra.mxu0 %v1012
    %4139 = vmatprep.subr.mxu0 %v997
    %4140 = vmatpush2.msra.mxu0 %v996
    %4141 = vmatprep.subr.mxu0 %v981
    %4142 = vmatpush2.msra.mxu0 %v980
    %4143 = vmatprep.subr.mxu0 %v965
    %4144 = vmatpush2.msra.mxu0 %v964
    %4145 = vmatprep.subr.mxu0 %v949
    %4146 = vmatpush2.msra.mxu0 %v948
    %4147 = vmatprep.subr.mxu0 %v933
    %4148 = vmatpush2.msra.mxu0 %v932
    %4149 = vmatprep.subr.mxu0 %v917
    %4150 = vmatpush2.msra.mxu0 %v916
    %4151 = vmatprep.mubr.f32.mxu0 %v2286
    %4152 = vmatmul.mubr.f32.gmra.mxu0 %v2284
    %v4153 = vpop.f32.mrf.mxu0
    %v4154 = vadd.f32 %v4083, %v4153
    %v4155 = vpop.f32.mrf.mxu0
    %v4156 = vadd.f32 %v4085, %v4155
    %4157 = vdwg.mxu0
    %4158 = vmatprep.subr.mxu0 %v1413
    %4159 = vmatpush1.msra.mxu0 %v1412
    %4160 = vmatprep.subr.mxu0 %v1397
    %4161 = vmatpush1.msra.mxu0 %v1396
    %4162 = vmatprep.subr.mxu0 %v1381
    %4163 = vmatpush1.msra.mxu0 %v1380
    %4164 = vmatprep.subr.mxu0 %v1365
    %4165 = vmatpush1.msra.mxu0 %v1364
    %4166 = vmatprep.subr.mxu0 %v1349
    %4167 = vmatpush1.msra.mxu0 %v1348
    %4168 = vmatprep.subr.mxu0 %v1333
    %4169 = vmatpush1.msra.mxu0 %v1332
    %4170 = vmatprep.subr.mxu0 %v1317
    %4171 = vmatpush1.msra.mxu0 %v1316
    %4172 = vmatprep.subr.mxu0 %v1301
    %4173 = vmatpush1.msra.mxu0 %v1300
    %4174 = vmatprep.subr.mxu0 %v1285
    %4175 = vmatpush1.msra.mxu0 %v1284
    %4176 = vmatprep.subr.mxu0 %v1269
    %4177 = vmatpush1.msra.mxu0 %v1268
    %4178 = vmatprep.subr.mxu0 %v1253
    %4179 = vmatpush1.msra.mxu0 %v1252
    %4180 = vmatprep.subr.mxu0 %v1237
    %4181 = vmatpush1.msra.mxu0 %v1236
    %4182 = vmatprep.subr.mxu0 %v1221
    %4183 = vmatpush1.msra.mxu0 %v1220
    %4184 = vmatprep.subr.mxu0 %v1205
    %4185 = vmatpush1.msra.mxu0 %v1204
    %4186 = vmatprep.subr.mxu0 %v1189
    %4187 = vmatpush1.msra.mxu0 %v1188
    %4188 = vmatprep.subr.mxu0 %v1173
    %4189 = vmatpush1.msra.mxu0 %v1172
    %4190 = vmatprep.subr.mxu0 %v1669
    %4191 = vmatpush2.msra.mxu0 %v1668
    %4192 = vmatprep.subr.mxu0 %v1653
    %4193 = vmatpush2.msra.mxu0 %v1652
    %4194 = vmatprep.subr.mxu0 %v1637
    %4195 = vmatpush2.msra.mxu0 %v1636
    %4196 = vmatprep.subr.mxu0 %v1621
    %4197 = vmatpush2.msra.mxu0 %v1620
    %4198 = vmatprep.subr.mxu0 %v1605
    %4199 = vmatpush2.msra.mxu0 %v1604
    %4200 = vmatprep.subr.mxu0 %v1589
    %4201 = vmatpush2.msra.mxu0 %v1588
    %4202 = vmatprep.subr.mxu0 %v1573
    %4203 = vmatpush2.msra.mxu0 %v1572
    %4204 = vmatprep.subr.mxu0 %v1557
    %4205 = vmatpush2.msra.mxu0 %v1556
    %4206 = vmatprep.subr.mxu0 %v1541
    %4207 = vmatpush2.msra.mxu0 %v1540
    %4208 = vmatprep.subr.mxu0 %v1525
    %4209 = vmatpush2.msra.mxu0 %v1524
    %4210 = vmatprep.subr.mxu0 %v1509
    %4211 = vmatpush2.msra.mxu0 %v1508
    %4212 = vmatprep.subr.mxu0 %v1493
    %4213 = vmatpush2.msra.mxu0 %v1492
    %4214 = vmatprep.subr.mxu0 %v1477
    %4215 = vmatpush2.msra.mxu0 %v1476
    %4216 = vmatprep.subr.mxu0 %v1461
    %4217 = vmatpush2.msra.mxu0 %v1460
    %4218 = vmatprep.subr.mxu0 %v1445
    %4219 = vmatpush2.msra.mxu0 %v1444
    %4220 = vmatprep.subr.mxu0 %v1429
    %4221 = vmatpush2.msra.mxu0 %v1428
    %4222 = vmatprep.mubr.f32.mxu0 %v2302
    %4223 = vmatmul.mubr.f32.gmra.mxu0 %v2294
    %v4224 = vpop.f32.mrf.mxu0
    %v4225 = vadd.f32 %v4154, %v4224
    %v4226 = vpop.f32.mrf.mxu0
    %v4227 = vadd.f32 %v4156, %v4226
    %4228 = vdwg.mxu0
    %4229 = vmatprep.subr.mxu0 %v1925
    %4230 = vmatpush1.msra.mxu0 %v1924
    %4231 = vmatprep.subr.mxu0 %v1909
    %4232 = vmatpush1.msra.mxu0 %v1908
    %4233 = vmatprep.subr.mxu0 %v1893
    %4234 = vmatpush1.msra.mxu0 %v1892
    %4235 = vmatprep.subr.mxu0 %v1877
    %4236 = vmatpush1.msra.mxu0 %v1876
    %4237 = vmatprep.subr.mxu0 %v1861
    %4238 = vmatpush1.msra.mxu0 %v1860
    %4239 = vmatprep.subr.mxu0 %v1845
    %4240 = vmatpush1.msra.mxu0 %v1844
    %4241 = vmatprep.subr.mxu0 %v1829
    %4242 = vmatpush1.msra.mxu0 %v1828
    %4243 = vmatprep.subr.mxu0 %v1813
    %4244 = vmatpush1.msra.mxu0 %v1812
    %4245 = vmatprep.subr.mxu0 %v1797
    %4246 = vmatpush1.msra.mxu0 %v1796
    %4247 = vmatprep.subr.mxu0 %v1781
    %4248 = vmatpush1.msra.mxu0 %v1780
    %4249 = vmatprep.subr.mxu0 %v1765
    %4250 = vmatpush1.msra.mxu0 %v1764
    %4251 = vmatprep.subr.mxu0 %v1749
    %4252 = vmatpush1.msra.mxu0 %v1748
    %4253 = vmatprep.subr.mxu0 %v1733
    %4254 = vmatpush1.msra.mxu0 %v1732
    %4255 = vmatprep.subr.mxu0 %v1717
    %4256 = vmatpush1.msra.mxu0 %v1716
    %4257 = vmatprep.subr.mxu0 %v1701
    %4258 = vmatpush1.msra.mxu0 %v1700
    %4259 = vmatprep.subr.mxu0 %v1685
    %4260 = vmatpush1.msra.mxu0 %v1684
    %4261 = vmatprep.subr.mxu0 %v2181
    %4262 = vmatpush2.msra.mxu0 %v2180
    %4263 = vmatprep.subr.mxu0 %v2165
    %4264 = vmatpush2.msra.mxu0 %v2164
    %4265 = vmatprep.subr.mxu0 %v2149
    %4266 = vmatpush2.msra.mxu0 %v2148
    %4267 = vmatprep.subr.mxu0 %v2133
    %4268 = vmatpush2.msra.mxu0 %v2132
    %4269 = vmatprep.subr.mxu0 %v2117
    %4270 = vmatpush2.msra.mxu0 %v2116
    %4271 = vmatprep.subr.mxu0 %v2101
    %4272 = vmatpush2.msra.mxu0 %v2100
    %4273 = vmatprep.subr.mxu0 %v2085
    %4274 = vmatpush2.msra.mxu0 %v2084
    %4275 = vmatprep.subr.mxu0 %v2069
    %4276 = vmatpush2.msra.mxu0 %v2068
    %4277 = vmatprep.subr.mxu0 %v2053
    %4278 = vmatpush2.msra.mxu0 %v2052
    %4279 = vmatprep.subr.mxu0 %v2037
    %4280 = vmatpush2.msra.mxu0 %v2036
    %4281 = vmatprep.subr.mxu0 %v2021
    %4282 = vmatpush2.msra.mxu0 %v2020
    %4283 = vmatprep.subr.mxu0 %v2005
    %4284 = vmatpush2.msra.mxu0 %v2004
    %4285 = vmatprep.subr.mxu0 %v1989
    %4286 = vmatpush2.msra.mxu0 %v1988
    %4287 = vmatprep.subr.mxu0 %v1973
    %4288 = vmatpush2.msra.mxu0 %v1972
    %4289 = vmatprep.subr.mxu0 %v1957
    %4290 = vmatpush2.msra.mxu0 %v1956
    %4291 = vmatprep.subr.mxu0 %v1941
    %4292 = vmatpush2.msra.mxu0 %v1940
    %4293 = vmatprep.mubr.f32.mxu0 %v2303
    %4294 = vmatmul.mubr.f32.gmra.mxu0 %v2301
    %v4295 = vpop.f32.mrf.mxu0
    %v4296 = vadd.f32 %v4225, %v4295
    %v4297 = vpop.f32.mrf.mxu0
    %v4298 = vadd.f32 %v4227, %v4297
    %4299 = vdwg.mxu0
    %4300 = vmatprep.subr.mxu0 %v391
    %4301 = vmatpush1.msra.mxu0 %v390
    %4302 = vmatprep.subr.mxu0 %v375
    %4303 = vmatpush1.msra.mxu0 %v374
    %4304 = vmatprep.subr.mxu0 %v359
    %4305 = vmatpush1.msra.mxu0 %v358
    %4306 = vmatprep.subr.mxu0 %v343
    %4307 = vmatpush1.msra.mxu0 %v342
    %4308 = vmatprep.subr.mxu0 %v327
    %4309 = vmatpush1.msra.mxu0 %v326
    %4310 = vmatprep.subr.mxu0 %v311
    %4311 = vmatpush1.msra.mxu0 %v310
    %4312 = vmatprep.subr.mxu0 %v295
    %4313 = vmatpush1.msra.mxu0 %v294
    %4314 = vmatprep.subr.mxu0 %v279
    %4315 = vmatpush1.msra.mxu0 %v278
    %4316 = vmatprep.subr.mxu0 %v263
    %4317 = vmatpush1.msra.mxu0 %v262
    %4318 = vmatprep.subr.mxu0 %v247
    %4319 = vmatpush1.msra.mxu0 %v246
    %4320 = vmatprep.subr.mxu0 %v231
    %4321 = vmatpush1.msra.mxu0 %v230
    %4322 = vmatprep.subr.mxu0 %v215
    %4323 = vmatpush1.msra.mxu0 %v214
    %4324 = vmatprep.subr.mxu0 %v199
    %4325 = vmatpush1.msra.mxu0 %v198
    %4326 = vmatprep.subr.mxu0 %v183
    %4327 = vmatpush1.msra.mxu0 %v182
    %4328 = vmatprep.subr.mxu0 %v167
    %4329 = vmatpush1.msra.mxu0 %v166
    %4330 = vmatprep.subr.mxu0 %v151
    %4331 = vmatpush1.msra.mxu0 %v150
    %4332 = vmatprep.subr.mxu0 %v647
    %4333 = vmatpush2.msra.mxu0 %v646
    %4334 = vmatprep.subr.mxu0 %v631
    %4335 = vmatpush2.msra.mxu0 %v630
    %4336 = vmatprep.subr.mxu0 %v615
    %4337 = vmatpush2.msra.mxu0 %v614
    %4338 = vmatprep.subr.mxu0 %v599
    %4339 = vmatpush2.msra.mxu0 %v598
    %4340 = vmatprep.subr.mxu0 %v583
    %4341 = vmatpush2.msra.mxu0 %v582
    %4342 = vmatprep.subr.mxu0 %v567
    %4343 = vmatpush2.msra.mxu0 %v566
    %4344 = vmatprep.subr.mxu0 %v551
    %4345 = vmatpush2.msra.mxu0 %v550
    %4346 = vmatprep.subr.mxu0 %v535
    %4347 = vmatpush2.msra.mxu0 %v534
    %4348 = vmatprep.subr.mxu0 %v519
    %4349 = vmatpush2.msra.mxu0 %v518
    %4350 = vmatprep.subr.mxu0 %v503
    %4351 = vmatpush2.msra.mxu0 %v502
    %4352 = vmatprep.subr.mxu0 %v487
    %4353 = vmatpush2.msra.mxu0 %v486
    %4354 = vmatprep.subr.mxu0 %v471
    %4355 = vmatpush2.msra.mxu0 %v470
    %4356 = vmatprep.subr.mxu0 %v455
    %4357 = vmatpush2.msra.mxu0 %v454
    %4358 = vmatprep.subr.mxu0 %v439
    %4359 = vmatpush2.msra.mxu0 %v438
    %4360 = vmatprep.subr.mxu0 %v423
    %4361 = vmatpush2.msra.mxu0 %v422
    %4362 = vmatprep.subr.mxu0 %v407
    %4363 = vmatpush2.msra.mxu0 %v406
    %4364 = vmatprep.mubr.f32.mxu0 %v2285
    %4365 = vmatmul.mubr.f32.gmra.mxu0 %v2277
    %v4366 = vpop.f32.mrf.mxu0
    %v4367 = vadd.f32 %v2247, %v4366
    %v4368 = vpop.f32.mrf.mxu0
    %v4369 = vadd.f32 %v2251, %v4368
    %4370 = vdwg.mxu0
    %4371 = vmatprep.subr.mxu0 %v903
    %4372 = vmatpush1.msra.mxu0 %v902
    %4373 = vmatprep.subr.mxu0 %v887
    %4374 = vmatpush1.msra.mxu0 %v886
    %4375 = vmatprep.subr.mxu0 %v871
    %4376 = vmatpush1.msra.mxu0 %v870
    %4377 = vmatprep.subr.mxu0 %v855
    %4378 = vmatpush1.msra.mxu0 %v854
    %4379 = vmatprep.subr.mxu0 %v839
    %4380 = vmatpush1.msra.mxu0 %v838
    %4381 = vmatprep.subr.mxu0 %v823
    %4382 = vmatpush1.msra.mxu0 %v822
    %4383 = vmatprep.subr.mxu0 %v807
    %4384 = vmatpush1.msra.mxu0 %v806
    %4385 = vmatprep.subr.mxu0 %v791
    %4386 = vmatpush1.msra.mxu0 %v790
    %4387 = vmatprep.subr.mxu0 %v775
    %4388 = vmatpush1.msra.mxu0 %v774
    %4389 = vmatprep.subr.mxu0 %v759
    %4390 = vmatpush1.msra.mxu0 %v758
    %4391 = vmatprep.subr.mxu0 %v743
    %4392 = vmatpush1.msra.mxu0 %v742
    %4393 = vmatprep.subr.mxu0 %v727
    %4394 = vmatpush1.msra.mxu0 %v726
    %4395 = vmatprep.subr.mxu0 %v711
    %4396 = vmatpush1.msra.mxu0 %v710
    %4397 = vmatprep.subr.mxu0 %v695
    %4398 = vmatpush1.msra.mxu0 %v694
    %4399 = vmatprep.subr.mxu0 %v679
    %4400 = vmatpush1.msra.mxu0 %v678
    %4401 = vmatprep.subr.mxu0 %v663
    %4402 = vmatpush1.msra.mxu0 %v662
    %4403 = vmatprep.subr.mxu0 %v1159
    %4404 = vmatpush2.msra.mxu0 %v1158
    %4405 = vmatprep.subr.mxu0 %v1143
    %4406 = vmatpush2.msra.mxu0 %v1142
    %4407 = vmatprep.subr.mxu0 %v1127
    %4408 = vmatpush2.msra.mxu0 %v1126
    %4409 = vmatprep.subr.mxu0 %v1111
    %4410 = vmatpush2.msra.mxu0 %v1110
    %4411 = vmatprep.subr.mxu0 %v1095
    %4412 = vmatpush2.msra.mxu0 %v1094
    %4413 = vmatprep.subr.mxu0 %v1079
    %4414 = vmatpush2.msra.mxu0 %v1078
    %4415 = vmatprep.subr.mxu0 %v1063
    %4416 = vmatpush2.msra.mxu0 %v1062
    %4417 = vmatprep.subr.mxu0 %v1047
    %4418 = vmatpush2.msra.mxu0 %v1046
    %4419 = vmatprep.subr.mxu0 %v1031
    %4420 = vmatpush2.msra.mxu0 %v1030
    %4421 = vmatprep.subr.mxu0 %v1015
    %4422 = vmatpush2.msra.mxu0 %v1014
    %4423 = vmatprep.subr.mxu0 %v999
    %4424 = vmatpush2.msra.mxu0 %v998
    %4425 = vmatprep.subr.mxu0 %v983
    %4426 = vmatpush2.msra.mxu0 %v982
    %4427 = vmatprep.subr.mxu0 %v967
    %4428 = vmatpush2.msra.mxu0 %v966
    %4429 = vmatprep.subr.mxu0 %v951
    %4430 = vmatpush2.msra.mxu0 %v950
    %4431 = vmatprep.subr.mxu0 %v935
    %4432 = vmatpush2.msra.mxu0 %v934
    %4433 = vmatprep.subr.mxu0 %v919
    %4434 = vmatpush2.msra.mxu0 %v918
    %4435 = vmatprep.mubr.f32.mxu0 %v2286
    %4436 = vmatmul.mubr.f32.gmra.mxu0 %v2284
    %v4437 = vpop.f32.mrf.mxu0
    %v4438 = vadd.f32 %v4367, %v4437
    %v4439 = vpop.f32.mrf.mxu0
    %v4440 = vadd.f32 %v4369, %v4439
    %4441 = vdwg.mxu0
    %4442 = vmatprep.subr.mxu0 %v1415
    %4443 = vmatpush1.msra.mxu0 %v1414
    %4444 = vmatprep.subr.mxu0 %v1399
    %4445 = vmatpush1.msra.mxu0 %v1398
    %4446 = vmatprep.subr.mxu0 %v1383
    %4447 = vmatpush1.msra.mxu0 %v1382
    %4448 = vmatprep.subr.mxu0 %v1367
    %4449 = vmatpush1.msra.mxu0 %v1366
    %4450 = vmatprep.subr.mxu0 %v1351
    %4451 = vmatpush1.msra.mxu0 %v1350
    %4452 = vmatprep.subr.mxu0 %v1335
    %4453 = vmatpush1.msra.mxu0 %v1334
    %4454 = vmatprep.subr.mxu0 %v1319
    %4455 = vmatpush1.msra.mxu0 %v1318
    %4456 = vmatprep.subr.mxu0 %v1303
    %4457 = vmatpush1.msra.mxu0 %v1302
    %4458 = vmatprep.subr.mxu0 %v1287
    %4459 = vmatpush1.msra.mxu0 %v1286
    %4460 = vmatprep.subr.mxu0 %v1271
    %4461 = vmatpush1.msra.mxu0 %v1270
    %4462 = vmatprep.subr.mxu0 %v1255
    %4463 = vmatpush1.msra.mxu0 %v1254
    %4464 = vmatprep.subr.mxu0 %v1239
    %4465 = vmatpush1.msra.mxu0 %v1238
    %4466 = vmatprep.subr.mxu0 %v1223
    %4467 = vmatpush1.msra.mxu0 %v1222
    %4468 = vmatprep.subr.mxu0 %v1207
    %4469 = vmatpush1.msra.mxu0 %v1206
    %4470 = vmatprep.subr.mxu0 %v1191
    %4471 = vmatpush1.msra.mxu0 %v1190
    %4472 = vmatprep.subr.mxu0 %v1175
    %4473 = vmatpush1.msra.mxu0 %v1174
    %4474 = vmatprep.subr.mxu0 %v1671
    %4475 = vmatpush2.msra.mxu0 %v1670
    %4476 = vmatprep.subr.mxu0 %v1655
    %4477 = vmatpush2.msra.mxu0 %v1654
    %4478 = vmatprep.subr.mxu0 %v1639
    %4479 = vmatpush2.msra.mxu0 %v1638
    %4480 = vmatprep.subr.mxu0 %v1623
    %4481 = vmatpush2.msra.mxu0 %v1622
    %4482 = vmatprep.subr.mxu0 %v1607
    %4483 = vmatpush2.msra.mxu0 %v1606
    %4484 = vmatprep.subr.mxu0 %v1591
    %4485 = vmatpush2.msra.mxu0 %v1590
    %4486 = vmatprep.subr.mxu0 %v1575
    %4487 = vmatpush2.msra.mxu0 %v1574
    %4488 = vmatprep.subr.mxu0 %v1559
    %4489 = vmatpush2.msra.mxu0 %v1558
    %4490 = vmatprep.subr.mxu0 %v1543
    %4491 = vmatpush2.msra.mxu0 %v1542
    %4492 = vmatprep.subr.mxu0 %v1527
    %4493 = vmatpush2.msra.mxu0 %v1526
    %4494 = vmatprep.subr.mxu0 %v1511
    %4495 = vmatpush2.msra.mxu0 %v1510
    %4496 = vmatprep.subr.mxu0 %v1495
    %4497 = vmatpush2.msra.mxu0 %v1494
    %4498 = vmatprep.subr.mxu0 %v1479
    %4499 = vmatpush2.msra.mxu0 %v1478
    %4500 = vmatprep.subr.mxu0 %v1463
    %4501 = vmatpush2.msra.mxu0 %v1462
    %4502 = vmatprep.subr.mxu0 %v1447
    %4503 = vmatpush2.msra.mxu0 %v1446
    %4504 = vmatprep.subr.mxu0 %v1431
    %4505 = vmatpush2.msra.mxu0 %v1430
    %4506 = vmatprep.mubr.f32.mxu0 %v2302
    %4507 = vmatmul.mubr.f32.gmra.mxu0 %v2294
    %v4508 = vpop.f32.mrf.mxu0
    %v4509 = vadd.f32 %v4438, %v4508
    %v4510 = vpop.f32.mrf.mxu0
    %v4511 = vadd.f32 %v4440, %v4510
    %4512 = vdwg.mxu0
    %4513 = vmatprep.subr.mxu0 %v1927
    %4514 = vmatpush1.msra.mxu0 %v1926
    %4515 = vmatprep.subr.mxu0 %v1911
    %4516 = vmatpush1.msra.mxu0 %v1910
    %4517 = vmatprep.subr.mxu0 %v1895
    %4518 = vmatpush1.msra.mxu0 %v1894
    %4519 = vmatprep.subr.mxu0 %v1879
    %4520 = vmatpush1.msra.mxu0 %v1878
    %4521 = vmatprep.subr.mxu0 %v1863
    %4522 = vmatpush1.msra.mxu0 %v1862
    %4523 = vmatprep.subr.mxu0 %v1847
    %4524 = vmatpush1.msra.mxu0 %v1846
    %4525 = vmatprep.subr.mxu0 %v1831
    %4526 = vmatpush1.msra.mxu0 %v1830
    %4527 = vmatprep.subr.mxu0 %v1815
    %4528 = vmatpush1.msra.mxu0 %v1814
    %4529 = vmatprep.subr.mxu0 %v1799
    %4530 = vmatpush1.msra.mxu0 %v1798
    %4531 = vmatprep.subr.mxu0 %v1783
    %4532 = vmatpush1.msra.mxu0 %v1782
    %4533 = vmatprep.subr.mxu0 %v1767
    %4534 = vmatpush1.msra.mxu0 %v1766
    %4535 = vmatprep.subr.mxu0 %v1751
    %4536 = vmatpush1.msra.mxu0 %v1750
    %4537 = vmatprep.subr.mxu0 %v1735
    %4538 = vmatpush1.msra.mxu0 %v1734
    %4539 = vmatprep.subr.mxu0 %v1719
    %4540 = vmatpush1.msra.mxu0 %v1718
    %4541 = vmatprep.subr.mxu0 %v1703
    %4542 = vmatpush1.msra.mxu0 %v1702
    %4543 = vmatprep.subr.mxu0 %v1687
    %4544 = vmatpush1.msra.mxu0 %v1686
    %4545 = vmatprep.subr.mxu0 %v2183
    %4546 = vmatpush2.msra.mxu0 %v2182
    %4547 = vmatprep.subr.mxu0 %v2167
    %4548 = vmatpush2.msra.mxu0 %v2166
    %4549 = vmatprep.subr.mxu0 %v2151
    %4550 = vmatpush2.msra.mxu0 %v2150
    %4551 = vmatprep.subr.mxu0 %v2135
    %4552 = vmatpush2.msra.mxu0 %v2134
    %4553 = vmatprep.subr.mxu0 %v2119
    %4554 = vmatpush2.msra.mxu0 %v2118
    %4555 = vmatprep.subr.mxu0 %v2103
    %4556 = vmatpush2.msra.mxu0 %v2102
    %4557 = vmatprep.subr.mxu0 %v2087
    %4558 = vmatpush2.msra.mxu0 %v2086
    %4559 = vmatprep.subr.mxu0 %v2071
    %4560 = vmatpush2.msra.mxu0 %v2070
    %4561 = vmatprep.subr.mxu0 %v2055
    %4562 = vmatpush2.msra.mxu0 %v2054
    %4563 = vmatprep.subr.mxu0 %v2039
    %4564 = vmatpush2.msra.mxu0 %v2038
    %4565 = vmatprep.subr.mxu0 %v2023
    %4566 = vmatpush2.msra.mxu0 %v2022
    %4567 = vmatprep.subr.mxu0 %v2007
    %4568 = vmatpush2.msra.mxu0 %v2006
    %4569 = vmatprep.subr.mxu0 %v1991
    %4570 = vmatpush2.msra.mxu0 %v1990
    %4571 = vmatprep.subr.mxu0 %v1975
    %4572 = vmatpush2.msra.mxu0 %v1974
    %4573 = vmatprep.subr.mxu0 %v1959
    %4574 = vmatpush2.msra.mxu0 %v1958
    %4575 = vmatprep.subr.mxu0 %v1943
    %4576 = vmatpush2.msra.mxu0 %v1942
    %4577 = vmatprep.mubr.f32.mxu0 %v2303
    %4578 = vmatmul.mubr.f32.gmra.mxu0 %v2301
    %v4579 = vpop.f32.mrf.mxu0
    %v4580 = vadd.f32 %v4509, %v4579
    %v4581 = vpop.f32.mrf.mxu0
    %v4582 = vadd.f32 %v4511, %v4581
    %4583 = vdwg.mxu0
    %v4584 = vld [vmem:[#allocation7] sm:$0xff]
    %v4585 = vld [vmem:[#allocation7 + $0x8] sm:$0xff]
    %v4586 = vld [vmem:[#allocation7 + $0x10] sm:$0xff]
    %v4587 = vld [vmem:[#allocation7 + $0x18] sm:$0xff]
    %v4588 = vld [vmem:[#allocation7 + $0x20] sm:$0xff]
    %v4589 = vld [vmem:[#allocation7 + $0x28] sm:$0xff]
    %v4590 = vld [vmem:[#allocation7 + $0x30] sm:$0xff]
    %v4591 = vld [vmem:[#allocation7 + $0x38] sm:$0xff]
    %v4592 = vld [vmem:[#allocation7 + $0x40] sm:$0xff]
    %v4593 = vld [vmem:[#allocation7 + $0x48] sm:$0xff]
    %v4594 = vld [vmem:[#allocation7 + $0x50] sm:$0xff]
    %v4595 = vld [vmem:[#allocation7 + $0x58] sm:$0xff]
    %v4596 = vld [vmem:[#allocation7 + $0x60] sm:$0xff]
    %v4597 = vld [vmem:[#allocation7 + $0x68] sm:$0xff]
    %v4598 = vld [vmem:[#allocation7 + $0x70] sm:$0xff]
    %v4599 = vld [vmem:[#allocation7 + $0x78] sm:$0xff]
    %v4600 = vld [vmem:[#allocation7 + $0x80] sm:$0xff]
    %v4601 = vld [vmem:[#allocation7 + $0x88] sm:$0xff]
    %v4602 = vld [vmem:[#allocation7 + $0x90] sm:$0xff]
    %v4603 = vld [vmem:[#allocation7 + $0x98] sm:$0xff]
    %v4604 = vld [vmem:[#allocation7 + $0xa0] sm:$0xff]
    %v4605 = vld [vmem:[#allocation7 + $0xa8] sm:$0xff]
    %v4606 = vld [vmem:[#allocation7 + $0xb0] sm:$0xff]
    %v4607 = vld [vmem:[#allocation7 + $0xb8] sm:$0xff]
    %v4608 = vld [vmem:[#allocation7 + $0xc0] sm:$0xff]
    %v4609 = vld [vmem:[#allocation7 + $0xc8] sm:$0xff]
    %v4610 = vld [vmem:[#allocation7 + $0xd0] sm:$0xff]
    %v4611 = vld [vmem:[#allocation7 + $0xd8] sm:$0xff]
    %v4612 = vld [vmem:[#allocation7 + $0xe0] sm:$0xff]
    %v4613 = vld [vmem:[#allocation7 + $0xe8] sm:$0xff]
    %v4614 = vld [vmem:[#allocation7 + $0xf0] sm:$0xff]
    %v4615 = vld [vmem:[#allocation7 + $0xf8] sm:$0xff]
    %v4616 = vld [vmem:[#allocation7 + $0x100] sm:$0xff]
    %v4617 = vld [vmem:[#allocation7 + $0x108] sm:$0xff]
    %v4618 = vld [vmem:[#allocation7 + $0x110] sm:$0xff]
    %v4619 = vld [vmem:[#allocation7 + $0x118] sm:$0xff]
    %v4620 = vld [vmem:[#allocation7 + $0x120] sm:$0xff]
    %v4621 = vld [vmem:[#allocation7 + $0x128] sm:$0xff]
    %v4622 = vld [vmem:[#allocation7 + $0x130] sm:$0xff]
    %v4623 = vld [vmem:[#allocation7 + $0x138] sm:$0xff]
    %v4624 = vld [vmem:[#allocation7 + $0x140] sm:$0xff]
    %v4625 = vld [vmem:[#allocation7 + $0x148] sm:$0xff]
    %v4626 = vld [vmem:[#allocation7 + $0x150] sm:$0xff]
    %v4627 = vld [vmem:[#allocation7 + $0x158] sm:$0xff]
    %v4628 = vld [vmem:[#allocation7 + $0x160] sm:$0xff]
    %v4629 = vld [vmem:[#allocation7 + $0x168] sm:$0xff]
    %v4630 = vld [vmem:[#allocation7 + $0x170] sm:$0xff]
    %v4631 = vld [vmem:[#allocation7 + $0x178] sm:$0xff]
    %v4632 = vld [vmem:[#allocation7 + $0x180] sm:$0xff]
    %v4633 = vld [vmem:[#allocation7 + $0x188] sm:$0xff]
    %v4634 = vld [vmem:[#allocation7 + $0x190] sm:$0xff]
    %v4635 = vld [vmem:[#allocation7 + $0x198] sm:$0xff]
    %v4636 = vld [vmem:[#allocation7 + $0x1a0] sm:$0xff]
    %v4637 = vld [vmem:[#allocation7 + $0x1a8] sm:$0xff]
    %v4638 = vld [vmem:[#allocation7 + $0x1b0] sm:$0xff]
    %v4639 = vld [vmem:[#allocation7 + $0x1b8] sm:$0xff]
    %v4640 = vld [vmem:[#allocation7 + $0x1c0] sm:$0xff]
    %v4641 = vld [vmem:[#allocation7 + $0x1c8] sm:$0xff]
    %v4642 = vld [vmem:[#allocation7 + $0x1d0] sm:$0xff]
    %v4643 = vld [vmem:[#allocation7 + $0x1d8] sm:$0xff]
    %v4644 = vld [vmem:[#allocation7 + $0x1e0] sm:$0xff]
    %v4645 = vld [vmem:[#allocation7 + $0x1e8] sm:$0xff]
    %v4646 = vld [vmem:[#allocation7 + $0x1f0] sm:$0xff]
    %v4647 = vld [vmem:[#allocation7 + $0x1f8] sm:$0xff]
    %v4648 = vld [vmem:[#allocation7 + $0x200] sm:$0xff]
    %v4649 = vld [vmem:[#allocation7 + $0x208] sm:$0xff]
    %v4650 = vld [vmem:[#allocation7 + $0x210] sm:$0xff]
    %v4651 = vld [vmem:[#allocation7 + $0x218] sm:$0xff]
    %v4652 = vld [vmem:[#allocation7 + $0x220] sm:$0xff]
    %v4653 = vld [vmem:[#allocation7 + $0x228] sm:$0xff]
    %v4654 = vld [vmem:[#allocation7 + $0x230] sm:$0xff]
    %v4655 = vld [vmem:[#allocation7 + $0x238] sm:$0xff]
    %v4656 = vld [vmem:[#allocation7 + $0x240] sm:$0xff]
    %v4657 = vld [vmem:[#allocation7 + $0x248] sm:$0xff]
    %v4658 = vld [vmem:[#allocation7 + $0x250] sm:$0xff]
    %v4659 = vld [vmem:[#allocation7 + $0x258] sm:$0xff]
    %v4660 = vld [vmem:[#allocation7 + $0x260] sm:$0xff]
    %v4661 = vld [vmem:[#allocation7 + $0x268] sm:$0xff]
    %v4662 = vld [vmem:[#allocation7 + $0x270] sm:$0xff]
    %v4663 = vld [vmem:[#allocation7 + $0x278] sm:$0xff]
    %v4664 = vld [vmem:[#allocation7 + $0x280] sm:$0xff]
    %v4665 = vld [vmem:[#allocation7 + $0x288] sm:$0xff]
    %v4666 = vld [vmem:[#allocation7 + $0x290] sm:$0xff]
    %v4667 = vld [vmem:[#allocation7 + $0x298] sm:$0xff]
    %v4668 = vld [vmem:[#allocation7 + $0x2a0] sm:$0xff]
    %v4669 = vld [vmem:[#allocation7 + $0x2a8] sm:$0xff]
    %v4670 = vld [vmem:[#allocation7 + $0x2b0] sm:$0xff]
    %v4671 = vld [vmem:[#allocation7 + $0x2b8] sm:$0xff]
    %v4672 = vld [vmem:[#allocation7 + $0x2c0] sm:$0xff]
    %v4673 = vld [vmem:[#allocation7 + $0x2c8] sm:$0xff]
    %v4674 = vld [vmem:[#allocation7 + $0x2d0] sm:$0xff]
    %v4675 = vld [vmem:[#allocation7 + $0x2d8] sm:$0xff]
    %v4676 = vld [vmem:[#allocation7 + $0x2e0] sm:$0xff]
    %v4677 = vld [vmem:[#allocation7 + $0x2e8] sm:$0xff]
    %v4678 = vld [vmem:[#allocation7 + $0x2f0] sm:$0xff]
    %v4679 = vld [vmem:[#allocation7 + $0x2f8] sm:$0xff]
    %v4680 = vld [vmem:[#allocation7 + $0x300] sm:$0xff]
    %v4681 = vld [vmem:[#allocation7 + $0x308] sm:$0xff]
    %v4682 = vld [vmem:[#allocation7 + $0x310] sm:$0xff]
    %v4683 = vld [vmem:[#allocation7 + $0x318] sm:$0xff]
    %v4684 = vld [vmem:[#allocation7 + $0x320] sm:$0xff]
    %v4685 = vld [vmem:[#allocation7 + $0x328] sm:$0xff]
    %v4686 = vld [vmem:[#allocation7 + $0x330] sm:$0xff]
    %v4687 = vld [vmem:[#allocation7 + $0x338] sm:$0xff]
    %v4688 = vld [vmem:[#allocation7 + $0x340] sm:$0xff]
    %v4689 = vld [vmem:[#allocation7 + $0x348] sm:$0xff]
    %v4690 = vld [vmem:[#allocation7 + $0x350] sm:$0xff]
    %v4691 = vld [vmem:[#allocation7 + $0x358] sm:$0xff]
    %v4692 = vld [vmem:[#allocation7 + $0x360] sm:$0xff]
    %v4693 = vld [vmem:[#allocation7 + $0x368] sm:$0xff]
    %v4694 = vld [vmem:[#allocation7 + $0x370] sm:$0xff]
    %v4695 = vld [vmem:[#allocation7 + $0x378] sm:$0xff]
    %v4696 = vld [vmem:[#allocation7 + $0x380] sm:$0xff]
    %v4697 = vld [vmem:[#allocation7 + $0x388] sm:$0xff]
    %v4698 = vld [vmem:[#allocation7 + $0x390] sm:$0xff]
    %v4699 = vld [vmem:[#allocation7 + $0x398] sm:$0xff]
    %v4700 = vld [vmem:[#allocation7 + $0x3a0] sm:$0xff]
    %v4701 = vld [vmem:[#allocation7 + $0x3a8] sm:$0xff]
    %v4702 = vld [vmem:[#allocation7 + $0x3b0] sm:$0xff]
    %v4703 = vld [vmem:[#allocation7 + $0x3b8] sm:$0xff]
    %v4704 = vld [vmem:[#allocation7 + $0x3c0] sm:$0xff]
    %v4705 = vld [vmem:[#allocation7 + $0x3c8] sm:$0xff]
    %v4706 = vld [vmem:[#allocation7 + $0x3d0] sm:$0xff]
    %v4707 = vld [vmem:[#allocation7 + $0x3d8] sm:$0xff]
    %v4708 = vld [vmem:[#allocation7 + $0x3e0] sm:$0xff]
    %v4709 = vld [vmem:[#allocation7 + $0x3e8] sm:$0xff]
    %v4710 = vld [vmem:[#allocation7 + $0x3f0] sm:$0xff]
    %v4711 = vld [vmem:[#allocation7 + $0x3f8] sm:$0xff]
    %v4712 = vld [vmem:[#allocation7 + $0x400] sm:$0xff]
    %v4713 = vld [vmem:[#allocation7 + $0x408] sm:$0xff]
    %v4714 = vld [vmem:[#allocation7 + $0x410] sm:$0xff]
    %v4715 = vld [vmem:[#allocation7 + $0x418] sm:$0xff]
    %v4716 = vld [vmem:[#allocation7 + $0x420] sm:$0xff]
    %v4717 = vld [vmem:[#allocation7 + $0x428] sm:$0xff]
    %v4718 = vld [vmem:[#allocation7 + $0x430] sm:$0xff]
    %v4719 = vld [vmem:[#allocation7 + $0x438] sm:$0xff]
    %v4720 = vld [vmem:[#allocation7 + $0x440] sm:$0xff]
    %v4721 = vld [vmem:[#allocation7 + $0x448] sm:$0xff]
    %v4722 = vld [vmem:[#allocation7 + $0x450] sm:$0xff]
    %v4723 = vld [vmem:[#allocation7 + $0x458] sm:$0xff]
    %v4724 = vld [vmem:[#allocation7 + $0x460] sm:$0xff]
    %v4725 = vld [vmem:[#allocation7 + $0x468] sm:$0xff]
    %v4726 = vld [vmem:[#allocation7 + $0x470] sm:$0xff]
    %v4727 = vld [vmem:[#allocation7 + $0x478] sm:$0xff]
    %v4728 = vld [vmem:[#allocation7 + $0x480] sm:$0xff]
    %v4729 = vld [vmem:[#allocation7 + $0x488] sm:$0xff]
    %v4730 = vld [vmem:[#allocation7 + $0x490] sm:$0xff]
    %v4731 = vld [vmem:[#allocation7 + $0x498] sm:$0xff]
    %v4732 = vld [vmem:[#allocation7 + $0x4a0] sm:$0xff]
    %v4733 = vld [vmem:[#allocation7 + $0x4a8] sm:$0xff]
    %v4734 = vld [vmem:[#allocation7 + $0x4b0] sm:$0xff]
    %v4735 = vld [vmem:[#allocation7 + $0x4b8] sm:$0xff]
    %v4736 = vld [vmem:[#allocation7 + $0x4c0] sm:$0xff]
    %v4737 = vld [vmem:[#allocation7 + $0x4c8] sm:$0xff]
    %v4738 = vld [vmem:[#allocation7 + $0x4d0] sm:$0xff]
    %v4739 = vld [vmem:[#allocation7 + $0x4d8] sm:$0xff]
    %v4740 = vld [vmem:[#allocation7 + $0x4e0] sm:$0xff]
    %v4741 = vld [vmem:[#allocation7 + $0x4e8] sm:$0xff]
    %v4742 = vld [vmem:[#allocation7 + $0x4f0] sm:$0xff]
    %v4743 = vld [vmem:[#allocation7 + $0x4f8] sm:$0xff]
    %v4744 = vld [vmem:[#allocation7 + $0x500] sm:$0xff]
    %v4745 = vld [vmem:[#allocation7 + $0x508] sm:$0xff]
    %v4746 = vld [vmem:[#allocation7 + $0x510] sm:$0xff]
    %v4747 = vld [vmem:[#allocation7 + $0x518] sm:$0xff]
    %v4748 = vld [vmem:[#allocation7 + $0x520] sm:$0xff]
    %v4749 = vld [vmem:[#allocation7 + $0x528] sm:$0xff]
    %v4750 = vld [vmem:[#allocation7 + $0x530] sm:$0xff]
    %v4751 = vld [vmem:[#allocation7 + $0x538] sm:$0xff]
    %v4752 = vld [vmem:[#allocation7 + $0x540] sm:$0xff]
    %v4753 = vld [vmem:[#allocation7 + $0x548] sm:$0xff]
    %v4754 = vld [vmem:[#allocation7 + $0x550] sm:$0xff]
    %v4755 = vld [vmem:[#allocation7 + $0x558] sm:$0xff]
    %v4756 = vld [vmem:[#allocation7 + $0x560] sm:$0xff]
    %v4757 = vld [vmem:[#allocation7 + $0x568] sm:$0xff]
    %v4758 = vld [vmem:[#allocation7 + $0x570] sm:$0xff]
    %v4759 = vld [vmem:[#allocation7 + $0x578] sm:$0xff]
    %v4760 = vld [vmem:[#allocation7 + $0x580] sm:$0xff]
    %v4761 = vld [vmem:[#allocation7 + $0x588] sm:$0xff]
    %v4762 = vld [vmem:[#allocation7 + $0x590] sm:$0xff]
    %v4763 = vld [vmem:[#allocation7 + $0x598] sm:$0xff]
    %v4764 = vld [vmem:[#allocation7 + $0x5a0] sm:$0xff]
    %v4765 = vld [vmem:[#allocation7 + $0x5a8] sm:$0xff]
    %v4766 = vld [vmem:[#allocation7 + $0x5b0] sm:$0xff]
    %v4767 = vld [vmem:[#allocation7 + $0x5b8] sm:$0xff]
    %v4768 = vld [vmem:[#allocation7 + $0x5c0] sm:$0xff]
    %v4769 = vld [vmem:[#allocation7 + $0x5c8] sm:$0xff]
    %v4770 = vld [vmem:[#allocation7 + $0x5d0] sm:$0xff]
    %v4771 = vld [vmem:[#allocation7 + $0x5d8] sm:$0xff]
    %v4772 = vld [vmem:[#allocation7 + $0x5e0] sm:$0xff]
    %v4773 = vld [vmem:[#allocation7 + $0x5e8] sm:$0xff]
    %v4774 = vld [vmem:[#allocation7 + $0x5f0] sm:$0xff]
    %v4775 = vld [vmem:[#allocation7 + $0x5f8] sm:$0xff]
    %v4776 = vld [vmem:[#allocation7 + $0x600] sm:$0xff]
    %v4777 = vld [vmem:[#allocation7 + $0x608] sm:$0xff]
    %v4778 = vld [vmem:[#allocation7 + $0x610] sm:$0xff]
    %v4779 = vld [vmem:[#allocation7 + $0x618] sm:$0xff]
    %v4780 = vld [vmem:[#allocation7 + $0x620] sm:$0xff]
    %v4781 = vld [vmem:[#allocation7 + $0x628] sm:$0xff]
    %v4782 = vld [vmem:[#allocation7 + $0x630] sm:$0xff]
    %v4783 = vld [vmem:[#allocation7 + $0x638] sm:$0xff]
    %v4784 = vld [vmem:[#allocation7 + $0x640] sm:$0xff]
    %v4785 = vld [vmem:[#allocation7 + $0x648] sm:$0xff]
    %v4786 = vld [vmem:[#allocation7 + $0x650] sm:$0xff]
    %v4787 = vld [vmem:[#allocation7 + $0x658] sm:$0xff]
    %v4788 = vld [vmem:[#allocation7 + $0x660] sm:$0xff]
    %v4789 = vld [vmem:[#allocation7 + $0x668] sm:$0xff]
    %v4790 = vld [vmem:[#allocation7 + $0x670] sm:$0xff]
    %v4791 = vld [vmem:[#allocation7 + $0x678] sm:$0xff]
    %v4792 = vld [vmem:[#allocation7 + $0x680] sm:$0xff]
    %v4793 = vld [vmem:[#allocation7 + $0x688] sm:$0xff]
    %v4794 = vld [vmem:[#allocation7 + $0x690] sm:$0xff]
    %v4795 = vld [vmem:[#allocation7 + $0x698] sm:$0xff]
    %v4796 = vld [vmem:[#allocation7 + $0x6a0] sm:$0xff]
    %v4797 = vld [vmem:[#allocation7 + $0x6a8] sm:$0xff]
    %v4798 = vld [vmem:[#allocation7 + $0x6b0] sm:$0xff]
    %v4799 = vld [vmem:[#allocation7 + $0x6b8] sm:$0xff]
    %v4800 = vld [vmem:[#allocation7 + $0x6c0] sm:$0xff]
    %v4801 = vld [vmem:[#allocation7 + $0x6c8] sm:$0xff]
    %v4802 = vld [vmem:[#allocation7 + $0x6d0] sm:$0xff]
    %v4803 = vld [vmem:[#allocation7 + $0x6d8] sm:$0xff]
    %v4804 = vld [vmem:[#allocation7 + $0x6e0] sm:$0xff]
    %v4805 = vld [vmem:[#allocation7 + $0x6e8] sm:$0xff]
    %v4806 = vld [vmem:[#allocation7 + $0x6f0] sm:$0xff]
    %v4807 = vld [vmem:[#allocation7 + $0x6f8] sm:$0xff]
    %v4808 = vld [vmem:[#allocation7 + $0x700] sm:$0xff]
    %v4809 = vld [vmem:[#allocation7 + $0x708] sm:$0xff]
    %v4810 = vld [vmem:[#allocation7 + $0x710] sm:$0xff]
    %v4811 = vld [vmem:[#allocation7 + $0x718] sm:$0xff]
    %v4812 = vld [vmem:[#allocation7 + $0x720] sm:$0xff]
    %v4813 = vld [vmem:[#allocation7 + $0x728] sm:$0xff]
    %v4814 = vld [vmem:[#allocation7 + $0x730] sm:$0xff]
    %v4815 = vld [vmem:[#allocation7 + $0x738] sm:$0xff]
    %v4816 = vld [vmem:[#allocation7 + $0x740] sm:$0xff]
    %v4817 = vld [vmem:[#allocation7 + $0x748] sm:$0xff]
    %v4818 = vld [vmem:[#allocation7 + $0x750] sm:$0xff]
    %v4819 = vld [vmem:[#allocation7 + $0x758] sm:$0xff]
    %v4820 = vld [vmem:[#allocation7 + $0x760] sm:$0xff]
    %v4821 = vld [vmem:[#allocation7 + $0x768] sm:$0xff]
    %v4822 = vld [vmem:[#allocation7 + $0x770] sm:$0xff]
    %v4823 = vld [vmem:[#allocation7 + $0x778] sm:$0xff]
    %v4824 = vld [vmem:[#allocation7 + $0x780] sm:$0xff]
    %v4825 = vld [vmem:[#allocation7 + $0x788] sm:$0xff]
    %v4826 = vld [vmem:[#allocation7 + $0x790] sm:$0xff]
    %v4827 = vld [vmem:[#allocation7 + $0x798] sm:$0xff]
    %v4828 = vld [vmem:[#allocation7 + $0x7a0] sm:$0xff]
    %v4829 = vld [vmem:[#allocation7 + $0x7a8] sm:$0xff]
    %v4830 = vld [vmem:[#allocation7 + $0x7b0] sm:$0xff]
    %v4831 = vld [vmem:[#allocation7 + $0x7b8] sm:$0xff]
    %v4832 = vld [vmem:[#allocation7 + $0x7c0] sm:$0xff]
    %v4833 = vld [vmem:[#allocation7 + $0x7c8] sm:$0xff]
    %v4834 = vld [vmem:[#allocation7 + $0x7d0] sm:$0xff]
    %v4835 = vld [vmem:[#allocation7 + $0x7d8] sm:$0xff]
    %v4836 = vld [vmem:[#allocation7 + $0x7e0] sm:$0xff]
    %v4837 = vld [vmem:[#allocation7 + $0x7e8] sm:$0xff]
    %v4838 = vld [vmem:[#allocation7 + $0x7f0] sm:$0xff]
    %v4839 = vld [vmem:[#allocation7 + $0x7f8] sm:$0xff]
    %v4840 = vld [vmem:[#allocation7 + $0x800] sm:$0xff]
    %v4841 = vld [vmem:[#allocation7 + $0x808] sm:$0xff]
    %v4842 = vld [vmem:[#allocation7 + $0x810] sm:$0xff]
    %v4843 = vld [vmem:[#allocation7 + $0x818] sm:$0xff]
    %v4844 = vld [vmem:[#allocation7 + $0x820] sm:$0xff]
    %v4845 = vld [vmem:[#allocation7 + $0x828] sm:$0xff]
    %v4846 = vld [vmem:[#allocation7 + $0x830] sm:$0xff]
    %v4847 = vld [vmem:[#allocation7 + $0x838] sm:$0xff]
    %v4848 = vld [vmem:[#allocation7 + $0x840] sm:$0xff]
    %v4849 = vld [vmem:[#allocation7 + $0x848] sm:$0xff]
    %v4850 = vld [vmem:[#allocation7 + $0x850] sm:$0xff]
    %v4851 = vld [vmem:[#allocation7 + $0x858] sm:$0xff]
    %v4852 = vld [vmem:[#allocation7 + $0x860] sm:$0xff]
    %v4853 = vld [vmem:[#allocation7 + $0x868] sm:$0xff]
    %v4854 = vld [vmem:[#allocation7 + $0x870] sm:$0xff]
    %v4855 = vld [vmem:[#allocation7 + $0x878] sm:$0xff]
    %v4856 = vld [vmem:[#allocation7 + $0x880] sm:$0xff]
    %v4857 = vld [vmem:[#allocation7 + $0x888] sm:$0xff]
    %v4858 = vld [vmem:[#allocation7 + $0x890] sm:$0xff]
    %v4859 = vld [vmem:[#allocation7 + $0x898] sm:$0xff]
    %v4860 = vld [vmem:[#allocation7 + $0x8a0] sm:$0xff]
    %v4861 = vld [vmem:[#allocation7 + $0x8a8] sm:$0xff]
    %v4862 = vld [vmem:[#allocation7 + $0x8b0] sm:$0xff]
    %v4863 = vld [vmem:[#allocation7 + $0x8b8] sm:$0xff]
    %v4864 = vld [vmem:[#allocation7 + $0x8c0] sm:$0xff]
    %v4865 = vld [vmem:[#allocation7 + $0x8c8] sm:$0xff]
    %v4866 = vld [vmem:[#allocation7 + $0x8d0] sm:$0xff]
    %v4867 = vld [vmem:[#allocation7 + $0x8d8] sm:$0xff]
    %v4868 = vld [vmem:[#allocation7 + $0x8e0] sm:$0xff]
    %v4869 = vld [vmem:[#allocation7 + $0x8e8] sm:$0xff]
    %v4870 = vld [vmem:[#allocation7 + $0x8f0] sm:$0xff]
    %v4871 = vld [vmem:[#allocation7 + $0x8f8] sm:$0xff]
    %v4872 = vld [vmem:[#allocation7 + $0x900] sm:$0xff]
    %v4873 = vld [vmem:[#allocation7 + $0x908] sm:$0xff]
    %v4874 = vld [vmem:[#allocation7 + $0x910] sm:$0xff]
    %v4875 = vld [vmem:[#allocation7 + $0x918] sm:$0xff]
    %v4876 = vld [vmem:[#allocation7 + $0x920] sm:$0xff]
    %v4877 = vld [vmem:[#allocation7 + $0x928] sm:$0xff]
    %v4878 = vld [vmem:[#allocation7 + $0x930] sm:$0xff]
    %v4879 = vld [vmem:[#allocation7 + $0x938] sm:$0xff]
    %v4880 = vld [vmem:[#allocation7 + $0x940] sm:$0xff]
    %v4881 = vld [vmem:[#allocation7 + $0x948] sm:$0xff]
    %v4882 = vld [vmem:[#allocation7 + $0x950] sm:$0xff]
    %v4883 = vld [vmem:[#allocation7 + $0x958] sm:$0xff]
    %v4884 = vld [vmem:[#allocation7 + $0x960] sm:$0xff]
    %v4885 = vld [vmem:[#allocation7 + $0x968] sm:$0xff]
    %v4886 = vld [vmem:[#allocation7 + $0x970] sm:$0xff]
    %v4887 = vld [vmem:[#allocation7 + $0x978] sm:$0xff]
    %v4888 = vld [vmem:[#allocation7 + $0x980] sm:$0xff]
    %v4889 = vld [vmem:[#allocation7 + $0x988] sm:$0xff]
    %v4890 = vld [vmem:[#allocation7 + $0x990] sm:$0xff]
    %v4891 = vld [vmem:[#allocation7 + $0x998] sm:$0xff]
    %v4892 = vld [vmem:[#allocation7 + $0x9a0] sm:$0xff]
    %v4893 = vld [vmem:[#allocation7 + $0x9a8] sm:$0xff]
    %v4894 = vld [vmem:[#allocation7 + $0x9b0] sm:$0xff]
    %v4895 = vld [vmem:[#allocation7 + $0x9b8] sm:$0xff]
    %v4896 = vld [vmem:[#allocation7 + $0x9c0] sm:$0xff]
    %v4897 = vld [vmem:[#allocation7 + $0x9c8] sm:$0xff]
    %v4898 = vld [vmem:[#allocation7 + $0x9d0] sm:$0xff]
    %v4899 = vld [vmem:[#allocation7 + $0x9d8] sm:$0xff]
    %v4900 = vld [vmem:[#allocation7 + $0x9e0] sm:$0xff]
    %v4901 = vld [vmem:[#allocation7 + $0x9e8] sm:$0xff]
    %v4902 = vld [vmem:[#allocation7 + $0x9f0] sm:$0xff]
    %v4903 = vld [vmem:[#allocation7 + $0x9f8] sm:$0xff]
    %v4904 = vld [vmem:[#allocation7 + $0xa00] sm:$0xff]
    %v4905 = vld [vmem:[#allocation7 + $0xa08] sm:$0xff]
    %v4906 = vld [vmem:[#allocation7 + $0xa10] sm:$0xff]
    %v4907 = vld [vmem:[#allocation7 + $0xa18] sm:$0xff]
    %v4908 = vld [vmem:[#allocation7 + $0xa20] sm:$0xff]
    %v4909 = vld [vmem:[#allocation7 + $0xa28] sm:$0xff]
    %v4910 = vld [vmem:[#allocation7 + $0xa30] sm:$0xff]
    %v4911 = vld [vmem:[#allocation7 + $0xa38] sm:$0xff]
    %v4912 = vld [vmem:[#allocation7 + $0xa40] sm:$0xff]
    %v4913 = vld [vmem:[#allocation7 + $0xa48] sm:$0xff]
    %v4914 = vld [vmem:[#allocation7 + $0xa50] sm:$0xff]
    %v4915 = vld [vmem:[#allocation7 + $0xa58] sm:$0xff]
    %v4916 = vld [vmem:[#allocation7 + $0xa60] sm:$0xff]
    %v4917 = vld [vmem:[#allocation7 + $0xa68] sm:$0xff]
    %v4918 = vld [vmem:[#allocation7 + $0xa70] sm:$0xff]
    %v4919 = vld [vmem:[#allocation7 + $0xa78] sm:$0xff]
    %v4920 = vld [vmem:[#allocation7 + $0xa80] sm:$0xff]
    %v4921 = vld [vmem:[#allocation7 + $0xa88] sm:$0xff]
    %v4922 = vld [vmem:[#allocation7 + $0xa90] sm:$0xff]
    %v4923 = vld [vmem:[#allocation7 + $0xa98] sm:$0xff]
    %v4924 = vld [vmem:[#allocation7 + $0xaa0] sm:$0xff]
    %v4925 = vld [vmem:[#allocation7 + $0xaa8] sm:$0xff]
    %v4926 = vld [vmem:[#allocation7 + $0xab0] sm:$0xff]
    %v4927 = vld [vmem:[#allocation7 + $0xab8] sm:$0xff]
    %v4928 = vld [vmem:[#allocation7 + $0xac0] sm:$0xff]
    %v4929 = vld [vmem:[#allocation7 + $0xac8] sm:$0xff]
    %v4930 = vld [vmem:[#allocation7 + $0xad0] sm:$0xff]
    %v4931 = vld [vmem:[#allocation7 + $0xad8] sm:$0xff]
    %v4932 = vld [vmem:[#allocation7 + $0xae0] sm:$0xff]
    %v4933 = vld [vmem:[#allocation7 + $0xae8] sm:$0xff]
    %v4934 = vld [vmem:[#allocation7 + $0xaf0] sm:$0xff]
    %v4935 = vld [vmem:[#allocation7 + $0xaf8] sm:$0xff]
    %v4936 = vld [vmem:[#allocation7 + $0xb00] sm:$0xff]
    %v4937 = vld [vmem:[#allocation7 + $0xb08] sm:$0xff]
    %v4938 = vld [vmem:[#allocation7 + $0xb10] sm:$0xff]
    %v4939 = vld [vmem:[#allocation7 + $0xb18] sm:$0xff]
    %v4940 = vld [vmem:[#allocation7 + $0xb20] sm:$0xff]
    %v4941 = vld [vmem:[#allocation7 + $0xb28] sm:$0xff]
    %v4942 = vld [vmem:[#allocation7 + $0xb30] sm:$0xff]
    %v4943 = vld [vmem:[#allocation7 + $0xb38] sm:$0xff]
    %v4944 = vld [vmem:[#allocation7 + $0xb40] sm:$0xff]
    %v4945 = vld [vmem:[#allocation7 + $0xb48] sm:$0xff]
    %v4946 = vld [vmem:[#allocation7 + $0xb50] sm:$0xff]
    %v4947 = vld [vmem:[#allocation7 + $0xb58] sm:$0xff]
    %v4948 = vld [vmem:[#allocation7 + $0xb60] sm:$0xff]
    %v4949 = vld [vmem:[#allocation7 + $0xb68] sm:$0xff]
    %v4950 = vld [vmem:[#allocation7 + $0xb70] sm:$0xff]
    %v4951 = vld [vmem:[#allocation7 + $0xb78] sm:$0xff]
    %v4952 = vld [vmem:[#allocation7 + $0xb80] sm:$0xff]
    %v4953 = vld [vmem:[#allocation7 + $0xb88] sm:$0xff]
    %v4954 = vld [vmem:[#allocation7 + $0xb90] sm:$0xff]
    %v4955 = vld [vmem:[#allocation7 + $0xb98] sm:$0xff]
    %v4956 = vld [vmem:[#allocation7 + $0xba0] sm:$0xff]
    %v4957 = vld [vmem:[#allocation7 + $0xba8] sm:$0xff]
    %v4958 = vld [vmem:[#allocation7 + $0xbb0] sm:$0xff]
    %v4959 = vld [vmem:[#allocation7 + $0xbb8] sm:$0xff]
    %v4960 = vld [vmem:[#allocation7 + $0xbc0] sm:$0xff]
    %v4961 = vld [vmem:[#allocation7 + $0xbc8] sm:$0xff]
    %v4962 = vld [vmem:[#allocation7 + $0xbd0] sm:$0xff]
    %v4963 = vld [vmem:[#allocation7 + $0xbd8] sm:$0xff]
    %v4964 = vld [vmem:[#allocation7 + $0xbe0] sm:$0xff]
    %v4965 = vld [vmem:[#allocation7 + $0xbe8] sm:$0xff]
    %v4966 = vld [vmem:[#allocation7 + $0xbf0] sm:$0xff]
    %v4967 = vld [vmem:[#allocation7 + $0xbf8] sm:$0xff]
    %v4968 = vld [vmem:[#allocation7 + $0xc00] sm:$0xff]
    %v4969 = vld [vmem:[#allocation7 + $0xc08] sm:$0xff]
    %v4970 = vld [vmem:[#allocation7 + $0xc10] sm:$0xff]
    %v4971 = vld [vmem:[#allocation7 + $0xc18] sm:$0xff]
    %v4972 = vld [vmem:[#allocation7 + $0xc20] sm:$0xff]
    %v4973 = vld [vmem:[#allocation7 + $0xc28] sm:$0xff]
    %v4974 = vld [vmem:[#allocation7 + $0xc30] sm:$0xff]
    %v4975 = vld [vmem:[#allocation7 + $0xc38] sm:$0xff]
    %v4976 = vld [vmem:[#allocation7 + $0xc40] sm:$0xff]
    %v4977 = vld [vmem:[#allocation7 + $0xc48] sm:$0xff]
    %v4978 = vld [vmem:[#allocation7 + $0xc50] sm:$0xff]
    %v4979 = vld [vmem:[#allocation7 + $0xc58] sm:$0xff]
    %v4980 = vld [vmem:[#allocation7 + $0xc60] sm:$0xff]
    %v4981 = vld [vmem:[#allocation7 + $0xc68] sm:$0xff]
    %v4982 = vld [vmem:[#allocation7 + $0xc70] sm:$0xff]
    %v4983 = vld [vmem:[#allocation7 + $0xc78] sm:$0xff]
    %v4984 = vld [vmem:[#allocation7 + $0xc80] sm:$0xff]
    %v4985 = vld [vmem:[#allocation7 + $0xc88] sm:$0xff]
    %v4986 = vld [vmem:[#allocation7 + $0xc90] sm:$0xff]
    %v4987 = vld [vmem:[#allocation7 + $0xc98] sm:$0xff]
    %v4988 = vld [vmem:[#allocation7 + $0xca0] sm:$0xff]
    %v4989 = vld [vmem:[#allocation7 + $0xca8] sm:$0xff]
    %v4990 = vld [vmem:[#allocation7 + $0xcb0] sm:$0xff]
    %v4991 = vld [vmem:[#allocation7 + $0xcb8] sm:$0xff]
    %v4992 = vld [vmem:[#allocation7 + $0xcc0] sm:$0xff]
    %v4993 = vld [vmem:[#allocation7 + $0xcc8] sm:$0xff]
    %v4994 = vld [vmem:[#allocation7 + $0xcd0] sm:$0xff]
    %v4995 = vld [vmem:[#allocation7 + $0xcd8] sm:$0xff]
    %v4996 = vld [vmem:[#allocation7 + $0xce0] sm:$0xff]
    %v4997 = vld [vmem:[#allocation7 + $0xce8] sm:$0xff]
    %v4998 = vld [vmem:[#allocation7 + $0xcf0] sm:$0xff]
    %v4999 = vld [vmem:[#allocation7 + $0xcf8] sm:$0xff]
    %v5000 = vld [vmem:[#allocation7 + $0xd00] sm:$0xff]
    %v5001 = vld [vmem:[#allocation7 + $0xd08] sm:$0xff]
    %v5002 = vld [vmem:[#allocation7 + $0xd10] sm:$0xff]
    %v5003 = vld [vmem:[#allocation7 + $0xd18] sm:$0xff]
    %v5004 = vld [vmem:[#allocation7 + $0xd20] sm:$0xff]
    %v5005 = vld [vmem:[#allocation7 + $0xd28] sm:$0xff]
    %v5006 = vld [vmem:[#allocation7 + $0xd30] sm:$0xff]
    %v5007 = vld [vmem:[#allocation7 + $0xd38] sm:$0xff]
    %v5008 = vld [vmem:[#allocation7 + $0xd40] sm:$0xff]
    %v5009 = vld [vmem:[#allocation7 + $0xd48] sm:$0xff]
    %v5010 = vld [vmem:[#allocation7 + $0xd50] sm:$0xff]
    %v5011 = vld [vmem:[#allocation7 + $0xd58] sm:$0xff]
    %v5012 = vld [vmem:[#allocation7 + $0xd60] sm:$0xff]
    %v5013 = vld [vmem:[#allocation7 + $0xd68] sm:$0xff]
    %v5014 = vld [vmem:[#allocation7 + $0xd70] sm:$0xff]
    %v5015 = vld [vmem:[#allocation7 + $0xd78] sm:$0xff]
    %v5016 = vld [vmem:[#allocation7 + $0xd80] sm:$0xff]
    %v5017 = vld [vmem:[#allocation7 + $0xd88] sm:$0xff]
    %v5018 = vld [vmem:[#allocation7 + $0xd90] sm:$0xff]
    %v5019 = vld [vmem:[#allocation7 + $0xd98] sm:$0xff]
    %v5020 = vld [vmem:[#allocation7 + $0xda0] sm:$0xff]
    %v5021 = vld [vmem:[#allocation7 + $0xda8] sm:$0xff]
    %v5022 = vld [vmem:[#allocation7 + $0xdb0] sm:$0xff]
    %v5023 = vld [vmem:[#allocation7 + $0xdb8] sm:$0xff]
    %v5024 = vld [vmem:[#allocation7 + $0xdc0] sm:$0xff]
    %v5025 = vld [vmem:[#allocation7 + $0xdc8] sm:$0xff]
    %v5026 = vld [vmem:[#allocation7 + $0xdd0] sm:$0xff]
    %v5027 = vld [vmem:[#allocation7 + $0xdd8] sm:$0xff]
    %v5028 = vld [vmem:[#allocation7 + $0xde0] sm:$0xff]
    %v5029 = vld [vmem:[#allocation7 + $0xde8] sm:$0xff]
    %v5030 = vld [vmem:[#allocation7 + $0xdf0] sm:$0xff]
    %v5031 = vld [vmem:[#allocation7 + $0xdf8] sm:$0xff]
    %v5032 = vld [vmem:[#allocation7 + $0xe00] sm:$0xff]
    %v5033 = vld [vmem:[#allocation7 + $0xe08] sm:$0xff]
    %v5034 = vld [vmem:[#allocation7 + $0xe10] sm:$0xff]
    %v5035 = vld [vmem:[#allocation7 + $0xe18] sm:$0xff]
    %v5036 = vld [vmem:[#allocation7 + $0xe20] sm:$0xff]
    %v5037 = vld [vmem:[#allocation7 + $0xe28] sm:$0xff]
    %v5038 = vld [vmem:[#allocation7 + $0xe30] sm:$0xff]
    %v5039 = vld [vmem:[#allocation7 + $0xe38] sm:$0xff]
    %v5040 = vld [vmem:[#allocation7 + $0xe40] sm:$0xff]
    %v5041 = vld [vmem:[#allocation7 + $0xe48] sm:$0xff]
    %v5042 = vld [vmem:[#allocation7 + $0xe50] sm:$0xff]
    %v5043 = vld [vmem:[#allocation7 + $0xe58] sm:$0xff]
    %v5044 = vld [vmem:[#allocation7 + $0xe60] sm:$0xff]
    %v5045 = vld [vmem:[#allocation7 + $0xe68] sm:$0xff]
    %v5046 = vld [vmem:[#allocation7 + $0xe70] sm:$0xff]
    %v5047 = vld [vmem:[#allocation7 + $0xe78] sm:$0xff]
    %v5048 = vld [vmem:[#allocation7 + $0xe80] sm:$0xff]
    %v5049 = vld [vmem:[#allocation7 + $0xe88] sm:$0xff]
    %v5050 = vld [vmem:[#allocation7 + $0xe90] sm:$0xff]
    %v5051 = vld [vmem:[#allocation7 + $0xe98] sm:$0xff]
    %v5052 = vld [vmem:[#allocation7 + $0xea0] sm:$0xff]
    %v5053 = vld [vmem:[#allocation7 + $0xea8] sm:$0xff]
    %v5054 = vld [vmem:[#allocation7 + $0xeb0] sm:$0xff]
    %v5055 = vld [vmem:[#allocation7 + $0xeb8] sm:$0xff]
    %v5056 = vld [vmem:[#allocation7 + $0xec0] sm:$0xff]
    %v5057 = vld [vmem:[#allocation7 + $0xec8] sm:$0xff]
    %v5058 = vld [vmem:[#allocation7 + $0xed0] sm:$0xff]
    %v5059 = vld [vmem:[#allocation7 + $0xed8] sm:$0xff]
    %v5060 = vld [vmem:[#allocation7 + $0xee0] sm:$0xff]
    %v5061 = vld [vmem:[#allocation7 + $0xee8] sm:$0xff]
    %v5062 = vld [vmem:[#allocation7 + $0xef0] sm:$0xff]
    %v5063 = vld [vmem:[#allocation7 + $0xef8] sm:$0xff]
    %v5064 = vld [vmem:[#allocation7 + $0xf00] sm:$0xff]
    %v5065 = vld [vmem:[#allocation7 + $0xf08] sm:$0xff]
    %v5066 = vld [vmem:[#allocation7 + $0xf10] sm:$0xff]
    %v5067 = vld [vmem:[#allocation7 + $0xf18] sm:$0xff]
    %v5068 = vld [vmem:[#allocation7 + $0xf20] sm:$0xff]
    %v5069 = vld [vmem:[#allocation7 + $0xf28] sm:$0xff]
    %v5070 = vld [vmem:[#allocation7 + $0xf30] sm:$0xff]
    %v5071 = vld [vmem:[#allocation7 + $0xf38] sm:$0xff]
    %v5072 = vld [vmem:[#allocation7 + $0xf40] sm:$0xff]
    %v5073 = vld [vmem:[#allocation7 + $0xf48] sm:$0xff]
    %v5074 = vld [vmem:[#allocation7 + $0xf50] sm:$0xff]
    %v5075 = vld [vmem:[#allocation7 + $0xf58] sm:$0xff]
    %v5076 = vld [vmem:[#allocation7 + $0xf60] sm:$0xff]
    %v5077 = vld [vmem:[#allocation7 + $0xf68] sm:$0xff]
    %v5078 = vld [vmem:[#allocation7 + $0xf70] sm:$0xff]
    %v5079 = vld [vmem:[#allocation7 + $0xf78] sm:$0xff]
    %v5080 = vld [vmem:[#allocation7 + $0xf80] sm:$0xff]
    %v5081 = vld [vmem:[#allocation7 + $0xf88] sm:$0xff]
    %v5082 = vld [vmem:[#allocation7 + $0xf90] sm:$0xff]
    %v5083 = vld [vmem:[#allocation7 + $0xf98] sm:$0xff]
    %v5084 = vld [vmem:[#allocation7 + $0xfa0] sm:$0xff]
    %v5085 = vld [vmem:[#allocation7 + $0xfa8] sm:$0xff]
    %v5086 = vld [vmem:[#allocation7 + $0xfb0] sm:$0xff]
    %v5087 = vld [vmem:[#allocation7 + $0xfb8] sm:$0xff]
    %v5088 = vld [vmem:[#allocation7 + $0xfc0] sm:$0xff]
    %v5089 = vld [vmem:[#allocation7 + $0xfc8] sm:$0xff]
    %v5090 = vld [vmem:[#allocation7 + $0xfd0] sm:$0xff]
    %v5091 = vld [vmem:[#allocation7 + $0xfd8] sm:$0xff]
    %v5092 = vld [vmem:[#allocation7 + $0xfe0] sm:$0xff]
    %v5093 = vld [vmem:[#allocation7 + $0xfe8] sm:$0xff]
    %v5094 = vld [vmem:[#allocation7 + $0xff0] sm:$0xff]
    %v5095 = vld [vmem:[#allocation7 + $0xff8] sm:$0xff]
    %v5096 = vld [vmem:[#allocation7 + $0x1000] sm:$0xff]
    %v5097 = vld [vmem:[#allocation7 + $0x1008] sm:$0xff]
    %v5098 = vld [vmem:[#allocation7 + $0x1010] sm:$0xff]
    %v5099 = vld [vmem:[#allocation7 + $0x1018] sm:$0xff]
    %v5100 = vld [vmem:[#allocation7 + $0x1020] sm:$0xff]
    %v5101 = vld [vmem:[#allocation7 + $0x1028] sm:$0xff]
    %v5102 = vld [vmem:[#allocation7 + $0x1030] sm:$0xff]
    %v5103 = vld [vmem:[#allocation7 + $0x1038] sm:$0xff]
    %v5104 = vld [vmem:[#allocation7 + $0x1040] sm:$0xff]
    %v5105 = vld [vmem:[#allocation7 + $0x1048] sm:$0xff]
    %v5106 = vld [vmem:[#allocation7 + $0x1050] sm:$0xff]
    %v5107 = vld [vmem:[#allocation7 + $0x1058] sm:$0xff]
    %v5108 = vld [vmem:[#allocation7 + $0x1060] sm:$0xff]
    %v5109 = vld [vmem:[#allocation7 + $0x1068] sm:$0xff]
    %v5110 = vld [vmem:[#allocation7 + $0x1070] sm:$0xff]
    %v5111 = vld [vmem:[#allocation7 + $0x1078] sm:$0xff]
    %v5112 = vld [vmem:[#allocation7 + $0x1080] sm:$0xff]
    %v5113 = vld [vmem:[#allocation7 + $0x1088] sm:$0xff]
    %v5114 = vld [vmem:[#allocation7 + $0x1090] sm:$0xff]
    %v5115 = vld [vmem:[#allocation7 + $0x1098] sm:$0xff]
    %v5116 = vld [vmem:[#allocation7 + $0x10a0] sm:$0xff]
    %v5117 = vld [vmem:[#allocation7 + $0x10a8] sm:$0xff]
    %v5118 = vld [vmem:[#allocation7 + $0x10b0] sm:$0xff]
    %v5119 = vld [vmem:[#allocation7 + $0x10b8] sm:$0xff]
    %v5120 = vld [vmem:[#allocation7 + $0x10c0] sm:$0xff]
    %v5121 = vld [vmem:[#allocation7 + $0x10c8] sm:$0xff]
    %v5122 = vld [vmem:[#allocation7 + $0x10d0] sm:$0xff]
    %v5123 = vld [vmem:[#allocation7 + $0x10d8] sm:$0xff]
    %v5124 = vld [vmem:[#allocation7 + $0x10e0] sm:$0xff]
    %v5125 = vld [vmem:[#allocation7 + $0x10e8] sm:$0xff]
    %v5126 = vld [vmem:[#allocation7 + $0x10f0] sm:$0xff]
    %v5127 = vld [vmem:[#allocation7 + $0x10f8] sm:$0xff]
    %v5128 = vld [vmem:[#allocation7 + $0x1100] sm:$0xff]
    %v5129 = vld [vmem:[#allocation7 + $0x1108] sm:$0xff]
    %v5130 = vld [vmem:[#allocation7 + $0x1110] sm:$0xff]
    %v5131 = vld [vmem:[#allocation7 + $0x1118] sm:$0xff]
    %v5132 = vld [vmem:[#allocation7 + $0x1120] sm:$0xff]
    %v5133 = vld [vmem:[#allocation7 + $0x1128] sm:$0xff]
    %v5134 = vld [vmem:[#allocation7 + $0x1130] sm:$0xff]
    %v5135 = vld [vmem:[#allocation7 + $0x1138] sm:$0xff]
    %v5136 = vld [vmem:[#allocation7 + $0x1140] sm:$0xff]
    %v5137 = vld [vmem:[#allocation7 + $0x1148] sm:$0xff]
    %v5138 = vld [vmem:[#allocation7 + $0x1150] sm:$0xff]
    %v5139 = vld [vmem:[#allocation7 + $0x1158] sm:$0xff]
    %v5140 = vld [vmem:[#allocation7 + $0x1160] sm:$0xff]
    %v5141 = vld [vmem:[#allocation7 + $0x1168] sm:$0xff]
    %v5142 = vld [vmem:[#allocation7 + $0x1170] sm:$0xff]
    %v5143 = vld [vmem:[#allocation7 + $0x1178] sm:$0xff]
    %v5144 = vld [vmem:[#allocation7 + $0x1180] sm:$0xff]
    %v5145 = vld [vmem:[#allocation7 + $0x1188] sm:$0xff]
    %v5146 = vld [vmem:[#allocation7 + $0x1190] sm:$0xff]
    %v5147 = vld [vmem:[#allocation7 + $0x1198] sm:$0xff]
    %v5148 = vld [vmem:[#allocation7 + $0x11a0] sm:$0xff]
    %v5149 = vld [vmem:[#allocation7 + $0x11a8] sm:$0xff]
    %v5150 = vld [vmem:[#allocation7 + $0x11b0] sm:$0xff]
    %v5151 = vld [vmem:[#allocation7 + $0x11b8] sm:$0xff]
    %v5152 = vld [vmem:[#allocation7 + $0x11c0] sm:$0xff]
    %v5153 = vld [vmem:[#allocation7 + $0x11c8] sm:$0xff]
    %v5154 = vld [vmem:[#allocation7 + $0x11d0] sm:$0xff]
    %v5155 = vld [vmem:[#allocation7 + $0x11d8] sm:$0xff]
    %v5156 = vld [vmem:[#allocation7 + $0x11e0] sm:$0xff]
    %v5157 = vld [vmem:[#allocation7 + $0x11e8] sm:$0xff]
    %v5158 = vld [vmem:[#allocation7 + $0x11f0] sm:$0xff]
    %v5159 = vld [vmem:[#allocation7 + $0x11f8] sm:$0xff]
    %v5160 = vld [vmem:[#allocation7 + $0x1200] sm:$0xff]
    %v5161 = vld [vmem:[#allocation7 + $0x1208] sm:$0xff]
    %v5162 = vld [vmem:[#allocation7 + $0x1210] sm:$0xff]
    %v5163 = vld [vmem:[#allocation7 + $0x1218] sm:$0xff]
    %v5164 = vld [vmem:[#allocation7 + $0x1220] sm:$0xff]
    %v5165 = vld [vmem:[#allocation7 + $0x1228] sm:$0xff]
    %v5166 = vld [vmem:[#allocation7 + $0x1230] sm:$0xff]
    %v5167 = vld [vmem:[#allocation7 + $0x1238] sm:$0xff]
    %v5168 = vld [vmem:[#allocation7 + $0x1240] sm:$0xff]
    %v5169 = vld [vmem:[#allocation7 + $0x1248] sm:$0xff]
    %v5170 = vld [vmem:[#allocation7 + $0x1250] sm:$0xff]
    %v5171 = vld [vmem:[#allocation7 + $0x1258] sm:$0xff]
    %v5172 = vld [vmem:[#allocation7 + $0x1260] sm:$0xff]
    %v5173 = vld [vmem:[#allocation7 + $0x1268] sm:$0xff]
    %v5174 = vld [vmem:[#allocation7 + $0x1270] sm:$0xff]
    %v5175 = vld [vmem:[#allocation7 + $0x1278] sm:$0xff]
    %v5176 = vld [vmem:[#allocation7 + $0x1280] sm:$0xff]
    %v5177 = vld [vmem:[#allocation7 + $0x1288] sm:$0xff]
    %v5178 = vld [vmem:[#allocation7 + $0x1290] sm:$0xff]
    %v5179 = vld [vmem:[#allocation7 + $0x1298] sm:$0xff]
    %v5180 = vld [vmem:[#allocation7 + $0x12a0] sm:$0xff]
    %v5181 = vld [vmem:[#allocation7 + $0x12a8] sm:$0xff]
    %v5182 = vld [vmem:[#allocation7 + $0x12b0] sm:$0xff]
    %v5183 = vld [vmem:[#allocation7 + $0x12b8] sm:$0xff]
    %v5184 = vld [vmem:[#allocation7 + $0x12c0] sm:$0xff]
    %v5185 = vld [vmem:[#allocation7 + $0x12c8] sm:$0xff]
    %v5186 = vld [vmem:[#allocation7 + $0x12d0] sm:$0xff]
    %v5187 = vld [vmem:[#allocation7 + $0x12d8] sm:$0xff]
    %v5188 = vld [vmem:[#allocation7 + $0x12e0] sm:$0xff]
    %v5189 = vld [vmem:[#allocation7 + $0x12e8] sm:$0xff]
    %v5190 = vld [vmem:[#allocation7 + $0x12f0] sm:$0xff]
    %v5191 = vld [vmem:[#allocation7 + $0x12f8] sm:$0xff]
    %v5192 = vld [vmem:[#allocation7 + $0x1300] sm:$0xff]
    %v5193 = vld [vmem:[#allocation7 + $0x1308] sm:$0xff]
    %v5194 = vld [vmem:[#allocation7 + $0x1310] sm:$0xff]
    %v5195 = vld [vmem:[#allocation7 + $0x1318] sm:$0xff]
    %v5196 = vld [vmem:[#allocation7 + $0x1320] sm:$0xff]
    %v5197 = vld [vmem:[#allocation7 + $0x1328] sm:$0xff]
    %v5198 = vld [vmem:[#allocation7 + $0x1330] sm:$0xff]
    %v5199 = vld [vmem:[#allocation7 + $0x1338] sm:$0xff]
    %v5200 = vld [vmem:[#allocation7 + $0x1340] sm:$0xff]
    %v5201 = vld [vmem:[#allocation7 + $0x1348] sm:$0xff]
    %v5202 = vld [vmem:[#allocation7 + $0x1350] sm:$0xff]
    %v5203 = vld [vmem:[#allocation7 + $0x1358] sm:$0xff]
    %v5204 = vld [vmem:[#allocation7 + $0x1360] sm:$0xff]
    %v5205 = vld [vmem:[#allocation7 + $0x1368] sm:$0xff]
    %v5206 = vld [vmem:[#allocation7 + $0x1370] sm:$0xff]
    %v5207 = vld [vmem:[#allocation7 + $0x1378] sm:$0xff]
    %v5208 = vld [vmem:[#allocation7 + $0x1380] sm:$0xff]
    %v5209 = vld [vmem:[#allocation7 + $0x1388] sm:$0xff]
    %v5210 = vld [vmem:[#allocation7 + $0x1390] sm:$0xff]
    %v5211 = vld [vmem:[#allocation7 + $0x1398] sm:$0xff]
    %v5212 = vld [vmem:[#allocation7 + $0x13a0] sm:$0xff]
    %v5213 = vld [vmem:[#allocation7 + $0x13a8] sm:$0xff]
    %v5214 = vld [vmem:[#allocation7 + $0x13b0] sm:$0xff]
    %v5215 = vld [vmem:[#allocation7 + $0x13b8] sm:$0xff]
    %v5216 = vld [vmem:[#allocation7 + $0x13c0] sm:$0xff]
    %v5217 = vld [vmem:[#allocation7 + $0x13c8] sm:$0xff]
    %v5218 = vld [vmem:[#allocation7 + $0x13d0] sm:$0xff]
    %v5219 = vld [vmem:[#allocation7 + $0x13d8] sm:$0xff]
    %v5220 = vld [vmem:[#allocation7 + $0x13e0] sm:$0xff]
    %v5221 = vld [vmem:[#allocation7 + $0x13e8] sm:$0xff]
    %v5222 = vld [vmem:[#allocation7 + $0x13f0] sm:$0xff]
    %v5223 = vld [vmem:[#allocation7 + $0x13f8] sm:$0xff]
    %v5224 = vld [vmem:[#allocation7 + $0x1400] sm:$0xff]
    %v5225 = vld [vmem:[#allocation7 + $0x1408] sm:$0xff]
    %v5226 = vld [vmem:[#allocation7 + $0x1410] sm:$0xff]
    %v5227 = vld [vmem:[#allocation7 + $0x1418] sm:$0xff]
    %v5228 = vld [vmem:[#allocation7 + $0x1420] sm:$0xff]
    %v5229 = vld [vmem:[#allocation7 + $0x1428] sm:$0xff]
    %v5230 = vld [vmem:[#allocation7 + $0x1430] sm:$0xff]
    %v5231 = vld [vmem:[#allocation7 + $0x1438] sm:$0xff]
    %v5232 = vld [vmem:[#allocation7 + $0x1440] sm:$0xff]
    %v5233 = vld [vmem:[#allocation7 + $0x1448] sm:$0xff]
    %v5234 = vld [vmem:[#allocation7 + $0x1450] sm:$0xff]
    %v5235 = vld [vmem:[#allocation7 + $0x1458] sm:$0xff]
    %v5236 = vld [vmem:[#allocation7 + $0x1460] sm:$0xff]
    %v5237 = vld [vmem:[#allocation7 + $0x1468] sm:$0xff]
    %v5238 = vld [vmem:[#allocation7 + $0x1470] sm:$0xff]
    %v5239 = vld [vmem:[#allocation7 + $0x1478] sm:$0xff]
    %v5240 = vld [vmem:[#allocation7 + $0x1480] sm:$0xff]
    %v5241 = vld [vmem:[#allocation7 + $0x1488] sm:$0xff]
    %v5242 = vld [vmem:[#allocation7 + $0x1490] sm:$0xff]
    %v5243 = vld [vmem:[#allocation7 + $0x1498] sm:$0xff]
    %v5244 = vld [vmem:[#allocation7 + $0x14a0] sm:$0xff]
    %v5245 = vld [vmem:[#allocation7 + $0x14a8] sm:$0xff]
    %v5246 = vld [vmem:[#allocation7 + $0x14b0] sm:$0xff]
    %v5247 = vld [vmem:[#allocation7 + $0x14b8] sm:$0xff]
    %v5248 = vld [vmem:[#allocation7 + $0x14c0] sm:$0xff]
    %v5249 = vld [vmem:[#allocation7 + $0x14c8] sm:$0xff]
    %v5250 = vld [vmem:[#allocation7 + $0x14d0] sm:$0xff]
    %v5251 = vld [vmem:[#allocation7 + $0x14d8] sm:$0xff]
    %v5252 = vld [vmem:[#allocation7 + $0x14e0] sm:$0xff]
    %v5253 = vld [vmem:[#allocation7 + $0x14e8] sm:$0xff]
    %v5254 = vld [vmem:[#allocation7 + $0x14f0] sm:$0xff]
    %v5255 = vld [vmem:[#allocation7 + $0x14f8] sm:$0xff]
    %v5256 = vld [vmem:[#allocation7 + $0x1500] sm:$0xff]
    %v5257 = vld [vmem:[#allocation7 + $0x1508] sm:$0xff]
    %v5258 = vld [vmem:[#allocation7 + $0x1510] sm:$0xff]
    %v5259 = vld [vmem:[#allocation7 + $0x1518] sm:$0xff]
    %v5260 = vld [vmem:[#allocation7 + $0x1520] sm:$0xff]
    %v5261 = vld [vmem:[#allocation7 + $0x1528] sm:$0xff]
    %v5262 = vld [vmem:[#allocation7 + $0x1530] sm:$0xff]
    %v5263 = vld [vmem:[#allocation7 + $0x1538] sm:$0xff]
    %v5264 = vld [vmem:[#allocation7 + $0x1540] sm:$0xff]
    %v5265 = vld [vmem:[#allocation7 + $0x1548] sm:$0xff]
    %v5266 = vld [vmem:[#allocation7 + $0x1550] sm:$0xff]
    %v5267 = vld [vmem:[#allocation7 + $0x1558] sm:$0xff]
    %v5268 = vld [vmem:[#allocation7 + $0x1560] sm:$0xff]
    %v5269 = vld [vmem:[#allocation7 + $0x1568] sm:$0xff]
    %v5270 = vld [vmem:[#allocation7 + $0x1570] sm:$0xff]
    %v5271 = vld [vmem:[#allocation7 + $0x1578] sm:$0xff]
    %v5272 = vld [vmem:[#allocation7 + $0x1580] sm:$0xff]
    %v5273 = vld [vmem:[#allocation7 + $0x1588] sm:$0xff]
    %v5274 = vld [vmem:[#allocation7 + $0x1590] sm:$0xff]
    %v5275 = vld [vmem:[#allocation7 + $0x1598] sm:$0xff]
    %v5276 = vld [vmem:[#allocation7 + $0x15a0] sm:$0xff]
    %v5277 = vld [vmem:[#allocation7 + $0x15a8] sm:$0xff]
    %v5278 = vld [vmem:[#allocation7 + $0x15b0] sm:$0xff]
    %v5279 = vld [vmem:[#allocation7 + $0x15b8] sm:$0xff]
    %v5280 = vld [vmem:[#allocation7 + $0x15c0] sm:$0xff]
    %v5281 = vld [vmem:[#allocation7 + $0x15c8] sm:$0xff]
    %v5282 = vld [vmem:[#allocation7 + $0x15d0] sm:$0xff]
    %v5283 = vld [vmem:[#allocation7 + $0x15d8] sm:$0xff]
    %v5284 = vld [vmem:[#allocation7 + $0x15e0] sm:$0xff]
    %v5285 = vld [vmem:[#allocation7 + $0x15e8] sm:$0xff]
    %v5286 = vld [vmem:[#allocation7 + $0x15f0] sm:$0xff]
    %v5287 = vld [vmem:[#allocation7 + $0x15f8] sm:$0xff]
    %v5288 = vld [vmem:[#allocation7 + $0x1600] sm:$0xff]
    %v5289 = vld [vmem:[#allocation7 + $0x1608] sm:$0xff]
    %v5290 = vld [vmem:[#allocation7 + $0x1610] sm:$0xff]
    %v5291 = vld [vmem:[#allocation7 + $0x1618] sm:$0xff]
    %v5292 = vld [vmem:[#allocation7 + $0x1620] sm:$0xff]
    %v5293 = vld [vmem:[#allocation7 + $0x1628] sm:$0xff]
    %v5294 = vld [vmem:[#allocation7 + $0x1630] sm:$0xff]
    %v5295 = vld [vmem:[#allocation7 + $0x1638] sm:$0xff]
    %v5296 = vld [vmem:[#allocation7 + $0x1640] sm:$0xff]
    %v5297 = vld [vmem:[#allocation7 + $0x1648] sm:$0xff]
    %v5298 = vld [vmem:[#allocation7 + $0x1650] sm:$0xff]
    %v5299 = vld [vmem:[#allocation7 + $0x1658] sm:$0xff]
    %v5300 = vld [vmem:[#allocation7 + $0x1660] sm:$0xff]
    %v5301 = vld [vmem:[#allocation7 + $0x1668] sm:$0xff]
    %v5302 = vld [vmem:[#allocation7 + $0x1670] sm:$0xff]
    %v5303 = vld [vmem:[#allocation7 + $0x1678] sm:$0xff]
    %v5304 = vld [vmem:[#allocation7 + $0x1680] sm:$0xff]
    %v5305 = vld [vmem:[#allocation7 + $0x1688] sm:$0xff]
    %v5306 = vld [vmem:[#allocation7 + $0x1690] sm:$0xff]
    %v5307 = vld [vmem:[#allocation7 + $0x1698] sm:$0xff]
    %v5308 = vld [vmem:[#allocation7 + $0x16a0] sm:$0xff]
    %v5309 = vld [vmem:[#allocation7 + $0x16a8] sm:$0xff]
    %v5310 = vld [vmem:[#allocation7 + $0x16b0] sm:$0xff]
    %v5311 = vld [vmem:[#allocation7 + $0x16b8] sm:$0xff]
    %v5312 = vld [vmem:[#allocation7 + $0x16c0] sm:$0xff]
    %v5313 = vld [vmem:[#allocation7 + $0x16c8] sm:$0xff]
    %v5314 = vld [vmem:[#allocation7 + $0x16d0] sm:$0xff]
    %v5315 = vld [vmem:[#allocation7 + $0x16d8] sm:$0xff]
    %v5316 = vld [vmem:[#allocation7 + $0x16e0] sm:$0xff]
    %v5317 = vld [vmem:[#allocation7 + $0x16e8] sm:$0xff]
    %v5318 = vld [vmem:[#allocation7 + $0x16f0] sm:$0xff]
    %v5319 = vld [vmem:[#allocation7 + $0x16f8] sm:$0xff]
    %v5320 = vld [vmem:[#allocation7 + $0x1700] sm:$0xff]
    %v5321 = vld [vmem:[#allocation7 + $0x1708] sm:$0xff]
    %v5322 = vld [vmem:[#allocation7 + $0x1710] sm:$0xff]
    %v5323 = vld [vmem:[#allocation7 + $0x1718] sm:$0xff]
    %v5324 = vld [vmem:[#allocation7 + $0x1720] sm:$0xff]
    %v5325 = vld [vmem:[#allocation7 + $0x1728] sm:$0xff]
    %v5326 = vld [vmem:[#allocation7 + $0x1730] sm:$0xff]
    %v5327 = vld [vmem:[#allocation7 + $0x1738] sm:$0xff]
    %v5328 = vld [vmem:[#allocation7 + $0x1740] sm:$0xff]
    %v5329 = vld [vmem:[#allocation7 + $0x1748] sm:$0xff]
    %v5330 = vld [vmem:[#allocation7 + $0x1750] sm:$0xff]
    %v5331 = vld [vmem:[#allocation7 + $0x1758] sm:$0xff]
    %v5332 = vld [vmem:[#allocation7 + $0x1760] sm:$0xff]
    %v5333 = vld [vmem:[#allocation7 + $0x1768] sm:$0xff]
    %v5334 = vld [vmem:[#allocation7 + $0x1770] sm:$0xff]
    %v5335 = vld [vmem:[#allocation7 + $0x1778] sm:$0xff]
    %v5336 = vld [vmem:[#allocation7 + $0x1780] sm:$0xff]
    %v5337 = vld [vmem:[#allocation7 + $0x1788] sm:$0xff]
    %v5338 = vld [vmem:[#allocation7 + $0x1790] sm:$0xff]
    %v5339 = vld [vmem:[#allocation7 + $0x1798] sm:$0xff]
    %v5340 = vld [vmem:[#allocation7 + $0x17a0] sm:$0xff]
    %v5341 = vld [vmem:[#allocation7 + $0x17a8] sm:$0xff]
    %v5342 = vld [vmem:[#allocation7 + $0x17b0] sm:$0xff]
    %v5343 = vld [vmem:[#allocation7 + $0x17b8] sm:$0xff]
    %v5344 = vld [vmem:[#allocation7 + $0x17c0] sm:$0xff]
    %v5345 = vld [vmem:[#allocation7 + $0x17c8] sm:$0xff]
    %v5346 = vld [vmem:[#allocation7 + $0x17d0] sm:$0xff]
    %v5347 = vld [vmem:[#allocation7 + $0x17d8] sm:$0xff]
    %v5348 = vld [vmem:[#allocation7 + $0x17e0] sm:$0xff]
    %v5349 = vld [vmem:[#allocation7 + $0x17e8] sm:$0xff]
    %v5350 = vld [vmem:[#allocation7 + $0x17f0] sm:$0xff]
    %v5351 = vld [vmem:[#allocation7 + $0x17f8] sm:$0xff]
    %v5352 = vld [vmem:[#allocation7 + $0x1800] sm:$0xff]
    %v5353 = vld [vmem:[#allocation7 + $0x1808] sm:$0xff]
    %v5354 = vld [vmem:[#allocation7 + $0x1810] sm:$0xff]
    %v5355 = vld [vmem:[#allocation7 + $0x1818] sm:$0xff]
    %v5356 = vld [vmem:[#allocation7 + $0x1820] sm:$0xff]
    %v5357 = vld [vmem:[#allocation7 + $0x1828] sm:$0xff]
    %v5358 = vld [vmem:[#allocation7 + $0x1830] sm:$0xff]
    %v5359 = vld [vmem:[#allocation7 + $0x1838] sm:$0xff]
    %v5360 = vld [vmem:[#allocation7 + $0x1840] sm:$0xff]
    %v5361 = vld [vmem:[#allocation7 + $0x1848] sm:$0xff]
    %v5362 = vld [vmem:[#allocation7 + $0x1850] sm:$0xff]
    %v5363 = vld [vmem:[#allocation7 + $0x1858] sm:$0xff]
    %v5364 = vld [vmem:[#allocation7 + $0x1860] sm:$0xff]
    %v5365 = vld [vmem:[#allocation7 + $0x1868] sm:$0xff]
    %v5366 = vld [vmem:[#allocation7 + $0x1870] sm:$0xff]
    %v5367 = vld [vmem:[#allocation7 + $0x1878] sm:$0xff]
    %v5368 = vld [vmem:[#allocation7 + $0x1880] sm:$0xff]
    %v5369 = vld [vmem:[#allocation7 + $0x1888] sm:$0xff]
    %v5370 = vld [vmem:[#allocation7 + $0x1890] sm:$0xff]
    %v5371 = vld [vmem:[#allocation7 + $0x1898] sm:$0xff]
    %v5372 = vld [vmem:[#allocation7 + $0x18a0] sm:$0xff]
    %v5373 = vld [vmem:[#allocation7 + $0x18a8] sm:$0xff]
    %v5374 = vld [vmem:[#allocation7 + $0x18b0] sm:$0xff]
    %v5375 = vld [vmem:[#allocation7 + $0x18b8] sm:$0xff]
    %v5376 = vld [vmem:[#allocation7 + $0x18c0] sm:$0xff]
    %v5377 = vld [vmem:[#allocation7 + $0x18c8] sm:$0xff]
    %v5378 = vld [vmem:[#allocation7 + $0x18d0] sm:$0xff]
    %v5379 = vld [vmem:[#allocation7 + $0x18d8] sm:$0xff]
    %v5380 = vld [vmem:[#allocation7 + $0x18e0] sm:$0xff]
    %v5381 = vld [vmem:[#allocation7 + $0x18e8] sm:$0xff]
    %v5382 = vld [vmem:[#allocation7 + $0x18f0] sm:$0xff]
    %v5383 = vld [vmem:[#allocation7 + $0x18f8] sm:$0xff]
    %v5384 = vld [vmem:[#allocation7 + $0x1900] sm:$0xff]
    %v5385 = vld [vmem:[#allocation7 + $0x1908] sm:$0xff]
    %v5386 = vld [vmem:[#allocation7 + $0x1910] sm:$0xff]
    %v5387 = vld [vmem:[#allocation7 + $0x1918] sm:$0xff]
    %v5388 = vld [vmem:[#allocation7 + $0x1920] sm:$0xff]
    %v5389 = vld [vmem:[#allocation7 + $0x1928] sm:$0xff]
    %v5390 = vld [vmem:[#allocation7 + $0x1930] sm:$0xff]
    %v5391 = vld [vmem:[#allocation7 + $0x1938] sm:$0xff]
    %v5392 = vld [vmem:[#allocation7 + $0x1940] sm:$0xff]
    %v5393 = vld [vmem:[#allocation7 + $0x1948] sm:$0xff]
    %v5394 = vld [vmem:[#allocation7 + $0x1950] sm:$0xff]
    %v5395 = vld [vmem:[#allocation7 + $0x1958] sm:$0xff]
    %v5396 = vld [vmem:[#allocation7 + $0x1960] sm:$0xff]
    %v5397 = vld [vmem:[#allocation7 + $0x1968] sm:$0xff]
    %v5398 = vld [vmem:[#allocation7 + $0x1970] sm:$0xff]
    %v5399 = vld [vmem:[#allocation7 + $0x1978] sm:$0xff]
    %v5400 = vld [vmem:[#allocation7 + $0x1980] sm:$0xff]
    %v5401 = vld [vmem:[#allocation7 + $0x1988] sm:$0xff]
    %v5402 = vld [vmem:[#allocation7 + $0x1990] sm:$0xff]
    %v5403 = vld [vmem:[#allocation7 + $0x1998] sm:$0xff]
    %v5404 = vld [vmem:[#allocation7 + $0x19a0] sm:$0xff]
    %v5405 = vld [vmem:[#allocation7 + $0x19a8] sm:$0xff]
    %v5406 = vld [vmem:[#allocation7 + $0x19b0] sm:$0xff]
    %v5407 = vld [vmem:[#allocation7 + $0x19b8] sm:$0xff]
    %v5408 = vld [vmem:[#allocation7 + $0x19c0] sm:$0xff]
    %v5409 = vld [vmem:[#allocation7 + $0x19c8] sm:$0xff]
    %v5410 = vld [vmem:[#allocation7 + $0x19d0] sm:$0xff]
    %v5411 = vld [vmem:[#allocation7 + $0x19d8] sm:$0xff]
    %v5412 = vld [vmem:[#allocation7 + $0x19e0] sm:$0xff]
    %v5413 = vld [vmem:[#allocation7 + $0x19e8] sm:$0xff]
    %v5414 = vld [vmem:[#allocation7 + $0x19f0] sm:$0xff]
    %v5415 = vld [vmem:[#allocation7 + $0x19f8] sm:$0xff]
    %v5416 = vld [vmem:[#allocation7 + $0x1a00] sm:$0xff]
    %v5417 = vld [vmem:[#allocation7 + $0x1a08] sm:$0xff]
    %v5418 = vld [vmem:[#allocation7 + $0x1a10] sm:$0xff]
    %v5419 = vld [vmem:[#allocation7 + $0x1a18] sm:$0xff]
    %v5420 = vld [vmem:[#allocation7 + $0x1a20] sm:$0xff]
    %v5421 = vld [vmem:[#allocation7 + $0x1a28] sm:$0xff]
    %v5422 = vld [vmem:[#allocation7 + $0x1a30] sm:$0xff]
    %v5423 = vld [vmem:[#allocation7 + $0x1a38] sm:$0xff]
    %v5424 = vld [vmem:[#allocation7 + $0x1a40] sm:$0xff]
    %v5425 = vld [vmem:[#allocation7 + $0x1a48] sm:$0xff]
    %v5426 = vld [vmem:[#allocation7 + $0x1a50] sm:$0xff]
    %v5427 = vld [vmem:[#allocation7 + $0x1a58] sm:$0xff]
    %v5428 = vld [vmem:[#allocation7 + $0x1a60] sm:$0xff]
    %v5429 = vld [vmem:[#allocation7 + $0x1a68] sm:$0xff]
    %v5430 = vld [vmem:[#allocation7 + $0x1a70] sm:$0xff]
    %v5431 = vld [vmem:[#allocation7 + $0x1a78] sm:$0xff]
    %v5432 = vld [vmem:[#allocation7 + $0x1a80] sm:$0xff]
    %v5433 = vld [vmem:[#allocation7 + $0x1a88] sm:$0xff]
    %v5434 = vld [vmem:[#allocation7 + $0x1a90] sm:$0xff]
    %v5435 = vld [vmem:[#allocation7 + $0x1a98] sm:$0xff]
    %v5436 = vld [vmem:[#allocation7 + $0x1aa0] sm:$0xff]
    %v5437 = vld [vmem:[#allocation7 + $0x1aa8] sm:$0xff]
    %v5438 = vld [vmem:[#allocation7 + $0x1ab0] sm:$0xff]
    %v5439 = vld [vmem:[#allocation7 + $0x1ab8] sm:$0xff]
    %v5440 = vld [vmem:[#allocation7 + $0x1ac0] sm:$0xff]
    %v5441 = vld [vmem:[#allocation7 + $0x1ac8] sm:$0xff]
    %v5442 = vld [vmem:[#allocation7 + $0x1ad0] sm:$0xff]
    %v5443 = vld [vmem:[#allocation7 + $0x1ad8] sm:$0xff]
    %v5444 = vld [vmem:[#allocation7 + $0x1ae0] sm:$0xff]
    %v5445 = vld [vmem:[#allocation7 + $0x1ae8] sm:$0xff]
    %v5446 = vld [vmem:[#allocation7 + $0x1af0] sm:$0xff]
    %v5447 = vld [vmem:[#allocation7 + $0x1af8] sm:$0xff]
    %v5448 = vld [vmem:[#allocation7 + $0x1b00] sm:$0xff]
    %v5449 = vld [vmem:[#allocation7 + $0x1b08] sm:$0xff]
    %v5450 = vld [vmem:[#allocation7 + $0x1b10] sm:$0xff]
    %v5451 = vld [vmem:[#allocation7 + $0x1b18] sm:$0xff]
    %v5452 = vld [vmem:[#allocation7 + $0x1b20] sm:$0xff]
    %v5453 = vld [vmem:[#allocation7 + $0x1b28] sm:$0xff]
    %v5454 = vld [vmem:[#allocation7 + $0x1b30] sm:$0xff]
    %v5455 = vld [vmem:[#allocation7 + $0x1b38] sm:$0xff]
    %v5456 = vld [vmem:[#allocation7 + $0x1b40] sm:$0xff]
    %v5457 = vld [vmem:[#allocation7 + $0x1b48] sm:$0xff]
    %v5458 = vld [vmem:[#allocation7 + $0x1b50] sm:$0xff]
    %v5459 = vld [vmem:[#allocation7 + $0x1b58] sm:$0xff]
    %v5460 = vld [vmem:[#allocation7 + $0x1b60] sm:$0xff]
    %v5461 = vld [vmem:[#allocation7 + $0x1b68] sm:$0xff]
    %v5462 = vld [vmem:[#allocation7 + $0x1b70] sm:$0xff]
    %v5463 = vld [vmem:[#allocation7 + $0x1b78] sm:$0xff]
    %v5464 = vld [vmem:[#allocation7 + $0x1b80] sm:$0xff]
    %v5465 = vld [vmem:[#allocation7 + $0x1b88] sm:$0xff]
    %v5466 = vld [vmem:[#allocation7 + $0x1b90] sm:$0xff]
    %v5467 = vld [vmem:[#allocation7 + $0x1b98] sm:$0xff]
    %v5468 = vld [vmem:[#allocation7 + $0x1ba0] sm:$0xff]
    %v5469 = vld [vmem:[#allocation7 + $0x1ba8] sm:$0xff]
    %v5470 = vld [vmem:[#allocation7 + $0x1bb0] sm:$0xff]
    %v5471 = vld [vmem:[#allocation7 + $0x1bb8] sm:$0xff]
    %v5472 = vld [vmem:[#allocation7 + $0x1bc0] sm:$0xff]
    %v5473 = vld [vmem:[#allocation7 + $0x1bc8] sm:$0xff]
    %v5474 = vld [vmem:[#allocation7 + $0x1bd0] sm:$0xff]
    %v5475 = vld [vmem:[#allocation7 + $0x1bd8] sm:$0xff]
    %v5476 = vld [vmem:[#allocation7 + $0x1be0] sm:$0xff]
    %v5477 = vld [vmem:[#allocation7 + $0x1be8] sm:$0xff]
    %v5478 = vld [vmem:[#allocation7 + $0x1bf0] sm:$0xff]
    %v5479 = vld [vmem:[#allocation7 + $0x1bf8] sm:$0xff]
    %v5480 = vld [vmem:[#allocation7 + $0x1c00] sm:$0xff]
    %v5481 = vld [vmem:[#allocation7 + $0x1c08] sm:$0xff]
    %v5482 = vld [vmem:[#allocation7 + $0x1c10] sm:$0xff]
    %v5483 = vld [vmem:[#allocation7 + $0x1c18] sm:$0xff]
    %v5484 = vld [vmem:[#allocation7 + $0x1c20] sm:$0xff]
    %v5485 = vld [vmem:[#allocation7 + $0x1c28] sm:$0xff]
    %v5486 = vld [vmem:[#allocation7 + $0x1c30] sm:$0xff]
    %v5487 = vld [vmem:[#allocation7 + $0x1c38] sm:$0xff]
    %v5488 = vld [vmem:[#allocation7 + $0x1c40] sm:$0xff]
    %v5489 = vld [vmem:[#allocation7 + $0x1c48] sm:$0xff]
    %v5490 = vld [vmem:[#allocation7 + $0x1c50] sm:$0xff]
    %v5491 = vld [vmem:[#allocation7 + $0x1c58] sm:$0xff]
    %v5492 = vld [vmem:[#allocation7 + $0x1c60] sm:$0xff]
    %v5493 = vld [vmem:[#allocation7 + $0x1c68] sm:$0xff]
    %v5494 = vld [vmem:[#allocation7 + $0x1c70] sm:$0xff]
    %v5495 = vld [vmem:[#allocation7 + $0x1c78] sm:$0xff]
    %v5496 = vld [vmem:[#allocation7 + $0x1c80] sm:$0xff]
    %v5497 = vld [vmem:[#allocation7 + $0x1c88] sm:$0xff]
    %v5498 = vld [vmem:[#allocation7 + $0x1c90] sm:$0xff]
    %v5499 = vld [vmem:[#allocation7 + $0x1c98] sm:$0xff]
    %v5500 = vld [vmem:[#allocation7 + $0x1ca0] sm:$0xff]
    %v5501 = vld [vmem:[#allocation7 + $0x1ca8] sm:$0xff]
    %v5502 = vld [vmem:[#allocation7 + $0x1cb0] sm:$0xff]
    %v5503 = vld [vmem:[#allocation7 + $0x1cb8] sm:$0xff]
    %v5504 = vld [vmem:[#allocation7 + $0x1cc0] sm:$0xff]
    %v5505 = vld [vmem:[#allocation7 + $0x1cc8] sm:$0xff]
    %v5506 = vld [vmem:[#allocation7 + $0x1cd0] sm:$0xff]
    %v5507 = vld [vmem:[#allocation7 + $0x1cd8] sm:$0xff]
    %v5508 = vld [vmem:[#allocation7 + $0x1ce0] sm:$0xff]
    %v5509 = vld [vmem:[#allocation7 + $0x1ce8] sm:$0xff]
    %v5510 = vld [vmem:[#allocation7 + $0x1cf0] sm:$0xff]
    %v5511 = vld [vmem:[#allocation7 + $0x1cf8] sm:$0xff]
    %v5512 = vld [vmem:[#allocation7 + $0x1d00] sm:$0xff]
    %v5513 = vld [vmem:[#allocation7 + $0x1d08] sm:$0xff]
    %v5514 = vld [vmem:[#allocation7 + $0x1d10] sm:$0xff]
    %v5515 = vld [vmem:[#allocation7 + $0x1d18] sm:$0xff]
    %v5516 = vld [vmem:[#allocation7 + $0x1d20] sm:$0xff]
    %v5517 = vld [vmem:[#allocation7 + $0x1d28] sm:$0xff]
    %v5518 = vld [vmem:[#allocation7 + $0x1d30] sm:$0xff]
    %v5519 = vld [vmem:[#allocation7 + $0x1d38] sm:$0xff]
    %v5520 = vld [vmem:[#allocation7 + $0x1d40] sm:$0xff]
    %v5521 = vld [vmem:[#allocation7 + $0x1d48] sm:$0xff]
    %v5522 = vld [vmem:[#allocation7 + $0x1d50] sm:$0xff]
    %v5523 = vld [vmem:[#allocation7 + $0x1d58] sm:$0xff]
    %v5524 = vld [vmem:[#allocation7 + $0x1d60] sm:$0xff]
    %v5525 = vld [vmem:[#allocation7 + $0x1d68] sm:$0xff]
    %v5526 = vld [vmem:[#allocation7 + $0x1d70] sm:$0xff]
    %v5527 = vld [vmem:[#allocation7 + $0x1d78] sm:$0xff]
    %v5528 = vld [vmem:[#allocation7 + $0x1d80] sm:$0xff]
    %v5529 = vld [vmem:[#allocation7 + $0x1d88] sm:$0xff]
    %v5530 = vld [vmem:[#allocation7 + $0x1d90] sm:$0xff]
    %v5531 = vld [vmem:[#allocation7 + $0x1d98] sm:$0xff]
    %v5532 = vld [vmem:[#allocation7 + $0x1da0] sm:$0xff]
    %v5533 = vld [vmem:[#allocation7 + $0x1da8] sm:$0xff]
    %v5534 = vld [vmem:[#allocation7 + $0x1db0] sm:$0xff]
    %v5535 = vld [vmem:[#allocation7 + $0x1db8] sm:$0xff]
    %v5536 = vld [vmem:[#allocation7 + $0x1dc0] sm:$0xff]
    %v5537 = vld [vmem:[#allocation7 + $0x1dc8] sm:$0xff]
    %v5538 = vld [vmem:[#allocation7 + $0x1dd0] sm:$0xff]
    %v5539 = vld [vmem:[#allocation7 + $0x1dd8] sm:$0xff]
    %v5540 = vld [vmem:[#allocation7 + $0x1de0] sm:$0xff]
    %v5541 = vld [vmem:[#allocation7 + $0x1de8] sm:$0xff]
    %v5542 = vld [vmem:[#allocation7 + $0x1df0] sm:$0xff]
    %v5543 = vld [vmem:[#allocation7 + $0x1df8] sm:$0xff]
    %v5544 = vld [vmem:[#allocation7 + $0x1e00] sm:$0xff]
    %v5545 = vld [vmem:[#allocation7 + $0x1e08] sm:$0xff]
    %v5546 = vld [vmem:[#allocation7 + $0x1e10] sm:$0xff]
    %v5547 = vld [vmem:[#allocation7 + $0x1e18] sm:$0xff]
    %v5548 = vld [vmem:[#allocation7 + $0x1e20] sm:$0xff]
    %v5549 = vld [vmem:[#allocation7 + $0x1e28] sm:$0xff]
    %v5550 = vld [vmem:[#allocation7 + $0x1e30] sm:$0xff]
    %v5551 = vld [vmem:[#allocation7 + $0x1e38] sm:$0xff]
    %v5552 = vld [vmem:[#allocation7 + $0x1e40] sm:$0xff]
    %v5553 = vld [vmem:[#allocation7 + $0x1e48] sm:$0xff]
    %v5554 = vld [vmem:[#allocation7 + $0x1e50] sm:$0xff]
    %v5555 = vld [vmem:[#allocation7 + $0x1e58] sm:$0xff]
    %v5556 = vld [vmem:[#allocation7 + $0x1e60] sm:$0xff]
    %v5557 = vld [vmem:[#allocation7 + $0x1e68] sm:$0xff]
    %v5558 = vld [vmem:[#allocation7 + $0x1e70] sm:$0xff]
    %v5559 = vld [vmem:[#allocation7 + $0x1e78] sm:$0xff]
    %v5560 = vld [vmem:[#allocation7 + $0x1e80] sm:$0xff]
    %v5561 = vld [vmem:[#allocation7 + $0x1e88] sm:$0xff]
    %v5562 = vld [vmem:[#allocation7 + $0x1e90] sm:$0xff]
    %v5563 = vld [vmem:[#allocation7 + $0x1e98] sm:$0xff]
    %v5564 = vld [vmem:[#allocation7 + $0x1ea0] sm:$0xff]
    %v5565 = vld [vmem:[#allocation7 + $0x1ea8] sm:$0xff]
    %v5566 = vld [vmem:[#allocation7 + $0x1eb0] sm:$0xff]
    %v5567 = vld [vmem:[#allocation7 + $0x1eb8] sm:$0xff]
    %v5568 = vld [vmem:[#allocation7 + $0x1ec0] sm:$0xff]
    %v5569 = vld [vmem:[#allocation7 + $0x1ec8] sm:$0xff]
    %v5570 = vld [vmem:[#allocation7 + $0x1ed0] sm:$0xff]
    %v5571 = vld [vmem:[#allocation7 + $0x1ed8] sm:$0xff]
    %v5572 = vld [vmem:[#allocation7 + $0x1ee0] sm:$0xff]
    %v5573 = vld [vmem:[#allocation7 + $0x1ee8] sm:$0xff]
    %v5574 = vld [vmem:[#allocation7 + $0x1ef0] sm:$0xff]
    %v5575 = vld [vmem:[#allocation7 + $0x1ef8] sm:$0xff]
    %v5576 = vld [vmem:[#allocation7 + $0x1f00] sm:$0xff]
    %v5577 = vld [vmem:[#allocation7 + $0x1f08] sm:$0xff]
    %v5578 = vld [vmem:[#allocation7 + $0x1f10] sm:$0xff]
    %v5579 = vld [vmem:[#allocation7 + $0x1f18] sm:$0xff]
    %v5580 = vld [vmem:[#allocation7 + $0x1f20] sm:$0xff]
    %v5581 = vld [vmem:[#allocation7 + $0x1f28] sm:$0xff]
    %v5582 = vld [vmem:[#allocation7 + $0x1f30] sm:$0xff]
    %v5583 = vld [vmem:[#allocation7 + $0x1f38] sm:$0xff]
    %v5584 = vld [vmem:[#allocation7 + $0x1f40] sm:$0xff]
    %v5585 = vld [vmem:[#allocation7 + $0x1f48] sm:$0xff]
    %v5586 = vld [vmem:[#allocation7 + $0x1f50] sm:$0xff]
    %v5587 = vld [vmem:[#allocation7 + $0x1f58] sm:$0xff]
    %v5588 = vld [vmem:[#allocation7 + $0x1f60] sm:$0xff]
    %v5589 = vld [vmem:[#allocation7 + $0x1f68] sm:$0xff]
    %v5590 = vld [vmem:[#allocation7 + $0x1f70] sm:$0xff]
    %v5591 = vld [vmem:[#allocation7 + $0x1f78] sm:$0xff]
    %v5592 = vld [vmem:[#allocation7 + $0x1f80] sm:$0xff]
    %v5593 = vld [vmem:[#allocation7 + $0x1f88] sm:$0xff]
    %v5594 = vld [vmem:[#allocation7 + $0x1f90] sm:$0xff]
    %v5595 = vld [vmem:[#allocation7 + $0x1f98] sm:$0xff]
    %v5596 = vld [vmem:[#allocation7 + $0x1fa0] sm:$0xff]
    %v5597 = vld [vmem:[#allocation7 + $0x1fa8] sm:$0xff]
    %v5598 = vld [vmem:[#allocation7 + $0x1fb0] sm:$0xff]
    %v5599 = vld [vmem:[#allocation7 + $0x1fb8] sm:$0xff]
    %v5600 = vld [vmem:[#allocation7 + $0x1fc0] sm:$0xff]
    %v5601 = vld [vmem:[#allocation7 + $0x1fc8] sm:$0xff]
    %v5602 = vld [vmem:[#allocation7 + $0x1fd0] sm:$0xff]
    %v5603 = vld [vmem:[#allocation7 + $0x1fd8] sm:$0xff]
    %v5604 = vld [vmem:[#allocation7 + $0x1fe0] sm:$0xff]
    %v5605 = vld [vmem:[#allocation7 + $0x1fe8] sm:$0xff]
    %v5606 = vld [vmem:[#allocation7 + $0x1ff0] sm:$0xff]
    %v5607 = vld [vmem:[#allocation7 + $0x1ff8] sm:$0xff]
    %v5608 = vld [vmem:[#allocation8] sm:$0xf]
    %v5610 = vlaneseq
    %v5611 = vshrl.u32 %v5610, 7
    %v5612 = vsub.s32 0, %v5611
    %v5613 = vrot.slane %v5608, %v5612
    %v5614 = vlaneseq
    %v5615 = vshrl.u32 %v5614, 7
    %v5616 = vsub.s32 1, %v5615
    %v5617 = vrot.slane %v5608, %v5616
    %v5618 = vlaneseq
    %v5619 = vshrl.u32 %v5618, 7
    %v5620 = vsub.s32 2, %v5619
    %v5621 = vrot.slane %v5608, %v5620
    %v5622 = vlaneseq
    %v5623 = vshrl.u32 %v5622, 7
    %v5624 = vsub.s32 3, %v5623
    %v5625 = vrot.slane %v5608, %v5624
    %5630 = vmatprep.subr.mxu0 %v4645
    %5631 = vmatpush1.msra.mxu0 %v4644
    %5632 = vmatprep.subr.mxu0 %v4641
    %5633 = vmatpush1.msra.mxu0 %v4640
    %5634 = vmatprep.subr.mxu0 %v4637
    %5635 = vmatpush1.msra.mxu0 %v4636
    %5636 = vmatprep.subr.mxu0 %v4633
    %5637 = vmatpush1.msra.mxu0 %v4632
    %5638 = vmatprep.subr.mxu0 %v4629
    %5639 = vmatpush1.msra.mxu0 %v4628
    %5640 = vmatprep.subr.mxu0 %v4625
    %5641 = vmatpush1.msra.mxu0 %v4624
    %5642 = vmatprep.subr.mxu0 %v4621
    %5643 = vmatpush1.msra.mxu0 %v4620
    %5644 = vmatprep.subr.mxu0 %v4617
    %5645 = vmatpush1.msra.mxu0 %v4616
    %5646 = vmatprep.subr.mxu0 %v4613
    %5647 = vmatpush1.msra.mxu0 %v4612
    %5648 = vmatprep.subr.mxu0 %v4609
    %5649 = vmatpush1.msra.mxu0 %v4608
    %5650 = vmatprep.subr.mxu0 %v4605
    %5651 = vmatpush1.msra.mxu0 %v4604
    %5652 = vmatprep.subr.mxu0 %v4601
    %5653 = vmatpush1.msra.mxu0 %v4600
    %5654 = vmatprep.subr.mxu0 %v4597
    %5655 = vmatpush1.msra.mxu0 %v4596
    %5656 = vmatprep.subr.mxu0 %v4593
    %5657 = vmatpush1.msra.mxu0 %v4592
    %5658 = vmatprep.subr.mxu0 %v4589
    %5659 = vmatpush1.msra.mxu0 %v4588
    %5660 = vmatprep.subr.mxu0 %v4585
    %5661 = vmatpush1.msra.mxu0 %v4584
    %5662 = vmatprep.subr.mxu0 %v4709
    %5663 = vmatpush2.msra.mxu0 %v4708
    %5664 = vmatprep.subr.mxu0 %v4705
    %5665 = vmatpush2.msra.mxu0 %v4704
    %5666 = vmatprep.subr.mxu0 %v4701
    %5667 = vmatpush2.msra.mxu0 %v4700
    %5668 = vmatprep.subr.mxu0 %v4697
    %5669 = vmatpush2.msra.mxu0 %v4696
    %5670 = vmatprep.subr.mxu0 %v4693
    %5671 = vmatpush2.msra.mxu0 %v4692
    %5672 = vmatprep.subr.mxu0 %v4689
    %5673 = vmatpush2.msra.mxu0 %v4688
    %5674 = vmatprep.subr.mxu0 %v4685
    %5675 = vmatpush2.msra.mxu0 %v4684
    %5676 = vmatprep.subr.mxu0 %v4681
    %5677 = vmatpush2.msra.mxu0 %v4680
    %5678 = vmatprep.subr.mxu0 %v4677
    %5679 = vmatpush2.msra.mxu0 %v4676
    %5680 = vmatprep.subr.mxu0 %v4673
    %5681 = vmatpush2.msra.mxu0 %v4672
    %5682 = vmatprep.subr.mxu0 %v4669
    %5683 = vmatpush2.msra.mxu0 %v4668
    %5684 = vmatprep.subr.mxu0 %v4665
    %5685 = vmatpush2.msra.mxu0 %v4664
    %5686 = vmatprep.subr.mxu0 %v4661
    %5687 = vmatpush2.msra.mxu0 %v4660
    %5688 = vmatprep.subr.mxu0 %v4657
    %5689 = vmatpush2.msra.mxu0 %v4656
    %5690 = vmatprep.subr.mxu0 %v4653
    %5691 = vmatpush2.msra.mxu0 %v4652
    %5692 = vmatprep.subr.mxu0 %v4649
    %5693 = vmatpush2.msra.mxu0 %v4648
    %5694 = vmatprep.mubr.f32.mxu0 %v2594
    %5695 = vmatmul.mubr.f32.gmra.mxu0 %v2592
    %v5696 = vpop.f32.mrf.mxu0
    %v5697 = vadd.f32 %v5613, %v5696
    %v5698 = vpop.f32.mrf.mxu0
    %v5699 = vadd.f32 %v5617, %v5698
    %5700 = vdwg.mxu0
    %5701 = vmatprep.subr.mxu0 %v4773
    %5702 = vmatpush1.msra.mxu0 %v4772
    %5703 = vmatprep.subr.mxu0 %v4769
    %5704 = vmatpush1.msra.mxu0 %v4768
    %5705 = vmatprep.subr.mxu0 %v4765
    %5706 = vmatpush1.msra.mxu0 %v4764
    %5707 = vmatprep.subr.mxu0 %v4761
    %5708 = vmatpush1.msra.mxu0 %v4760
    %5709 = vmatprep.subr.mxu0 %v4757
    %5710 = vmatpush1.msra.mxu0 %v4756
    %5711 = vmatprep.subr.mxu0 %v4753
    %5712 = vmatpush1.msra.mxu0 %v4752
    %5713 = vmatprep.subr.mxu0 %v4749
    %5714 = vmatpush1.msra.mxu0 %v4748
    %5715 = vmatprep.subr.mxu0 %v4745
    %5716 = vmatpush1.msra.mxu0 %v4744
    %5717 = vmatprep.subr.mxu0 %v4741
    %5718 = vmatpush1.msra.mxu0 %v4740
    %5719 = vmatprep.subr.mxu0 %v4737
    %5720 = vmatpush1.msra.mxu0 %v4736
    %5721 = vmatprep.subr.mxu0 %v4733
    %5722 = vmatpush1.msra.mxu0 %v4732
    %5723 = vmatprep.subr.mxu0 %v4729
    %5724 = vmatpush1.msra.mxu0 %v4728
    %5725 = vmatprep.subr.mxu0 %v4725
    %5726 = vmatpush1.msra.mxu0 %v4724
    %5727 = vmatprep.subr.mxu0 %v4721
    %5728 = vmatpush1.msra.mxu0 %v4720
    %5729 = vmatprep.subr.mxu0 %v4717
    %5730 = vmatpush1.msra.mxu0 %v4716
    %5731 = vmatprep.subr.mxu0 %v4713
    %5732 = vmatpush1.msra.mxu0 %v4712
    %5733 = vmatprep.subr.mxu0 %v4837
    %5734 = vmatpush2.msra.mxu0 %v4836
    %5735 = vmatprep.subr.mxu0 %v4833
    %5736 = vmatpush2.msra.mxu0 %v4832
    %5737 = vmatprep.subr.mxu0 %v4829
    %5738 = vmatpush2.msra.mxu0 %v4828
    %5739 = vmatprep.subr.mxu0 %v4825
    %5740 = vmatpush2.msra.mxu0 %v4824
    %5741 = vmatprep.subr.mxu0 %v4821
    %5742 = vmatpush2.msra.mxu0 %v4820
    %5743 = vmatprep.subr.mxu0 %v4817
    %5744 = vmatpush2.msra.mxu0 %v4816
    %5745 = vmatprep.subr.mxu0 %v4813
    %5746 = vmatpush2.msra.mxu0 %v4812
    %5747 = vmatprep.subr.mxu0 %v4809
    %5748 = vmatpush2.msra.mxu0 %v4808
    %5749 = vmatprep.subr.mxu0 %v4805
    %5750 = vmatpush2.msra.mxu0 %v4804
    %5751 = vmatprep.subr.mxu0 %v4801
    %5752 = vmatpush2.msra.mxu0 %v4800
    %5753 = vmatprep.subr.mxu0 %v4797
    %5754 = vmatpush2.msra.mxu0 %v4796
    %5755 = vmatprep.subr.mxu0 %v4793
    %5756 = vmatpush2.msra.mxu0 %v4792
    %5757 = vmatprep.subr.mxu0 %v4789
    %5758 = vmatpush2.msra.mxu0 %v4788
    %5759 = vmatprep.subr.mxu0 %v4785
    %5760 = vmatpush2.msra.mxu0 %v4784
    %5761 = vmatprep.subr.mxu0 %v4781
    %5762 = vmatpush2.msra.mxu0 %v4780
    %5763 = vmatprep.subr.mxu0 %v4777
    %5764 = vmatpush2.msra.mxu0 %v4776
    %5765 = vmatprep.mubr.f32.mxu0 %v2878
    %5766 = vmatmul.mubr.f32.gmra.mxu0 %v2876
    %v5767 = vpop.f32.mrf.mxu0
    %v5768 = vadd.f32 %v5697, %v5767
    %v5769 = vpop.f32.mrf.mxu0
    %v5770 = vadd.f32 %v5699, %v5769
    %5771 = vdwg.mxu0
    %5772 = vmatprep.subr.mxu0 %v4901
    %5773 = vmatpush1.msra.mxu0 %v4900
    %5774 = vmatprep.subr.mxu0 %v4897
    %5775 = vmatpush1.msra.mxu0 %v4896
    %5776 = vmatprep.subr.mxu0 %v4893
    %5777 = vmatpush1.msra.mxu0 %v4892
    %5778 = vmatprep.subr.mxu0 %v4889
    %5779 = vmatpush1.msra.mxu0 %v4888
    %5780 = vmatprep.subr.mxu0 %v4885
    %5781 = vmatpush1.msra.mxu0 %v4884
    %5782 = vmatprep.subr.mxu0 %v4881
    %5783 = vmatpush1.msra.mxu0 %v4880
    %5784 = vmatprep.subr.mxu0 %v4877
    %5785 = vmatpush1.msra.mxu0 %v4876
    %5786 = vmatprep.subr.mxu0 %v4873
    %5787 = vmatpush1.msra.mxu0 %v4872
    %5788 = vmatprep.subr.mxu0 %v4869
    %5789 = vmatpush1.msra.mxu0 %v4868
    %5790 = vmatprep.subr.mxu0 %v4865
    %5791 = vmatpush1.msra.mxu0 %v4864
    %5792 = vmatprep.subr.mxu0 %v4861
    %5793 = vmatpush1.msra.mxu0 %v4860
    %5794 = vmatprep.subr.mxu0 %v4857
    %5795 = vmatpush1.msra.mxu0 %v4856
    %5796 = vmatprep.subr.mxu0 %v4853
    %5797 = vmatpush1.msra.mxu0 %v4852
    %5798 = vmatprep.subr.mxu0 %v4849
    %5799 = vmatpush1.msra.mxu0 %v4848
    %5800 = vmatprep.subr.mxu0 %v4845
    %5801 = vmatpush1.msra.mxu0 %v4844
    %5802 = vmatprep.subr.mxu0 %v4841
    %5803 = vmatpush1.msra.mxu0 %v4840
    %5804 = vmatprep.subr.mxu0 %v4965
    %5805 = vmatpush2.msra.mxu0 %v4964
    %5806 = vmatprep.subr.mxu0 %v4961
    %5807 = vmatpush2.msra.mxu0 %v4960
    %5808 = vmatprep.subr.mxu0 %v4957
    %5809 = vmatpush2.msra.mxu0 %v4956
    %5810 = vmatprep.subr.mxu0 %v4953
    %5811 = vmatpush2.msra.mxu0 %v4952
    %5812 = vmatprep.subr.mxu0 %v4949
    %5813 = vmatpush2.msra.mxu0 %v4948
    %5814 = vmatprep.subr.mxu0 %v4945
    %5815 = vmatpush2.msra.mxu0 %v4944
    %5816 = vmatprep.subr.mxu0 %v4941
    %5817 = vmatpush2.msra.mxu0 %v4940
    %5818 = vmatprep.subr.mxu0 %v4937
    %5819 = vmatpush2.msra.mxu0 %v4936
    %5820 = vmatprep.subr.mxu0 %v4933
    %5821 = vmatpush2.msra.mxu0 %v4932
    %5822 = vmatprep.subr.mxu0 %v4929
    %5823 = vmatpush2.msra.mxu0 %v4928
    %5824 = vmatprep.subr.mxu0 %v4925
    %5825 = vmatpush2.msra.mxu0 %v4924
    %5826 = vmatprep.subr.mxu0 %v4921
    %5827 = vmatpush2.msra.mxu0 %v4920
    %5828 = vmatprep.subr.mxu0 %v4917
    %5829 = vmatpush2.msra.mxu0 %v4916
    %5830 = vmatprep.subr.mxu0 %v4913
    %5831 = vmatpush2.msra.mxu0 %v4912
    %5832 = vmatprep.subr.mxu0 %v4909
    %5833 = vmatpush2.msra.mxu0 %v4908
    %5834 = vmatprep.subr.mxu0 %v4905
    %5835 = vmatpush2.msra.mxu0 %v4904
    %5836 = vmatprep.mubr.f32.mxu0 %v3162
    %5837 = vmatmul.mubr.f32.gmra.mxu0 %v3160
    %v5838 = vpop.f32.mrf.mxu0
    %v5839 = vadd.f32 %v5768, %v5838
    %v5840 = vpop.f32.mrf.mxu0
    %v5841 = vadd.f32 %v5770, %v5840
    %5842 = vdwg.mxu0
    %5843 = vmatprep.subr.mxu0 %v5029
    %5844 = vmatpush1.msra.mxu0 %v5028
    %5845 = vmatprep.subr.mxu0 %v5025
    %5846 = vmatpush1.msra.mxu0 %v5024
    %5847 = vmatprep.subr.mxu0 %v5021
    %5848 = vmatpush1.msra.mxu0 %v5020
    %5849 = vmatprep.subr.mxu0 %v5017
    %5850 = vmatpush1.msra.mxu0 %v5016
    %5851 = vmatprep.subr.mxu0 %v5013
    %5852 = vmatpush1.msra.mxu0 %v5012
    %5853 = vmatprep.subr.mxu0 %v5009
    %5854 = vmatpush1.msra.mxu0 %v5008
    %5855 = vmatprep.subr.mxu0 %v5005
    %5856 = vmatpush1.msra.mxu0 %v5004
    %5857 = vmatprep.subr.mxu0 %v5001
    %5858 = vmatpush1.msra.mxu0 %v5000
    %5859 = vmatprep.subr.mxu0 %v4997
    %5860 = vmatpush1.msra.mxu0 %v4996
    %5861 = vmatprep.subr.mxu0 %v4993
    %5862 = vmatpush1.msra.mxu0 %v4992
    %5863 = vmatprep.subr.mxu0 %v4989
    %5864 = vmatpush1.msra.mxu0 %v4988
    %5865 = vmatprep.subr.mxu0 %v4985
    %5866 = vmatpush1.msra.mxu0 %v4984
    %5867 = vmatprep.subr.mxu0 %v4981
    %5868 = vmatpush1.msra.mxu0 %v4980
    %5869 = vmatprep.subr.mxu0 %v4977
    %5870 = vmatpush1.msra.mxu0 %v4976
    %5871 = vmatprep.subr.mxu0 %v4973
    %5872 = vmatpush1.msra.mxu0 %v4972
    %5873 = vmatprep.subr.mxu0 %v4969
    %5874 = vmatpush1.msra.mxu0 %v4968
    %5875 = vmatprep.subr.mxu0 %v5093
    %5876 = vmatpush2.msra.mxu0 %v5092
    %5877 = vmatprep.subr.mxu0 %v5089
    %5878 = vmatpush2.msra.mxu0 %v5088
    %5879 = vmatprep.subr.mxu0 %v5085
    %5880 = vmatpush2.msra.mxu0 %v5084
    %5881 = vmatprep.subr.mxu0 %v5081
    %5882 = vmatpush2.msra.mxu0 %v5080
    %5883 = vmatprep.subr.mxu0 %v5077
    %5884 = vmatpush2.msra.mxu0 %v5076
    %5885 = vmatprep.subr.mxu0 %v5073
    %5886 = vmatpush2.msra.mxu0 %v5072
    %5887 = vmatprep.subr.mxu0 %v5069
    %5888 = vmatpush2.msra.mxu0 %v5068
    %5889 = vmatprep.subr.mxu0 %v5065
    %5890 = vmatpush2.msra.mxu0 %v5064
    %5891 = vmatprep.subr.mxu0 %v5061
    %5892 = vmatpush2.msra.mxu0 %v5060
    %5893 = vmatprep.subr.mxu0 %v5057
    %5894 = vmatpush2.msra.mxu0 %v5056
    %5895 = vmatprep.subr.mxu0 %v5053
    %5896 = vmatpush2.msra.mxu0 %v5052
    %5897 = vmatprep.subr.mxu0 %v5049
    %5898 = vmatpush2.msra.mxu0 %v5048
    %5899 = vmatprep.subr.mxu0 %v5045
    %5900 = vmatpush2.msra.mxu0 %v5044
    %5901 = vmatprep.subr.mxu0 %v5041
    %5902 = vmatpush2.msra.mxu0 %v5040
    %5903 = vmatprep.subr.mxu0 %v5037
    %5904 = vmatpush2.msra.mxu0 %v5036
    %5905 = vmatprep.subr.mxu0 %v5033
    %5906 = vmatpush2.msra.mxu0 %v5032
    %5907 = vmatprep.mubr.f32.mxu0 %v3446
    %5908 = vmatmul.mubr.f32.gmra.mxu0 %v3444
    %v5909 = vpop.f32.mrf.mxu0
    %v5910 = vadd.f32 %v5839, %v5909
    %v5911 = vpop.f32.mrf.mxu0
    %v5912 = vadd.f32 %v5841, %v5911
    %5913 = vdwg.mxu0
    %5914 = vmatprep.subr.mxu0 %v5157
    %5915 = vmatpush1.msra.mxu0 %v5156
    %5916 = vmatprep.subr.mxu0 %v5153
    %5917 = vmatpush1.msra.mxu0 %v5152
    %5918 = vmatprep.subr.mxu0 %v5149
    %5919 = vmatpush1.msra.mxu0 %v5148
    %5920 = vmatprep.subr.mxu0 %v5145
    %5921 = vmatpush1.msra.mxu0 %v5144
    %5922 = vmatprep.subr.mxu0 %v5141
    %5923 = vmatpush1.msra.mxu0 %v5140
    %5924 = vmatprep.subr.mxu0 %v5137
    %5925 = vmatpush1.msra.mxu0 %v5136
    %5926 = vmatprep.subr.mxu0 %v5133
    %5927 = vmatpush1.msra.mxu0 %v5132
    %5928 = vmatprep.subr.mxu0 %v5129
    %5929 = vmatpush1.msra.mxu0 %v5128
    %5930 = vmatprep.subr.mxu0 %v5125
    %5931 = vmatpush1.msra.mxu0 %v5124
    %5932 = vmatprep.subr.mxu0 %v5121
    %5933 = vmatpush1.msra.mxu0 %v5120
    %5934 = vmatprep.subr.mxu0 %v5117
    %5935 = vmatpush1.msra.mxu0 %v5116
    %5936 = vmatprep.subr.mxu0 %v5113
    %5937 = vmatpush1.msra.mxu0 %v5112
    %5938 = vmatprep.subr.mxu0 %v5109
    %5939 = vmatpush1.msra.mxu0 %v5108
    %5940 = vmatprep.subr.mxu0 %v5105
    %5941 = vmatpush1.msra.mxu0 %v5104
    %5942 = vmatprep.subr.mxu0 %v5101
    %5943 = vmatpush1.msra.mxu0 %v5100
    %5944 = vmatprep.subr.mxu0 %v5097
    %5945 = vmatpush1.msra.mxu0 %v5096
    %5946 = vmatprep.subr.mxu0 %v5221
    %5947 = vmatpush2.msra.mxu0 %v5220
    %5948 = vmatprep.subr.mxu0 %v5217
    %5949 = vmatpush2.msra.mxu0 %v5216
    %5950 = vmatprep.subr.mxu0 %v5213
    %5951 = vmatpush2.msra.mxu0 %v5212
    %5952 = vmatprep.subr.mxu0 %v5209
    %5953 = vmatpush2.msra.mxu0 %v5208
    %5954 = vmatprep.subr.mxu0 %v5205
    %5955 = vmatpush2.msra.mxu0 %v5204
    %5956 = vmatprep.subr.mxu0 %v5201
    %5957 = vmatpush2.msra.mxu0 %v5200
    %5958 = vmatprep.subr.mxu0 %v5197
    %5959 = vmatpush2.msra.mxu0 %v5196
    %5960 = vmatprep.subr.mxu0 %v5193
    %5961 = vmatpush2.msra.mxu0 %v5192
    %5962 = vmatprep.subr.mxu0 %v5189
    %5963 = vmatpush2.msra.mxu0 %v5188
    %5964 = vmatprep.subr.mxu0 %v5185
    %5965 = vmatpush2.msra.mxu0 %v5184
    %5966 = vmatprep.subr.mxu0 %v5181
    %5967 = vmatpush2.msra.mxu0 %v5180
    %5968 = vmatprep.subr.mxu0 %v5177
    %5969 = vmatpush2.msra.mxu0 %v5176
    %5970 = vmatprep.subr.mxu0 %v5173
    %5971 = vmatpush2.msra.mxu0 %v5172
    %5972 = vmatprep.subr.mxu0 %v5169
    %5973 = vmatpush2.msra.mxu0 %v5168
    %5974 = vmatprep.subr.mxu0 %v5165
    %5975 = vmatpush2.msra.mxu0 %v5164
    %5976 = vmatprep.subr.mxu0 %v5161
    %5977 = vmatpush2.msra.mxu0 %v5160
    %5978 = vmatprep.mubr.f32.mxu0 %v3730
    %5979 = vmatmul.mubr.f32.gmra.mxu0 %v3728
    %v5980 = vpop.f32.mrf.mxu0
    %v5981 = vadd.f32 %v5910, %v5980
    %v5982 = vpop.f32.mrf.mxu0
    %v5983 = vadd.f32 %v5912, %v5982
    %5984 = vdwg.mxu0
    %5985 = vmatprep.subr.mxu0 %v5285
    %5986 = vmatpush1.msra.mxu0 %v5284
    %5987 = vmatprep.subr.mxu0 %v5281
    %5988 = vmatpush1.msra.mxu0 %v5280
    %5989 = vmatprep.subr.mxu0 %v5277
    %5990 = vmatpush1.msra.mxu0 %v5276
    %5991 = vmatprep.subr.mxu0 %v5273
    %5992 = vmatpush1.msra.mxu0 %v5272
    %5993 = vmatprep.subr.mxu0 %v5269
    %5994 = vmatpush1.msra.mxu0 %v5268
    %5995 = vmatprep.subr.mxu0 %v5265
    %5996 = vmatpush1.msra.mxu0 %v5264
    %5997 = vmatprep.subr.mxu0 %v5261
    %5998 = vmatpush1.msra.mxu0 %v5260
    %5999 = vmatprep.subr.mxu0 %v5257
    %6000 = vmatpush1.msra.mxu0 %v5256
    %6001 = vmatprep.subr.mxu0 %v5253
    %6002 = vmatpush1.msra.mxu0 %v5252
    %6003 = vmatprep.subr.mxu0 %v5249
    %6004 = vmatpush1.msra.mxu0 %v5248
    %6005 = vmatprep.subr.mxu0 %v5245
    %6006 = vmatpush1.msra.mxu0 %v5244
    %6007 = vmatprep.subr.mxu0 %v5241
    %6008 = vmatpush1.msra.mxu0 %v5240
    %6009 = vmatprep.subr.mxu0 %v5237
    %6010 = vmatpush1.msra.mxu0 %v5236
    %6011 = vmatprep.subr.mxu0 %v5233
    %6012 = vmatpush1.msra.mxu0 %v5232
    %6013 = vmatprep.subr.mxu0 %v5229
    %6014 = vmatpush1.msra.mxu0 %v5228
    %6015 = vmatprep.subr.mxu0 %v5225
    %6016 = vmatpush1.msra.mxu0 %v5224
    %6017 = vmatprep.subr.mxu0 %v5349
    %6018 = vmatpush2.msra.mxu0 %v5348
    %6019 = vmatprep.subr.mxu0 %v5345
    %6020 = vmatpush2.msra.mxu0 %v5344
    %6021 = vmatprep.subr.mxu0 %v5341
    %6022 = vmatpush2.msra.mxu0 %v5340
    %6023 = vmatprep.subr.mxu0 %v5337
    %6024 = vmatpush2.msra.mxu0 %v5336
    %6025 = vmatprep.subr.mxu0 %v5333
    %6026 = vmatpush2.msra.mxu0 %v5332
    %6027 = vmatprep.subr.mxu0 %v5329
    %6028 = vmatpush2.msra.mxu0 %v5328
    %6029 = vmatprep.subr.mxu0 %v5325
    %6030 = vmatpush2.msra.mxu0 %v5324
    %6031 = vmatprep.subr.mxu0 %v5321
    %6032 = vmatpush2.msra.mxu0 %v5320
    %6033 = vmatprep.subr.mxu0 %v5317
    %6034 = vmatpush2.msra.mxu0 %v5316
    %6035 = vmatprep.subr.mxu0 %v5313
    %6036 = vmatpush2.msra.mxu0 %v5312
    %6037 = vmatprep.subr.mxu0 %v5309
    %6038 = vmatpush2.msra.mxu0 %v5308
    %6039 = vmatprep.subr.mxu0 %v5305
    %6040 = vmatpush2.msra.mxu0 %v5304
    %6041 = vmatprep.subr.mxu0 %v5301
    %6042 = vmatpush2.msra.mxu0 %v5300
    %6043 = vmatprep.subr.mxu0 %v5297
    %6044 = vmatpush2.msra.mxu0 %v5296
    %6045 = vmatprep.subr.mxu0 %v5293
    %6046 = vmatpush2.msra.mxu0 %v5292
    %6047 = vmatprep.subr.mxu0 %v5289
    %6048 = vmatpush2.msra.mxu0 %v5288
    %6049 = vmatprep.mubr.f32.mxu0 %v4014
    %6050 = vmatmul.mubr.f32.gmra.mxu0 %v4012
    %v6051 = vpop.f32.mrf.mxu0
    %v6052 = vadd.f32 %v5981, %v6051
    %v6053 = vpop.f32.mrf.mxu0
    %v6054 = vadd.f32 %v5983, %v6053
    %6055 = vdwg.mxu0
    %6056 = vmatprep.subr.mxu0 %v5413
    %6057 = vmatpush1.msra.mxu0 %v5412
    %6058 = vmatprep.subr.mxu0 %v5409
    %6059 = vmatpush1.msra.mxu0 %v5408
    %6060 = vmatprep.subr.mxu0 %v5405
    %6061 = vmatpush1.msra.mxu0 %v5404
    %6062 = vmatprep.subr.mxu0 %v5401
    %6063 = vmatpush1.msra.mxu0 %v5400
    %6064 = vmatprep.subr.mxu0 %v5397
    %6065 = vmatpush1.msra.mxu0 %v5396
    %6066 = vmatprep.subr.mxu0 %v5393
    %6067 = vmatpush1.msra.mxu0 %v5392
    %6068 = vmatprep.subr.mxu0 %v5389
    %6069 = vmatpush1.msra.mxu0 %v5388
    %6070 = vmatprep.subr.mxu0 %v5385
    %6071 = vmatpush1.msra.mxu0 %v5384
    %6072 = vmatprep.subr.mxu0 %v5381
    %6073 = vmatpush1.msra.mxu0 %v5380
    %6074 = vmatprep.subr.mxu0 %v5377
    %6075 = vmatpush1.msra.mxu0 %v5376
    %6076 = vmatprep.subr.mxu0 %v5373
    %6077 = vmatpush1.msra.mxu0 %v5372
    %6078 = vmatprep.subr.mxu0 %v5369
    %6079 = vmatpush1.msra.mxu0 %v5368
    %6080 = vmatprep.subr.mxu0 %v5365
    %6081 = vmatpush1.msra.mxu0 %v5364
    %6082 = vmatprep.subr.mxu0 %v5361
    %6083 = vmatpush1.msra.mxu0 %v5360
    %6084 = vmatprep.subr.mxu0 %v5357
    %6085 = vmatpush1.msra.mxu0 %v5356
    %6086 = vmatprep.subr.mxu0 %v5353
    %6087 = vmatpush1.msra.mxu0 %v5352
    %6088 = vmatprep.subr.mxu0 %v5477
    %6089 = vmatpush2.msra.mxu0 %v5476
    %6090 = vmatprep.subr.mxu0 %v5473
    %6091 = vmatpush2.msra.mxu0 %v5472
    %6092 = vmatprep.subr.mxu0 %v5469
    %6093 = vmatpush2.msra.mxu0 %v5468
    %6094 = vmatprep.subr.mxu0 %v5465
    %6095 = vmatpush2.msra.mxu0 %v5464
    %6096 = vmatprep.subr.mxu0 %v5461
    %6097 = vmatpush2.msra.mxu0 %v5460
    %6098 = vmatprep.subr.mxu0 %v5457
    %6099 = vmatpush2.msra.mxu0 %v5456
    %6100 = vmatprep.subr.mxu0 %v5453
    %6101 = vmatpush2.msra.mxu0 %v5452
    %6102 = vmatprep.subr.mxu0 %v5449
    %6103 = vmatpush2.msra.mxu0 %v5448
    %6104 = vmatprep.subr.mxu0 %v5445
    %6105 = vmatpush2.msra.mxu0 %v5444
    %6106 = vmatprep.subr.mxu0 %v5441
    %6107 = vmatpush2.msra.mxu0 %v5440
    %6108 = vmatprep.subr.mxu0 %v5437
    %6109 = vmatpush2.msra.mxu0 %v5436
    %6110 = vmatprep.subr.mxu0 %v5433
    %6111 = vmatpush2.msra.mxu0 %v5432
    %6112 = vmatprep.subr.mxu0 %v5429
    %6113 = vmatpush2.msra.mxu0 %v5428
    %6114 = vmatprep.subr.mxu0 %v5425
    %6115 = vmatpush2.msra.mxu0 %v5424
    %6116 = vmatprep.subr.mxu0 %v5421
    %6117 = vmatpush2.msra.mxu0 %v5420
    %6118 = vmatprep.subr.mxu0 %v5417
    %6119 = vmatpush2.msra.mxu0 %v5416
    %6120 = vmatprep.mubr.f32.mxu0 %v4298
    %6121 = vmatmul.mubr.f32.gmra.mxu0 %v4296
    %v6122 = vpop.f32.mrf.mxu0
    %v6123 = vadd.f32 %v6052, %v6122
    %v6124 = vpop.f32.mrf.mxu0
    %v6125 = vadd.f32 %v6054, %v6124
    %6126 = vdwg.mxu0
    %6127 = vmatprep.subr.mxu0 %v5541
    %6128 = vmatpush1.msra.mxu0 %v5540
    %6129 = vmatprep.subr.mxu0 %v5537
    %6130 = vmatpush1.msra.mxu0 %v5536
    %6131 = vmatprep.subr.mxu0 %v5533
    %6132 = vmatpush1.msra.mxu0 %v5532
    %6133 = vmatprep.subr.mxu0 %v5529
    %6134 = vmatpush1.msra.mxu0 %v5528
    %6135 = vmatprep.subr.mxu0 %v5525
    %6136 = vmatpush1.msra.mxu0 %v5524
    %6137 = vmatprep.subr.mxu0 %v5521
    %6138 = vmatpush1.msra.mxu0 %v5520
    %6139 = vmatprep.subr.mxu0 %v5517
    %6140 = vmatpush1.msra.mxu0 %v5516
    %6141 = vmatprep.subr.mxu0 %v5513
    %6142 = vmatpush1.msra.mxu0 %v5512
    %6143 = vmatprep.subr.mxu0 %v5509
    %6144 = vmatpush1.msra.mxu0 %v5508
    %6145 = vmatprep.subr.mxu0 %v5505
    %6146 = vmatpush1.msra.mxu0 %v5504
    %6147 = vmatprep.subr.mxu0 %v5501
    %6148 = vmatpush1.msra.mxu0 %v5500
    %6149 = vmatprep.subr.mxu0 %v5497
    %6150 = vmatpush1.msra.mxu0 %v5496
    %6151 = vmatprep.subr.mxu0 %v5493
    %6152 = vmatpush1.msra.mxu0 %v5492
    %6153 = vmatprep.subr.mxu0 %v5489
    %6154 = vmatpush1.msra.mxu0 %v5488
    %6155 = vmatprep.subr.mxu0 %v5485
    %6156 = vmatpush1.msra.mxu0 %v5484
    %6157 = vmatprep.subr.mxu0 %v5481
    %6158 = vmatpush1.msra.mxu0 %v5480
    %6159 = vmatprep.subr.mxu0 %v5605
    %6160 = vmatpush2.msra.mxu0 %v5604
    %6161 = vmatprep.subr.mxu0 %v5601
    %6162 = vmatpush2.msra.mxu0 %v5600
    %6163 = vmatprep.subr.mxu0 %v5597
    %6164 = vmatpush2.msra.mxu0 %v5596
    %6165 = vmatprep.subr.mxu0 %v5593
    %6166 = vmatpush2.msra.mxu0 %v5592
    %6167 = vmatprep.subr.mxu0 %v5589
    %6168 = vmatpush2.msra.mxu0 %v5588
    %6169 = vmatprep.subr.mxu0 %v5585
    %6170 = vmatpush2.msra.mxu0 %v5584
    %6171 = vmatprep.subr.mxu0 %v5581
    %6172 = vmatpush2.msra.mxu0 %v5580
    %6173 = vmatprep.subr.mxu0 %v5577
    %6174 = vmatpush2.msra.mxu0 %v5576
    %6175 = vmatprep.subr.mxu0 %v5573
    %6176 = vmatpush2.msra.mxu0 %v5572
    %6177 = vmatprep.subr.mxu0 %v5569
    %6178 = vmatpush2.msra.mxu0 %v5568
    %6179 = vmatprep.subr.mxu0 %v5565
    %6180 = vmatpush2.msra.mxu0 %v5564
    %6181 = vmatprep.subr.mxu0 %v5561
    %6182 = vmatpush2.msra.mxu0 %v5560
    %6183 = vmatprep.subr.mxu0 %v5557
    %6184 = vmatpush2.msra.mxu0 %v5556
    %6185 = vmatprep.subr.mxu0 %v5553
    %6186 = vmatpush2.msra.mxu0 %v5552
    %6187 = vmatprep.subr.mxu0 %v5549
    %6188 = vmatpush2.msra.mxu0 %v5548
    %6189 = vmatprep.subr.mxu0 %v5545
    %6190 = vmatpush2.msra.mxu0 %v5544
    %6191 = vmatprep.mubr.f32.mxu0 %v4582
    %6192 = vmatmul.mubr.f32.gmra.mxu0 %v4580
    %v6193 = vpop.f32.mrf.mxu0
    %v6194 = vadd.f32 %v6123, %v6193
    %v6195 = vpop.f32.mrf.mxu0
    %v6196 = vadd.f32 %v6125, %v6195
    %6197 = vdwg.mxu0
    %6198 = vmatprep.subr.mxu0 %v4647
    %6199 = vmatpush1.msra.mxu0 %v4646
    %6200 = vmatprep.subr.mxu0 %v4643
    %6201 = vmatpush1.msra.mxu0 %v4642
    %6202 = vmatprep.subr.mxu0 %v4639
    %6203 = vmatpush1.msra.mxu0 %v4638
    %6204 = vmatprep.subr.mxu0 %v4635
    %6205 = vmatpush1.msra.mxu0 %v4634
    %6206 = vmatprep.subr.mxu0 %v4631
    %6207 = vmatpush1.msra.mxu0 %v4630
    %6208 = vmatprep.subr.mxu0 %v4627
    %6209 = vmatpush1.msra.mxu0 %v4626
    %6210 = vmatprep.subr.mxu0 %v4623
    %6211 = vmatpush1.msra.mxu0 %v4622
    %6212 = vmatprep.subr.mxu0 %v4619
    %6213 = vmatpush1.msra.mxu0 %v4618
    %6214 = vmatprep.subr.mxu0 %v4615
    %6215 = vmatpush1.msra.mxu0 %v4614
    %6216 = vmatprep.subr.mxu0 %v4611
    %6217 = vmatpush1.msra.mxu0 %v4610
    %6218 = vmatprep.subr.mxu0 %v4607
    %6219 = vmatpush1.msra.mxu0 %v4606
    %6220 = vmatprep.subr.mxu0 %v4603
    %6221 = vmatpush1.msra.mxu0 %v4602
    %6222 = vmatprep.subr.mxu0 %v4599
    %6223 = vmatpush1.msra.mxu0 %v4598
    %6224 = vmatprep.subr.mxu0 %v4595
    %6225 = vmatpush1.msra.mxu0 %v4594
    %6226 = vmatprep.subr.mxu0 %v4591
    %6227 = vmatpush1.msra.mxu0 %v4590
    %6228 = vmatprep.subr.mxu0 %v4587
    %6229 = vmatpush1.msra.mxu0 %v4586
    %6230 = vmatprep.subr.mxu0 %v4711
    %6231 = vmatpush2.msra.mxu0 %v4710
    %6232 = vmatprep.subr.mxu0 %v4707
    %6233 = vmatpush2.msra.mxu0 %v4706
    %6234 = vmatprep.subr.mxu0 %v4703
    %6235 = vmatpush2.msra.mxu0 %v4702
    %6236 = vmatprep.subr.mxu0 %v4699
    %6237 = vmatpush2.msra.mxu0 %v4698
    %6238 = vmatprep.subr.mxu0 %v4695
    %6239 = vmatpush2.msra.mxu0 %v4694
    %6240 = vmatprep.subr.mxu0 %v4691
    %6241 = vmatpush2.msra.mxu0 %v4690
    %6242 = vmatprep.subr.mxu0 %v4687
    %6243 = vmatpush2.msra.mxu0 %v4686
    %6244 = vmatprep.subr.mxu0 %v4683
    %6245 = vmatpush2.msra.mxu0 %v4682
    %6246 = vmatprep.subr.mxu0 %v4679
    %6247 = vmatpush2.msra.mxu0 %v4678
    %6248 = vmatprep.subr.mxu0 %v4675
    %6249 = vmatpush2.msra.mxu0 %v4674
    %6250 = vmatprep.subr.mxu0 %v4671
    %6251 = vmatpush2.msra.mxu0 %v4670
    %6252 = vmatprep.subr.mxu0 %v4667
    %6253 = vmatpush2.msra.mxu0 %v4666
    %6254 = vmatprep.subr.mxu0 %v4663
    %6255 = vmatpush2.msra.mxu0 %v4662
    %6256 = vmatprep.subr.mxu0 %v4659
    %6257 = vmatpush2.msra.mxu0 %v4658
    %6258 = vmatprep.subr.mxu0 %v4655
    %6259 = vmatpush2.msra.mxu0 %v4654
    %6260 = vmatprep.subr.mxu0 %v4651
    %6261 = vmatpush2.msra.mxu0 %v4650
    %6262 = vmatprep.mubr.f32.mxu0 %v2594
    %6263 = vmatmul.mubr.f32.gmra.mxu0 %v2592
    %v6264 = vpop.f32.mrf.mxu0
    %v6265 = vadd.f32 %v5621, %v6264
    %v6266 = vpop.f32.mrf.mxu0
    %v6267 = vadd.f32 %v5625, %v6266
    %6268 = vdwg.mxu0
    %6269 = vmatprep.subr.mxu0 %v4775
    %6270 = vmatpush1.msra.mxu0 %v4774
    %6271 = vmatprep.subr.mxu0 %v4771
    %6272 = vmatpush1.msra.mxu0 %v4770
    %6273 = vmatprep.subr.mxu0 %v4767
    %6274 = vmatpush1.msra.mxu0 %v4766
    %6275 = vmatprep.subr.mxu0 %v4763
    %6276 = vmatpush1.msra.mxu0 %v4762
    %6277 = vmatprep.subr.mxu0 %v4759
    %6278 = vmatpush1.msra.mxu0 %v4758
    %6279 = vmatprep.subr.mxu0 %v4755
    %6280 = vmatpush1.msra.mxu0 %v4754
    %6281 = vmatprep.subr.mxu0 %v4751
    %6282 = vmatpush1.msra.mxu0 %v4750
    %6283 = vmatprep.subr.mxu0 %v4747
    %6284 = vmatpush1.msra.mxu0 %v4746
    %6285 = vmatprep.subr.mxu0 %v4743
    %6286 = vmatpush1.msra.mxu0 %v4742
    %6287 = vmatprep.subr.mxu0 %v4739
    %6288 = vmatpush1.msra.mxu0 %v4738
    %6289 = vmatprep.subr.mxu0 %v4735
    %6290 = vmatpush1.msra.mxu0 %v4734
    %6291 = vmatprep.subr.mxu0 %v4731
    %6292 = vmatpush1.msra.mxu0 %v4730
    %6293 = vmatprep.subr.mxu0 %v4727
    %6294 = vmatpush1.msra.mxu0 %v4726
    %6295 = vmatprep.subr.mxu0 %v4723
    %6296 = vmatpush1.msra.mxu0 %v4722
    %6297 = vmatprep.subr.mxu0 %v4719
    %6298 = vmatpush1.msra.mxu0 %v4718
    %6299 = vmatprep.subr.mxu0 %v4715
    %6300 = vmatpush1.msra.mxu0 %v4714
    %6301 = vmatprep.subr.mxu0 %v4839
    %6302 = vmatpush2.msra.mxu0 %v4838
    %6303 = vmatprep.subr.mxu0 %v4835
    %6304 = vmatpush2.msra.mxu0 %v4834
    %6305 = vmatprep.subr.mxu0 %v4831
    %6306 = vmatpush2.msra.mxu0 %v4830
    %6307 = vmatprep.subr.mxu0 %v4827
    %6308 = vmatpush2.msra.mxu0 %v4826
    %6309 = vmatprep.subr.mxu0 %v4823
    %6310 = vmatpush2.msra.mxu0 %v4822
    %6311 = vmatprep.subr.mxu0 %v4819
    %6312 = vmatpush2.msra.mxu0 %v4818
    %6313 = vmatprep.subr.mxu0 %v4815
    %6314 = vmatpush2.msra.mxu0 %v4814
    %6315 = vmatprep.subr.mxu0 %v4811
    %6316 = vmatpush2.msra.mxu0 %v4810
    %6317 = vmatprep.subr.mxu0 %v4807
    %6318 = vmatpush2.msra.mxu0 %v4806
    %6319 = vmatprep.subr.mxu0 %v4803
    %6320 = vmatpush2.msra.mxu0 %v4802
    %6321 = vmatprep.subr.mxu0 %v4799
    %6322 = vmatpush2.msra.mxu0 %v4798
    %6323 = vmatprep.subr.mxu0 %v4795
    %6324 = vmatpush2.msra.mxu0 %v4794
    %6325 = vmatprep.subr.mxu0 %v4791
    %6326 = vmatpush2.msra.mxu0 %v4790
    %6327 = vmatprep.subr.mxu0 %v4787
    %6328 = vmatpush2.msra.mxu0 %v4786
    %6329 = vmatprep.subr.mxu0 %v4783
    %6330 = vmatpush2.msra.mxu0 %v4782
    %6331 = vmatprep.subr.mxu0 %v4779
    %6332 = vmatpush2.msra.mxu0 %v4778
    %6333 = vmatprep.mubr.f32.mxu0 %v2878
    %6334 = vmatmul.mubr.f32.gmra.mxu0 %v2876
    %v6335 = vpop.f32.mrf.mxu0
    %v6336 = vadd.f32 %v6265, %v6335
    %v6337 = vpop.f32.mrf.mxu0
    %v6338 = vadd.f32 %v6267, %v6337
    %6339 = vdwg.mxu0
    %6340 = vmatprep.subr.mxu0 %v4903
    %6341 = vmatpush1.msra.mxu0 %v4902
    %6342 = vmatprep.subr.mxu0 %v4899
    %6343 = vmatpush1.msra.mxu0 %v4898
    %6344 = vmatprep.subr.mxu0 %v4895
    %6345 = vmatpush1.msra.mxu0 %v4894
    %6346 = vmatprep.subr.mxu0 %v4891
    %6347 = vmatpush1.msra.mxu0 %v4890
    %6348 = vmatprep.subr.mxu0 %v4887
    %6349 = vmatpush1.msra.mxu0 %v4886
    %6350 = vmatprep.subr.mxu0 %v4883
    %6351 = vmatpush1.msra.mxu0 %v4882
    %6352 = vmatprep.subr.mxu0 %v4879
    %6353 = vmatpush1.msra.mxu0 %v4878
    %6354 = vmatprep.subr.mxu0 %v4875
    %6355 = vmatpush1.msra.mxu0 %v4874
    %6356 = vmatprep.subr.mxu0 %v4871
    %6357 = vmatpush1.msra.mxu0 %v4870
    %6358 = vmatprep.subr.mxu0 %v4867
    %6359 = vmatpush1.msra.mxu0 %v4866
    %6360 = vmatprep.subr.mxu0 %v4863
    %6361 = vmatpush1.msra.mxu0 %v4862
    %6362 = vmatprep.subr.mxu0 %v4859
    %6363 = vmatpush1.msra.mxu0 %v4858
    %6364 = vmatprep.subr.mxu0 %v4855
    %6365 = vmatpush1.msra.mxu0 %v4854
    %6366 = vmatprep.subr.mxu0 %v4851
    %6367 = vmatpush1.msra.mxu0 %v4850
    %6368 = vmatprep.subr.mxu0 %v4847
    %6369 = vmatpush1.msra.mxu0 %v4846
    %6370 = vmatprep.subr.mxu0 %v4843
    %6371 = vmatpush1.msra.mxu0 %v4842
    %6372 = vmatprep.subr.mxu0 %v4967
    %6373 = vmatpush2.msra.mxu0 %v4966
    %6374 = vmatprep.subr.mxu0 %v4963
    %6375 = vmatpush2.msra.mxu0 %v4962
    %6376 = vmatprep.subr.mxu0 %v4959
    %6377 = vmatpush2.msra.mxu0 %v4958
    %6378 = vmatprep.subr.mxu0 %v4955
    %6379 = vmatpush2.msra.mxu0 %v4954
    %6380 = vmatprep.subr.mxu0 %v4951
    %6381 = vmatpush2.msra.mxu0 %v4950
    %6382 = vmatprep.subr.mxu0 %v4947
    %6383 = vmatpush2.msra.mxu0 %v4946
    %6384 = vmatprep.subr.mxu0 %v4943
    %6385 = vmatpush2.msra.mxu0 %v4942
    %6386 = vmatprep.subr.mxu0 %v4939
    %6387 = vmatpush2.msra.mxu0 %v4938
    %6388 = vmatprep.subr.mxu0 %v4935
    %6389 = vmatpush2.msra.mxu0 %v4934
    %6390 = vmatprep.subr.mxu0 %v4931
    %6391 = vmatpush2.msra.mxu0 %v4930
    %6392 = vmatprep.subr.mxu0 %v4927
    %6393 = vmatpush2.msra.mxu0 %v4926
    %6394 = vmatprep.subr.mxu0 %v4923
    %6395 = vmatpush2.msra.mxu0 %v4922
    %6396 = vmatprep.subr.mxu0 %v4919
    %6397 = vmatpush2.msra.mxu0 %v4918
    %6398 = vmatprep.subr.mxu0 %v4915
    %6399 = vmatpush2.msra.mxu0 %v4914
    %6400 = vmatprep.subr.mxu0 %v4911
    %6401 = vmatpush2.msra.mxu0 %v4910
    %6402 = vmatprep.subr.mxu0 %v4907
    %6403 = vmatpush2.msra.mxu0 %v4906
    %6404 = vmatprep.mubr.f32.mxu0 %v3162
    %6405 = vmatmul.mubr.f32.gmra.mxu0 %v3160
    %v6406 = vpop.f32.mrf.mxu0
    %v6407 = vadd.f32 %v6336, %v6406
    %v6408 = vpop.f32.mrf.mxu0
    %v6409 = vadd.f32 %v6338, %v6408
    %6410 = vdwg.mxu0
    %6411 = vmatprep.subr.mxu0 %v5031
    %6412 = vmatpush1.msra.mxu0 %v5030
    %6413 = vmatprep.subr.mxu0 %v5027
    %6414 = vmatpush1.msra.mxu0 %v5026
    %6415 = vmatprep.subr.mxu0 %v5023
    %6416 = vmatpush1.msra.mxu0 %v5022
    %6417 = vmatprep.subr.mxu0 %v5019
    %6418 = vmatpush1.msra.mxu0 %v5018
    %6419 = vmatprep.subr.mxu0 %v5015
    %6420 = vmatpush1.msra.mxu0 %v5014
    %6421 = vmatprep.subr.mxu0 %v5011
    %6422 = vmatpush1.msra.mxu0 %v5010
    %6423 = vmatprep.subr.mxu0 %v5007
    %6424 = vmatpush1.msra.mxu0 %v5006
    %6425 = vmatprep.subr.mxu0 %v5003
    %6426 = vmatpush1.msra.mxu0 %v5002
    %6427 = vmatprep.subr.mxu0 %v4999
    %6428 = vmatpush1.msra.mxu0 %v4998
    %6429 = vmatprep.subr.mxu0 %v4995
    %6430 = vmatpush1.msra.mxu0 %v4994
    %6431 = vmatprep.subr.mxu0 %v4991
    %6432 = vmatpush1.msra.mxu0 %v4990
    %6433 = vmatprep.subr.mxu0 %v4987
    %6434 = vmatpush1.msra.mxu0 %v4986
    %6435 = vmatprep.subr.mxu0 %v4983
    %6436 = vmatpush1.msra.mxu0 %v4982
    %6437 = vmatprep.subr.mxu0 %v4979
    %6438 = vmatpush1.msra.mxu0 %v4978
    %6439 = vmatprep.subr.mxu0 %v4975
    %6440 = vmatpush1.msra.mxu0 %v4974
    %6441 = vmatprep.subr.mxu0 %v4971
    %6442 = vmatpush1.msra.mxu0 %v4970
    %6443 = vmatprep.subr.mxu0 %v5095
    %6444 = vmatpush2.msra.mxu0 %v5094
    %6445 = vmatprep.subr.mxu0 %v5091
    %6446 = vmatpush2.msra.mxu0 %v5090
    %6447 = vmatprep.subr.mxu0 %v5087
    %6448 = vmatpush2.msra.mxu0 %v5086
    %6449 = vmatprep.subr.mxu0 %v5083
    %6450 = vmatpush2.msra.mxu0 %v5082
    %6451 = vmatprep.subr.mxu0 %v5079
    %6452 = vmatpush2.msra.mxu0 %v5078
    %6453 = vmatprep.subr.mxu0 %v5075
    %6454 = vmatpush2.msra.mxu0 %v5074
    %6455 = vmatprep.subr.mxu0 %v5071
    %6456 = vmatpush2.msra.mxu0 %v5070
    %6457 = vmatprep.subr.mxu0 %v5067
    %6458 = vmatpush2.msra.mxu0 %v5066
    %6459 = vmatprep.subr.mxu0 %v5063
    %6460 = vmatpush2.msra.mxu0 %v5062
    %6461 = vmatprep.subr.mxu0 %v5059
    %6462 = vmatpush2.msra.mxu0 %v5058
    %6463 = vmatprep.subr.mxu0 %v5055
    %6464 = vmatpush2.msra.mxu0 %v5054
    %6465 = vmatprep.subr.mxu0 %v5051
    %6466 = vmatpush2.msra.mxu0 %v5050
    %6467 = vmatprep.subr.mxu0 %v5047
    %6468 = vmatpush2.msra.mxu0 %v5046
    %6469 = vmatprep.subr.mxu0 %v5043
    %6470 = vmatpush2.msra.mxu0 %v5042
    %6471 = vmatprep.subr.mxu0 %v5039
    %6472 = vmatpush2.msra.mxu0 %v5038
    %6473 = vmatprep.subr.mxu0 %v5035
    %6474 = vmatpush2.msra.mxu0 %v5034
    %6475 = vmatprep.mubr.f32.mxu0 %v3446
    %6476 = vmatmul.mubr.f32.gmra.mxu0 %v3444
    %v6477 = vpop.f32.mrf.mxu0
    %v6478 = vadd.f32 %v6407, %v6477
    %v6479 = vpop.f32.mrf.mxu0
    %v6480 = vadd.f32 %v6409, %v6479
    %6481 = vdwg.mxu0
    %6482 = vmatprep.subr.mxu0 %v5159
    %6483 = vmatpush1.msra.mxu0 %v5158
    %6484 = vmatprep.subr.mxu0 %v5155
    %6485 = vmatpush1.msra.mxu0 %v5154
    %6486 = vmatprep.subr.mxu0 %v5151
    %6487 = vmatpush1.msra.mxu0 %v5150
    %6488 = vmatprep.subr.mxu0 %v5147
    %6489 = vmatpush1.msra.mxu0 %v5146
    %6490 = vmatprep.subr.mxu0 %v5143
    %6491 = vmatpush1.msra.mxu0 %v5142
    %6492 = vmatprep.subr.mxu0 %v5139
    %6493 = vmatpush1.msra.mxu0 %v5138
    %6494 = vmatprep.subr.mxu0 %v5135
    %6495 = vmatpush1.msra.mxu0 %v5134
    %6496 = vmatprep.subr.mxu0 %v5131
    %6497 = vmatpush1.msra.mxu0 %v5130
    %6498 = vmatprep.subr.mxu0 %v5127
    %6499 = vmatpush1.msra.mxu0 %v5126
    %6500 = vmatprep.subr.mxu0 %v5123
    %6501 = vmatpush1.msra.mxu0 %v5122
    %6502 = vmatprep.subr.mxu0 %v5119
    %6503 = vmatpush1.msra.mxu0 %v5118
    %6504 = vmatprep.subr.mxu0 %v5115
    %6505 = vmatpush1.msra.mxu0 %v5114
    %6506 = vmatprep.subr.mxu0 %v5111
    %6507 = vmatpush1.msra.mxu0 %v5110
    %6508 = vmatprep.subr.mxu0 %v5107
    %6509 = vmatpush1.msra.mxu0 %v5106
    %6510 = vmatprep.subr.mxu0 %v5103
    %6511 = vmatpush1.msra.mxu0 %v5102
    %6512 = vmatprep.subr.mxu0 %v5099
    %6513 = vmatpush1.msra.mxu0 %v5098
    %6514 = vmatprep.subr.mxu0 %v5223
    %6515 = vmatpush2.msra.mxu0 %v5222
    %6516 = vmatprep.subr.mxu0 %v5219
    %6517 = vmatpush2.msra.mxu0 %v5218
    %6518 = vmatprep.subr.mxu0 %v5215
    %6519 = vmatpush2.msra.mxu0 %v5214
    %6520 = vmatprep.subr.mxu0 %v5211
    %6521 = vmatpush2.msra.mxu0 %v5210
    %6522 = vmatprep.subr.mxu0 %v5207
    %6523 = vmatpush2.msra.mxu0 %v5206
    %6524 = vmatprep.subr.mxu0 %v5203
    %6525 = vmatpush2.msra.mxu0 %v5202
    %6526 = vmatprep.subr.mxu0 %v5199
    %6527 = vmatpush2.msra.mxu0 %v5198
    %6528 = vmatprep.subr.mxu0 %v5195
    %6529 = vmatpush2.msra.mxu0 %v5194
    %6530 = vmatprep.subr.mxu0 %v5191
    %6531 = vmatpush2.msra.mxu0 %v5190
    %6532 = vmatprep.subr.mxu0 %v5187
    %6533 = vmatpush2.msra.mxu0 %v5186
    %6534 = vmatprep.subr.mxu0 %v5183
    %6535 = vmatpush2.msra.mxu0 %v5182
    %6536 = vmatprep.subr.mxu0 %v5179
    %6537 = vmatpush2.msra.mxu0 %v5178
    %6538 = vmatprep.subr.mxu0 %v5175
    %6539 = vmatpush2.msra.mxu0 %v5174
    %6540 = vmatprep.subr.mxu0 %v5171
    %6541 = vmatpush2.msra.mxu0 %v5170
    %6542 = vmatprep.subr.mxu0 %v5167
    %6543 = vmatpush2.msra.mxu0 %v5166
    %6544 = vmatprep.subr.mxu0 %v5163
    %6545 = vmatpush2.msra.mxu0 %v5162
    %6546 = vmatprep.mubr.f32.mxu0 %v3730
    %6547 = vmatmul.mubr.f32.gmra.mxu0 %v3728
    %v6548 = vpop.f32.mrf.mxu0
    %v6549 = vadd.f32 %v6478, %v6548
    %v6550 = vpop.f32.mrf.mxu0
    %v6551 = vadd.f32 %v6480, %v6550
    %6552 = vdwg.mxu0
    %6553 = vmatprep.subr.mxu0 %v5287
    %6554 = vmatpush1.msra.mxu0 %v5286
    %6555 = vmatprep.subr.mxu0 %v5283
    %6556 = vmatpush1.msra.mxu0 %v5282
    %6557 = vmatprep.subr.mxu0 %v5279
    %6558 = vmatpush1.msra.mxu0 %v5278
    %6559 = vmatprep.subr.mxu0 %v5275
    %6560 = vmatpush1.msra.mxu0 %v5274
    %6561 = vmatprep.subr.mxu0 %v5271
    %6562 = vmatpush1.msra.mxu0 %v5270
    %6563 = vmatprep.subr.mxu0 %v5267
    %6564 = vmatpush1.msra.mxu0 %v5266
    %6565 = vmatprep.subr.mxu0 %v5263
    %6566 = vmatpush1.msra.mxu0 %v5262
    %6567 = vmatprep.subr.mxu0 %v5259
    %6568 = vmatpush1.msra.mxu0 %v5258
    %6569 = vmatprep.subr.mxu0 %v5255
    %6570 = vmatpush1.msra.mxu0 %v5254
    %6571 = vmatprep.subr.mxu0 %v5251
    %6572 = vmatpush1.msra.mxu0 %v5250
    %6573 = vmatprep.subr.mxu0 %v5247
    %6574 = vmatpush1.msra.mxu0 %v5246
    %6575 = vmatprep.subr.mxu0 %v5243
    %6576 = vmatpush1.msra.mxu0 %v5242
    %6577 = vmatprep.subr.mxu0 %v5239
    %6578 = vmatpush1.msra.mxu0 %v5238
    %6579 = vmatprep.subr.mxu0 %v5235
    %6580 = vmatpush1.msra.mxu0 %v5234
    %6581 = vmatprep.subr.mxu0 %v5231
    %6582 = vmatpush1.msra.mxu0 %v5230
    %6583 = vmatprep.subr.mxu0 %v5227
    %6584 = vmatpush1.msra.mxu0 %v5226
    %6585 = vmatprep.subr.mxu0 %v5351
    %6586 = vmatpush2.msra.mxu0 %v5350
    %6587 = vmatprep.subr.mxu0 %v5347
    %6588 = vmatpush2.msra.mxu0 %v5346
    %6589 = vmatprep.subr.mxu0 %v5343
    %6590 = vmatpush2.msra.mxu0 %v5342
    %6591 = vmatprep.subr.mxu0 %v5339
    %6592 = vmatpush2.msra.mxu0 %v5338
    %6593 = vmatprep.subr.mxu0 %v5335
    %6594 = vmatpush2.msra.mxu0 %v5334
    %6595 = vmatprep.subr.mxu0 %v5331
    %6596 = vmatpush2.msra.mxu0 %v5330
    %6597 = vmatprep.subr.mxu0 %v5327
    %6598 = vmatpush2.msra.mxu0 %v5326
    %6599 = vmatprep.subr.mxu0 %v5323
    %6600 = vmatpush2.msra.mxu0 %v5322
    %6601 = vmatprep.subr.mxu0 %v5319
    %6602 = vmatpush2.msra.mxu0 %v5318
    %6603 = vmatprep.subr.mxu0 %v5315
    %6604 = vmatpush2.msra.mxu0 %v5314
    %6605 = vmatprep.subr.mxu0 %v5311
    %6606 = vmatpush2.msra.mxu0 %v5310
    %6607 = vmatprep.subr.mxu0 %v5307
    %6608 = vmatpush2.msra.mxu0 %v5306
    %6609 = vmatprep.subr.mxu0 %v5303
    %6610 = vmatpush2.msra.mxu0 %v5302
    %6611 = vmatprep.subr.mxu0 %v5299
    %6612 = vmatpush2.msra.mxu0 %v5298
    %6613 = vmatprep.subr.mxu0 %v5295
    %6614 = vmatpush2.msra.mxu0 %v5294
    %6615 = vmatprep.subr.mxu0 %v5291
    %6616 = vmatpush2.msra.mxu0 %v5290
    %6617 = vmatprep.mubr.f32.mxu0 %v4014
    %6618 = vmatmul.mubr.f32.gmra.mxu0 %v4012
    %v6619 = vpop.f32.mrf.mxu0
    %v6620 = vadd.f32 %v6549, %v6619
    %v6621 = vpop.f32.mrf.mxu0
    %v6622 = vadd.f32 %v6551, %v6621
    %6623 = vdwg.mxu0
    %6624 = vmatprep.subr.mxu0 %v5415
    %6625 = vmatpush1.msra.mxu0 %v5414
    %6626 = vmatprep.subr.mxu0 %v5411
    %6627 = vmatpush1.msra.mxu0 %v5410
    %6628 = vmatprep.subr.mxu0 %v5407
    %6629 = vmatpush1.msra.mxu0 %v5406
    %6630 = vmatprep.subr.mxu0 %v5403
    %6631 = vmatpush1.msra.mxu0 %v5402
    %6632 = vmatprep.subr.mxu0 %v5399
    %6633 = vmatpush1.msra.mxu0 %v5398
    %6634 = vmatprep.subr.mxu0 %v5395
    %6635 = vmatpush1.msra.mxu0 %v5394
    %6636 = vmatprep.subr.mxu0 %v5391
    %6637 = vmatpush1.msra.mxu0 %v5390
    %6638 = vmatprep.subr.mxu0 %v5387
    %6639 = vmatpush1.msra.mxu0 %v5386
    %6640 = vmatprep.subr.mxu0 %v5383
    %6641 = vmatpush1.msra.mxu0 %v5382
    %6642 = vmatprep.subr.mxu0 %v5379
    %6643 = vmatpush1.msra.mxu0 %v5378
    %6644 = vmatprep.subr.mxu0 %v5375
    %6645 = vmatpush1.msra.mxu0 %v5374
    %6646 = vmatprep.subr.mxu0 %v5371
    %6647 = vmatpush1.msra.mxu0 %v5370
    %6648 = vmatprep.subr.mxu0 %v5367
    %6649 = vmatpush1.msra.mxu0 %v5366
    %6650 = vmatprep.subr.mxu0 %v5363
    %6651 = vmatpush1.msra.mxu0 %v5362
    %6652 = vmatprep.subr.mxu0 %v5359
    %6653 = vmatpush1.msra.mxu0 %v5358
    %6654 = vmatprep.subr.mxu0 %v5355
    %6655 = vmatpush1.msra.mxu0 %v5354
    %6656 = vmatprep.subr.mxu0 %v5479
    %6657 = vmatpush2.msra.mxu0 %v5478
    %6658 = vmatprep.subr.mxu0 %v5475
    %6659 = vmatpush2.msra.mxu0 %v5474
    %6660 = vmatprep.subr.mxu0 %v5471
    %6661 = vmatpush2.msra.mxu0 %v5470
    %6662 = vmatprep.subr.mxu0 %v5467
    %6663 = vmatpush2.msra.mxu0 %v5466
    %6664 = vmatprep.subr.mxu0 %v5463
    %6665 = vmatpush2.msra.mxu0 %v5462
    %6666 = vmatprep.subr.mxu0 %v5459
    %6667 = vmatpush2.msra.mxu0 %v5458
    %6668 = vmatprep.subr.mxu0 %v5455
    %6669 = vmatpush2.msra.mxu0 %v5454
    %6670 = vmatprep.subr.mxu0 %v5451
    %6671 = vmatpush2.msra.mxu0 %v5450
    %6672 = vmatprep.subr.mxu0 %v5447
    %6673 = vmatpush2.msra.mxu0 %v5446
    %6674 = vmatprep.subr.mxu0 %v5443
    %6675 = vmatpush2.msra.mxu0 %v5442
    %6676 = vmatprep.subr.mxu0 %v5439
    %6677 = vmatpush2.msra.mxu0 %v5438
    %6678 = vmatprep.subr.mxu0 %v5435
    %6679 = vmatpush2.msra.mxu0 %v5434
    %6680 = vmatprep.subr.mxu0 %v5431
    %6681 = vmatpush2.msra.mxu0 %v5430
    %6682 = vmatprep.subr.mxu0 %v5427
    %6683 = vmatpush2.msra.mxu0 %v5426
    %6684 = vmatprep.subr.mxu0 %v5423
    %6685 = vmatpush2.msra.mxu0 %v5422
    %6686 = vmatprep.subr.mxu0 %v5419
    %6687 = vmatpush2.msra.mxu0 %v5418
    %6688 = vmatprep.mubr.f32.mxu0 %v4298
    %6689 = vmatmul.mubr.f32.gmra.mxu0 %v4296
    %v6690 = vpop.f32.mrf.mxu0
    %v6691 = vadd.f32 %v6620, %v6690
    %v6692 = vpop.f32.mrf.mxu0
    %v6693 = vadd.f32 %v6622, %v6692
    %6694 = vdwg.mxu0
    %6695 = vmatprep.subr.mxu0 %v5543
    %6696 = vmatpush1.msra.mxu0 %v5542
    %6697 = vmatprep.subr.mxu0 %v5539
    %6698 = vmatpush1.msra.mxu0 %v5538
    %6699 = vmatprep.subr.mxu0 %v5535
    %6700 = vmatpush1.msra.mxu0 %v5534
    %6701 = vmatprep.subr.mxu0 %v5531
    %6702 = vmatpush1.msra.mxu0 %v5530
    %6703 = vmatprep.subr.mxu0 %v5527
    %6704 = vmatpush1.msra.mxu0 %v5526
    %6705 = vmatprep.subr.mxu0 %v5523
    %6706 = vmatpush1.msra.mxu0 %v5522
    %6707 = vmatprep.subr.mxu0 %v5519
    %6708 = vmatpush1.msra.mxu0 %v5518
    %6709 = vmatprep.subr.mxu0 %v5515
    %6710 = vmatpush1.msra.mxu0 %v5514
    %6711 = vmatprep.subr.mxu0 %v5511
    %6712 = vmatpush1.msra.mxu0 %v5510
    %6713 = vmatprep.subr.mxu0 %v5507
    %6714 = vmatpush1.msra.mxu0 %v5506
    %6715 = vmatprep.subr.mxu0 %v5503
    %6716 = vmatpush1.msra.mxu0 %v5502
    %6717 = vmatprep.subr.mxu0 %v5499
    %6718 = vmatpush1.msra.mxu0 %v5498
    %6719 = vmatprep.subr.mxu0 %v5495
    %6720 = vmatpush1.msra.mxu0 %v5494
    %6721 = vmatprep.subr.mxu0 %v5491
    %6722 = vmatpush1.msra.mxu0 %v5490
    %6723 = vmatprep.subr.mxu0 %v5487
    %6724 = vmatpush1.msra.mxu0 %v5486
    %6725 = vmatprep.subr.mxu0 %v5483
    %6726 = vmatpush1.msra.mxu0 %v5482
    %6727 = vmatprep.subr.mxu0 %v5607
    %6728 = vmatpush2.msra.mxu0 %v5606
    %6729 = vmatprep.subr.mxu0 %v5603
    %6730 = vmatpush2.msra.mxu0 %v5602
    %6731 = vmatprep.subr.mxu0 %v5599
    %6732 = vmatpush2.msra.mxu0 %v5598
    %6733 = vmatprep.subr.mxu0 %v5595
    %6734 = vmatpush2.msra.mxu0 %v5594
    %6735 = vmatprep.subr.mxu0 %v5591
    %6736 = vmatpush2.msra.mxu0 %v5590
    %6737 = vmatprep.subr.mxu0 %v5587
    %6738 = vmatpush2.msra.mxu0 %v5586
    %6739 = vmatprep.subr.mxu0 %v5583
    %6740 = vmatpush2.msra.mxu0 %v5582
    %6741 = vmatprep.subr.mxu0 %v5579
    %6742 = vmatpush2.msra.mxu0 %v5578
    %6743 = vmatprep.subr.mxu0 %v5575
    %6744 = vmatpush2.msra.mxu0 %v5574
    %6745 = vmatprep.subr.mxu0 %v5571
    %6746 = vmatpush2.msra.mxu0 %v5570
    %6747 = vmatprep.subr.mxu0 %v5567
    %6748 = vmatpush2.msra.mxu0 %v5566
    %6749 = vmatprep.subr.mxu0 %v5563
    %6750 = vmatpush2.msra.mxu0 %v5562
    %6751 = vmatprep.subr.mxu0 %v5559
    %6752 = vmatpush2.msra.mxu0 %v5558
    %6753 = vmatprep.subr.mxu0 %v5555
    %6754 = vmatpush2.msra.mxu0 %v5554
    %6755 = vmatprep.subr.mxu0 %v5551
    %6756 = vmatpush2.msra.mxu0 %v5550
    %6757 = vmatprep.subr.mxu0 %v5547
    %6758 = vmatpush2.msra.mxu0 %v5546
    %6759 = vmatprep.mubr.f32.mxu0 %v4582
    %6760 = vmatmul.mubr.f32.gmra.mxu0 %v4580
    %v6761 = vpop.f32.mrf.mxu0
    %v6762 = vadd.f32 %v6691, %v6761
    %v6763 = vpop.f32.mrf.mxu0
    %v6764 = vadd.f32 %v6693, %v6763
    %6765 = vdwg.mxu0
    %v6766 = vld [vmem:[#allocation10] sm:$0xff]
    %v6767 = vld [vmem:[#allocation10 + $0x8] sm:$0xff]
    %v6768 = vld [vmem:[#allocation10 + $0x10] sm:$0xff]
    %v6769 = vld [vmem:[#allocation10 + $0x18] sm:$0xff]
    %v6770 = vld [vmem:[#allocation10 + $0x20] sm:$0xff]
    %v6771 = vld [vmem:[#allocation10 + $0x28] sm:$0xff]
    %v6772 = vld [vmem:[#allocation10 + $0x30] sm:$0xff]
    %v6773 = vld [vmem:[#allocation10 + $0x38] sm:$0xff]
    %v6774 = vld [vmem:[#allocation10 + $0x40] sm:$0xff]
    %v6775 = vld [vmem:[#allocation10 + $0x48] sm:$0xff]
    %v6776 = vld [vmem:[#allocation10 + $0x50] sm:$0xff]
    %v6777 = vld [vmem:[#allocation10 + $0x58] sm:$0xff]
    %v6778 = vld [vmem:[#allocation10 + $0x60] sm:$0xff]
    %v6779 = vld [vmem:[#allocation10 + $0x68] sm:$0xff]
    %v6780 = vld [vmem:[#allocation10 + $0x70] sm:$0xff]
    %v6781 = vld [vmem:[#allocation10 + $0x78] sm:$0xff]
    %v6782 = vld [vmem:[#allocation10 + $0x80] sm:$0xff]
    %v6783 = vld [vmem:[#allocation10 + $0x88] sm:$0xff]
    %v6784 = vld [vmem:[#allocation10 + $0x90] sm:$0xff]
    %v6785 = vld [vmem:[#allocation10 + $0x98] sm:$0xff]
    %v6786 = vld [vmem:[#allocation10 + $0xa0] sm:$0xff]
    %v6787 = vld [vmem:[#allocation10 + $0xa8] sm:$0xff]
    %v6788 = vld [vmem:[#allocation10 + $0xb0] sm:$0xff]
    %v6789 = vld [vmem:[#allocation10 + $0xb8] sm:$0xff]
    %v6790 = vld [vmem:[#allocation10 + $0xc0] sm:$0xff]
    %v6791 = vld [vmem:[#allocation10 + $0xc8] sm:$0xff]
    %v6792 = vld [vmem:[#allocation10 + $0xd0] sm:$0xff]
    %v6793 = vld [vmem:[#allocation10 + $0xd8] sm:$0xff]
    %v6794 = vld [vmem:[#allocation10 + $0xe0] sm:$0xff]
    %v6795 = vld [vmem:[#allocation10 + $0xe8] sm:$0xff]
    %v6796 = vld [vmem:[#allocation10 + $0xf0] sm:$0xff]
    %v6797 = vld [vmem:[#allocation10 + $0xf8] sm:$0xff]
    %v6798 = vld [vmem:[#allocation10 + $0x100] sm:$0xff]
    %v6799 = vld [vmem:[#allocation10 + $0x108] sm:$0xff]
    %v6800 = vld [vmem:[#allocation10 + $0x110] sm:$0xff]
    %v6801 = vld [vmem:[#allocation10 + $0x118] sm:$0xff]
    %v6802 = vld [vmem:[#allocation10 + $0x120] sm:$0xff]
    %v6803 = vld [vmem:[#allocation10 + $0x128] sm:$0xff]
    %v6804 = vld [vmem:[#allocation10 + $0x130] sm:$0xff]
    %v6805 = vld [vmem:[#allocation10 + $0x138] sm:$0xff]
    %v6806 = vld [vmem:[#allocation10 + $0x140] sm:$0xff]
    %v6807 = vld [vmem:[#allocation10 + $0x148] sm:$0xff]
    %v6808 = vld [vmem:[#allocation10 + $0x150] sm:$0xff]
    %v6809 = vld [vmem:[#allocation10 + $0x158] sm:$0xff]
    %v6810 = vld [vmem:[#allocation10 + $0x160] sm:$0xff]
    %v6811 = vld [vmem:[#allocation10 + $0x168] sm:$0xff]
    %v6812 = vld [vmem:[#allocation10 + $0x170] sm:$0xff]
    %v6813 = vld [vmem:[#allocation10 + $0x178] sm:$0xff]
    %v6814 = vld [vmem:[#allocation10 + $0x180] sm:$0xff]
    %v6815 = vld [vmem:[#allocation10 + $0x188] sm:$0xff]
    %v6816 = vld [vmem:[#allocation10 + $0x190] sm:$0xff]
    %v6817 = vld [vmem:[#allocation10 + $0x198] sm:$0xff]
    %v6818 = vld [vmem:[#allocation10 + $0x1a0] sm:$0xff]
    %v6819 = vld [vmem:[#allocation10 + $0x1a8] sm:$0xff]
    %v6820 = vld [vmem:[#allocation10 + $0x1b0] sm:$0xff]
    %v6821 = vld [vmem:[#allocation10 + $0x1b8] sm:$0xff]
    %v6822 = vld [vmem:[#allocation10 + $0x1c0] sm:$0xff]
    %v6823 = vld [vmem:[#allocation10 + $0x1c8] sm:$0xff]
    %v6824 = vld [vmem:[#allocation10 + $0x1d0] sm:$0xff]
    %v6825 = vld [vmem:[#allocation10 + $0x1d8] sm:$0xff]
    %v6826 = vld [vmem:[#allocation10 + $0x1e0] sm:$0xff]
    %v6827 = vld [vmem:[#allocation10 + $0x1e8] sm:$0xff]
    %v6828 = vld [vmem:[#allocation10 + $0x1f0] sm:$0xff]
    %v6829 = vld [vmem:[#allocation10 + $0x1f8] sm:$0xff]
    %v6830 = vld [vmem:[#allocation11] sm:$0x1]
    %v6832 = vlaneseq
    %v6833 = vshrl.u32 %v6832, 7
    %v6834 = vsub.s32 0, %v6833
    %v6835 = vrot.slane %v6830, %v6834
    %6837 = vmatprep.subr.mxu0 0.0
    %6838 = vmatpush1.msra.mxu0 %v6781
    %6839 = vmatprep.subr.mxu0 0.0
    %6840 = vmatpush1.msra.mxu0 %v6780
    %6841 = vmatprep.subr.mxu0 0.0
    %6842 = vmatpush1.msra.mxu0 %v6779
    %6843 = vmatprep.subr.mxu0 0.0
    %6844 = vmatpush1.msra.mxu0 %v6778
    %6845 = vmatprep.subr.mxu0 0.0
    %6846 = vmatpush1.msra.mxu0 %v6777
    %6847 = vmatprep.subr.mxu0 0.0
    %6848 = vmatpush1.msra.mxu0 %v6776
    %6849 = vmatprep.subr.mxu0 0.0
    %6850 = vmatpush1.msra.mxu0 %v6775
    %6851 = vmatprep.subr.mxu0 0.0
    %6852 = vmatpush1.msra.mxu0 %v6774
    %6853 = vmatprep.subr.mxu0 0.0
    %6854 = vmatpush1.msra.mxu0 %v6773
    %6855 = vmatprep.subr.mxu0 0.0
    %6856 = vmatpush1.msra.mxu0 %v6772
    %6857 = vmatprep.subr.mxu0 0.0
    %6858 = vmatpush1.msra.mxu0 %v6771
    %6859 = vmatprep.subr.mxu0 0.0
    %6860 = vmatpush1.msra.mxu0 %v6770
    %6861 = vmatprep.subr.mxu0 0.0
    %6862 = vmatpush1.msra.mxu0 %v6769
    %6863 = vmatprep.subr.mxu0 0.0
    %6864 = vmatpush1.msra.mxu0 %v6768
    %6865 = vmatprep.subr.mxu0 0.0
    %6866 = vmatpush1.msra.mxu0 %v6767
    %6867 = vmatprep.subr.mxu0 0.0
    %6868 = vmatpush1.msra.mxu0 %v6766
    %6869 = vmatprep.subr.mxu0 0.0
    %6870 = vmatpush2.msra.mxu0 %v6797
    %6871 = vmatprep.subr.mxu0 0.0
    %6872 = vmatpush2.msra.mxu0 %v6796
    %6873 = vmatprep.subr.mxu0 0.0
    %6874 = vmatpush2.msra.mxu0 %v6795
    %6875 = vmatprep.subr.mxu0 0.0
    %6876 = vmatpush2.msra.mxu0 %v6794
    %6877 = vmatprep.subr.mxu0 0.0
    %6878 = vmatpush2.msra.mxu0 %v6793
    %6879 = vmatprep.subr.mxu0 0.0
    %6880 = vmatpush2.msra.mxu0 %v6792
    %6881 = vmatprep.subr.mxu0 0.0
    %6882 = vmatpush2.msra.mxu0 %v6791
    %6883 = vmatprep.subr.mxu0 0.0
    %6884 = vmatpush2.msra.mxu0 %v6790
    %6885 = vmatprep.subr.mxu0 0.0
    %6886 = vmatpush2.msra.mxu0 %v6789
    %6887 = vmatprep.subr.mxu0 0.0
    %6888 = vmatpush2.msra.mxu0 %v6788
    %6889 = vmatprep.subr.mxu0 0.0
    %6890 = vmatpush2.msra.mxu0 %v6787
    %6891 = vmatprep.subr.mxu0 0.0
    %6892 = vmatpush2.msra.mxu0 %v6786
    %6893 = vmatprep.subr.mxu0 0.0
    %6894 = vmatpush2.msra.mxu0 %v6785
    %6895 = vmatprep.subr.mxu0 0.0
    %6896 = vmatpush2.msra.mxu0 %v6784
    %6897 = vmatprep.subr.mxu0 0.0
    %6898 = vmatpush2.msra.mxu0 %v6783
    %6899 = vmatprep.subr.mxu0 0.0
    %6900 = vmatpush2.msra.mxu0 %v6782
    %6901 = vmatprep.mubr.f32.mxu0 %v6196
    %6902 = vmatmul.mubr.f32.gmra.mxu0 %v6194
    %v6903 = vpop.f32.mrf.mxu0
    %v6904 = vadd.f32 %v6835, %v6903
    %v6905 = vpop.f32.mrf.mxu0
    %6906 = vdwg.mxu0
    %6907 = vmatprep.subr.mxu0 0.0
    %6908 = vmatpush1.msra.mxu0 %v6813
    %6909 = vmatprep.subr.mxu0 0.0
    %6910 = vmatpush1.msra.mxu0 %v6812
    %6911 = vmatprep.subr.mxu0 0.0
    %6912 = vmatpush1.msra.mxu0 %v6811
    %6913 = vmatprep.subr.mxu0 0.0
    %6914 = vmatpush1.msra.mxu0 %v6810
    %6915 = vmatprep.subr.mxu0 0.0
    %6916 = vmatpush1.msra.mxu0 %v6809
    %6917 = vmatprep.subr.mxu0 0.0
    %6918 = vmatpush1.msra.mxu0 %v6808
    %6919 = vmatprep.subr.mxu0 0.0
    %6920 = vmatpush1.msra.mxu0 %v6807
    %6921 = vmatprep.subr.mxu0 0.0
    %6922 = vmatpush1.msra.mxu0 %v6806
    %6923 = vmatprep.subr.mxu0 0.0
    %6924 = vmatpush1.msra.mxu0 %v6805
    %6925 = vmatprep.subr.mxu0 0.0
    %6926 = vmatpush1.msra.mxu0 %v6804
    %6927 = vmatprep.subr.mxu0 0.0
    %6928 = vmatpush1.msra.mxu0 %v6803
    %6929 = vmatprep.subr.mxu0 0.0
    %6930 = vmatpush1.msra.mxu0 %v6802
    %6931 = vmatprep.subr.mxu0 0.0
    %6932 = vmatpush1.msra.mxu0 %v6801
    %6933 = vmatprep.subr.mxu0 0.0
    %6934 = vmatpush1.msra.mxu0 %v6800
    %6935 = vmatprep.subr.mxu0 0.0
    %6936 = vmatpush1.msra.mxu0 %v6799
    %6937 = vmatprep.subr.mxu0 0.0
    %6938 = vmatpush1.msra.mxu0 %v6798
    %6939 = vmatprep.subr.mxu0 0.0
    %6940 = vmatpush2.msra.mxu0 %v6829
    %6941 = vmatprep.subr.mxu0 0.0
    %6942 = vmatpush2.msra.mxu0 %v6828
    %6943 = vmatprep.subr.mxu0 0.0
    %6944 = vmatpush2.msra.mxu0 %v6827
    %6945 = vmatprep.subr.mxu0 0.0
    %6946 = vmatpush2.msra.mxu0 %v6826
    %6947 = vmatprep.subr.mxu0 0.0
    %6948 = vmatpush2.msra.mxu0 %v6825
    %6949 = vmatprep.subr.mxu0 0.0
    %6950 = vmatpush2.msra.mxu0 %v6824
    %6951 = vmatprep.subr.mxu0 0.0
    %6952 = vmatpush2.msra.mxu0 %v6823
    %6953 = vmatprep.subr.mxu0 0.0
    %6954 = vmatpush2.msra.mxu0 %v6822
    %6955 = vmatprep.subr.mxu0 0.0
    %6956 = vmatpush2.msra.mxu0 %v6821
    %6957 = vmatprep.subr.mxu0 0.0
    %6958 = vmatpush2.msra.mxu0 %v6820
    %6959 = vmatprep.subr.mxu0 0.0
    %6960 = vmatpush2.msra.mxu0 %v6819
    %6961 = vmatprep.subr.mxu0 0.0
    %6962 = vmatpush2.msra.mxu0 %v6818
    %6963 = vmatprep.subr.mxu0 0.0
    %6964 = vmatpush2.msra.mxu0 %v6817
    %6965 = vmatprep.subr.mxu0 0.0
    %6966 = vmatpush2.msra.mxu0 %v6816
    %6967 = vmatprep.subr.mxu0 0.0
    %6968 = vmatpush2.msra.mxu0 %v6815
    %6969 = vmatprep.subr.mxu0 0.0
    %6970 = vmatpush2.msra.mxu0 %v6814
    %6971 = vmatprep.mubr.f32.mxu0 %v6764
    %6972 = vmatmul.mubr.f32.gmra.mxu0 %v6762
    %v6973 = vpop.f32.mrf.mxu0
    %v6974 = vadd.f32 %v6904, %v6973
    %v6975 = vpop.f32.mrf.mxu0
    %6976 = vdwg.mxu0
    %v6977 = vld [vmem:[#allocation13] sm:$0xff]
    %v6978 = vld [vmem:[#allocation13 + $0x8] sm:$0xff]
    %v6979 = vld [vmem:[#allocation13 + $0x10] sm:$0xff]
    %v6980 = vld [vmem:[#allocation13 + $0x18] sm:$0xff]
    %v6981 = vld [vmem:[#allocation13 + $0x20] sm:$0xff]
    %v6982 = vld [vmem:[#allocation13 + $0x28] sm:$0xff]
    %v6983 = vld [vmem:[#allocation13 + $0x30] sm:$0xff]
    %v6984 = vld [vmem:[#allocation13 + $0x38] sm:$0xff]
    %v6985 = vld [vmem:[#allocation13 + $0x40] sm:$0xff]
    %v6986 = vld [vmem:[#allocation13 + $0x48] sm:$0xff]
    %v6987 = vld [vmem:[#allocation13 + $0x50] sm:$0xff]
    %v6988 = vld [vmem:[#allocation13 + $0x58] sm:$0xff]
    %v6989 = vld [vmem:[#allocation13 + $0x60] sm:$0xff]
    %v6990 = vld [vmem:[#allocation13 + $0x68] sm:$0xff]
    %v6991 = vld [vmem:[#allocation13 + $0x70] sm:$0xff]
    %v6992 = vld [vmem:[#allocation13 + $0x78] sm:$0xff]
    %v6993 = vld [vmem:[#allocation14] sm:$0x1]
    %v6995 = vlaneseq
    %v6996 = vshrl.u32 %v6995, 7
    %v6997 = vsub.s32 0, %v6996
    %v6998 = vrot.slane %v6993, %v6997
    %7000 = vmatprep.subr.mxu0 0.0
    %7001 = vmatpush1.msra.mxu0 %v6992
    %7002 = vmatprep.subr.mxu0 0.0
    %7003 = vmatpush1.msra.mxu0 %v6991
    %7004 = vmatprep.subr.mxu0 0.0
    %7005 = vmatpush1.msra.mxu0 %v6990
    %7006 = vmatprep.subr.mxu0 0.0
    %7007 = vmatpush1.msra.mxu0 %v6989
    %7008 = vmatprep.subr.mxu0 0.0
    %7009 = vmatpush1.msra.mxu0 %v6988
    %7010 = vmatprep.subr.mxu0 0.0
    %7011 = vmatpush1.msra.mxu0 %v6987
    %7012 = vmatprep.subr.mxu0 0.0
    %7013 = vmatpush1.msra.mxu0 %v6986
    %7014 = vmatprep.subr.mxu0 0.0
    %7015 = vmatpush1.msra.mxu0 %v6985
    %7016 = vmatprep.subr.mxu0 0.0
    %7017 = vmatpush1.msra.mxu0 %v6984
    %7018 = vmatprep.subr.mxu0 0.0
    %7019 = vmatpush1.msra.mxu0 %v6983
    %7020 = vmatprep.subr.mxu0 0.0
    %7021 = vmatpush1.msra.mxu0 %v6982
    %7022 = vmatprep.subr.mxu0 0.0
    %7023 = vmatpush1.msra.mxu0 %v6981
    %7024 = vmatprep.subr.mxu0 0.0
    %7025 = vmatpush1.msra.mxu0 %v6980
    %7026 = vmatprep.subr.mxu0 0.0
    %7027 = vmatpush1.msra.mxu0 %v6979
    %7028 = vmatprep.subr.mxu0 0.0
    %7029 = vmatpush1.msra.mxu0 %v6978
    %7030 = vmatprep.subr.mxu0 0.0
    %7031 = vmatpush1.msra.mxu0 %v6977
    %7032 = vmatprep.subr.mxu0 0.0
    %7033 = vmatpush2.msra.mxu0 0.0
    %7034 = vmatprep.subr.mxu0 0.0
    %7035 = vmatpush2.msra.mxu0 0.0
    %7036 = vmatprep.subr.mxu0 0.0
    %7037 = vmatpush2.msra.mxu0 0.0
    %7038 = vmatprep.subr.mxu0 0.0
    %7039 = vmatpush2.msra.mxu0 0.0
    %7040 = vmatprep.subr.mxu0 0.0
    %7041 = vmatpush2.msra.mxu0 0.0
    %7042 = vmatprep.subr.mxu0 0.0
    %7043 = vmatpush2.msra.mxu0 0.0
    %7044 = vmatprep.subr.mxu0 0.0
    %7045 = vmatpush2.msra.mxu0 0.0
    %7046 = vmatprep.subr.mxu0 0.0
    %7047 = vmatpush2.msra.mxu0 0.0
    %7048 = vmatprep.subr.mxu0 0.0
    %7049 = vmatpush2.msra.mxu0 0.0
    %7050 = vmatprep.subr.mxu0 0.0
    %7051 = vmatpush2.msra.mxu0 0.0
    %7052 = vmatprep.subr.mxu0 0.0
    %7053 = vmatpush2.msra.mxu0 0.0
    %7054 = vmatprep.subr.mxu0 0.0
    %7055 = vmatpush2.msra.mxu0 0.0
    %7056 = vmatprep.subr.mxu0 0.0
    %7057 = vmatpush2.msra.mxu0 0.0
    %7058 = vmatprep.subr.mxu0 0.0
    %7059 = vmatpush2.msra.mxu0 0.0
    %7060 = vmatprep.subr.mxu0 0.0
    %7061 = vmatpush2.msra.mxu0 0.0
    %7062 = vmatprep.subr.mxu0 0.0
    %7063 = vmatpush2.msra.mxu0 0.0
    %7064 = vmatprep.mubr.f32.mxu0 0.0
    %7065 = vmatmul.mubr.f32.gmra.mxu0 %v6974
    %v7066 = vpop.f32.mrf.mxu0
    %v7067 = vadd.f32 %v6998, %v7066
    %v7068 = vpop.f32.mrf.mxu0
    %7069 = vdwg.mxu0
    %7070 = vst [vmem:[#allocation16] sm:$0x3] %v7067
    // Predicated region
    $region70: #{actor_critic_forward.1} parent=1 // pred_check
      _
    $region71: #{actor_critic_forward.1} parent=1 // pred_check_branch
      %7072 = sbr.rel (0) target = $region73
    $region72: #{actor_critic_forward.1} parent=1 // pred_region
      %s7074 = ssub.s32 32, 32
      %7075 = vsyncadd [#allocation4], %s7074
      %s7077 = sshll.u32 [#allocation16], 4
      %s7078 = int_to_ptr.vmem [resolvable:$true] %s7077
      %7080 = dma.vmem_to_hbm [thread:$0]  %s7078, 32, %s9, [#allocation4]
    $region73: #{actor_critic_forward.1} parent=1 // pred_fallthru
      _
    // Predicated region
    $region74: #{actor_critic_forward.1} parent=1 // pred_check
      _
    $region75: #{actor_critic_forward.1} parent=1 // pred_check_branch
      %7082 = sbr.rel (0) target = $region77
    $region76: #{actor_critic_forward.1} parent=1 // pred_region
      %7083 = dma.done [#allocation4], 32
    $region77: #{actor_critic_forward.1} parent=1 // pred_fallthru
      _
    %7084 = vsyncpa [#allocation3], 1
    %7085 = vsyncpa [#allocation6], 1
    %7086 = vsyncpa [#allocation9], 1
    %7087 = vsyncpa [#allocation12], 1
    %7088 = vsyncpa [#allocation15], 1
    %7089 = vsyncpa [#allocation4], 1

</llo_original>
